<compile_context>
chip_gen: v7x
topology: tpu7x:2x2x1
jax: 0.10.0
libtpu: 0.0.40
codegen_flags: <defaults>
</compile_context>

<pallas_src>
import jax
import jax.numpy as jnp
from jax import lax
from jax.experimental import pallas as pl
from jax.experimental.pallas import tpu as pltpu


def _toeplitz_weights_along_w(w, W):
    """Expand DHWIO conv weights into banded (W*Cin, W*Cout) matrices per (kd, kh).

    w2[kd, kh, wi*Cin + ci, wo*Cout + co] = w[kd, kh, (wi - wo) + 1, ci, co]
    for |wi - wo| <= 1, zero otherwise.  One K = W*Cin matmul then applies all three
    kw taps at once; the W boundary (padding=1) falls out of the band edges.
    """
    kD, kH, kW, Cin, Cout = w.shape
    w2 = jnp.zeros((kD, kH, W, Cin, W, Cout), w.dtype)
    for kw in range(kW):
        for wo in range(W):
            wi = wo + kw - 1
            if 0 <= wi < W:
                w2 = w2.at[:, :, wi, :, wo, :].set(w[:, :, kw, :, :])
    return w2.reshape(kD, kH, W * Cin, W * Cout)


def fused_conv_block(x_fold, params, *, H, W):
    """n_stages x (Conv3d(k=3, s=1, p=1) + bias + ReLU) fused in one pallas_call.

    x_fold : (N, D, H, W*Cin0) bf16 activations (channels folded into the lane dim)
    params : list of (w (3,3,3,Cin,Cout) f32, b (Cout,) f32), DHWIO weights
    returns: (N, D, H, W*Cout) f32
    """
    N, D, H_, WCi0 = x_fold.shape
    assert H_ == H
    n_stages = len(params)
    Cout = params[0][0].shape[-1]
    WCo = W * Cout

    # Gate the W-folded Toeplitz path on size (it scales quadratically in W).
    # TODO(synk): for realistic widths (C >= 32, W >= 32) fall back to a plain
    # channels-last kernel (M = TD*H*W, K = Cin, N = Cout) with D tiling.
    assert WCi0 <= 256 and WCo <= 256, "W-folded Toeplitz path only for small W*C"
    for (w, _) in params:
        assert w.shape[:3] == (3, 3, 3) and w.shape[-1] == Cout

    # Per-stage banded weights (bf16 MXU operands) + W-tiled bias (f32), built once.
    w2s, bfs, wcis = [], [], []
    for (w, b) in params:
        cin = w.shape[3]
        w2s.append(_toeplitz_weights_along_w(w, W).astype(jnp.bfloat16))
        bfs.append(jnp.tile(b, (W,)).reshape(1, WCo).astype(jnp.float32))
        wcis.append(W * cin)

    n_inter = min(n_stages - 1, 2)  # ping-pong intermediate scratches

    def kernel(*refs):
        x_ref = refs[0]
        w_refs = [refs[1 + 2 * s] for s in range(n_stages)]
        b_refs = [refs[2 + 2 * s] for s in range(n_stages)]
        o_ref = refs[1 + 2 * n_stages]
        pad_refs = list(refs[2 + 2 * n_stages:])  # [xpad0] + intermediates

        def fill_pad(pad_ref, interior):
            """Zero only the halo border, then one fat interior block copy (bf16)."""
            wc = pad_ref.shape[-1]
            pad_ref[0:1, :, :] = jnp.zeros((1, H + 2, wc), pad_ref.dtype)
            pad_ref[D + 1:D + 2, :, :] = jnp.zeros((1, H + 2, wc), pad_ref.dtype)
            pad_ref[1:D + 1, 0:1, :] = jnp.zeros((D, 1, wc), pad_ref.dtype)
            pad_ref[1:D + 1, H + 1:H + 2, :] = jnp.zeros((D, 1, wc), pad_ref.dtype)
            pad_ref[1:D + 1, 1:H + 1, :] = interior

        # Stage-0 input: cast to bf16 exactly once, at the copy into the padded scratch.
        fill_pad(pad_refs[0], x_ref[...].astype(jnp.bfloat16))

        for s in range(n_stages):
            wci = wcis[s]
            pad_in = pad_refs[0] if s == 0 else pad_refs[1 + (s - 1) % n_inter]
            bias = b_refs[s][...]                                  # (1, WCo) f32
            # 9 fat MXU matmuls, M = D*H, chained f32 accumulation (MRB-friendly).
            acc = jnp.zeros((D * H, WCo), jnp.float32)
            for kd in range(3):
                for kh in range(3):
                    lhs = pad_in[kd:kd + D, kh:kh + H, :].reshape(D * H, wci)
                    acc += lax.dot_general(
                        lhs, w_refs[s][kd, kh],                    # load weight at use
                        dimension_numbers=(((1,), (0,)), ((), ())),
                        preferred_element_type=jnp.float32)
            y = jnp.maximum(acc + bias, 0.0)                       # bias + ReLU in f32
            if s == n_stages - 1:
                o_ref[...] = y.reshape(D, H, WCo).astype(o_ref.dtype)
            else:
                fill_pad(pad_refs[1 + s % n_inter],
                         y.reshape(D, H, WCo).astype(jnp.bfloat16))

    in_specs = [pl.BlockSpec((None, D, H, WCi0), lambda n: (n, 0, 0, 0))]
    in_arrays = [x_fold]
    for s in range(n_stages):
        wci = wcis[s]
        # Constant block index -> weights/bias stay resident in VMEM across the grid.
        in_specs.append(pl.BlockSpec((3, 3, wci, WCo), lambda n: (0, 0, 0, 0)))
        in_specs.append(pl.BlockSpec((1, WCo), lambda n: (0, 0)))
        in_arrays += [w2s[s], bfs[s]]

    scratch_shapes = [pltpu.VMEM((D + 2, H + 2, WCi0), jnp.bfloat16)]
    scratch_shapes += [pltpu.VMEM((D + 2, H + 2, WCo), jnp.bfloat16)] * n_inter

    # True conv FLOPs (not inflated by the Toeplitz band zeros).
    flops = sum(2 * N * D * H * W * 27 * (wci // W) * Cout for wci in wcis)
    bytes_accessed = int(
        N * D * H * WCi0 * x_fold.dtype.itemsize          # input (bf16)
        + N * D * H * WCo * 4                              # output (f32)
        + sum(9 * wci * WCo * 2 + WCo * 4 for wci in wcis))  # weights (bf16) + bias

    return pl.pallas_call(
        kernel,
        out_shape=jax.ShapeDtypeStruct((N, D, H, WCo), jnp.float32),
        grid_spec=pltpu.PrefetchScalarGridSpec(
            num_scalar_prefetch=0,
            grid=(N,),                         # N>=2 keeps both v7x TensorCores busy
            in_specs=in_specs,
            out_specs=pl.BlockSpec((None, D, H, WCo), lambda n: (n, 0, 0, 0)),
            scratch_shapes=scratch_shapes,
        ),
        compiler_params=pltpu.CompilerParams(
            dimension_semantics=("parallel",),
            vmem_limit_bytes=32 * 1024 * 1024),
        cost_estimate=pl.CostEstimate(flops=flops, transcendentals=0,
                                      bytes_accessed=bytes_accessed),
    )(*in_arrays)


def init_conv_block_params(key, n_stages, n_filters_in, n_filters_out):
    """Deterministic init mimicking nn.Conv3d default (uniform +-1/sqrt(fan_in)), DHWIO."""
    params = []
    cin = n_filters_in
    for _ in range(n_stages):
        key, kw_, kb_ = jax.random.split(key, 3)
        fan_in = cin * 27
        bound = 1.0 / (fan_in ** 0.5)
        w = jax.random.uniform(kw_, (3, 3, 3, cin, n_filters_out), jnp.float32, -bound, bound)
        b = jax.random.uniform(kb_, (n_filters_out,), jnp.float32, -bound, bound)
        params.append((w, b))
        cin = n_filters_out
    return params


def conv_block_forward(x_ncdhw, params):
    """ConvBlock.forward with normalization='none' (the module default)."""
    # TODO(synk): batchnorm/groupnorm/instancenorm branches of ConvBlock are not
    # implemented; only the default normalization='none' path is reproduced.
    N, C, D, H, W = x_ncdhw.shape
    # NCDHW -> NDHWC -> W-folded (N, D, H, W*C); bf16 HBM activations (MXU operands are
    # bf16 anyway, and this halves the input HBM read).
    x = jnp.transpose(x_ncdhw, (0, 2, 3, 4, 1)).reshape(N, D, H, W * C)
    x = x.astype(jnp.bfloat16)
    out = fused_conv_block(x, params, H=H, W=W)          # (N, D, H, W*Cout) f32
    cout = params[-1][0].shape[-1]
    return jnp.transpose(out.reshape(N, D, H, W, cout), (0, 4, 1, 2, 3))


def _reference_forward(x_ncdhw, params):
    x = jnp.transpose(x_ncdhw, (0, 2, 3, 4, 1))
    for (w, b) in params:
        x = lax.conv_general_dilated(
            x, w, window_strides=(1, 1, 1), padding="SAME",
            dimension_numbers=("NDHWC", "DHWIO", "NDHWC"))
        x = jnp.maximum(x + b, 0.0)
    return jnp.transpose(x, (0, 4, 1, 2, 3))


if __name__ == "__main__":
    key = jax.random.PRNGKey(0)
    k_x, k_p = jax.random.split(key)

    n_stages, n_filters_in, n_filters_out = 2, 4, 8
    N, D, H, W = 2, 16, 16, 16

    # PyTorch-style NCDHW input
    x = jax.random.normal(k_x, (N, n_filters_in, D, H, W), jnp.float32)
    params = init_conv_block_params(k_p, n_stages, n_filters_in, n_filters_out)

    out = jax.block_until_ready(jax.jit(conv_block_forward)(x, params))
    ref = jax.block_until_ready(_reference_forward(x, params))

    assert out.shape == (N, n_filters_out, D, H, W)
    max_err = float(jnp.max(jnp.abs(out - ref)))
    # bf16 activations/MXU operands with f32 accumulation -> conv-appropriate tolerance
    assert jnp.allclose(out, ref, rtol=2e-2, atol=2e-2), f"max abs err {max_err}"
    print("KERNEL_OK")
</pallas_src>

<mosaic_0001>
module attributes {stable_mosaic.version = 11 : i64} {
  func.func @kernel(%arg0: i32, %arg1: memref<1x16x16x64xbf16, #tpu.memory_space<vmem>>, %arg2: memref<3x3x64x128xbf16, #tpu.memory_space<vmem>>, %arg3: memref<1x128xf32, #tpu.memory_space<vmem>>, %arg4: memref<3x3x128x128xbf16, #tpu.memory_space<vmem>>, %arg5: memref<1x128xf32, #tpu.memory_space<vmem>>, %arg6: memref<1x16x16x128xf32, #tpu.memory_space<vmem>>, %arg7: memref<18x18x64xbf16, #tpu.memory_space<vmem>>, %arg8: memref<18x18x128xbf16, #tpu.memory_space<vmem>>) attributes {dimension_semantics = [#tpu.dimension_semantics<parallel>], iteration_bounds = array<i64: 2>, scalar_prefetch = 0 : i64, scratch_operands = 2 : i64, tpu.core_type = #tpu.core_type<tc>, window_params = [{transform_indices = @transform_0, window_bounds = array<i64: 1, 16, 16, 64>}, {pipeline_mode = #tpu.pipeline_mode<synchronous>, transform_indices = @transform_1, window_bounds = array<i64: 3, 3, 64, 128>}, {pipeline_mode = #tpu.pipeline_mode<synchronous>, transform_indices = @transform_2, window_bounds = array<i64: 1, 128>}, {pipeline_mode = #tpu.pipeline_mode<synchronous>, transform_indices = @transform_3, window_bounds = array<i64: 3, 3, 128, 128>}, {pipeline_mode = #tpu.pipeline_mode<synchronous>, transform_indices = @transform_4, window_bounds = array<i64: 1, 128>}, {transform_indices = @transform_5, window_bounds = array<i64: 1, 16, 16, 128>}]} {
    %c0 = arith.constant 0 : index
    %c0_0 = arith.constant 0 : index
    %c0_1 = arith.constant 0 : index
    %c0_2 = arith.constant 0 : index
    %0 = vector.load %arg1[%c0, %c0_0, %c0_1, %c0_2] : memref<1x16x16x64xbf16, #tpu.memory_space<vmem>>, vector<1x16x16x64xbf16>
    %1 = vector.shape_cast %0 : vector<1x16x16x64xbf16> to vector<16x16x64xbf16>
    %cst = arith.constant 0.000000e+00 : bf16
    %2 = vector.broadcast %cst : bf16 to vector<1x18x64xbf16>
    %c0_3 = arith.constant 0 : index
    %c0_4 = arith.constant 0 : index
    %c0_5 = arith.constant 0 : index
    %3 = vector.load %arg7[%c0_3, %c0_4, %c0_5] : memref<18x18x64xbf16, #tpu.memory_space<vmem>>, vector<1x18x64xbf16>
    tpu.vector_store %arg7[%c0_3, %c0_4, %c0_5], %2 {strides = array<i32>} : memref<18x18x64xbf16, #tpu.memory_space<vmem>>, vector<1x18x64xbf16>,
    %cst_6 = arith.constant 0.000000e+00 : bf16
    %4 = vector.broadcast %cst_6 : bf16 to vector<1x18x64xbf16>
    %c17 = arith.constant 17 : index
    %c0_7 = arith.constant 0 : index
    %c0_8 = arith.constant 0 : index
    %5 = vector.load %arg7[%c17, %c0_7, %c0_8] : memref<18x18x64xbf16, #tpu.memory_space<vmem>>, vector<1x18x64xbf16>
    tpu.vector_store %arg7[%c17, %c0_7, %c0_8], %4 {strides = array<i32>} : memref<18x18x64xbf16, #tpu.memory_space<vmem>>, vector<1x18x64xbf16>,
    %cst_9 = arith.constant 0.000000e+00 : bf16
    %6 = vector.broadcast %cst_9 : bf16 to vector<16x1x64xbf16>
    %c1 = arith.constant 1 : index
    %c0_10 = arith.constant 0 : index
    %c0_11 = arith.constant 0 : index
    %7 = vector.load %arg7[%c1, %c0_10, %c0_11] : memref<18x18x64xbf16, #tpu.memory_space<vmem>>, vector<16x1x64xbf16>
    tpu.vector_store %arg7[%c1, %c0_10, %c0_11], %6 {strides = array<i32>} : memref<18x18x64xbf16, #tpu.memory_space<vmem>>, vector<16x1x64xbf16>,
    %cst_12 = arith.constant 0.000000e+00 : bf16
    %8 = vector.broadcast %cst_12 : bf16 to vector<16x1x64xbf16>
    %c1_13 = arith.constant 1 : index
    %c17_14 = arith.constant 17 : index
    %c0_15 = arith.constant 0 : index
    %9 = vector.load %arg7[%c1_13, %c17_14, %c0_15] : memref<18x18x64xbf16, #tpu.memory_space<vmem>>, vector<16x1x64xbf16>
    tpu.vector_store %arg7[%c1_13, %c17_14, %c0_15], %8 {strides = array<i32>} : memref<18x18x64xbf16, #tpu.memory_space<vmem>>, vector<16x1x64xbf16>,
    %c1_16 = arith.constant 1 : index
    %c1_17 = arith.constant 1 : index
    %c0_18 = arith.constant 0 : index
    %10 = vector.load %arg7[%c1_16, %c1_17, %c0_18] : memref<18x18x64xbf16, #tpu.memory_space<vmem>>, vector<16x16x64xbf16>
    tpu.vector_store %arg7[%c1_16, %c1_17, %c0_18], %1 {strides = array<i32>} : memref<18x18x64xbf16, #tpu.memory_space<vmem>>, vector<16x16x64xbf16>,
    %c0_19 = arith.constant 0 : index
    %c0_20 = arith.constant 0 : index
    %11 = vector.load %arg3[%c0_19, %c0_20] : memref<1x128xf32, #tpu.memory_space<vmem>>, vector<1x128xf32>
    %cst_21 = arith.constant 0.000000e+00 : f32
    %12 = vector.broadcast %cst_21 : f32 to vector<256x128xf32>
    %c0_22 = arith.constant 0 : index
    %c0_23 = arith.constant 0 : index
    %c0_24 = arith.constant 0 : index
    %13 = vector.load %arg7[%c0_22, %c0_23, %c0_24] : memref<18x18x64xbf16, #tpu.memory_space<vmem>>, vector<16x16x64xbf16>
    %14 = vector.shape_cast %13 : vector<16x16x64xbf16> to vector<256x64xbf16>
    %c0_25 = arith.constant 0 : index
    %c0_26 = arith.constant 0 : index
    %c0_27 = arith.constant 0 : index
    %c0_28 = arith.constant 0 : index
    %15 = vector.load %arg2[%c0_25, %c0_26, %c0_27, %c0_28] : memref<3x3x64x128xbf16, #tpu.memory_space<vmem>>, vector<1x1x64x128xbf16>
    %16 = vector.shape_cast %15 : vector<1x1x64x128xbf16> to vector<64x128xbf16>
    %cst_29 = arith.constant dense<0.000000e+00> : vector<256x128xf32>
    %17 = tpu.matmul %14, %16, %cst_29 {dimension_numbers = #tpu.dot_dimension_numbers<[1], [0], [0], [1], [0, 0, 1, 1], [], []>} : vector<256x64xbf16>, vector<64x128xbf16>, vector<256x128xf32> -> vector<256x128xf32>
    %18 = arith.addf %12, %17 : vector<256x128xf32>
    %c0_30 = arith.constant 0 : index
    %c1_31 = arith.constant 1 : index
    %c0_32 = arith.constant 0 : index
    %19 = vector.load %arg7[%c0_30, %c1_31, %c0_32] : memref<18x18x64xbf16, #tpu.memory_space<vmem>>, vector<16x16x64xbf16>
    %20 = vector.shape_cast %19 : vector<16x16x64xbf16> to vector<256x64xbf16>
    %c0_33 = arith.constant 0 : index
    %c1_34 = arith.constant 1 : index
    %c0_35 = arith.constant 0 : index
    %c0_36 = arith.constant 0 : index
    %21 = vector.load %arg2[%c0_33, %c1_34, %c0_35, %c0_36] : memref<3x3x64x128xbf16, #tpu.memory_space<vmem>>, vector<1x1x64x128xbf16>
    %22 = vector.shape_cast %21 : vector<1x1x64x128xbf16> to vector<64x128xbf16>
    %cst_37 = arith.constant dense<0.000000e+00> : vector<256x128xf32>
    %23 = tpu.matmul %20, %22, %cst_37 {dimension_numbers = #tpu.dot_dimension_numbers<[1], [0], [0], [1], [0, 0, 1, 1], [], []>} : vector<256x64xbf16>, vector<64x128xbf16>, vector<256x128xf32> -> vector<256x128xf32>
    %24 = arith.addf %18, %23 : vector<256x128xf32>
    %c0_38 = arith.constant 0 : index
    %c2 = arith.constant 2 : index
    %c0_39 = arith.constant 0 : index
    %25 = vector.load %arg7[%c0_38, %c2, %c0_39] : memref<18x18x64xbf16, #tpu.memory_space<vmem>>, vector<16x16x64xbf16>
    %26 = vector.shape_cast %25 : vector<16x16x64xbf16> to vector<256x64xbf16>
    %c0_40 = arith.constant 0 : index
    %c2_41 = arith.constant 2 : index
    %c0_42 = arith.constant 0 : index
    %c0_43 = arith.constant 0 : index
    %27 = vector.load %arg2[%c0_40, %c2_41, %c0_42, %c0_43] : memref<3x3x64x128xbf16, #tpu.memory_space<vmem>>, vector<1x1x64x128xbf16>
    %28 = vector.shape_cast %27 : vector<1x1x64x128xbf16> to vector<64x128xbf16>
    %cst_44 = arith.constant dense<0.000000e+00> : vector<256x128xf32>
    %29 = tpu.matmul %26, %28, %cst_44 {dimension_numbers = #tpu.dot_dimension_numbers<[1], [0], [0], [1], [0, 0, 1, 1], [], []>} : vector<256x64xbf16>, vector<64x128xbf16>, vector<256x128xf32> -> vector<256x128xf32>
    %30 = arith.addf %24, %29 : vector<256x128xf32>
    %c1_45 = arith.constant 1 : index
    %c0_46 = arith.constant 0 : index
    %c0_47 = arith.constant 0 : index
    %31 = vector.load %arg7[%c1_45, %c0_46, %c0_47] : memref<18x18x64xbf16, #tpu.memory_space<vmem>>, vector<16x16x64xbf16>
    %32 = vector.shape_cast %31 : vector<16x16x64xbf16> to vector<256x64xbf16>
    %c1_48 = arith.constant 1 : index
    %c0_49 = arith.constant 0 : index
    %c0_50 = arith.constant 0 : index
    %c0_51 = arith.constant 0 : index
    %33 = vector.load %arg2[%c1_48, %c0_49, %c0_50, %c0_51] : memref<3x3x64x128xbf16, #tpu.memory_space<vmem>>, vector<1x1x64x128xbf16>
    %34 = vector.shape_cast %33 : vector<1x1x64x128xbf16> to vector<64x128xbf16>
    %cst_52 = arith.constant dense<0.000000e+00> : vector<256x128xf32>
    %35 = tpu.matmul %32, %34, %cst_52 {dimension_numbers = #tpu.dot_dimension_numbers<[1], [0], [0], [1], [0, 0, 1, 1], [], []>} : vector<256x64xbf16>, vector<64x128xbf16>, vector<256x128xf32> -> vector<256x128xf32>
    %36 = arith.addf %30, %35 : vector<256x128xf32>
    %c1_53 = arith.constant 1 : index
    %c1_54 = arith.constant 1 : index
    %c0_55 = arith.constant 0 : index
    %37 = vector.load %arg7[%c1_53, %c1_54, %c0_55] : memref<18x18x64xbf16, #tpu.memory_space<vmem>>, vector<16x16x64xbf16>
    %38 = vector.shape_cast %37 : vector<16x16x64xbf16> to vector<256x64xbf16>
    %c1_56 = arith.constant 1 : index
    %c1_57 = arith.constant 1 : index
    %c0_58 = arith.constant 0 : index
    %c0_59 = arith.constant 0 : index
    %39 = vector.load %arg2[%c1_56, %c1_57, %c0_58, %c0_59] : memref<3x3x64x128xbf16, #tpu.memory_space<vmem>>, vector<1x1x64x128xbf16>
    %40 = vector.shape_cast %39 : vector<1x1x64x128xbf16> to vector<64x128xbf16>
    %cst_60 = arith.constant dense<0.000000e+00> : vector<256x128xf32>
    %41 = tpu.matmul %38, %40, %cst_60 {dimension_numbers = #tpu.dot_dimension_numbers<[1], [0], [0], [1], [0, 0, 1, 1], [], []>} : vector<256x64xbf16>, vector<64x128xbf16>, vector<256x128xf32> -> vector<256x128xf32>
    %42 = arith.addf %36, %41 : vector<256x128xf32>
    %c1_61 = arith.constant 1 : index
    %c2_62 = arith.constant 2 : index
    %c0_63 = arith.constant 0 : index
    %43 = vector.load %arg7[%c1_61, %c2_62, %c0_63] : memref<18x18x64xbf16, #tpu.memory_space<vmem>>, vector<16x16x64xbf16>
    %44 = vector.shape_cast %43 : vector<16x16x64xbf16> to vector<256x64xbf16>
    %c1_64 = arith.constant 1 : index
    %c2_65 = arith.constant 2 : index
    %c0_66 = arith.constant 0 : index
    %c0_67 = arith.constant 0 : index
    %45 = vector.load %arg2[%c1_64, %c2_65, %c0_66, %c0_67] : memref<3x3x64x128xbf16, #tpu.memory_space<vmem>>, vector<1x1x64x128xbf16>
    %46 = vector.shape_cast %45 : vector<1x1x64x128xbf16> to vector<64x128xbf16>
    %cst_68 = arith.constant dense<0.000000e+00> : vector<256x128xf32>
    %47 = tpu.matmul %44, %46, %cst_68 {dimension_numbers = #tpu.dot_dimension_numbers<[1], [0], [0], [1], [0, 0, 1, 1], [], []>} : vector<256x64xbf16>, vector<64x128xbf16>, vector<256x128xf32> -> vector<256x128xf32>
    %48 = arith.addf %42, %47 : vector<256x128xf32>
    %c2_69 = arith.constant 2 : index
    %c0_70 = arith.constant 0 : index
    %c0_71 = arith.constant 0 : index
    %49 = vector.load %arg7[%c2_69, %c0_70, %c0_71] : memref<18x18x64xbf16, #tpu.memory_space<vmem>>, vector<16x16x64xbf16>
    %50 = vector.shape_cast %49 : vector<16x16x64xbf16> to vector<256x64xbf16>
    %c2_72 = arith.constant 2 : index
    %c0_73 = arith.constant 0 : index
    %c0_74 = arith.constant 0 : index
    %c0_75 = arith.constant 0 : index
    %51 = vector.load %arg2[%c2_72, %c0_73, %c0_74, %c0_75] : memref<3x3x64x128xbf16, #tpu.memory_space<vmem>>, vector<1x1x64x128xbf16>
    %52 = vector.shape_cast %51 : vector<1x1x64x128xbf16> to vector<64x128xbf16>
    %cst_76 = arith.constant dense<0.000000e+00> : vector<256x128xf32>
    %53 = tpu.matmul %50, %52, %cst_76 {dimension_numbers = #tpu.dot_dimension_numbers<[1], [0], [0], [1], [0, 0, 1, 1], [], []>} : vector<256x64xbf16>, vector<64x128xbf16>, vector<256x128xf32> -> vector<256x128xf32>
    %54 = arith.addf %48, %53 : vector<256x128xf32>
    %c2_77 = arith.constant 2 : index
    %c1_78 = arith.constant 1 : index
    %c0_79 = arith.constant 0 : index
    %55 = vector.load %arg7[%c2_77, %c1_78, %c0_79] : memref<18x18x64xbf16, #tpu.memory_space<vmem>>, vector<16x16x64xbf16>
    %56 = vector.shape_cast %55 : vector<16x16x64xbf16> to vector<256x64xbf16>
    %c2_80 = arith.constant 2 : index
    %c1_81 = arith.constant 1 : index
    %c0_82 = arith.constant 0 : index
    %c0_83 = arith.constant 0 : index
    %57 = vector.load %arg2[%c2_80, %c1_81, %c0_82, %c0_83] : memref<3x3x64x128xbf16, #tpu.memory_space<vmem>>, vector<1x1x64x128xbf16>
    %58 = vector.shape_cast %57 : vector<1x1x64x128xbf16> to vector<64x128xbf16>
    %cst_84 = arith.constant dense<0.000000e+00> : vector<256x128xf32>
    %59 = tpu.matmul %56, %58, %cst_84 {dimension_numbers = #tpu.dot_dimension_numbers<[1], [0], [0], [1], [0, 0, 1, 1], [], []>} : vector<256x64xbf16>, vector<64x128xbf16>, vector<256x128xf32> -> vector<256x128xf32>
    %60 = arith.addf %54, %59 : vector<256x128xf32>
    %c2_85 = arith.constant 2 : index
    %c2_86 = arith.constant 2 : index
    %c0_87 = arith.constant 0 : index
    %61 = vector.load %arg7[%c2_85, %c2_86, %c0_87] : memref<18x18x64xbf16, #tpu.memory_space<vmem>>, vector<16x16x64xbf16>
    %62 = vector.shape_cast %61 : vector<16x16x64xbf16> to vector<256x64xbf16>
    %c2_88 = arith.constant 2 : index
    %c2_89 = arith.constant 2 : index
    %c0_90 = arith.constant 0 : index
    %c0_91 = arith.constant 0 : index
    %63 = vector.load %arg2[%c2_88, %c2_89, %c0_90, %c0_91] : memref<3x3x64x128xbf16, #tpu.memory_space<vmem>>, vector<1x1x64x128xbf16>
    %64 = vector.shape_cast %63 : vector<1x1x64x128xbf16> to vector<64x128xbf16>
    %cst_92 = arith.constant dense<0.000000e+00> : vector<256x128xf32>
    %65 = tpu.matmul %62, %64, %cst_92 {dimension_numbers = #tpu.dot_dimension_numbers<[1], [0], [0], [1], [0, 0, 1, 1], [], []>} : vector<256x64xbf16>, vector<64x128xbf16>, vector<256x128xf32> -> vector<256x128xf32>
    %66 = arith.addf %60, %65 : vector<256x128xf32>
    %67 = vector.broadcast %11 : vector<1x128xf32> to vector<256x128xf32>
    %68 = arith.addf %66, %67 : vector<256x128xf32>
    %cst_93 = arith.constant 0.000000e+00 : f32
    %69 = vector.broadcast %cst_93 : f32 to vector<256x128xf32>
    %70 = arith.maximumf %68, %69 : vector<256x128xf32>
    %71 = vector.shape_cast %70 : vector<256x128xf32> to vector<16x16x128xf32>
    %72 = arith.truncf %71 : vector<16x16x128xf32> to vector<16x16x128xbf16>
    %cst_94 = arith.constant 0.000000e+00 : bf16
    %73 = vector.broadcast %cst_94 : bf16 to vector<1x18x128xbf16>
    %c0_95 = arith.constant 0 : index
    %c0_96 = arith.constant 0 : index
    %c0_97 = arith.constant 0 : index
    %74 = vector.load %arg8[%c0_95, %c0_96, %c0_97] : memref<18x18x128xbf16, #tpu.memory_space<vmem>>, vector<1x18x128xbf16>
    tpu.vector_store %arg8[%c0_95, %c0_96, %c0_97], %73 {strides = array<i32>} : memref<18x18x128xbf16, #tpu.memory_space<vmem>>, vector<1x18x128xbf16>,
    %cst_98 = arith.constant 0.000000e+00 : bf16
    %75 = vector.broadcast %cst_98 : bf16 to vector<1x18x128xbf16>
    %c17_99 = arith.constant 17 : index
    %c0_100 = arith.constant 0 : index
    %c0_101 = arith.constant 0 : index
    %76 = vector.load %arg8[%c17_99, %c0_100, %c0_101] : memref<18x18x128xbf16, #tpu.memory_space<vmem>>, vector<1x18x128xbf16>
    tpu.vector_store %arg8[%c17_99, %c0_100, %c0_101], %75 {strides = array<i32>} : memref<18x18x128xbf16, #tpu.memory_space<vmem>>, vector<1x18x128xbf16>,
    %cst_102 = arith.constant 0.000000e+00 : bf16
    %77 = vector.broadcast %cst_102 : bf16 to vector<16x1x128xbf16>
    %c1_103 = arith.constant 1 : index
    %c0_104 = arith.constant 0 : index
    %c0_105 = arith.constant 0 : index
    %78 = vector.load %arg8[%c1_103, %c0_104, %c0_105] : memref<18x18x128xbf16, #tpu.memory_space<vmem>>, vector<16x1x128xbf16>
    tpu.vector_store %arg8[%c1_103, %c0_104, %c0_105], %77 {strides = array<i32>} : memref<18x18x128xbf16, #tpu.memory_space<vmem>>, vector<16x1x128xbf16>,
    %cst_106 = arith.constant 0.000000e+00 : bf16
    %79 = vector.broadcast %cst_106 : bf16 to vector<16x1x128xbf16>
    %c1_107 = arith.constant 1 : index
    %c17_108 = arith.constant 17 : index
    %c0_109 = arith.constant 0 : index
    %80 = vector.load %arg8[%c1_107, %c17_108, %c0_109] : memref<18x18x128xbf16, #tpu.memory_space<vmem>>, vector<16x1x128xbf16>
    tpu.vector_store %arg8[%c1_107, %c17_108, %c0_109], %79 {strides = array<i32>} : memref<18x18x128xbf16, #tpu.memory_space<vmem>>, vector<16x1x128xbf16>,
    %c1_110 = arith.constant 1 : index
    %c1_111 = arith.constant 1 : index
    %c0_112 = arith.constant 0 : index
    %81 = vector.load %arg8[%c1_110, %c1_111, %c0_112] : memref<18x18x128xbf16, #tpu.memory_space<vmem>>, vector<16x16x128xbf16>
    tpu.vector_store %arg8[%c1_110, %c1_111, %c0_112], %72 {strides = array<i32>} : memref<18x18x128xbf16, #tpu.memory_space<vmem>>, vector<16x16x128xbf16>,
    %c0_113 = arith.constant 0 : index
    %c0_114 = arith.constant 0 : index
    %82 = vector.load %arg5[%c0_113, %c0_114] : memref<1x128xf32, #tpu.memory_space<vmem>>, vector<1x128xf32>
    %cst_115 = arith.constant 0.000000e+00 : f32
    %83 = vector.broadcast %cst_115 : f32 to vector<256x128xf32>
    %c0_116 = arith.constant 0 : index
    %c0_117 = arith.constant 0 : index
    %c0_118 = arith.constant 0 : index
    %84 = vector.load %arg8[%c0_116, %c0_117, %c0_118] : memref<18x18x128xbf16, #tpu.memory_space<vmem>>, vector<16x16x128xbf16>
    %85 = vector.shape_cast %84 : vector<16x16x128xbf16> to vector<256x128xbf16>
    %c0_119 = arith.constant 0 : index
    %c0_120 = arith.constant 0 : index
    %c0_121 = arith.constant 0 : index
    %c0_122 = arith.constant 0 : index
    %86 = vector.load %arg4[%c0_119, %c0_120, %c0_121, %c0_122] : memref<3x3x128x128xbf16, #tpu.memory_space<vmem>>, vector<1x1x128x128xbf16>
    %87 = vector.shape_cast %86 : vector<1x1x128x128xbf16> to vector<128x128xbf16>
    %cst_123 = arith.constant dense<0.000000e+00> : vector<256x128xf32>
    %88 = tpu.matmul %85, %87, %cst_123 {dimension_numbers = #tpu.dot_dimension_numbers<[1], [0], [0], [1], [0, 0, 1, 1], [], []>} : vector<256x128xbf16>, vector<128x128xbf16>, vector<256x128xf32> -> vector<256x128xf32>
    %89 = arith.addf %83, %88 : vector<256x128xf32>
    %c0_124 = arith.constant 0 : index
    %c1_125 = arith.constant 1 : index
    %c0_126 = arith.constant 0 : index
    %90 = vector.load %arg8[%c0_124, %c1_125, %c0_126] : memref<18x18x128xbf16, #tpu.memory_space<vmem>>, vector<16x16x128xbf16>
    %91 = vector.shape_cast %90 : vector<16x16x128xbf16> to vector<256x128xbf16>
    %c0_127 = arith.constant 0 : index
    %c1_128 = arith.constant 1 : index
    %c0_129 = arith.constant 0 : index
    %c0_130 = arith.constant 0 : index
    %92 = vector.load %arg4[%c0_127, %c1_128, %c0_129, %c0_130] : memref<3x3x128x128xbf16, #tpu.memory_space<vmem>>, vector<1x1x128x128xbf16>
    %93 = vector.shape_cast %92 : vector<1x1x128x128xbf16> to vector<128x128xbf16>
    %cst_131 = arith.constant dense<0.000000e+00> : vector<256x128xf32>
    %94 = tpu.matmul %91, %93, %cst_131 {dimension_numbers = #tpu.dot_dimension_numbers<[1], [0], [0], [1], [0, 0, 1, 1], [], []>} : vector<256x128xbf16>, vector<128x128xbf16>, vector<256x128xf32> -> vector<256x128xf32>
    %95 = arith.addf %89, %94 : vector<256x128xf32>
    %c0_132 = arith.constant 0 : index
    %c2_133 = arith.constant 2 : index
    %c0_134 = arith.constant 0 : index
    %96 = vector.load %arg8[%c0_132, %c2_133, %c0_134] : memref<18x18x128xbf16, #tpu.memory_space<vmem>>, vector<16x16x128xbf16>
    %97 = vector.shape_cast %96 : vector<16x16x128xbf16> to vector<256x128xbf16>
    %c0_135 = arith.constant 0 : index
    %c2_136 = arith.constant 2 : index
    %c0_137 = arith.constant 0 : index
    %c0_138 = arith.constant 0 : index
    %98 = vector.load %arg4[%c0_135, %c2_136, %c0_137, %c0_138] : memref<3x3x128x128xbf16, #tpu.memory_space<vmem>>, vector<1x1x128x128xbf16>
    %99 = vector.shape_cast %98 : vector<1x1x128x128xbf16> to vector<128x128xbf16>
    %cst_139 = arith.constant dense<0.000000e+00> : vector<256x128xf32>
    %100 = tpu.matmul %97, %99, %cst_139 {dimension_numbers = #tpu.dot_dimension_numbers<[1], [0], [0], [1], [0, 0, 1, 1], [], []>} : vector<256x128xbf16>, vector<128x128xbf16>, vector<256x128xf32> -> vector<256x128xf32>
    %101 = arith.addf %95, %100 : vector<256x128xf32>
    %c1_140 = arith.constant 1 : index
    %c0_141 = arith.constant 0 : index
    %c0_142 = arith.constant 0 : index
    %102 = vector.load %arg8[%c1_140, %c0_141, %c0_142] : memref<18x18x128xbf16, #tpu.memory_space<vmem>>, vector<16x16x128xbf16>
    %103 = vector.shape_cast %102 : vector<16x16x128xbf16> to vector<256x128xbf16>
    %c1_143 = arith.constant 1 : index
    %c0_144 = arith.constant 0 : index
    %c0_145 = arith.constant 0 : index
    %c0_146 = arith.constant 0 : index
    %104 = vector.load %arg4[%c1_143, %c0_144, %c0_145, %c0_146] : memref<3x3x128x128xbf16, #tpu.memory_space<vmem>>, vector<1x1x128x128xbf16>
    %105 = vector.shape_cast %104 : vector<1x1x128x128xbf16> to vector<128x128xbf16>
    %cst_147 = arith.constant dense<0.000000e+00> : vector<256x128xf32>
    %106 = tpu.matmul %103, %105, %cst_147 {dimension_numbers = #tpu.dot_dimension_numbers<[1], [0], [0], [1], [0, 0, 1, 1], [], []>} : vector<256x128xbf16>, vector<128x128xbf16>, vector<256x128xf32> -> vector<256x128xf32>
    %107 = arith.addf %101, %106 : vector<256x128xf32>
    %c1_148 = arith.constant 1 : index
    %c1_149 = arith.constant 1 : index
    %c0_150 = arith.constant 0 : index
    %108 = vector.load %arg8[%c1_148, %c1_149, %c0_150] : memref<18x18x128xbf16, #tpu.memory_space<vmem>>, vector<16x16x128xbf16>
    %109 = vector.shape_cast %108 : vector<16x16x128xbf16> to vector<256x128xbf16>
    %c1_151 = arith.constant 1 : index
    %c1_152 = arith.constant 1 : index
    %c0_153 = arith.constant 0 : index
    %c0_154 = arith.constant 0 : index
    %110 = vector.load %arg4[%c1_151, %c1_152, %c0_153, %c0_154] : memref<3x3x128x128xbf16, #tpu.memory_space<vmem>>, vector<1x1x128x128xbf16>
    %111 = vector.shape_cast %110 : vector<1x1x128x128xbf16> to vector<128x128xbf16>
    %cst_155 = arith.constant dense<0.000000e+00> : vector<256x128xf32>
    %112 = tpu.matmul %109, %111, %cst_155 {dimension_numbers = #tpu.dot_dimension_numbers<[1], [0], [0], [1], [0, 0, 1, 1], [], []>} : vector<256x128xbf16>, vector<128x128xbf16>, vector<256x128xf32> -> vector<256x128xf32>
    %113 = arith.addf %107, %112 : vector<256x128xf32>
    %c1_156 = arith.constant 1 : index
    %c2_157 = arith.constant 2 : index
    %c0_158 = arith.constant 0 : index
    %114 = vector.load %arg8[%c1_156, %c2_157, %c0_158] : memref<18x18x128xbf16, #tpu.memory_space<vmem>>, vector<16x16x128xbf16>
    %115 = vector.shape_cast %114 : vector<16x16x128xbf16> to vector<256x128xbf16>
    %c1_159 = arith.constant 1 : index
    %c2_160 = arith.constant 2 : index
    %c0_161 = arith.constant 0 : index
    %c0_162 = arith.constant 0 : index
    %116 = vector.load %arg4[%c1_159, %c2_160, %c0_161, %c0_162] : memref<3x3x128x128xbf16, #tpu.memory_space<vmem>>, vector<1x1x128x128xbf16>
    %117 = vector.shape_cast %116 : vector<1x1x128x128xbf16> to vector<128x128xbf16>
    %cst_163 = arith.constant dense<0.000000e+00> : vector<256x128xf32>
    %118 = tpu.matmul %115, %117, %cst_163 {dimension_numbers = #tpu.dot_dimension_numbers<[1], [0], [0], [1], [0, 0, 1, 1], [], []>} : vector<256x128xbf16>, vector<128x128xbf16>, vector<256x128xf32> -> vector<256x128xf32>
    %119 = arith.addf %113, %118 : vector<256x128xf32>
    %c2_164 = arith.constant 2 : index
    %c0_165 = arith.constant 0 : index
    %c0_166 = arith.constant 0 : index
    %120 = vector.load %arg8[%c2_164, %c0_165, %c0_166] : memref<18x18x128xbf16, #tpu.memory_space<vmem>>, vector<16x16x128xbf16>
    %121 = vector.shape_cast %120 : vector<16x16x128xbf16> to vector<256x128xbf16>
    %c2_167 = arith.constant 2 : index
    %c0_168 = arith.constant 0 : index
    %c0_169 = arith.constant 0 : index
    %c0_170 = arith.constant 0 : index
    %122 = vector.load %arg4[%c2_167, %c0_168, %c0_169, %c0_170] : memref<3x3x128x128xbf16, #tpu.memory_space<vmem>>, vector<1x1x128x128xbf16>
    %123 = vector.shape_cast %122 : vector<1x1x128x128xbf16> to vector<128x128xbf16>
    %cst_171 = arith.constant dense<0.000000e+00> : vector<256x128xf32>
    %124 = tpu.matmul %121, %123, %cst_171 {dimension_numbers = #tpu.dot_dimension_numbers<[1], [0], [0], [1], [0, 0, 1, 1], [], []>} : vector<256x128xbf16>, vector<128x128xbf16>, vector<256x128xf32> -> vector<256x128xf32>
    %125 = arith.addf %119, %124 : vector<256x128xf32>
    %c2_172 = arith.constant 2 : index
    %c1_173 = arith.constant 1 : index
    %c0_174 = arith.constant 0 : index
    %126 = vector.load %arg8[%c2_172, %c1_173, %c0_174] : memref<18x18x128xbf16, #tpu.memory_space<vmem>>, vector<16x16x128xbf16>
    %127 = vector.shape_cast %126 : vector<16x16x128xbf16> to vector<256x128xbf16>
    %c2_175 = arith.constant 2 : index
    %c1_176 = arith.constant 1 : index
    %c0_177 = arith.constant 0 : index
    %c0_178 = arith.constant 0 : index
    %128 = vector.load %arg4[%c2_175, %c1_176, %c0_177, %c0_178] : memref<3x3x128x128xbf16, #tpu.memory_space<vmem>>, vector<1x1x128x128xbf16>
    %129 = vector.shape_cast %128 : vector<1x1x128x128xbf16> to vector<128x128xbf16>
    %cst_179 = arith.constant dense<0.000000e+00> : vector<256x128xf32>
    %130 = tpu.matmul %127, %129, %cst_179 {dimension_numbers = #tpu.dot_dimension_numbers<[1], [0], [0], [1], [0, 0, 1, 1], [], []>} : vector<256x128xbf16>, vector<128x128xbf16>, vector<256x128xf32> -> vector<256x128xf32>
    %131 = arith.addf %125, %130 : vector<256x128xf32>
    %c2_180 = arith.constant 2 : index
    %c2_181 = arith.constant 2 : index
    %c0_182 = arith.constant 0 : index
    %132 = vector.load %arg8[%c2_180, %c2_181, %c0_182] : memref<18x18x128xbf16, #tpu.memory_space<vmem>>, vector<16x16x128xbf16>
    %133 = vector.shape_cast %132 : vector<16x16x128xbf16> to vector<256x128xbf16>
    %c2_183 = arith.constant 2 : index
    %c2_184 = arith.constant 2 : index
    %c0_185 = arith.constant 0 : index
    %c0_186 = arith.constant 0 : index
    %134 = vector.load %arg4[%c2_183, %c2_184, %c0_185, %c0_186] : memref<3x3x128x128xbf16, #tpu.memory_space<vmem>>, vector<1x1x128x128xbf16>
    %135 = vector.shape_cast %134 : vector<1x1x128x128xbf16> to vector<128x128xbf16>
    %cst_187 = arith.constant dense<0.000000e+00> : vector<256x128xf32>
    %136 = tpu.matmul %133, %135, %cst_187 {dimension_numbers = #tpu.dot_dimension_numbers<[1], [0], [0], [1], [0, 0, 1, 1], [], []>} : vector<256x128xbf16>, vector<128x128xbf16>, vector<256x128xf32> -> vector<256x128xf32>
    %137 = arith.addf %131, %136 : vector<256x128xf32>
    %138 = vector.broadcast %82 : vector<1x128xf32> to vector<256x128xf32>
    %139 = arith.addf %137, %138 : vector<256x128xf32>
    %cst_188 = arith.constant 0.000000e+00 : f32
    %140 = vector.broadcast %cst_188 : f32 to vector<256x128xf32>
    %141 = arith.maximumf %139, %140 : vector<256x128xf32>
    %142 = vector.shape_cast %141 : vector<256x128xf32> to vector<16x16x128xf32>
    %c0_189 = arith.constant 0 : index
    %c0_190 = arith.constant 0 : index
    %c0_191 = arith.constant 0 : index
    %c0_192 = arith.constant 0 : index
    %143 = vector.load %arg6[%c0_189, %c0_190, %c0_191, %c0_192] : memref<1x16x16x128xf32, #tpu.memory_space<vmem>>, vector<1x16x16x128xf32>
    %144 = vector.shape_cast %143 : vector<1x16x16x128xf32> to vector<16x16x128xf32>
    %145 = vector.shape_cast %142 : vector<16x16x128xf32> to vector<1x16x16x128xf32>
    tpu.vector_store %arg6[%c0_189, %c0_190, %c0_191, %c0_192], %145 {strides = array<i32>} : memref<1x16x16x128xf32, #tpu.memory_space<vmem>>, vector<1x16x16x128xf32>,
    return
  }
  func.func @transform_0(%arg0: i32) -> (i32, i32, i32, i32) {
    %c0_i32 = arith.constant 0 : i32
    %c0_i32_0 = arith.constant 0 : i32
    %c0_i32_1 = arith.constant 0 : i32
    %c0_i32_2 = arith.constant 0 : i32
    return %arg0, %c0_i32, %c0_i32_0, %c0_i32_1 : i32, i32, i32, i32
  }
  func.func @transform_1(%arg0: i32) -> (i32, i32, i32, i32) {
    %c0_i32 = arith.constant 0 : i32
    %c0_i32_0 = arith.constant 0 : i32
    %c0_i32_1 = arith.constant 0 : i32
    %c0_i32_2 = arith.constant 0 : i32
    %c0_i32_3 = arith.constant 0 : i32
    return %c0_i32, %c0_i32_0, %c0_i32_1, %c0_i32_2 : i32, i32, i32, i32
  }
  func.func @transform_2(%arg0: i32) -> (i32, i32) {
    %c0_i32 = arith.constant 0 : i32
    %c0_i32_0 = arith.constant 0 : i32
    %c0_i32_1 = arith.constant 0 : i32
    return %c0_i32, %c0_i32_0 : i32, i32
  }
  func.func @transform_3(%arg0: i32) -> (i32, i32, i32, i32) {
    %c0_i32 = arith.constant 0 : i32
    %c0_i32_0 = arith.constant 0 : i32
    %c0_i32_1 = arith.constant 0 : i32
    %c0_i32_2 = arith.constant 0 : i32
    %c0_i32_3 = arith.constant 0 : i32
    return %c0_i32, %c0_i32_0, %c0_i32_1, %c0_i32_2 : i32, i32, i32, i32
  }
  func.func @transform_4(%arg0: i32) -> (i32, i32) {
    %c0_i32 = arith.constant 0 : i32
    %c0_i32_0 = arith.constant 0 : i32
    %c0_i32_1 = arith.constant 0 : i32
    return %c0_i32, %c0_i32_0 : i32, i32
  }
  func.func @transform_5(%arg0: i32) -> (i32, i32, i32, i32) {
    %c0_i32 = arith.constant 0 : i32
    %c0_i32_0 = arith.constant 0 : i32
    %c0_i32_1 = arith.constant 0 : i32
    %c0_i32_2 = arith.constant 0 : i32
    return %arg0, %c0_i32, %c0_i32_0, %c0_i32_1 : i32, i32, i32, i32
  }
}

</mosaic_0001>

<llo_original>
// kernel: tile.13
$region0: #{tile.13}
  #allocation0 [shape = 's32[1]{0}', space=sflag, size = 0x4, scoped, tag = 'scoped memory for tile.13']
  %s0 = inlined_call_operand.vmem [shape: f32[8], index: 0, kind: input, shape index: {}]
  %s1 = inlined_call_operand.vmem [shape: f32[16,8], index: 1, kind: output, shape index: {}]
  // Predicated region
  $region2: #{tile.13} parent=0 // pred_check
    _
  $region3: #{tile.13} parent=0 // pred_check_branch
    %3 = sbr.rel (0) target = $region5
  $region4: #{tile.13} parent=0 // pred_region
    _
  $region5: #{tile.13} parent=0 // pred_fallthru
    _
  %v4 = vld [vmem:[%s0] ss:$0 sm:$0xff]
  %5 = vst [vmem:[%s1] sm:$0xff] %v4
  %s6 = scalar_lea.vmem %s1, 8
  %7 = vst [vmem:[%s6] sm:$0xff] %v4

// kernel: tile.14
$region0: #{tile.14}
  %s0 = inlined_call_operand.vmem [shape: f32[16,8], index: 0, kind: input, shape index: {}]
  %s1 = inlined_call_operand.vmem [shape: f32[1,128], index: 1, kind: output, shape index: {}]
  $region1: #{tile.14} parent=0
    #allocation0 [shape = 'u8[4096]{0}', space=vmem, size = 0x1000, scoped, tag = 'scoped mem for output reshape']
    %v2 = vld [vmem:[%s0] sm:$0x1]
    %vm3 = vcmask 64512
    %4 = vst.msk [vmem:[#allocation0] sm:$0x1] %vm3, %v2
    %s5 = scalar_lea.vmem %s0, 15
    %v6 = vld [vmem:[%s5] sm:$0x1]
    %7 = vrot.lane.b32.xlu0 %v6, 120
    %v8 = vpop.permute.xlu0 %7
    %vm9 = vcmask 1048512
    %10 = vst.msk [vmem:[#allocation0] sm:$0x1] %vm9, %v8
    %s11 = scalar_lea.vmem %s0, 14
    %v12 = vld [vmem:[%s11] sm:$0x1]
    %13 = vrot.lane.b32.xlu0 %v12, 112
    %v14 = vpop.permute.xlu0 %13
    %vm15 = vcmask 982912
    %16 = vst.msk [vmem:[#allocation0] sm:$0x1] %vm15, %v14
    %s17 = scalar_lea.vmem %s0, 13
    %v18 = vld [vmem:[%s17] sm:$0x1]
    %19 = vrot.lane.b32.xlu0 %v18, 104
    %v20 = vpop.permute.xlu0 %19
    %vm21 = vcmask 917312
    %22 = vst.msk [vmem:[#allocation0] sm:$0x1] %vm21, %v20
    %s23 = scalar_lea.vmem %s0, 12
    %v24 = vld [vmem:[%s23] sm:$0x1]
    %25 = vrot.lane.b32.xlu0 %v24, 96
    %v26 = vpop.permute.xlu0 %25
    %vm27 = vcmask 851712
    %28 = vst.msk [vmem:[#allocation0] sm:$0x1] %vm27, %v26
    %s29 = scalar_lea.vmem %s0, 11
    %v30 = vld [vmem:[%s29] sm:$0x1]
    %31 = vrot.lane.b32.xlu0 %v30, 88
    %v32 = vpop.permute.xlu0 %31
    %vm33 = vcmask 786112
    %34 = vst.msk [vmem:[#allocation0] sm:$0x1] %vm33, %v32
    %s35 = scalar_lea.vmem %s0, 10
    %v36 = vld [vmem:[%s35] sm:$0x1]
    %37 = vrot.lane.b32.xlu0 %v36, 80
    %v38 = vpop.permute.xlu0 %37
    %vm39 = vcmask 720512
    %40 = vst.msk [vmem:[#allocation0] sm:$0x1] %vm39, %v38
    %s41 = scalar_lea.vmem %s0, 9
    %v42 = vld [vmem:[%s41] sm:$0x1]
    %43 = vrot.lane.b32.xlu0 %v42, 72
    %v44 = vpop.permute.xlu0 %43
    %vm45 = vcmask 654912
    %46 = vst.msk [vmem:[#allocation0] sm:$0x1] %vm45, %v44
    %s47 = scalar_lea.vmem %s0, 8
    %v48 = vld [vmem:[%s47] sm:$0x1]
    %49 = vrot.lane.b32.xlu0 %v48, 64
    %v50 = vpop.permute.xlu0 %49
    %vm51 = vcmask 589312
    %52 = vst.msk [vmem:[#allocation0] sm:$0x1] %vm51, %v50
    %s53 = scalar_lea.vmem %s0, 7
    %v54 = vld [vmem:[%s53] sm:$0x1]
    %55 = vrot.lane.b32.xlu0 %v54, 56
    %v56 = vpop.permute.xlu0 %55
    %vm57 = vcmask 523712
    %58 = vst.msk [vmem:[#allocation0] sm:$0x1] %vm57, %v56
    %s59 = scalar_lea.vmem %s0, 6
    %v60 = vld [vmem:[%s59] sm:$0x1]
    %61 = vrot.lane.b32.xlu0 %v60, 48
    %v62 = vpop.permute.xlu0 %61
    %vm63 = vcmask 458112
    %64 = vst.msk [vmem:[#allocation0] sm:$0x1] %vm63, %v62
    %s65 = scalar_lea.vmem %s0, 5
    %v66 = vld [vmem:[%s65] sm:$0x1]
    %67 = vrot.lane.b32.xlu0 %v66, 40
    %v68 = vpop.permute.xlu0 %67
    %vm69 = vcmask 392512
    %70 = vst.msk [vmem:[#allocation0] sm:$0x1] %vm69, %v68
    %s71 = scalar_lea.vmem %s0, 4
    %v72 = vld [vmem:[%s71] sm:$0x1]
    %73 = vrot.lane.b32.xlu0 %v72, 32
    %v74 = vpop.permute.xlu0 %73
    %vm75 = vcmask 326912
    %76 = vst.msk [vmem:[#allocation0] sm:$0x1] %vm75, %v74
    %s77 = scalar_lea.vmem %s0, 3
    %v78 = vld [vmem:[%s77] sm:$0x1]
    %79 = vrot.lane.b32.xlu0 %v78, 24
    %v80 = vpop.permute.xlu0 %79
    %vm81 = vcmask 261312
    %82 = vst.msk [vmem:[#allocation0] sm:$0x1] %vm81, %v80
    %s83 = scalar_lea.vmem %s0, 2
    %v84 = vld [vmem:[%s83] sm:$0x1]
    %85 = vrot.lane.b32.xlu0 %v84, 16
    %v86 = vpop.permute.xlu0 %85
    %vm87 = vcmask 195712
    %88 = vst.msk [vmem:[#allocation0] sm:$0x1] %vm87, %v86
    %s89 = scalar_lea.vmem %s0, 1
    %v90 = vld [vmem:[%s89] sm:$0x1]
    %91 = vrot.lane.b32.xlu0 %v90, 8
    %v92 = vpop.permute.xlu0 %91
    %vm93 = vcmask 130112
    %94 = vst.msk [vmem:[#allocation0] sm:$0x1] %vm93, %v92
    %s96 = sshllo.u32 0, 1
    %v98 = vld [vmem:[#allocation0] sm:%s96]
    %s99 = sshllo.u32 0, 1
    %100 = vst [vmem:[%s1] sm:%s99] %v98

// kernel: conv_block_forward.1
$region0: #{conv_block_forward.1}
  #allocation0 [shape = 'u32[]', space=smem, size = 0x4, offset = 0x4, fixed_abs, tag = 'smem constant byte address 0x4 - core index']
  #allocation1 [shape = 'u32[144,128]{1,0:T(1,128)}', space=vmem, size = 0x12000, scoped, tag = 'internal scratch']
  #allocation2 [shape = 'bf16[18,18,64]{2,1,0:T(8,128)(2,1)}', space=vmem, size = 0x1b000, scoped, tag = 'scratch operand']
  #allocation3 [shape = 'bf16[18,18,128]{2,1,0:T(8,128)(2,1)}', space=vmem, size = 0x1b000, scoped, tag = 'scratch operand']
  %s0 = inlined_call_operand.vmem [shape: bf16[2,16,16,64], index: 0, kind: input, shape index: {}]
  %s1 = inlined_call_operand.vmem [shape: bf16[3,3,64,128], index: 1, kind: input, shape index: {}]
  %s2 = inlined_call_operand.vmem [shape: f32[1,128], index: 2, kind: input, shape index: {}]
  %s3 = inlined_call_operand.vmem [shape: bf16[3,3,128,128], index: 3, kind: input, shape index: {}]
  %s4 = inlined_call_operand.vmem [shape: f32[1,128], index: 4, kind: input, shape index: {}]
  %s5 = inlined_call_operand.vmem [shape: f32[2,16,16,128], index: 5, kind: output, shape index: {}]
  %s6 = sld [smem:[#allocation0]]
  $region53: #{conv_block_forward.1} parent=0
    _
  %s8 = ssub.s32 1, %s6
  %s9 = scalar_select 0, %s8, %s6
  loop: start=0, step=1, limit=4
  $region2: #{conv_block_forward.1} parent=0 // loop_pre_header
    _
  $region3: #{conv_block_forward.1} parent=0 // loop_header
    %s11 = sphi 0, %s15
    %p12 = scmp.ge.s32.totalorder %s11, 4
    %s21 = sphi 0, %s23
    %s24 = sphi 0, %s21
    %s25 = sphi 0, %s24
    %s41 = sphi 0, %s25
    %s45 = sphi 0, %s45
    %s47 = sphi 0, %s45
    %s48 = sphi 0, %s47
    %s62 = sphi 0, %s48
    %s66 = sphi 0, %s66
    %s68 = sphi 0, %s66
    %s69 = sphi 0, %s68
    %s83 = sphi 0, %s69
    %s87 = sphi 0, %s87
    %s89 = sphi 0, %s87
    %s90 = sphi 0, %s89
    %s104 = sphi 0, %s90
    %s108 = sphi 0, %s108
    %s110 = sphi 0, %s108
    %s111 = sphi 0, %s110
    %s125 = sphi 0, %s111
    %s131 = sphi 0, %s133
    %s134 = sphi 0, %s131
    %s135 = sphi 0, %s134
    %s151 = sphi 0, %s135
  $region4: #{conv_block_forward.1} parent=0 // loop_header_branch
    %14 = sbr.rel (%p12) target = $region8
  $region5: #{conv_block_forward.1} parent=0 // loop_body
    %s16 = ssub.s32 %s11, 1
    %s17 = ssub.s32 %s11, 2
    %s18 = sadd.s32 %s11, 1
    %s19 = ssub.s32 %s11, %s18
    %p20 = scmp.eq.s32.totalorder %s19, 0
    %s22 = sadd.s32 %s21, 1
    %s23 = scalar_select %p20, %s21, %s22
    %p26 = pneg %p20
    %p27 = scmp.eq.s32.totalorder %s11, 1
    %p28 = por %p26, %p27
    %p29 = scmp.ne.s32.totalorder %s21, %s24
    %p30 = scmp.eq.s32.totalorder %s11, 0
    %p31 = por %p29, %p30
    %p32 = scmp.ne.s32.totalorder %s21, %s24
    %p33 = scmp.eq.s32.totalorder %s16, 1
    %p34 = por %p32, %p33
    %p35 = scmp.ne.s32.totalorder %s24, %s25
    %p36 = scmp.eq.s32.totalorder %s16, 0
    %p37 = por %p35, %p36
    %p38 = scmp.ne.s32.totalorder %s24, %s25
    %p39 = scmp.eq.s32.totalorder %s17, 1
    %p40 = por %p38, %p39
    %p42 = scmp.ne.s32.totalorder %s25, %s41
    %p43 = scmp.eq.s32.totalorder %s17, 0
    %p44 = por %p42, %p43
    %s46 = sadd.s32 %s45, 1
    %p49 = scmp.eq.s32.totalorder %s11, 1
    %p50 = scmp.ne.s32.totalorder %s45, %s47
    %p51 = scmp.eq.s32.totalorder %s11, 0
    %p52 = por %p50, %p51
    %p53 = scmp.ne.s32.totalorder %s45, %s47
    %p54 = scmp.eq.s32.totalorder %s16, 1
    %p55 = por %p53, %p54
    %p56 = scmp.ne.s32.totalorder %s47, %s48
    %p57 = scmp.eq.s32.totalorder %s16, 0
    %p58 = por %p56, %p57
    %p59 = scmp.ne.s32.totalorder %s47, %s48
    %p60 = scmp.eq.s32.totalorder %s17, 1
    %p61 = por %p59, %p60
    %p63 = scmp.ne.s32.totalorder %s48, %s62
    %p64 = scmp.eq.s32.totalorder %s17, 0
    %p65 = por %p63, %p64
    %s67 = sadd.s32 %s66, 1
    %p70 = scmp.eq.s32.totalorder %s11, 1
    %p71 = scmp.ne.s32.totalorder %s66, %s68
    %p72 = scmp.eq.s32.totalorder %s11, 0
    %p73 = por %p71, %p72
    %p74 = scmp.ne.s32.totalorder %s66, %s68
    %p75 = scmp.eq.s32.totalorder %s16, 1
    %p76 = por %p74, %p75
    %p77 = scmp.ne.s32.totalorder %s68, %s69
    %p78 = scmp.eq.s32.totalorder %s16, 0
    %p79 = por %p77, %p78
    %p80 = scmp.ne.s32.totalorder %s68, %s69
    %p81 = scmp.eq.s32.totalorder %s17, 1
    %p82 = por %p80, %p81
    %p84 = scmp.ne.s32.totalorder %s69, %s83
    %p85 = scmp.eq.s32.totalorder %s17, 0
    %p86 = por %p84, %p85
    %s88 = sadd.s32 %s87, 1
    %p91 = scmp.eq.s32.totalorder %s11, 1
    %p92 = scmp.ne.s32.totalorder %s87, %s89
    %p93 = scmp.eq.s32.totalorder %s11, 0
    %p94 = por %p92, %p93
    %p95 = scmp.ne.s32.totalorder %s87, %s89
    %p96 = scmp.eq.s32.totalorder %s16, 1
    %p97 = por %p95, %p96
    %p98 = scmp.ne.s32.totalorder %s89, %s90
    %p99 = scmp.eq.s32.totalorder %s16, 0
    %p100 = por %p98, %p99
    %p101 = scmp.ne.s32.totalorder %s89, %s90
    %p102 = scmp.eq.s32.totalorder %s17, 1
    %p103 = por %p101, %p102
    %p105 = scmp.ne.s32.totalorder %s90, %s104
    %p106 = scmp.eq.s32.totalorder %s17, 0
    %p107 = por %p105, %p106
    %s109 = sadd.s32 %s108, 1
    %p112 = scmp.eq.s32.totalorder %s11, 1
    %p113 = scmp.ne.s32.totalorder %s108, %s110
    %p114 = scmp.eq.s32.totalorder %s11, 0
    %p115 = por %p113, %p114
    %p116 = scmp.ne.s32.totalorder %s108, %s110
    %p117 = scmp.eq.s32.totalorder %s16, 1
    %p118 = por %p116, %p117
    %p119 = scmp.ne.s32.totalorder %s110, %s111
    %p120 = scmp.eq.s32.totalorder %s16, 0
    %p121 = por %p119, %p120
    %p122 = scmp.ne.s32.totalorder %s110, %s111
    %p123 = scmp.eq.s32.totalorder %s17, 1
    %p124 = por %p122, %p123
    %p126 = scmp.ne.s32.totalorder %s111, %s125
    %p127 = scmp.eq.s32.totalorder %s17, 0
    %p128 = por %p126, %p127
    %s129 = ssub.s32 %s11, %s18
    %p130 = scmp.eq.s32.totalorder %s129, 0
    %s132 = sadd.s32 %s131, 1
    %s133 = scalar_select %p130, %s131, %s132
    %p136 = pneg %p130
    %p137 = scmp.eq.s32.totalorder %s11, 1
    %p138 = por %p136, %p137
    %p139 = scmp.ne.s32.totalorder %s131, %s134
    %p140 = scmp.eq.s32.totalorder %s11, 0
    %p141 = por %p139, %p140
    %p142 = scmp.ne.s32.totalorder %s131, %s134
    %p143 = scmp.eq.s32.totalorder %s16, 1
    %p144 = por %p142, %p143
    %p145 = scmp.ne.s32.totalorder %s134, %s135
    %p146 = scmp.eq.s32.totalorder %s16, 0
    %p147 = por %p145, %p146
    %p148 = scmp.ne.s32.totalorder %s134, %s135
    %p149 = scmp.eq.s32.totalorder %s17, 1
    %p150 = por %p148, %p149
    %p152 = scmp.ne.s32.totalorder %s135, %s151
    %p153 = scmp.eq.s32.totalorder %s17, 0
    %p154 = por %p152, %p153
    %p155 = scmp.le.s32.totalorder 1, %s11
    %p156 = scmp.lt.s32.totalorder %s11, 3
    %p157 = pnand %p155, %p156
    %p158 = pneg %p157
    // Predicated region
    $region9: #{conv_block_forward.1} parent=5 // pred_check
      _
    $region10: #{conv_block_forward.1} parent=5 // pred_check_branch
      %160 = sbr.rel (%p157) target = $region12
    $region11: #{conv_block_forward.1} parent=5 // pred_region
      %s161 = ssub.s32 %s11, 1
      // Predicated region
      $region13: #{conv_block_forward.1} parent=11 // pred_check
        %p162 = pneg %p58
      $region14: #{conv_block_forward.1} parent=11 // pred_check_branch
        %164 = sbr.rel (%p162) target = $region16
      $region15: #{conv_block_forward.1} parent=11 // pred_region
        _
      $region16: #{conv_block_forward.1} parent=11 // pred_fallthru
        _
      // Predicated region
      $region17: #{conv_block_forward.1} parent=11 // pred_check
        %p165 = pneg %p79
      $region18: #{conv_block_forward.1} parent=11 // pred_check_branch
        %167 = sbr.rel (%p165) target = $region20
      $region19: #{conv_block_forward.1} parent=11 // pred_region
        _
      $region20: #{conv_block_forward.1} parent=11 // pred_fallthru
        _
      // Predicated region
      $region21: #{conv_block_forward.1} parent=11 // pred_check
        %p168 = pneg %p100
      $region22: #{conv_block_forward.1} parent=11 // pred_check_branch
        %170 = sbr.rel (%p168) target = $region24
      $region23: #{conv_block_forward.1} parent=11 // pred_region
        _
      $region24: #{conv_block_forward.1} parent=11 // pred_fallthru
        _
      // Predicated region
      $region25: #{conv_block_forward.1} parent=11 // pred_check
        %p171 = pneg %p121
      $region26: #{conv_block_forward.1} parent=11 // pred_check_branch
        %173 = sbr.rel (%p171) target = $region28
      $region27: #{conv_block_forward.1} parent=11 // pred_region
        _
      $region28: #{conv_block_forward.1} parent=11 // pred_fallthru
        _
    $region12: #{conv_block_forward.1} parent=5 // pred_fallthru
      _
    %p174 = scmp.lt.s32.totalorder %s11, 2
    // Predicated region
    $region29: #{conv_block_forward.1} parent=5 // pred_check
      %p175 = pneg %p174
    $region30: #{conv_block_forward.1} parent=5 // pred_check_branch
      %177 = sbr.rel (%p175) target = $region32
    $region31: #{conv_block_forward.1} parent=5 // pred_region
      // Predicated region
      $region33: #{conv_block_forward.1} parent=31 // pred_check
        %p178 = pneg %p31
      $region34: #{conv_block_forward.1} parent=31 // pred_check_branch
        %180 = sbr.rel (%p178) target = $region36
      $region35: #{conv_block_forward.1} parent=31 // pred_region
        %p181 = scmp.lt.s32.totalorder %s11, 1
        %s182 = scalar_select %p181, %s11, 1
        %s183 = smul.addr %s182, 32
        %s184 = smul.addr %s183, 4
        %s185 = scalar_lea.vmem %s0, %s184
      $region36: #{conv_block_forward.1} parent=31 // pred_fallthru
        _
    $region32: #{conv_block_forward.1} parent=5 // pred_fallthru
      _
    %p186 = scmp.le.s32.totalorder 1, %s11
    %p187 = scmp.lt.s32.totalorder %s11, 3
    %p188 = pnand %p186, %p187
    %p189 = pneg %p188
    // Predicated region
    $region37: #{conv_block_forward.1} parent=5 // pred_check
      _
    $region38: #{conv_block_forward.1} parent=5 // pred_check_branch
      %191 = sbr.rel (%p188) target = $region40
    $region39: #{conv_block_forward.1} parent=5 // pred_region
      %s192 = ssub.s32 %s11, 1
      %p193 = scmp.lt.s32.totalorder %s16, 1
      %s194 = scalar_select %p193, %s16, 1
      %s195 = smul.addr %s194, 32
      %s196 = smul.addr %s195, 4
      %s197 = scalar_lea.vmem %s0, %s196
      %p198 = pneg %p37
      %p199 = pneg %p34
      %p200 = pneg %p58
      %p201 = pneg %p55
      %p202 = pneg %p79
      %p203 = pneg %p76
      %p204 = pneg %p100
      %p205 = pneg %p97
      %p206 = pneg %p121
      %p207 = pneg %p118
      %p208 = pneg %p147
      %p209 = pneg %p144
      %p210 = scmp.lt.s32.totalorder %s16, 1
      %s211 = scalar_select %p210, %s16, 1
      %s212 = smul.addr %s211, 32
      %s213 = smul.addr %s212, 8
      %s214 = scalar_lea.vmem %s5, %s213
      %p215 = scmp.lt.s32.totalorder %s16, 1
      %s216 = scalar_select %p215, %s16, 1
      %s217 = smul.addr %s216, 32
      %s218 = smul.addr %s217, 4
      %s219 = scalar_lea.vmem %s0, %s218
      %p220 = scmp.lt.s32.totalorder %s16, 1
      %s221 = scalar_select %p220, %s16, 1
      %s222 = smul.addr %s221, 32
      %s223 = smul.addr %s222, 8
      %s224 = scalar_lea.vmem %s5, %s223
      %v226 = vld [vmem:[%s219] sm:$0xf]
      %v227 = vld [vmem:[%s219 + $0x4] sm:$0xf]
      %v228 = vld [vmem:[%s219 + $0x8] sm:$0xf]
      %v229 = vld [vmem:[%s219 + $0xc] sm:$0xf]
      %v230 = vld [vmem:[%s219 + $0x10] sm:$0xf]
      %v231 = vld [vmem:[%s219 + $0x14] sm:$0xf]
      %v232 = vld [vmem:[%s219 + $0x18] sm:$0xf]
      %v233 = vld [vmem:[%s219 + $0x1c] sm:$0xf]
      %v234 = vld [vmem:[%s219 + $0x20] sm:$0xf]
      %v235 = vld [vmem:[%s219 + $0x24] sm:$0xf]
      %v236 = vld [vmem:[%s219 + $0x28] sm:$0xf]
      %v237 = vld [vmem:[%s219 + $0x2c] sm:$0xf]
      %v238 = vld [vmem:[%s219 + $0x30] sm:$0xf]
      %v239 = vld [vmem:[%s219 + $0x34] sm:$0xf]
      %v240 = vld [vmem:[%s219 + $0x38] sm:$0xf]
      %v241 = vld [vmem:[%s219 + $0x3c] sm:$0xf]
      %v242 = vld [vmem:[%s219 + $0x40] sm:$0xf]
      %v243 = vld [vmem:[%s219 + $0x44] sm:$0xf]
      %v244 = vld [vmem:[%s219 + $0x48] sm:$0xf]
      %v245 = vld [vmem:[%s219 + $0x4c] sm:$0xf]
      %v246 = vld [vmem:[%s219 + $0x50] sm:$0xf]
      %v247 = vld [vmem:[%s219 + $0x54] sm:$0xf]
      %v248 = vld [vmem:[%s219 + $0x58] sm:$0xf]
      %v249 = vld [vmem:[%s219 + $0x5c] sm:$0xf]
      %v250 = vld [vmem:[%s219 + $0x60] sm:$0xf]
      %v251 = vld [vmem:[%s219 + $0x64] sm:$0xf]
      %v252 = vld [vmem:[%s219 + $0x68] sm:$0xf]
      %v253 = vld [vmem:[%s219 + $0x6c] sm:$0xf]
      %v254 = vld [vmem:[%s219 + $0x70] sm:$0xf]
      %v255 = vld [vmem:[%s219 + $0x74] sm:$0xf]
      %v256 = vld [vmem:[%s219 + $0x78] sm:$0xf]
      %v257 = vld [vmem:[%s219 + $0x7c] sm:$0xf]
      %vm258 = vcmask 519168
      %259 = vst.msk [vmem:[#allocation2] sm:$0xf] %vm258, 0
      %260 = vst.msk [vmem:[#allocation2 + $0x4] sm:$0xf] %vm258, 0
      %vm261 = vcmask 516096
      %262 = vst.msk [vmem:[#allocation2 + $0x8] sm:$0x1] %vm261, 0
      %s263 = scalar_lea.vmem [#allocation2], 204
      %264 = vst.msk [vmem:[%s263] sm:$0xf] %vm258, 0
      %265 = vst.msk [vmem:[%s263 + $0x4] sm:$0xf] %vm258, 0
      %266 = vst.msk [vmem:[%s263 + $0x8] sm:$0x1] %vm261, 0
      %s267 = scalar_lea.vmem [#allocation2], 12
      %vm268 = vcmask 516096
      %vm269 = vsmask.f32 256
      %vm270 = vmand %vm268, %vm269
      %v271 = vld [vmem:[%s267] sm:$0x1]
      %v272 = vsel %vm270, 0, %v271
      %273 = vst [vmem:[%s267] sm:$0x1] %v272
      %v274 = vld [vmem:[%s267 + $0xc] sm:$0x1]
      %v275 = vsel %vm270, 0, %v274
      %276 = vst [vmem:[%s267 + $0xc] sm:$0x1] %v275
      %v277 = vld [vmem:[%s267 + $0x18] sm:$0x1]
      %v278 = vsel %vm270, 0, %v277
      %279 = vst [vmem:[%s267 + $0x18] sm:$0x1] %v278
      %v280 = vld [vmem:[%s267 + $0x24] sm:$0x1]
      %v281 = vsel %vm270, 0, %v280
      %282 = vst [vmem:[%s267 + $0x24] sm:$0x1] %v281
      %v283 = vld [vmem:[%s267 + $0x30] sm:$0x1]
      %v284 = vsel %vm270, 0, %v283
      %285 = vst [vmem:[%s267 + $0x30] sm:$0x1] %v284
      %v286 = vld [vmem:[%s267 + $0x3c] sm:$0x1]
      %v287 = vsel %vm270, 0, %v286
      %288 = vst [vmem:[%s267 + $0x3c] sm:$0x1] %v287
      %v289 = vld [vmem:[%s267 + $0x48] sm:$0x1]
      %v290 = vsel %vm270, 0, %v289
      %291 = vst [vmem:[%s267 + $0x48] sm:$0x1] %v290
      %v292 = vld [vmem:[%s267 + $0x54] sm:$0x1]
      %v293 = vsel %vm270, 0, %v292
      %294 = vst [vmem:[%s267 + $0x54] sm:$0x1] %v293
      %v295 = vld [vmem:[%s267 + $0x60] sm:$0x1]
      %v296 = vsel %vm270, 0, %v295
      %297 = vst [vmem:[%s267 + $0x60] sm:$0x1] %v296
      %v298 = vld [vmem:[%s267 + $0x6c] sm:$0x1]
      %v299 = vsel %vm270, 0, %v298
      %300 = vst [vmem:[%s267 + $0x6c] sm:$0x1] %v299
      %v301 = vld [vmem:[%s267 + $0x78] sm:$0x1]
      %v302 = vsel %vm270, 0, %v301
      %303 = vst [vmem:[%s267 + $0x78] sm:$0x1] %v302
      %v304 = vld [vmem:[%s267 + $0x84] sm:$0x1]
      %v305 = vsel %vm270, 0, %v304
      %306 = vst [vmem:[%s267 + $0x84] sm:$0x1] %v305
      %v307 = vld [vmem:[%s267 + $0x90] sm:$0x1]
      %v308 = vsel %vm270, 0, %v307
      %309 = vst [vmem:[%s267 + $0x90] sm:$0x1] %v308
      %v310 = vld [vmem:[%s267 + $0x9c] sm:$0x1]
      %v311 = vsel %vm270, 0, %v310
      %312 = vst [vmem:[%s267 + $0x9c] sm:$0x1] %v311
      %v313 = vld [vmem:[%s267 + $0xa8] sm:$0x1]
      %v314 = vsel %vm270, 0, %v313
      %315 = vst [vmem:[%s267 + $0xa8] sm:$0x1] %v314
      %v316 = vld [vmem:[%s267 + $0xb4] sm:$0x1]
      %v317 = vsel %vm270, 0, %v316
      %318 = vst [vmem:[%s267 + $0xb4] sm:$0x1] %v317
      %vm319 = vsmask.f32 7938
      %vm320 = vmand %vm268, %vm319
      %v321 = vld [vmem:[%s267 + $0x8] sm:$0x1]
      %v322 = vsel %vm320, 0, %v321
      %323 = vst [vmem:[%s267 + $0x8] sm:$0x1] %v322
      %v324 = vld [vmem:[%s267 + $0x14] sm:$0x1]
      %v325 = vsel %vm320, 0, %v324
      %326 = vst [vmem:[%s267 + $0x14] sm:$0x1] %v325
      %v327 = vld [vmem:[%s267 + $0x20] sm:$0x1]
      %v328 = vsel %vm320, 0, %v327
      %329 = vst [vmem:[%s267 + $0x20] sm:$0x1] %v328
      %v330 = vld [vmem:[%s267 + $0x2c] sm:$0x1]
      %v331 = vsel %vm320, 0, %v330
      %332 = vst [vmem:[%s267 + $0x2c] sm:$0x1] %v331
      %v333 = vld [vmem:[%s267 + $0x38] sm:$0x1]
      %v334 = vsel %vm320, 0, %v333
      %335 = vst [vmem:[%s267 + $0x38] sm:$0x1] %v334
      %v336 = vld [vmem:[%s267 + $0x44] sm:$0x1]
      %v337 = vsel %vm320, 0, %v336
      %338 = vst [vmem:[%s267 + $0x44] sm:$0x1] %v337
      %v339 = vld [vmem:[%s267 + $0x50] sm:$0x1]
      %v340 = vsel %vm320, 0, %v339
      %341 = vst [vmem:[%s267 + $0x50] sm:$0x1] %v340
      %v342 = vld [vmem:[%s267 + $0x5c] sm:$0x1]
      %v343 = vsel %vm320, 0, %v342
      %344 = vst [vmem:[%s267 + $0x5c] sm:$0x1] %v343
      %v345 = vld [vmem:[%s267 + $0x68] sm:$0x1]
      %v346 = vsel %vm320, 0, %v345
      %347 = vst [vmem:[%s267 + $0x68] sm:$0x1] %v346
      %v348 = vld [vmem:[%s267 + $0x74] sm:$0x1]
      %v349 = vsel %vm320, 0, %v348
      %350 = vst [vmem:[%s267 + $0x74] sm:$0x1] %v349
      %v351 = vld [vmem:[%s267 + $0x80] sm:$0x1]
      %v352 = vsel %vm320, 0, %v351
      %353 = vst [vmem:[%s267 + $0x80] sm:$0x1] %v352
      %v354 = vld [vmem:[%s267 + $0x8c] sm:$0x1]
      %v355 = vsel %vm320, 0, %v354
      %356 = vst [vmem:[%s267 + $0x8c] sm:$0x1] %v355
      %v357 = vld [vmem:[%s267 + $0x98] sm:$0x1]
      %v358 = vsel %vm320, 0, %v357
      %359 = vst [vmem:[%s267 + $0x98] sm:$0x1] %v358
      %v360 = vld [vmem:[%s267 + $0xa4] sm:$0x1]
      %v361 = vsel %vm320, 0, %v360
      %362 = vst [vmem:[%s267 + $0xa4] sm:$0x1] %v361
      %v363 = vld [vmem:[%s267 + $0xb0] sm:$0x1]
      %v364 = vsel %vm320, 0, %v363
      %365 = vst [vmem:[%s267 + $0xb0] sm:$0x1] %v364
      %v366 = vld [vmem:[%s267 + $0xbc] sm:$0x1]
      %v367 = vsel %vm320, 0, %v366
      %368 = vst [vmem:[%s267 + $0xbc] sm:$0x1] %v367
      %vm369 = vsmask.f32 4368
      %vm370 = vmor %vm269, %vm369
      %v372 = vshrl.u32 %v226, 16
      %v374 = vrot.slane %v372, 7
      %v375 = vshll.u32 %v226, 16
      %v377 = vor.u32 %v374, %v375
      %v378 = vrot.slane %v374, 4
      %v380 = vshrl.u32 %v227, 16
      %v382 = vrot.slane %v380, 7
      %v383 = vshll.u32 %v227, 16
      %v385 = vor.u32 %v382, %v383
      %v386 = vsel %vm370, %v378, %v385
      %v387 = vrot.slane %v382, 4
      %v389 = vshrl.u32 %v228, 16
      %v391 = vrot.slane %v389, 7
      %v392 = vshll.u32 %v228, 16
      %v394 = vor.u32 %v391, %v392
      %v395 = vrot.slane %v391, 4
      %v397 = vshrl.u32 %v229, 16
      %v399 = vrot.slane %v397, 7
      %v400 = vshll.u32 %v229, 16
      %v402 = vor.u32 %v399, %v400
      %v403 = vsel %vm370, %v395, %v402
      %v404 = vrot.slane %v399, 4
      %v406 = vshrl.u32 %v230, 16
      %v408 = vrot.slane %v406, 7
      %v409 = vshll.u32 %v230, 16
      %v411 = vor.u32 %v408, %v409
      %v412 = vrot.slane %v408, 4
      %v414 = vshrl.u32 %v231, 16
      %v416 = vrot.slane %v414, 7
      %v417 = vshll.u32 %v231, 16
      %v419 = vor.u32 %v416, %v417
      %v420 = vsel %vm370, %v412, %v419
      %v421 = vrot.slane %v416, 4
      %v423 = vshrl.u32 %v232, 16
      %v425 = vrot.slane %v423, 7
      %v426 = vshll.u32 %v232, 16
      %v428 = vor.u32 %v425, %v426
      %v429 = vrot.slane %v425, 4
      %v431 = vshrl.u32 %v233, 16
      %v433 = vrot.slane %v431, 7
      %v434 = vshll.u32 %v233, 16
      %v436 = vor.u32 %v433, %v434
      %v437 = vsel %vm370, %v429, %v436
      %v438 = vrot.slane %v433, 4
      %v440 = vshrl.u32 %v234, 16
      %v442 = vrot.slane %v440, 7
      %v443 = vshll.u32 %v234, 16
      %v445 = vor.u32 %v442, %v443
      %v446 = vrot.slane %v442, 4
      %v448 = vshrl.u32 %v235, 16
      %v450 = vrot.slane %v448, 7
      %v451 = vshll.u32 %v235, 16
      %v453 = vor.u32 %v450, %v451
      %v454 = vsel %vm370, %v446, %v453
      %v455 = vrot.slane %v450, 4
      %v457 = vshrl.u32 %v236, 16
      %v459 = vrot.slane %v457, 7
      %v460 = vshll.u32 %v236, 16
      %v462 = vor.u32 %v459, %v460
      %v463 = vrot.slane %v459, 4
      %v465 = vshrl.u32 %v237, 16
      %v467 = vrot.slane %v465, 7
      %v468 = vshll.u32 %v237, 16
      %v470 = vor.u32 %v467, %v468
      %v471 = vsel %vm370, %v463, %v470
      %v472 = vrot.slane %v467, 4
      %v474 = vshrl.u32 %v238, 16
      %v476 = vrot.slane %v474, 7
      %v477 = vshll.u32 %v238, 16
      %v479 = vor.u32 %v476, %v477
      %v480 = vrot.slane %v476, 4
      %v482 = vshrl.u32 %v239, 16
      %v484 = vrot.slane %v482, 7
      %v485 = vshll.u32 %v239, 16
      %v487 = vor.u32 %v484, %v485
      %v488 = vsel %vm370, %v480, %v487
      %v489 = vrot.slane %v484, 4
      %v491 = vshrl.u32 %v240, 16
      %v493 = vrot.slane %v491, 7
      %v494 = vshll.u32 %v240, 16
      %v496 = vor.u32 %v493, %v494
      %v497 = vrot.slane %v493, 4
      %v499 = vshrl.u32 %v241, 16
      %v501 = vrot.slane %v499, 7
      %v502 = vshll.u32 %v241, 16
      %v504 = vor.u32 %v501, %v502
      %v505 = vsel %vm370, %v497, %v504
      %v506 = vrot.slane %v501, 4
      %v508 = vshrl.u32 %v242, 16
      %v510 = vrot.slane %v508, 7
      %v511 = vshll.u32 %v242, 16
      %v513 = vor.u32 %v510, %v511
      %v514 = vrot.slane %v510, 4
      %v516 = vshrl.u32 %v243, 16
      %v518 = vrot.slane %v516, 7
      %v519 = vshll.u32 %v243, 16
      %v521 = vor.u32 %v518, %v519
      %v522 = vsel %vm370, %v514, %v521
      %v523 = vrot.slane %v518, 4
      %v525 = vshrl.u32 %v244, 16
      %v527 = vrot.slane %v525, 7
      %v528 = vshll.u32 %v244, 16
      %v530 = vor.u32 %v527, %v528
      %v531 = vrot.slane %v527, 4
      %v533 = vshrl.u32 %v245, 16
      %v535 = vrot.slane %v533, 7
      %v536 = vshll.u32 %v245, 16
      %v538 = vor.u32 %v535, %v536
      %v539 = vsel %vm370, %v531, %v538
      %v540 = vrot.slane %v535, 4
      %v542 = vshrl.u32 %v246, 16
      %v544 = vrot.slane %v542, 7
      %v545 = vshll.u32 %v246, 16
      %v547 = vor.u32 %v544, %v545
      %v548 = vrot.slane %v544, 4
      %v550 = vshrl.u32 %v247, 16
      %v552 = vrot.slane %v550, 7
      %v553 = vshll.u32 %v247, 16
      %v555 = vor.u32 %v552, %v553
      %v556 = vsel %vm370, %v548, %v555
      %v557 = vrot.slane %v552, 4
      %v559 = vshrl.u32 %v248, 16
      %v561 = vrot.slane %v559, 7
      %v562 = vshll.u32 %v248, 16
      %v564 = vor.u32 %v561, %v562
      %v565 = vrot.slane %v561, 4
      %v567 = vshrl.u32 %v249, 16
      %v569 = vrot.slane %v567, 7
      %v570 = vshll.u32 %v249, 16
      %v572 = vor.u32 %v569, %v570
      %v573 = vsel %vm370, %v565, %v572
      %v574 = vrot.slane %v569, 4
      %v576 = vshrl.u32 %v250, 16
      %v578 = vrot.slane %v576, 7
      %v579 = vshll.u32 %v250, 16
      %v581 = vor.u32 %v578, %v579
      %v582 = vrot.slane %v578, 4
      %v584 = vshrl.u32 %v251, 16
      %v586 = vrot.slane %v584, 7
      %v587 = vshll.u32 %v251, 16
      %v589 = vor.u32 %v586, %v587
      %v590 = vsel %vm370, %v582, %v589
      %v591 = vrot.slane %v586, 4
      %v593 = vshrl.u32 %v252, 16
      %v595 = vrot.slane %v593, 7
      %v596 = vshll.u32 %v252, 16
      %v598 = vor.u32 %v595, %v596
      %v599 = vrot.slane %v595, 4
      %v601 = vshrl.u32 %v253, 16
      %v603 = vrot.slane %v601, 7
      %v604 = vshll.u32 %v253, 16
      %v606 = vor.u32 %v603, %v604
      %v607 = vsel %vm370, %v599, %v606
      %v608 = vrot.slane %v603, 4
      %v610 = vshrl.u32 %v254, 16
      %v612 = vrot.slane %v610, 7
      %v613 = vshll.u32 %v254, 16
      %v615 = vor.u32 %v612, %v613
      %v616 = vrot.slane %v612, 4
      %v618 = vshrl.u32 %v255, 16
      %v620 = vrot.slane %v618, 7
      %v621 = vshll.u32 %v255, 16
      %v623 = vor.u32 %v620, %v621
      %v624 = vsel %vm370, %v616, %v623
      %v625 = vrot.slane %v620, 4
      %v627 = vshrl.u32 %v256, 16
      %v629 = vrot.slane %v627, 7
      %v630 = vshll.u32 %v256, 16
      %v632 = vor.u32 %v629, %v630
      %v633 = vrot.slane %v629, 4
      %v635 = vshrl.u32 %v257, 16
      %v637 = vrot.slane %v635, 7
      %v638 = vshll.u32 %v257, 16
      %v640 = vor.u32 %v637, %v638
      %v641 = vsel %vm370, %v633, %v640
      %v642 = vrot.slane %v637, 4
      %vm691 = vcmask 519168
      %vm692 = vmand %vm691, %vm319
      %v693 = vld [vmem:[%s267] sm:$0xf]
      %v694 = vsel %vm692, %v377, %v693
      %695 = vst [vmem:[%s267] sm:$0xf] %v694
      %696 = vst.msk [vmem:[%s267 + $0x4] sm:$0xf] %vm258, %v386
      %v697 = vld [vmem:[%s267 + $0x8] sm:$0x1]
      %v698 = vsel %vm270, %v387, %v697
      %699 = vst [vmem:[%s267 + $0x8] sm:$0x1] %v698
      %v700 = vld [vmem:[%s267 + $0xc] sm:$0xf]
      %v701 = vsel %vm692, %v394, %v700
      %702 = vst [vmem:[%s267 + $0xc] sm:$0xf] %v701
      %703 = vst.msk [vmem:[%s267 + $0x10] sm:$0xf] %vm258, %v403
      %v704 = vld [vmem:[%s267 + $0x14] sm:$0x1]
      %v705 = vsel %vm270, %v404, %v704
      %706 = vst [vmem:[%s267 + $0x14] sm:$0x1] %v705
      %v707 = vld [vmem:[%s267 + $0x18] sm:$0xf]
      %v708 = vsel %vm692, %v411, %v707
      %709 = vst [vmem:[%s267 + $0x18] sm:$0xf] %v708
      %710 = vst.msk [vmem:[%s267 + $0x1c] sm:$0xf] %vm258, %v420
      %v711 = vld [vmem:[%s267 + $0x20] sm:$0x1]
      %v712 = vsel %vm270, %v421, %v711
      %713 = vst [vmem:[%s267 + $0x20] sm:$0x1] %v712
      %v714 = vld [vmem:[%s267 + $0x24] sm:$0xf]
      %v715 = vsel %vm692, %v428, %v714
      %716 = vst [vmem:[%s267 + $0x24] sm:$0xf] %v715
      %717 = vst.msk [vmem:[%s267 + $0x28] sm:$0xf] %vm258, %v437
      %v718 = vld [vmem:[%s267 + $0x2c] sm:$0x1]
      %v719 = vsel %vm270, %v438, %v718
      %720 = vst [vmem:[%s267 + $0x2c] sm:$0x1] %v719
      %v721 = vld [vmem:[%s267 + $0x30] sm:$0xf]
      %v722 = vsel %vm692, %v445, %v721
      %723 = vst [vmem:[%s267 + $0x30] sm:$0xf] %v722
      %724 = vst.msk [vmem:[%s267 + $0x34] sm:$0xf] %vm258, %v454
      %v725 = vld [vmem:[%s267 + $0x38] sm:$0x1]
      %v726 = vsel %vm270, %v455, %v725
      %727 = vst [vmem:[%s267 + $0x38] sm:$0x1] %v726
      %v728 = vld [vmem:[%s267 + $0x3c] sm:$0xf]
      %v729 = vsel %vm692, %v462, %v728
      %730 = vst [vmem:[%s267 + $0x3c] sm:$0xf] %v729
      %731 = vst.msk [vmem:[%s267 + $0x40] sm:$0xf] %vm258, %v471
      %v732 = vld [vmem:[%s267 + $0x44] sm:$0x1]
      %v733 = vsel %vm270, %v472, %v732
      %734 = vst [vmem:[%s267 + $0x44] sm:$0x1] %v733
      %v735 = vld [vmem:[%s267 + $0x48] sm:$0xf]
      %v736 = vsel %vm692, %v479, %v735
      %737 = vst [vmem:[%s267 + $0x48] sm:$0xf] %v736
      %738 = vst.msk [vmem:[%s267 + $0x4c] sm:$0xf] %vm258, %v488
      %v739 = vld [vmem:[%s267 + $0x50] sm:$0x1]
      %v740 = vsel %vm270, %v489, %v739
      %741 = vst [vmem:[%s267 + $0x50] sm:$0x1] %v740
      %v742 = vld [vmem:[%s267 + $0x54] sm:$0xf]
      %v743 = vsel %vm692, %v496, %v742
      %744 = vst [vmem:[%s267 + $0x54] sm:$0xf] %v743
      %745 = vst.msk [vmem:[%s267 + $0x58] sm:$0xf] %vm258, %v505
      %v746 = vld [vmem:[%s267 + $0x5c] sm:$0x1]
      %v747 = vsel %vm270, %v506, %v746
      %748 = vst [vmem:[%s267 + $0x5c] sm:$0x1] %v747
      %v749 = vld [vmem:[%s267 + $0x60] sm:$0xf]
      %v750 = vsel %vm692, %v513, %v749
      %751 = vst [vmem:[%s267 + $0x60] sm:$0xf] %v750
      %752 = vst.msk [vmem:[%s267 + $0x64] sm:$0xf] %vm258, %v522
      %v753 = vld [vmem:[%s267 + $0x68] sm:$0x1]
      %v754 = vsel %vm270, %v523, %v753
      %755 = vst [vmem:[%s267 + $0x68] sm:$0x1] %v754
      %v756 = vld [vmem:[%s267 + $0x6c] sm:$0xf]
      %v757 = vsel %vm692, %v530, %v756
      %758 = vst [vmem:[%s267 + $0x6c] sm:$0xf] %v757
      %759 = vst.msk [vmem:[%s267 + $0x70] sm:$0xf] %vm258, %v539
      %v760 = vld [vmem:[%s267 + $0x74] sm:$0x1]
      %v761 = vsel %vm270, %v540, %v760
      %762 = vst [vmem:[%s267 + $0x74] sm:$0x1] %v761
      %v763 = vld [vmem:[%s267 + $0x78] sm:$0xf]
      %v764 = vsel %vm692, %v547, %v763
      %765 = vst [vmem:[%s267 + $0x78] sm:$0xf] %v764
      %766 = vst.msk [vmem:[%s267 + $0x7c] sm:$0xf] %vm258, %v556
      %v767 = vld [vmem:[%s267 + $0x80] sm:$0x1]
      %v768 = vsel %vm270, %v557, %v767
      %769 = vst [vmem:[%s267 + $0x80] sm:$0x1] %v768
      %v770 = vld [vmem:[%s267 + $0x84] sm:$0xf]
      %v771 = vsel %vm692, %v564, %v770
      %772 = vst [vmem:[%s267 + $0x84] sm:$0xf] %v771
      %773 = vst.msk [vmem:[%s267 + $0x88] sm:$0xf] %vm258, %v573
      %v774 = vld [vmem:[%s267 + $0x8c] sm:$0x1]
      %v775 = vsel %vm270, %v574, %v774
      %776 = vst [vmem:[%s267 + $0x8c] sm:$0x1] %v775
      %v777 = vld [vmem:[%s267 + $0x90] sm:$0xf]
      %v778 = vsel %vm692, %v581, %v777
      %779 = vst [vmem:[%s267 + $0x90] sm:$0xf] %v778
      %780 = vst.msk [vmem:[%s267 + $0x94] sm:$0xf] %vm258, %v590
      %v781 = vld [vmem:[%s267 + $0x98] sm:$0x1]
      %v782 = vsel %vm270, %v591, %v781
      %783 = vst [vmem:[%s267 + $0x98] sm:$0x1] %v782
      %v784 = vld [vmem:[%s267 + $0x9c] sm:$0xf]
      %v785 = vsel %vm692, %v598, %v784
      %786 = vst [vmem:[%s267 + $0x9c] sm:$0xf] %v785
      %787 = vst.msk [vmem:[%s267 + $0xa0] sm:$0xf] %vm258, %v607
      %v788 = vld [vmem:[%s267 + $0xa4] sm:$0x1]
      %v789 = vsel %vm270, %v608, %v788
      %790 = vst [vmem:[%s267 + $0xa4] sm:$0x1] %v789
      %v791 = vld [vmem:[%s267 + $0xa8] sm:$0xf]
      %v792 = vsel %vm692, %v615, %v791
      %793 = vst [vmem:[%s267 + $0xa8] sm:$0xf] %v792
      %794 = vst.msk [vmem:[%s267 + $0xac] sm:$0xf] %vm258, %v624
      %v795 = vld [vmem:[%s267 + $0xb0] sm:$0x1]
      %v796 = vsel %vm270, %v625, %v795
      %797 = vst [vmem:[%s267 + $0xb0] sm:$0x1] %v796
      %v798 = vld [vmem:[%s267 + $0xb4] sm:$0xf]
      %v799 = vsel %vm692, %v632, %v798
      %800 = vst [vmem:[%s267 + $0xb4] sm:$0xf] %v799
      %801 = vst.msk [vmem:[%s267 + $0xb8] sm:$0xf] %vm258, %v641
      %v802 = vld [vmem:[%s267 + $0xbc] sm:$0x1]
      %v803 = vsel %vm270, %v642, %v802
      %804 = vst [vmem:[%s267 + $0xbc] sm:$0x1] %v803
      %v805 = vld [vmem:[%s2] sm:$0x1]
      %v806 = vld [vmem:[#allocation2] sm:$0xf]
      %v807 = vld [vmem:[#allocation2 + $0x4] sm:$0xf]
      %v808 = vld [vmem:[#allocation2 + $0xc] sm:$0xf]
      %v809 = vld [vmem:[#allocation2 + $0x10] sm:$0xf]
      %v810 = vld [vmem:[#allocation2 + $0x18] sm:$0xf]
      %v811 = vld [vmem:[#allocation2 + $0x1c] sm:$0xf]
      %v812 = vld [vmem:[#allocation2 + $0x24] sm:$0xf]
      %v813 = vld [vmem:[#allocation2 + $0x28] sm:$0xf]
      %v814 = vld [vmem:[#allocation2 + $0x30] sm:$0xf]
      %v815 = vld [vmem:[#allocation2 + $0x34] sm:$0xf]
      %v816 = vld [vmem:[#allocation2 + $0x3c] sm:$0xf]
      %v817 = vld [vmem:[#allocation2 + $0x40] sm:$0xf]
      %v818 = vld [vmem:[#allocation2 + $0x48] sm:$0xf]
      %v819 = vld [vmem:[#allocation2 + $0x4c] sm:$0xf]
      %v820 = vld [vmem:[#allocation2 + $0x54] sm:$0xf]
      %v821 = vld [vmem:[#allocation2 + $0x58] sm:$0xf]
      %v822 = vld [vmem:[#allocation2 + $0x60] sm:$0xf]
      %v823 = vld [vmem:[#allocation2 + $0x64] sm:$0xf]
      %v824 = vld [vmem:[#allocation2 + $0x6c] sm:$0xf]
      %v825 = vld [vmem:[#allocation2 + $0x70] sm:$0xf]
      %v826 = vld [vmem:[#allocation2 + $0x78] sm:$0xf]
      %v827 = vld [vmem:[#allocation2 + $0x7c] sm:$0xf]
      %v828 = vld [vmem:[#allocation2 + $0x84] sm:$0xf]
      %v829 = vld [vmem:[#allocation2 + $0x88] sm:$0xf]
      %v830 = vld [vmem:[#allocation2 + $0x90] sm:$0xf]
      %v831 = vld [vmem:[#allocation2 + $0x94] sm:$0xf]
      %v832 = vld [vmem:[#allocation2 + $0x9c] sm:$0xf]
      %v833 = vld [vmem:[#allocation2 + $0xa0] sm:$0xf]
      %v834 = vld [vmem:[#allocation2 + $0xa8] sm:$0xf]
      %v835 = vld [vmem:[#allocation2 + $0xac] sm:$0xf]
      %v836 = vld [vmem:[#allocation2 + $0xb4] sm:$0xf]
      %v837 = vld [vmem:[#allocation2 + $0xb8] sm:$0xf]
      %v838 = vld [vmem:[%s1] sm:$0xf]
      %v839 = vld [vmem:[%s1 + $0x4] sm:$0xf]
      %v840 = vld [vmem:[%s1 + $0x8] sm:$0xf]
      %v841 = vld [vmem:[%s1 + $0xc] sm:$0xf]
      %v842 = vld [vmem:[%s1 + $0x10] sm:$0xf]
      %v843 = vld [vmem:[%s1 + $0x14] sm:$0xf]
      %v844 = vld [vmem:[%s1 + $0x18] sm:$0xf]
      %v845 = vld [vmem:[%s1 + $0x1c] sm:$0xf]
      %v846 = vld [vmem:[#allocation2 + $0x8] sm:$0x1]
      %v847 = vld [vmem:[#allocation2 + $0x14] sm:$0x1]
      %v848 = vld [vmem:[#allocation2 + $0x20] sm:$0x1]
      %v849 = vld [vmem:[#allocation2 + $0x2c] sm:$0x1]
      %v850 = vld [vmem:[#allocation2 + $0x38] sm:$0x1]
      %v851 = vld [vmem:[#allocation2 + $0x44] sm:$0x1]
      %v852 = vld [vmem:[#allocation2 + $0x50] sm:$0x1]
      %v853 = vld [vmem:[#allocation2 + $0x5c] sm:$0x1]
      %v854 = vld [vmem:[#allocation2 + $0x68] sm:$0x1]
      %v855 = vld [vmem:[#allocation2 + $0x74] sm:$0x1]
      %v856 = vld [vmem:[#allocation2 + $0x80] sm:$0x1]
      %v857 = vld [vmem:[#allocation2 + $0x8c] sm:$0x1]
      %v858 = vld [vmem:[#allocation2 + $0x98] sm:$0x1]
      %v859 = vld [vmem:[#allocation2 + $0xa4] sm:$0x1]
      %v860 = vld [vmem:[#allocation2 + $0xb0] sm:$0x1]
      %v861 = vld [vmem:[#allocation2 + $0xbc] sm:$0x1]
      %vm862 = vsmask.f32 3328
      %vm863 = vsmask.f32 7440
      %vm864 = vmor %vm862, %vm863
      %v866 = vshrl.u32 %v806, 16
      %v868 = vrot.slane %v866, 4
      %v869 = vshll.u32 %v806, 16
      %v871 = vrot.slane %v869, 5
      %v872 = vor.u32 %v868, %v871
      %v873 = vrot.slane %v872, 4
      %v875 = vshll.u32 %v807, 16
      %v877 = vrot.slane %v875, 5
      %v878 = vsel %vm864, %v873, %v877
      %v879 = vshrl.u32 %v807, 16
      %v881 = vrot.slane %v879, 4
      %v882 = vor.u32 %v881, %v877
      %v883 = vrot.slane %v882, 4
      %v885 = vshll.u32 %v846, 16
      %v887 = vrot.slane %v885, 5
      %v888 = vsel %vm864, %v883, %v887
      %v890 = vshrl.u32 %v808, 16
      %v892 = vrot.slane %v890, 4
      %v893 = vshll.u32 %v808, 16
      %v895 = vrot.slane %v893, 5
      %v896 = vor.u32 %v892, %v895
      %v897 = vrot.slane %v896, 4
      %v899 = vshll.u32 %v809, 16
      %v901 = vrot.slane %v899, 5
      %v902 = vsel %vm864, %v897, %v901
      %v903 = vshrl.u32 %v809, 16
      %v905 = vrot.slane %v903, 4
      %v906 = vor.u32 %v905, %v901
      %v907 = vrot.slane %v906, 4
      %v909 = vshll.u32 %v847, 16
      %v911 = vrot.slane %v909, 5
      %v912 = vsel %vm864, %v907, %v911
      %v914 = vshrl.u32 %v810, 16
      %v916 = vrot.slane %v914, 4
      %v917 = vshll.u32 %v810, 16
      %v919 = vrot.slane %v917, 5
      %v920 = vor.u32 %v916, %v919
      %v921 = vrot.slane %v920, 4
      %v923 = vshll.u32 %v811, 16
      %v925 = vrot.slane %v923, 5
      %v926 = vsel %vm864, %v921, %v925
      %v927 = vshrl.u32 %v811, 16
      %v929 = vrot.slane %v927, 4
      %v930 = vor.u32 %v929, %v925
      %v931 = vrot.slane %v930, 4
      %v933 = vshll.u32 %v848, 16
      %v935 = vrot.slane %v933, 5
      %v936 = vsel %vm864, %v931, %v935
      %v938 = vshrl.u32 %v812, 16
      %v940 = vrot.slane %v938, 4
      %v941 = vshll.u32 %v812, 16
      %v943 = vrot.slane %v941, 5
      %v944 = vor.u32 %v940, %v943
      %v945 = vrot.slane %v944, 4
      %v947 = vshll.u32 %v813, 16
      %v949 = vrot.slane %v947, 5
      %v950 = vsel %vm864, %v945, %v949
      %v951 = vshrl.u32 %v813, 16
      %v953 = vrot.slane %v951, 4
      %v954 = vor.u32 %v953, %v949
      %v955 = vrot.slane %v954, 4
      %v957 = vshll.u32 %v849, 16
      %v959 = vrot.slane %v957, 5
      %v960 = vsel %vm864, %v955, %v959
      %v962 = vshrl.u32 %v814, 16
      %v964 = vrot.slane %v962, 4
      %v965 = vshll.u32 %v814, 16
      %v967 = vrot.slane %v965, 5
      %v968 = vor.u32 %v964, %v967
      %v969 = vrot.slane %v968, 4
      %v971 = vshll.u32 %v815, 16
      %v973 = vrot.slane %v971, 5
      %v974 = vsel %vm864, %v969, %v973
      %v975 = vshrl.u32 %v815, 16
      %v977 = vrot.slane %v975, 4
      %v978 = vor.u32 %v977, %v973
      %v979 = vrot.slane %v978, 4
      %v981 = vshll.u32 %v850, 16
      %v983 = vrot.slane %v981, 5
      %v984 = vsel %vm864, %v979, %v983
      %v986 = vshrl.u32 %v816, 16
      %v988 = vrot.slane %v986, 4
      %v989 = vshll.u32 %v816, 16
      %v991 = vrot.slane %v989, 5
      %v992 = vor.u32 %v988, %v991
      %v993 = vrot.slane %v992, 4
      %v995 = vshll.u32 %v817, 16
      %v997 = vrot.slane %v995, 5
      %v998 = vsel %vm864, %v993, %v997
      %v999 = vshrl.u32 %v817, 16
      %v1001 = vrot.slane %v999, 4
      %v1002 = vor.u32 %v1001, %v997
      %v1003 = vrot.slane %v1002, 4
      %v1005 = vshll.u32 %v851, 16
      %v1007 = vrot.slane %v1005, 5
      %v1008 = vsel %vm864, %v1003, %v1007
      %v1010 = vshrl.u32 %v818, 16
      %v1012 = vrot.slane %v1010, 4
      %v1013 = vshll.u32 %v818, 16
      %v1015 = vrot.slane %v1013, 5
      %v1016 = vor.u32 %v1012, %v1015
      %v1017 = vrot.slane %v1016, 4
      %v1019 = vshll.u32 %v819, 16
      %v1021 = vrot.slane %v1019, 5
      %v1022 = vsel %vm864, %v1017, %v1021
      %v1023 = vshrl.u32 %v819, 16
      %v1025 = vrot.slane %v1023, 4
      %v1026 = vor.u32 %v1025, %v1021
      %v1027 = vrot.slane %v1026, 4
      %v1029 = vshll.u32 %v852, 16
      %v1031 = vrot.slane %v1029, 5
      %v1032 = vsel %vm864, %v1027, %v1031
      %v1034 = vshrl.u32 %v820, 16
      %v1036 = vrot.slane %v1034, 4
      %v1037 = vshll.u32 %v820, 16
      %v1039 = vrot.slane %v1037, 5
      %v1040 = vor.u32 %v1036, %v1039
      %v1041 = vrot.slane %v1040, 4
      %v1043 = vshll.u32 %v821, 16
      %v1045 = vrot.slane %v1043, 5
      %v1046 = vsel %vm864, %v1041, %v1045
      %v1047 = vshrl.u32 %v821, 16
      %v1049 = vrot.slane %v1047, 4
      %v1050 = vor.u32 %v1049, %v1045
      %v1051 = vrot.slane %v1050, 4
      %v1053 = vshll.u32 %v853, 16
      %v1055 = vrot.slane %v1053, 5
      %v1056 = vsel %vm864, %v1051, %v1055
      %v1058 = vshrl.u32 %v822, 16
      %v1060 = vrot.slane %v1058, 4
      %v1061 = vshll.u32 %v822, 16
      %v1063 = vrot.slane %v1061, 5
      %v1064 = vor.u32 %v1060, %v1063
      %v1065 = vrot.slane %v1064, 4
      %v1067 = vshll.u32 %v823, 16
      %v1069 = vrot.slane %v1067, 5
      %v1070 = vsel %vm864, %v1065, %v1069
      %v1071 = vshrl.u32 %v823, 16
      %v1073 = vrot.slane %v1071, 4
      %v1074 = vor.u32 %v1073, %v1069
      %v1075 = vrot.slane %v1074, 4
      %v1077 = vshll.u32 %v854, 16
      %v1079 = vrot.slane %v1077, 5
      %v1080 = vsel %vm864, %v1075, %v1079
      %v1082 = vshrl.u32 %v824, 16
      %v1084 = vrot.slane %v1082, 4
      %v1085 = vshll.u32 %v824, 16
      %v1087 = vrot.slane %v1085, 5
      %v1088 = vor.u32 %v1084, %v1087
      %v1089 = vrot.slane %v1088, 4
      %v1091 = vshll.u32 %v825, 16
      %v1093 = vrot.slane %v1091, 5
      %v1094 = vsel %vm864, %v1089, %v1093
      %v1095 = vshrl.u32 %v825, 16
      %v1097 = vrot.slane %v1095, 4
      %v1098 = vor.u32 %v1097, %v1093
      %v1099 = vrot.slane %v1098, 4
      %v1101 = vshll.u32 %v855, 16
      %v1103 = vrot.slane %v1101, 5
      %v1104 = vsel %vm864, %v1099, %v1103
      %v1106 = vshrl.u32 %v826, 16
      %v1108 = vrot.slane %v1106, 4
      %v1109 = vshll.u32 %v826, 16
      %v1111 = vrot.slane %v1109, 5
      %v1112 = vor.u32 %v1108, %v1111
      %v1113 = vrot.slane %v1112, 4
      %v1115 = vshll.u32 %v827, 16
      %v1117 = vrot.slane %v1115, 5
      %v1118 = vsel %vm864, %v1113, %v1117
      %v1119 = vshrl.u32 %v827, 16
      %v1121 = vrot.slane %v1119, 4
      %v1122 = vor.u32 %v1121, %v1117
      %v1123 = vrot.slane %v1122, 4
      %v1125 = vshll.u32 %v856, 16
      %v1127 = vrot.slane %v1125, 5
      %v1128 = vsel %vm864, %v1123, %v1127
      %v1130 = vshrl.u32 %v828, 16
      %v1132 = vrot.slane %v1130, 4
      %v1133 = vshll.u32 %v828, 16
      %v1135 = vrot.slane %v1133, 5
      %v1136 = vor.u32 %v1132, %v1135
      %v1137 = vrot.slane %v1136, 4
      %v1139 = vshll.u32 %v829, 16
      %v1141 = vrot.slane %v1139, 5
      %v1142 = vsel %vm864, %v1137, %v1141
      %v1143 = vshrl.u32 %v829, 16
      %v1145 = vrot.slane %v1143, 4
      %v1146 = vor.u32 %v1145, %v1141
      %v1147 = vrot.slane %v1146, 4
      %v1149 = vshll.u32 %v857, 16
      %v1151 = vrot.slane %v1149, 5
      %v1152 = vsel %vm864, %v1147, %v1151
      %v1154 = vshrl.u32 %v830, 16
      %v1156 = vrot.slane %v1154, 4
      %v1157 = vshll.u32 %v830, 16
      %v1159 = vrot.slane %v1157, 5
      %v1160 = vor.u32 %v1156, %v1159
      %v1161 = vrot.slane %v1160, 4
      %v1163 = vshll.u32 %v831, 16
      %v1165 = vrot.slane %v1163, 5
      %v1166 = vsel %vm864, %v1161, %v1165
      %v1167 = vshrl.u32 %v831, 16
      %v1169 = vrot.slane %v1167, 4
      %v1170 = vor.u32 %v1169, %v1165
      %v1171 = vrot.slane %v1170, 4
      %v1173 = vshll.u32 %v858, 16
      %v1175 = vrot.slane %v1173, 5
      %v1176 = vsel %vm864, %v1171, %v1175
      %v1178 = vshrl.u32 %v832, 16
      %v1180 = vrot.slane %v1178, 4
      %v1181 = vshll.u32 %v832, 16
      %v1183 = vrot.slane %v1181, 5
      %v1184 = vor.u32 %v1180, %v1183
      %v1185 = vrot.slane %v1184, 4
      %v1187 = vshll.u32 %v833, 16
      %v1189 = vrot.slane %v1187, 5
      %v1190 = vsel %vm864, %v1185, %v1189
      %v1191 = vshrl.u32 %v833, 16
      %v1193 = vrot.slane %v1191, 4
      %v1194 = vor.u32 %v1193, %v1189
      %v1195 = vrot.slane %v1194, 4
      %v1197 = vshll.u32 %v859, 16
      %v1199 = vrot.slane %v1197, 5
      %v1200 = vsel %vm864, %v1195, %v1199
      %v1202 = vshrl.u32 %v834, 16
      %v1204 = vrot.slane %v1202, 4
      %v1205 = vshll.u32 %v834, 16
      %v1207 = vrot.slane %v1205, 5
      %v1208 = vor.u32 %v1204, %v1207
      %v1209 = vrot.slane %v1208, 4
      %v1211 = vshll.u32 %v835, 16
      %v1213 = vrot.slane %v1211, 5
      %v1214 = vsel %vm864, %v1209, %v1213
      %v1215 = vshrl.u32 %v835, 16
      %v1217 = vrot.slane %v1215, 4
      %v1218 = vor.u32 %v1217, %v1213
      %v1219 = vrot.slane %v1218, 4
      %v1221 = vshll.u32 %v860, 16
      %v1223 = vrot.slane %v1221, 5
      %v1224 = vsel %vm864, %v1219, %v1223
      %v1226 = vshrl.u32 %v836, 16
      %v1228 = vrot.slane %v1226, 4
      %v1229 = vshll.u32 %v836, 16
      %v1231 = vrot.slane %v1229, 5
      %v1232 = vor.u32 %v1228, %v1231
      %v1233 = vrot.slane %v1232, 4
      %v1235 = vshll.u32 %v837, 16
      %v1237 = vrot.slane %v1235, 5
      %v1238 = vsel %vm864, %v1233, %v1237
      %v1239 = vshrl.u32 %v837, 16
      %v1241 = vrot.slane %v1239, 4
      %v1242 = vor.u32 %v1241, %v1237
      %v1243 = vrot.slane %v1242, 4
      %v1245 = vshll.u32 %v861, 16
      %v1247 = vrot.slane %v1245, 5
      %v1248 = vsel %vm864, %v1243, %v1247
      %s1249 = scalar_lea.vmem %s1, 32
      %v1250 = vld [vmem:[%s1249] sm:$0xf]
      %v1251 = vld [vmem:[%s1249 + $0x4] sm:$0xf]
      %v1252 = vld [vmem:[%s1249 + $0x8] sm:$0xf]
      %v1253 = vld [vmem:[%s1249 + $0xc] sm:$0xf]
      %v1254 = vld [vmem:[%s1249 + $0x10] sm:$0xf]
      %v1255 = vld [vmem:[%s1249 + $0x14] sm:$0xf]
      %v1256 = vld [vmem:[%s1249 + $0x18] sm:$0xf]
      %v1257 = vld [vmem:[%s1249 + $0x1c] sm:$0xf]
      %v1258 = vunpack.c.l.b16 %v878
      %v1259 = vunpack.c.l.b16 %v888
      %v1260 = vunpack.c.l.b16 %v902
      %v1261 = vunpack.c.l.b16 %v912
      %v1262 = vunpack.c.l.b16 %v926
      %v1263 = vunpack.c.l.b16 %v936
      %v1264 = vunpack.c.l.b16 %v950
      %v1265 = vunpack.c.l.b16 %v960
      %v1266 = vunpack.c.l.b16 %v974
      %v1267 = vunpack.c.l.b16 %v984
      %v1268 = vunpack.c.l.b16 %v998
      %v1269 = vunpack.c.l.b16 %v1008
      %v1270 = vunpack.c.l.b16 %v1022
      %v1271 = vunpack.c.l.b16 %v1032
      %v1272 = vunpack.c.l.b16 %v1046
      %v1273 = vunpack.c.l.b16 %v1056
      %v1274 = vunpack.c.l.b16 %v1070
      %v1275 = vunpack.c.l.b16 %v1080
      %v1276 = vunpack.c.l.b16 %v1094
      %v1277 = vunpack.c.l.b16 %v1104
      %v1278 = vunpack.c.l.b16 %v1118
      %v1279 = vunpack.c.l.b16 %v1128
      %v1280 = vunpack.c.l.b16 %v1142
      %v1281 = vunpack.c.l.b16 %v1152
      %v1282 = vunpack.c.l.b16 %v1166
      %v1283 = vunpack.c.l.b16 %v1176
      %v1284 = vunpack.c.l.b16 %v1190
      %v1285 = vunpack.c.l.b16 %v1200
      %v1286 = vunpack.c.l.b16 %v1214
      %v1287 = vunpack.c.l.b16 %v1224
      %v1288 = vunpack.c.l.b16 %v1238
      %v1289 = vunpack.c.l.b16 %v1248
      %v1290 = vpack.c.b16 %v1259, %v1258
      %v1291 = vpack.c.b16 %v1261, %v1260
      %v1292 = vpack.c.b16 %v1263, %v1262
      %v1293 = vpack.c.b16 %v1265, %v1264
      %v1294 = vpack.c.b16 %v1267, %v1266
      %v1295 = vpack.c.b16 %v1269, %v1268
      %v1296 = vpack.c.b16 %v1271, %v1270
      %v1297 = vpack.c.b16 %v1273, %v1272
      %v1298 = vpack.c.b16 %v1275, %v1274
      %v1299 = vpack.c.b16 %v1277, %v1276
      %v1300 = vpack.c.b16 %v1279, %v1278
      %v1301 = vpack.c.b16 %v1281, %v1280
      %v1302 = vpack.c.b16 %v1283, %v1282
      %v1303 = vpack.c.b16 %v1285, %v1284
      %v1304 = vpack.c.b16 %v1287, %v1286
      %v1305 = vpack.c.b16 %v1289, %v1288
      %v1314 = vunpack.c.l.b16 %v1250
      %v1315 = vunpack.c.l.b16 %v1251
      %v1316 = vunpack.c.l.b16 %v1252
      %v1317 = vunpack.c.l.b16 %v1253
      %v1318 = vunpack.c.l.b16 %v1254
      %v1319 = vunpack.c.l.b16 %v1255
      %v1320 = vunpack.c.l.b16 %v1256
      %v1321 = vunpack.c.l.b16 %v1257
      %v1322 = vpack.c.b16 %v1315, %v1314
      %v1323 = vpack.c.b16 %v1317, %v1316
      %v1324 = vpack.c.b16 %v1319, %v1318
      %v1325 = vpack.c.b16 %v1321, %v1320
      %vm1330 = vcmask 523264
      %v1332 = vsel %vm1330, %v1290, 0
      %v1335 = vsel %vm1330, %v1291, 0
      %v1338 = vsel %vm1330, %v1292, 0
      %v1341 = vsel %vm1330, %v1293, 0
      %v1344 = vsel %vm1330, %v1294, 0
      %v1347 = vsel %vm1330, %v1295, 0
      %v1350 = vsel %vm1330, %v1296, 0
      %v1353 = vsel %vm1330, %v1297, 0
      %v1356 = vsel %vm1330, %v1298, 0
      %v1359 = vsel %vm1330, %v1299, 0
      %v1362 = vsel %vm1330, %v1300, 0
      %v1365 = vsel %vm1330, %v1301, 0
      %v1368 = vsel %vm1330, %v1302, 0
      %v1371 = vsel %vm1330, %v1303, 0
      %v1374 = vsel %vm1330, %v1304, 0
      %v1377 = vsel %vm1330, %v1305, 0
      %1379 = vmatprep.subr.bf16.mxu0 0
      %1380 = vmatpush1.bf16.msra.mxu0 %v1322
      %1381 = vmatprep.subr.bf16.mxu0 0
      %1382 = vmatpush1.bf16.msra.mxu0 %v1323
      %1383 = vmatprep.subr.bf16.mxu0 0
      %1384 = vmatpush1.bf16.msra.mxu0 %v1324
      %1385 = vmatprep.subr.bf16.mxu0 0
      %1386 = vmatpush1.bf16.msra.mxu0 %v1325
      %1387 = vmatprep.subr.bf16.mxu0 0
      %1388 = vmatpush1.bf16.msra.mxu0 0
      %1389 = vmatprep.subr.bf16.mxu0 0
      %1390 = vmatpush1.bf16.msra.mxu0 0
      %1391 = vmatprep.subr.bf16.mxu0 0
      %1392 = vmatpush1.bf16.msra.mxu0 0
      %1393 = vmatprep.subr.bf16.mxu0 0
      %1394 = vmatpush1.bf16.msra.mxu0 0
      %1395 = vmatprep.subr.bf16.mxu0 0
      %1396 = vmatpush1.bf16.msra.mxu0 0
      %1397 = vmatprep.subr.bf16.mxu0 0
      %1398 = vmatpush1.bf16.msra.mxu0 0
      %1399 = vmatprep.subr.bf16.mxu0 0
      %1400 = vmatpush1.bf16.msra.mxu0 0
      %1401 = vmatprep.subr.bf16.mxu0 0
      %1402 = vmatpush1.bf16.msra.mxu0 0
      %1403 = vmatprep.subr.bf16.mxu0 0
      %1404 = vmatpush1.bf16.msra.mxu0 0
      %1405 = vmatprep.subr.bf16.mxu0 0
      %1406 = vmatpush1.bf16.msra.mxu0 0
      %1407 = vmatprep.subr.bf16.mxu0 0
      %1408 = vmatpush1.bf16.msra.mxu0 0
      %1409 = vmatprep.subr.bf16.mxu0 0
      %1410 = vmatpush1.bf16.msra.mxu0 0
      %1411 = vmatprep.mubr.bf16.mxu0 0
      %1412 = vmatmul.mubr.bf16.gmra.mrb[0].mxu0 %v1332
      %v1413 = vpop.f32.mrb[0].mxu0
      %v1414 = vadd.f32 0.0, %v1413
      %v1415 = vpop.f32.mrb[0].mxu0
      %v1416 = vpop.f32.mrb[0].mxu0
      %v1417 = vadd.f32 0.0, %v1416
      %v1418 = vpop.f32.mrb[0].mxu0
      %1419 = vmatprep.mubr.bf16.mxu0 0
      %1420 = vmatmul.mubr.bf16.gmra.mrb[0].mxu0 %v1335
      %v1421 = vpop.f32.mrb[0].mxu0
      %v1422 = vadd.f32 0.0, %v1421
      %v1423 = vpop.f32.mrb[0].mxu0
      %v1424 = vpop.f32.mrb[0].mxu0
      %v1425 = vadd.f32 0.0, %v1424
      %v1426 = vpop.f32.mrb[0].mxu0
      %1427 = vmatprep.mubr.bf16.mxu0 0
      %1428 = vmatmul.mubr.bf16.gmra.mrb[0].mxu0 %v1338
      %v1429 = vpop.f32.mrb[0].mxu0
      %v1430 = vadd.f32 0.0, %v1429
      %v1431 = vpop.f32.mrb[0].mxu0
      %v1432 = vpop.f32.mrb[0].mxu0
      %v1433 = vadd.f32 0.0, %v1432
      %v1434 = vpop.f32.mrb[0].mxu0
      %1435 = vmatprep.mubr.bf16.mxu0 0
      %1436 = vmatmul.mubr.bf16.gmra.mrb[0].mxu0 %v1341
      %v1437 = vpop.f32.mrb[0].mxu0
      %v1438 = vadd.f32 0.0, %v1437
      %v1439 = vpop.f32.mrb[0].mxu0
      %v1440 = vpop.f32.mrb[0].mxu0
      %v1441 = vadd.f32 0.0, %v1440
      %v1442 = vpop.f32.mrb[0].mxu0
      %1443 = vmatprep.mubr.bf16.mxu0 0
      %1444 = vmatmul.mubr.bf16.gmra.mrb[0].mxu0 %v1344
      %v1445 = vpop.f32.mrb[0].mxu0
      %v1446 = vadd.f32 0.0, %v1445
      %v1447 = vpop.f32.mrb[0].mxu0
      %v1448 = vpop.f32.mrb[0].mxu0
      %v1449 = vadd.f32 0.0, %v1448
      %v1450 = vpop.f32.mrb[0].mxu0
      %1451 = vmatprep.mubr.bf16.mxu0 0
      %1452 = vmatmul.mubr.bf16.gmra.mrb[0].mxu0 %v1347
      %v1453 = vpop.f32.mrb[0].mxu0
      %v1454 = vadd.f32 0.0, %v1453
      %v1455 = vpop.f32.mrb[0].mxu0
      %v1456 = vpop.f32.mrb[0].mxu0
      %v1457 = vadd.f32 0.0, %v1456
      %v1458 = vpop.f32.mrb[0].mxu0
      %1459 = vmatprep.mubr.bf16.mxu0 0
      %1460 = vmatmul.mubr.bf16.gmra.mrb[0].mxu0 %v1350
      %v1461 = vpop.f32.mrb[0].mxu0
      %v1462 = vadd.f32 0.0, %v1461
      %v1463 = vpop.f32.mrb[0].mxu0
      %v1464 = vpop.f32.mrb[0].mxu0
      %v1465 = vadd.f32 0.0, %v1464
      %v1466 = vpop.f32.mrb[0].mxu0
      %1467 = vmatprep.mubr.bf16.mxu0 0
      %1468 = vmatmul.mubr.bf16.gmra.mrb[0].mxu0 %v1353
      %v1469 = vpop.f32.mrb[0].mxu0
      %v1470 = vadd.f32 0.0, %v1469
      %v1471 = vpop.f32.mrb[0].mxu0
      %v1472 = vpop.f32.mrb[0].mxu0
      %v1473 = vadd.f32 0.0, %v1472
      %v1474 = vpop.f32.mrb[0].mxu0
      %1475 = vmatprep.mubr.bf16.mxu0 0
      %1476 = vmatmul.mubr.bf16.gmra.mrb[0].mxu0 %v1356
      %v1477 = vpop.f32.mrb[0].mxu0
      %v1478 = vadd.f32 0.0, %v1477
      %v1479 = vpop.f32.mrb[0].mxu0
      %v1480 = vpop.f32.mrb[0].mxu0
      %v1481 = vadd.f32 0.0, %v1480
      %v1482 = vpop.f32.mrb[0].mxu0
      %1483 = vmatprep.mubr.bf16.mxu0 0
      %1484 = vmatmul.mubr.bf16.gmra.mrb[0].mxu0 %v1359
      %v1485 = vpop.f32.mrb[0].mxu0
      %v1486 = vadd.f32 0.0, %v1485
      %v1487 = vpop.f32.mrb[0].mxu0
      %v1488 = vpop.f32.mrb[0].mxu0
      %v1489 = vadd.f32 0.0, %v1488
      %v1490 = vpop.f32.mrb[0].mxu0
      %1491 = vmatprep.mubr.bf16.mxu0 0
      %1492 = vmatmul.mubr.bf16.gmra.mrb[0].mxu0 %v1362
      %v1493 = vpop.f32.mrb[0].mxu0
      %v1494 = vadd.f32 0.0, %v1493
      %v1495 = vpop.f32.mrb[0].mxu0
      %v1496 = vpop.f32.mrb[0].mxu0
      %v1497 = vadd.f32 0.0, %v1496
      %v1498 = vpop.f32.mrb[0].mxu0
      %1499 = vmatprep.mubr.bf16.mxu0 0
      %1500 = vmatmul.mubr.bf16.gmra.mrb[0].mxu0 %v1365
      %v1501 = vpop.f32.mrb[0].mxu0
      %v1502 = vadd.f32 0.0, %v1501
      %v1503 = vpop.f32.mrb[0].mxu0
      %v1504 = vpop.f32.mrb[0].mxu0
      %v1505 = vadd.f32 0.0, %v1504
      %v1506 = vpop.f32.mrb[0].mxu0
      %1507 = vmatprep.mubr.bf16.mxu0 0
      %1508 = vmatmul.mubr.bf16.gmra.mrb[0].mxu0 %v1368
      %v1509 = vpop.f32.mrb[0].mxu0
      %v1510 = vadd.f32 0.0, %v1509
      %v1511 = vpop.f32.mrb[0].mxu0
      %v1512 = vpop.f32.mrb[0].mxu0
      %v1513 = vadd.f32 0.0, %v1512
      %v1514 = vpop.f32.mrb[0].mxu0
      %1515 = vmatprep.mubr.bf16.mxu0 0
      %1516 = vmatmul.mubr.bf16.gmra.mrb[0].mxu0 %v1371
      %v1517 = vpop.f32.mrb[0].mxu0
      %v1518 = vadd.f32 0.0, %v1517
      %v1519 = vpop.f32.mrb[0].mxu0
      %v1520 = vpop.f32.mrb[0].mxu0
      %v1521 = vadd.f32 0.0, %v1520
      %v1522 = vpop.f32.mrb[0].mxu0
      %1523 = vmatprep.mubr.bf16.mxu0 0
      %1524 = vmatmul.mubr.bf16.gmra.mrb[0].mxu0 %v1374
      %v1525 = vpop.f32.mrb[0].mxu0
      %v1526 = vadd.f32 0.0, %v1525
      %v1527 = vpop.f32.mrb[0].mxu0
      %v1528 = vpop.f32.mrb[0].mxu0
      %v1529 = vadd.f32 0.0, %v1528
      %v1530 = vpop.f32.mrb[0].mxu0
      %1531 = vmatprep.mubr.bf16.mxu0 0
      %1532 = vmatmul.mubr.bf16.gmra.mrb[0].mxu0 %v1377
      %v1533 = vpop.f32.mrb[0].mxu0
      %v1534 = vadd.f32 0.0, %v1533
      %v1535 = vpop.f32.mrb[0].mxu0
      %v1536 = vpop.f32.mrb[0].mxu0
      %v1537 = vadd.f32 0.0, %v1536
      %v1538 = vpop.f32.mrb[0].mxu0
      %1539 = vdwg.mxu0
      %v1572 = vunpack.c.l.b16 %v806
      %v1573 = vunpack.c.l.b16 %v807
      %v1574 = vunpack.c.l.b16 %v808
      %v1575 = vunpack.c.l.b16 %v809
      %v1576 = vunpack.c.l.b16 %v810
      %v1577 = vunpack.c.l.b16 %v811
      %v1578 = vunpack.c.l.b16 %v812
      %v1579 = vunpack.c.l.b16 %v813
      %v1580 = vunpack.c.l.b16 %v814
      %v1581 = vunpack.c.l.b16 %v815
      %v1582 = vunpack.c.l.b16 %v816
      %v1583 = vunpack.c.l.b16 %v817
      %v1584 = vunpack.c.l.b16 %v818
      %v1585 = vunpack.c.l.b16 %v819
      %v1586 = vunpack.c.l.b16 %v820
      %v1587 = vunpack.c.l.b16 %v821
      %v1588 = vunpack.c.l.b16 %v822
      %v1589 = vunpack.c.l.b16 %v823
      %v1590 = vunpack.c.l.b16 %v824
      %v1591 = vunpack.c.l.b16 %v825
      %v1592 = vunpack.c.l.b16 %v826
      %v1593 = vunpack.c.l.b16 %v827
      %v1594 = vunpack.c.l.b16 %v828
      %v1595 = vunpack.c.l.b16 %v829
      %v1596 = vunpack.c.l.b16 %v830
      %v1597 = vunpack.c.l.b16 %v831
      %v1598 = vunpack.c.l.b16 %v832
      %v1599 = vunpack.c.l.b16 %v833
      %v1600 = vunpack.c.l.b16 %v834
      %v1601 = vunpack.c.l.b16 %v835
      %v1602 = vunpack.c.l.b16 %v836
      %v1603 = vunpack.c.l.b16 %v837
      %v1604 = vpack.c.b16 %v1573, %v1572
      %v1605 = vpack.c.b16 %v1575, %v1574
      %v1606 = vpack.c.b16 %v1577, %v1576
      %v1607 = vpack.c.b16 %v1579, %v1578
      %v1608 = vpack.c.b16 %v1581, %v1580
      %v1609 = vpack.c.b16 %v1583, %v1582
      %v1610 = vpack.c.b16 %v1585, %v1584
      %v1611 = vpack.c.b16 %v1587, %v1586
      %v1612 = vpack.c.b16 %v1589, %v1588
      %v1613 = vpack.c.b16 %v1591, %v1590
      %v1614 = vpack.c.b16 %v1593, %v1592
      %v1615 = vpack.c.b16 %v1595, %v1594
      %v1616 = vpack.c.b16 %v1597, %v1596
      %v1617 = vpack.c.b16 %v1599, %v1598
      %v1618 = vpack.c.b16 %v1601, %v1600
      %v1619 = vpack.c.b16 %v1603, %v1602
      %v1628 = vunpack.c.l.b16 %v838
      %v1629 = vunpack.c.l.b16 %v839
      %v1630 = vunpack.c.l.b16 %v840
      %v1631 = vunpack.c.l.b16 %v841
      %v1632 = vunpack.c.l.b16 %v842
      %v1633 = vunpack.c.l.b16 %v843
      %v1634 = vunpack.c.l.b16 %v844
      %v1635 = vunpack.c.l.b16 %v845
      %v1636 = vpack.c.b16 %v1629, %v1628
      %v1637 = vpack.c.b16 %v1631, %v1630
      %v1638 = vpack.c.b16 %v1633, %v1632
      %v1639 = vpack.c.b16 %v1635, %v1634
      %v1645 = vsel %vm1330, %v1604, 0
      %v1648 = vsel %vm1330, %v1605, 0
      %v1651 = vsel %vm1330, %v1606, 0
      %v1654 = vsel %vm1330, %v1607, 0
      %v1657 = vsel %vm1330, %v1608, 0
      %v1660 = vsel %vm1330, %v1609, 0
      %v1663 = vsel %vm1330, %v1610, 0
      %v1666 = vsel %vm1330, %v1611, 0
      %v1669 = vsel %vm1330, %v1612, 0
      %v1672 = vsel %vm1330, %v1613, 0
      %v1675 = vsel %vm1330, %v1614, 0
      %v1678 = vsel %vm1330, %v1615, 0
      %v1681 = vsel %vm1330, %v1616, 0
      %v1684 = vsel %vm1330, %v1617, 0
      %v1687 = vsel %vm1330, %v1618, 0
      %v1690 = vsel %vm1330, %v1619, 0
      %1692 = vmatprep.subr.bf16.mxu0 0
      %1693 = vmatpush1.bf16.msra.mxu0 %v1636
      %1694 = vmatprep.subr.bf16.mxu0 0
      %1695 = vmatpush1.bf16.msra.mxu0 %v1637
      %1696 = vmatprep.subr.bf16.mxu0 0
      %1697 = vmatpush1.bf16.msra.mxu0 %v1638
      %1698 = vmatprep.subr.bf16.mxu0 0
      %1699 = vmatpush1.bf16.msra.mxu0 %v1639
      %1700 = vmatprep.subr.bf16.mxu0 0
      %1701 = vmatpush1.bf16.msra.mxu0 0
      %1702 = vmatprep.subr.bf16.mxu0 0
      %1703 = vmatpush1.bf16.msra.mxu0 0
      %1704 = vmatprep.subr.bf16.mxu0 0
      %1705 = vmatpush1.bf16.msra.mxu0 0
      %1706 = vmatprep.subr.bf16.mxu0 0
      %1707 = vmatpush1.bf16.msra.mxu0 0
      %1708 = vmatprep.subr.bf16.mxu0 0
      %1709 = vmatpush1.bf16.msra.mxu0 0
      %1710 = vmatprep.subr.bf16.mxu0 0
      %1711 = vmatpush1.bf16.msra.mxu0 0
      %1712 = vmatprep.subr.bf16.mxu0 0
      %1713 = vmatpush1.bf16.msra.mxu0 0
      %1714 = vmatprep.subr.bf16.mxu0 0
      %1715 = vmatpush1.bf16.msra.mxu0 0
      %1716 = vmatprep.subr.bf16.mxu0 0
      %1717 = vmatpush1.bf16.msra.mxu0 0
      %1718 = vmatprep.subr.bf16.mxu0 0
      %1719 = vmatpush1.bf16.msra.mxu0 0
      %1720 = vmatprep.subr.bf16.mxu0 0
      %1721 = vmatpush1.bf16.msra.mxu0 0
      %1722 = vmatprep.subr.bf16.mxu0 0
      %1723 = vmatpush1.bf16.msra.mxu0 0
      %1724 = vmatprep.mubr.bf16.mxu0 0
      %1725 = vmatmul.mubr.bf16.gmra.mrb[0].mxu0 %v1645
      %v1726 = vpop.f32.mrb[0].mxu0
      %v1727 = vadd.f32 %v1414, %v1726
      %v1728 = vpop.f32.mrb[0].mxu0
      %v1729 = vpop.f32.mrb[0].mxu0
      %v1730 = vadd.f32 %v1417, %v1729
      %v1731 = vpop.f32.mrb[0].mxu0
      %1732 = vmatprep.mubr.bf16.mxu0 0
      %1733 = vmatmul.mubr.bf16.gmra.mrb[0].mxu0 %v1648
      %v1734 = vpop.f32.mrb[0].mxu0
      %v1735 = vadd.f32 %v1422, %v1734
      %v1736 = vpop.f32.mrb[0].mxu0
      %v1737 = vpop.f32.mrb[0].mxu0
      %v1738 = vadd.f32 %v1425, %v1737
      %v1739 = vpop.f32.mrb[0].mxu0
      %1740 = vmatprep.mubr.bf16.mxu0 0
      %1741 = vmatmul.mubr.bf16.gmra.mrb[0].mxu0 %v1651
      %v1742 = vpop.f32.mrb[0].mxu0
      %v1743 = vadd.f32 %v1430, %v1742
      %v1744 = vpop.f32.mrb[0].mxu0
      %v1745 = vpop.f32.mrb[0].mxu0
      %v1746 = vadd.f32 %v1433, %v1745
      %v1747 = vpop.f32.mrb[0].mxu0
      %1748 = vmatprep.mubr.bf16.mxu0 0
      %1749 = vmatmul.mubr.bf16.gmra.mrb[0].mxu0 %v1654
      %v1750 = vpop.f32.mrb[0].mxu0
      %v1751 = vadd.f32 %v1438, %v1750
      %v1752 = vpop.f32.mrb[0].mxu0
      %v1753 = vpop.f32.mrb[0].mxu0
      %v1754 = vadd.f32 %v1441, %v1753
      %v1755 = vpop.f32.mrb[0].mxu0
      %1756 = vmatprep.mubr.bf16.mxu0 0
      %1757 = vmatmul.mubr.bf16.gmra.mrb[0].mxu0 %v1657
      %v1758 = vpop.f32.mrb[0].mxu0
      %v1759 = vadd.f32 %v1446, %v1758
      %v1760 = vpop.f32.mrb[0].mxu0
      %v1761 = vpop.f32.mrb[0].mxu0
      %v1762 = vadd.f32 %v1449, %v1761
      %v1763 = vpop.f32.mrb[0].mxu0
      %1764 = vmatprep.mubr.bf16.mxu0 0
      %1765 = vmatmul.mubr.bf16.gmra.mrb[0].mxu0 %v1660
      %v1766 = vpop.f32.mrb[0].mxu0
      %v1767 = vadd.f32 %v1454, %v1766
      %v1768 = vpop.f32.mrb[0].mxu0
      %v1769 = vpop.f32.mrb[0].mxu0
      %v1770 = vadd.f32 %v1457, %v1769
      %v1771 = vpop.f32.mrb[0].mxu0
      %1772 = vmatprep.mubr.bf16.mxu0 0
      %1773 = vmatmul.mubr.bf16.gmra.mrb[0].mxu0 %v1663
      %v1774 = vpop.f32.mrb[0].mxu0
      %v1775 = vadd.f32 %v1462, %v1774
      %v1776 = vpop.f32.mrb[0].mxu0
      %v1777 = vpop.f32.mrb[0].mxu0
      %v1778 = vadd.f32 %v1465, %v1777
      %v1779 = vpop.f32.mrb[0].mxu0
      %1780 = vmatprep.mubr.bf16.mxu0 0
      %1781 = vmatmul.mubr.bf16.gmra.mrb[0].mxu0 %v1666
      %v1782 = vpop.f32.mrb[0].mxu0
      %v1783 = vadd.f32 %v1470, %v1782
      %v1784 = vpop.f32.mrb[0].mxu0
      %v1785 = vpop.f32.mrb[0].mxu0
      %v1786 = vadd.f32 %v1473, %v1785
      %v1787 = vpop.f32.mrb[0].mxu0
      %1788 = vmatprep.mubr.bf16.mxu0 0
      %1789 = vmatmul.mubr.bf16.gmra.mrb[0].mxu0 %v1669
      %v1790 = vpop.f32.mrb[0].mxu0
      %v1791 = vadd.f32 %v1478, %v1790
      %v1792 = vpop.f32.mrb[0].mxu0
      %v1793 = vpop.f32.mrb[0].mxu0
      %v1794 = vadd.f32 %v1481, %v1793
      %v1795 = vpop.f32.mrb[0].mxu0
      %1796 = vmatprep.mubr.bf16.mxu0 0
      %1797 = vmatmul.mubr.bf16.gmra.mrb[0].mxu0 %v1672
      %v1798 = vpop.f32.mrb[0].mxu0
      %v1799 = vadd.f32 %v1486, %v1798
      %v1800 = vpop.f32.mrb[0].mxu0
      %v1801 = vpop.f32.mrb[0].mxu0
      %v1802 = vadd.f32 %v1489, %v1801
      %v1803 = vpop.f32.mrb[0].mxu0
      %1804 = vmatprep.mubr.bf16.mxu0 0
      %1805 = vmatmul.mubr.bf16.gmra.mrb[0].mxu0 %v1675
      %v1806 = vpop.f32.mrb[0].mxu0
      %v1807 = vadd.f32 %v1494, %v1806
      %v1808 = vpop.f32.mrb[0].mxu0
      %v1809 = vpop.f32.mrb[0].mxu0
      %v1810 = vadd.f32 %v1497, %v1809
      %v1811 = vpop.f32.mrb[0].mxu0
      %1812 = vmatprep.mubr.bf16.mxu0 0
      %1813 = vmatmul.mubr.bf16.gmra.mrb[0].mxu0 %v1678
      %v1814 = vpop.f32.mrb[0].mxu0
      %v1815 = vadd.f32 %v1502, %v1814
      %v1816 = vpop.f32.mrb[0].mxu0
      %v1817 = vpop.f32.mrb[0].mxu0
      %v1818 = vadd.f32 %v1505, %v1817
      %v1819 = vpop.f32.mrb[0].mxu0
      %1820 = vmatprep.mubr.bf16.mxu0 0
      %1821 = vmatmul.mubr.bf16.gmra.mrb[0].mxu0 %v1681
      %v1822 = vpop.f32.mrb[0].mxu0
      %v1823 = vadd.f32 %v1510, %v1822
      %v1824 = vpop.f32.mrb[0].mxu0
      %v1825 = vpop.f32.mrb[0].mxu0
      %v1826 = vadd.f32 %v1513, %v1825
      %v1827 = vpop.f32.mrb[0].mxu0
      %1828 = vmatprep.mubr.bf16.mxu0 0
      %1829 = vmatmul.mubr.bf16.gmra.mrb[0].mxu0 %v1684
      %v1830 = vpop.f32.mrb[0].mxu0
      %v1831 = vadd.f32 %v1518, %v1830
      %v1832 = vpop.f32.mrb[0].mxu0
      %v1833 = vpop.f32.mrb[0].mxu0
      %v1834 = vadd.f32 %v1521, %v1833
      %v1835 = vpop.f32.mrb[0].mxu0
      %1836 = vmatprep.mubr.bf16.mxu0 0
      %1837 = vmatmul.mubr.bf16.gmra.mrb[0].mxu0 %v1687
      %v1838 = vpop.f32.mrb[0].mxu0
      %v1839 = vadd.f32 %v1526, %v1838
      %v1840 = vpop.f32.mrb[0].mxu0
      %v1841 = vpop.f32.mrb[0].mxu0
      %v1842 = vadd.f32 %v1529, %v1841
      %v1843 = vpop.f32.mrb[0].mxu0
      %1844 = vmatprep.mubr.bf16.mxu0 0
      %1845 = vmatmul.mubr.bf16.gmra.mrb[0].mxu0 %v1690
      %v1846 = vpop.f32.mrb[0].mxu0
      %v1847 = vadd.f32 %v1534, %v1846
      %v1848 = vpop.f32.mrb[0].mxu0
      %v1849 = vpop.f32.mrb[0].mxu0
      %v1850 = vadd.f32 %v1537, %v1849
      %v1851 = vpop.f32.mrb[0].mxu0
      %1852 = vdwg.mxu0
      %v1853 = vld [vmem:[#allocation2] sm:$0xe]
      %v1854 = vld [vmem:[#allocation2 + $0xc] sm:$0xe]
      %v1855 = vld [vmem:[#allocation2 + $0x18] sm:$0xe]
      %v1856 = vld [vmem:[#allocation2 + $0x24] sm:$0xe]
      %v1857 = vld [vmem:[#allocation2 + $0x30] sm:$0xe]
      %v1858 = vld [vmem:[#allocation2 + $0x3c] sm:$0xe]
      %v1859 = vld [vmem:[#allocation2 + $0x48] sm:$0xe]
      %v1860 = vld [vmem:[#allocation2 + $0x54] sm:$0xe]
      %v1861 = vld [vmem:[#allocation2 + $0x60] sm:$0xe]
      %v1862 = vld [vmem:[#allocation2 + $0x6c] sm:$0xe]
      %v1863 = vld [vmem:[#allocation2 + $0x78] sm:$0xe]
      %v1864 = vld [vmem:[#allocation2 + $0x84] sm:$0xe]
      %v1865 = vld [vmem:[#allocation2 + $0x90] sm:$0xe]
      %v1866 = vld [vmem:[#allocation2 + $0x9c] sm:$0xe]
      %v1867 = vld [vmem:[#allocation2 + $0xa8] sm:$0xe]
      %v1868 = vld [vmem:[#allocation2 + $0xb4] sm:$0xe]
      %vm1901 = vcmask 1042432
      %vm1902 = vcmask 1046532
      %vm1903 = vmor %vm1901, %vm1902
      %v1904 = vrot.slane %v1853, 5
      %v1905 = vrot.slane %v1904, 4
      %v1906 = vrot.slane %v807, 5
      %v1907 = vsel %vm1903, %v1905, %v1906
      %v1908 = vrot.slane %v1906, 4
      %v1909 = vrot.slane %v846, 5
      %v1910 = vsel %vm1903, %v1908, %v1909
      %v1911 = vrot.slane %v1854, 5
      %v1912 = vrot.slane %v1911, 4
      %v1913 = vrot.slane %v809, 5
      %v1914 = vsel %vm1903, %v1912, %v1913
      %v1915 = vrot.slane %v1913, 4
      %v1916 = vrot.slane %v847, 5
      %v1917 = vsel %vm1903, %v1915, %v1916
      %v1918 = vrot.slane %v1855, 5
      %v1919 = vrot.slane %v1918, 4
      %v1920 = vrot.slane %v811, 5
      %v1921 = vsel %vm1903, %v1919, %v1920
      %v1922 = vrot.slane %v1920, 4
      %v1923 = vrot.slane %v848, 5
      %v1924 = vsel %vm1903, %v1922, %v1923
      %v1925 = vrot.slane %v1856, 5
      %v1926 = vrot.slane %v1925, 4
      %v1927 = vrot.slane %v813, 5
      %v1928 = vsel %vm1903, %v1926, %v1927
      %v1929 = vrot.slane %v1927, 4
      %v1930 = vrot.slane %v849, 5
      %v1931 = vsel %vm1903, %v1929, %v1930
      %v1932 = vrot.slane %v1857, 5
      %v1933 = vrot.slane %v1932, 4
      %v1934 = vrot.slane %v815, 5
      %v1935 = vsel %vm1903, %v1933, %v1934
      %v1936 = vrot.slane %v1934, 4
      %v1937 = vrot.slane %v850, 5
      %v1938 = vsel %vm1903, %v1936, %v1937
      %v1939 = vrot.slane %v1858, 5
      %v1940 = vrot.slane %v1939, 4
      %v1941 = vrot.slane %v817, 5
      %v1942 = vsel %vm1903, %v1940, %v1941
      %v1943 = vrot.slane %v1941, 4
      %v1944 = vrot.slane %v851, 5
      %v1945 = vsel %vm1903, %v1943, %v1944
      %v1946 = vrot.slane %v1859, 5
      %v1947 = vrot.slane %v1946, 4
      %v1948 = vrot.slane %v819, 5
      %v1949 = vsel %vm1903, %v1947, %v1948
      %v1950 = vrot.slane %v1948, 4
      %v1951 = vrot.slane %v852, 5
      %v1952 = vsel %vm1903, %v1950, %v1951
      %v1953 = vrot.slane %v1860, 5
      %v1954 = vrot.slane %v1953, 4
      %v1955 = vrot.slane %v821, 5
      %v1956 = vsel %vm1903, %v1954, %v1955
      %v1957 = vrot.slane %v1955, 4
      %v1958 = vrot.slane %v853, 5
      %v1959 = vsel %vm1903, %v1957, %v1958
      %v1960 = vrot.slane %v1861, 5
      %v1961 = vrot.slane %v1960, 4
      %v1962 = vrot.slane %v823, 5
      %v1963 = vsel %vm1903, %v1961, %v1962
      %v1964 = vrot.slane %v1962, 4
      %v1965 = vrot.slane %v854, 5
      %v1966 = vsel %vm1903, %v1964, %v1965
      %v1967 = vrot.slane %v1862, 5
      %v1968 = vrot.slane %v1967, 4
      %v1969 = vrot.slane %v825, 5
      %v1970 = vsel %vm1903, %v1968, %v1969
      %v1971 = vrot.slane %v1969, 4
      %v1972 = vrot.slane %v855, 5
      %v1973 = vsel %vm1903, %v1971, %v1972
      %v1974 = vrot.slane %v1863, 5
      %v1975 = vrot.slane %v1974, 4
      %v1976 = vrot.slane %v827, 5
      %v1977 = vsel %vm1903, %v1975, %v1976
      %v1978 = vrot.slane %v1976, 4
      %v1979 = vrot.slane %v856, 5
      %v1980 = vsel %vm1903, %v1978, %v1979
      %v1981 = vrot.slane %v1864, 5
      %v1982 = vrot.slane %v1981, 4
      %v1983 = vrot.slane %v829, 5
      %v1984 = vsel %vm1903, %v1982, %v1983
      %v1985 = vrot.slane %v1983, 4
      %v1986 = vrot.slane %v857, 5
      %v1987 = vsel %vm1903, %v1985, %v1986
      %v1988 = vrot.slane %v1865, 5
      %v1989 = vrot.slane %v1988, 4
      %v1990 = vrot.slane %v831, 5
      %v1991 = vsel %vm1903, %v1989, %v1990
      %v1992 = vrot.slane %v1990, 4
      %v1993 = vrot.slane %v858, 5
      %v1994 = vsel %vm1903, %v1992, %v1993
      %v1995 = vrot.slane %v1866, 5
      %v1996 = vrot.slane %v1995, 4
      %v1997 = vrot.slane %v833, 5
      %v1998 = vsel %vm1903, %v1996, %v1997
      %v1999 = vrot.slane %v1997, 4
      %v2000 = vrot.slane %v859, 5
      %v2001 = vsel %vm1903, %v1999, %v2000
      %v2002 = vrot.slane %v1867, 5
      %v2003 = vrot.slane %v2002, 4
      %v2004 = vrot.slane %v835, 5
      %v2005 = vsel %vm1903, %v2003, %v2004
      %v2006 = vrot.slane %v2004, 4
      %v2007 = vrot.slane %v860, 5
      %v2008 = vsel %vm1903, %v2006, %v2007
      %v2009 = vrot.slane %v1868, 5
      %v2010 = vrot.slane %v2009, 4
      %v2011 = vrot.slane %v837, 5
      %v2012 = vsel %vm1903, %v2010, %v2011
      %v2013 = vrot.slane %v2011, 4
      %v2014 = vrot.slane %v861, 5
      %v2015 = vsel %vm1903, %v2013, %v2014
      %s2016 = scalar_lea.vmem %s1, 64
      %v2017 = vld [vmem:[%s2016] sm:$0xf]
      %v2018 = vld [vmem:[%s2016 + $0x4] sm:$0xf]
      %v2019 = vld [vmem:[%s2016 + $0x8] sm:$0xf]
      %v2020 = vld [vmem:[%s2016 + $0xc] sm:$0xf]
      %v2021 = vld [vmem:[%s2016 + $0x10] sm:$0xf]
      %v2022 = vld [vmem:[%s2016 + $0x14] sm:$0xf]
      %v2023 = vld [vmem:[%s2016 + $0x18] sm:$0xf]
      %v2024 = vld [vmem:[%s2016 + $0x1c] sm:$0xf]
      %v2025 = vunpack.c.l.b16 %v1907
      %v2026 = vunpack.c.l.b16 %v1910
      %v2027 = vunpack.c.l.b16 %v1914
      %v2028 = vunpack.c.l.b16 %v1917
      %v2029 = vunpack.c.l.b16 %v1921
      %v2030 = vunpack.c.l.b16 %v1924
      %v2031 = vunpack.c.l.b16 %v1928
      %v2032 = vunpack.c.l.b16 %v1931
      %v2033 = vunpack.c.l.b16 %v1935
      %v2034 = vunpack.c.l.b16 %v1938
      %v2035 = vunpack.c.l.b16 %v1942
      %v2036 = vunpack.c.l.b16 %v1945
      %v2037 = vunpack.c.l.b16 %v1949
      %v2038 = vunpack.c.l.b16 %v1952
      %v2039 = vunpack.c.l.b16 %v1956
      %v2040 = vunpack.c.l.b16 %v1959
      %v2041 = vunpack.c.l.b16 %v1963
      %v2042 = vunpack.c.l.b16 %v1966
      %v2043 = vunpack.c.l.b16 %v1970
      %v2044 = vunpack.c.l.b16 %v1973
      %v2045 = vunpack.c.l.b16 %v1977
      %v2046 = vunpack.c.l.b16 %v1980
      %v2047 = vunpack.c.l.b16 %v1984
      %v2048 = vunpack.c.l.b16 %v1987
      %v2049 = vunpack.c.l.b16 %v1991
      %v2050 = vunpack.c.l.b16 %v1994
      %v2051 = vunpack.c.l.b16 %v1998
      %v2052 = vunpack.c.l.b16 %v2001
      %v2053 = vunpack.c.l.b16 %v2005
      %v2054 = vunpack.c.l.b16 %v2008
      %v2055 = vunpack.c.l.b16 %v2012
      %v2056 = vunpack.c.l.b16 %v2015
      %v2057 = vpack.c.b16 %v2026, %v2025
      %v2058 = vpack.c.b16 %v2028, %v2027
      %v2059 = vpack.c.b16 %v2030, %v2029
      %v2060 = vpack.c.b16 %v2032, %v2031
      %v2061 = vpack.c.b16 %v2034, %v2033
      %v2062 = vpack.c.b16 %v2036, %v2035
      %v2063 = vpack.c.b16 %v2038, %v2037
      %v2064 = vpack.c.b16 %v2040, %v2039
      %v2065 = vpack.c.b16 %v2042, %v2041
      %v2066 = vpack.c.b16 %v2044, %v2043
      %v2067 = vpack.c.b16 %v2046, %v2045
      %v2068 = vpack.c.b16 %v2048, %v2047
      %v2069 = vpack.c.b16 %v2050, %v2049
      %v2070 = vpack.c.b16 %v2052, %v2051
      %v2071 = vpack.c.b16 %v2054, %v2053
      %v2072 = vpack.c.b16 %v2056, %v2055
      %v2081 = vunpack.c.l.b16 %v2017
      %v2082 = vunpack.c.l.b16 %v2018
      %v2083 = vunpack.c.l.b16 %v2019
      %v2084 = vunpack.c.l.b16 %v2020
      %v2085 = vunpack.c.l.b16 %v2021
      %v2086 = vunpack.c.l.b16 %v2022
      %v2087 = vunpack.c.l.b16 %v2023
      %v2088 = vunpack.c.l.b16 %v2024
      %v2089 = vpack.c.b16 %v2082, %v2081
      %v2090 = vpack.c.b16 %v2084, %v2083
      %v2091 = vpack.c.b16 %v2086, %v2085
      %v2092 = vpack.c.b16 %v2088, %v2087
      %v2098 = vsel %vm1330, %v2057, 0
      %v2101 = vsel %vm1330, %v2058, 0
      %v2104 = vsel %vm1330, %v2059, 0
      %v2107 = vsel %vm1330, %v2060, 0
      %v2110 = vsel %vm1330, %v2061, 0
      %v2113 = vsel %vm1330, %v2062, 0
      %v2116 = vsel %vm1330, %v2063, 0
      %v2119 = vsel %vm1330, %v2064, 0
      %v2122 = vsel %vm1330, %v2065, 0
      %v2125 = vsel %vm1330, %v2066, 0
      %v2128 = vsel %vm1330, %v2067, 0
      %v2131 = vsel %vm1330, %v2068, 0
      %v2134 = vsel %vm1330, %v2069, 0
      %v2137 = vsel %vm1330, %v2070, 0
      %v2140 = vsel %vm1330, %v2071, 0
      %v2143 = vsel %vm1330, %v2072, 0
      %2145 = vmatprep.subr.bf16.mxu0 0
      %2146 = vmatpush1.bf16.msra.mxu0 %v2089
      %2147 = vmatprep.subr.bf16.mxu0 0
      %2148 = vmatpush1.bf16.msra.mxu0 %v2090
      %2149 = vmatprep.subr.bf16.mxu0 0
      %2150 = vmatpush1.bf16.msra.mxu0 %v2091
      %2151 = vmatprep.subr.bf16.mxu0 0
      %2152 = vmatpush1.bf16.msra.mxu0 %v2092
      %2153 = vmatprep.subr.bf16.mxu0 0
      %2154 = vmatpush1.bf16.msra.mxu0 0
      %2155 = vmatprep.subr.bf16.mxu0 0
      %2156 = vmatpush1.bf16.msra.mxu0 0
      %2157 = vmatprep.subr.bf16.mxu0 0
      %2158 = vmatpush1.bf16.msra.mxu0 0
      %2159 = vmatprep.subr.bf16.mxu0 0
      %2160 = vmatpush1.bf16.msra.mxu0 0
      %2161 = vmatprep.subr.bf16.mxu0 0
      %2162 = vmatpush1.bf16.msra.mxu0 0
      %2163 = vmatprep.subr.bf16.mxu0 0
      %2164 = vmatpush1.bf16.msra.mxu0 0
      %2165 = vmatprep.subr.bf16.mxu0 0
      %2166 = vmatpush1.bf16.msra.mxu0 0
      %2167 = vmatprep.subr.bf16.mxu0 0
      %2168 = vmatpush1.bf16.msra.mxu0 0
      %2169 = vmatprep.subr.bf16.mxu0 0
      %2170 = vmatpush1.bf16.msra.mxu0 0
      %2171 = vmatprep.subr.bf16.mxu0 0
      %2172 = vmatpush1.bf16.msra.mxu0 0
      %2173 = vmatprep.subr.bf16.mxu0 0
      %2174 = vmatpush1.bf16.msra.mxu0 0
      %2175 = vmatprep.subr.bf16.mxu0 0
      %2176 = vmatpush1.bf16.msra.mxu0 0
      %2177 = vmatprep.mubr.bf16.mxu0 0
      %2178 = vmatmul.mubr.bf16.gmra.mrb[0].mxu0 %v2098
      %v2179 = vpop.f32.mrb[0].mxu0
      %v2180 = vadd.f32 0.0, %v2179
      %v2181 = vpop.f32.mrb[0].mxu0
      %v2182 = vpop.f32.mrb[0].mxu0
      %v2183 = vadd.f32 0.0, %v2182
      %v2184 = vpop.f32.mrb[0].mxu0
      %2185 = vmatprep.mubr.bf16.mxu0 0
      %2186 = vmatmul.mubr.bf16.gmra.mrb[0].mxu0 %v2101
      %v2187 = vpop.f32.mrb[0].mxu0
      %v2188 = vadd.f32 0.0, %v2187
      %v2189 = vpop.f32.mrb[0].mxu0
      %v2190 = vpop.f32.mrb[0].mxu0
      %v2191 = vadd.f32 0.0, %v2190
      %v2192 = vpop.f32.mrb[0].mxu0
      %2193 = vmatprep.mubr.bf16.mxu0 0
      %2194 = vmatmul.mubr.bf16.gmra.mrb[0].mxu0 %v2104
      %v2195 = vpop.f32.mrb[0].mxu0
      %v2196 = vadd.f32 0.0, %v2195
      %v2197 = vpop.f32.mrb[0].mxu0
      %v2198 = vpop.f32.mrb[0].mxu0
      %v2199 = vadd.f32 0.0, %v2198
      %v2200 = vpop.f32.mrb[0].mxu0
      %2201 = vmatprep.mubr.bf16.mxu0 0
      %2202 = vmatmul.mubr.bf16.gmra.mrb[0].mxu0 %v2107
      %v2203 = vpop.f32.mrb[0].mxu0
      %v2204 = vadd.f32 0.0, %v2203
      %v2205 = vpop.f32.mrb[0].mxu0
      %v2206 = vpop.f32.mrb[0].mxu0
      %v2207 = vadd.f32 0.0, %v2206
      %v2208 = vpop.f32.mrb[0].mxu0
      %2209 = vmatprep.mubr.bf16.mxu0 0
      %2210 = vmatmul.mubr.bf16.gmra.mrb[0].mxu0 %v2110
      %v2211 = vpop.f32.mrb[0].mxu0
      %v2212 = vadd.f32 0.0, %v2211
      %v2213 = vpop.f32.mrb[0].mxu0
      %v2214 = vpop.f32.mrb[0].mxu0
      %v2215 = vadd.f32 0.0, %v2214
      %v2216 = vpop.f32.mrb[0].mxu0
      %2217 = vmatprep.mubr.bf16.mxu0 0
      %2218 = vmatmul.mubr.bf16.gmra.mrb[0].mxu0 %v2113
      %v2219 = vpop.f32.mrb[0].mxu0
      %v2220 = vadd.f32 0.0, %v2219
      %v2221 = vpop.f32.mrb[0].mxu0
      %v2222 = vpop.f32.mrb[0].mxu0
      %v2223 = vadd.f32 0.0, %v2222
      %v2224 = vpop.f32.mrb[0].mxu0
      %2225 = vmatprep.mubr.bf16.mxu0 0
      %2226 = vmatmul.mubr.bf16.gmra.mrb[0].mxu0 %v2116
      %v2227 = vpop.f32.mrb[0].mxu0
      %v2228 = vadd.f32 0.0, %v2227
      %v2229 = vpop.f32.mrb[0].mxu0
      %v2230 = vpop.f32.mrb[0].mxu0
      %v2231 = vadd.f32 0.0, %v2230
      %v2232 = vpop.f32.mrb[0].mxu0
      %2233 = vmatprep.mubr.bf16.mxu0 0
      %2234 = vmatmul.mubr.bf16.gmra.mrb[0].mxu0 %v2119
      %v2235 = vpop.f32.mrb[0].mxu0
      %v2236 = vadd.f32 0.0, %v2235
      %v2237 = vpop.f32.mrb[0].mxu0
      %v2238 = vpop.f32.mrb[0].mxu0
      %v2239 = vadd.f32 0.0, %v2238
      %v2240 = vpop.f32.mrb[0].mxu0
      %2241 = vmatprep.mubr.bf16.mxu0 0
      %2242 = vmatmul.mubr.bf16.gmra.mrb[0].mxu0 %v2122
      %v2243 = vpop.f32.mrb[0].mxu0
      %v2244 = vadd.f32 0.0, %v2243
      %v2245 = vpop.f32.mrb[0].mxu0
      %v2246 = vpop.f32.mrb[0].mxu0
      %v2247 = vadd.f32 0.0, %v2246
      %v2248 = vpop.f32.mrb[0].mxu0
      %2249 = vmatprep.mubr.bf16.mxu0 0
      %2250 = vmatmul.mubr.bf16.gmra.mrb[0].mxu0 %v2125
      %v2251 = vpop.f32.mrb[0].mxu0
      %v2252 = vadd.f32 0.0, %v2251
      %v2253 = vpop.f32.mrb[0].mxu0
      %v2254 = vpop.f32.mrb[0].mxu0
      %v2255 = vadd.f32 0.0, %v2254
      %v2256 = vpop.f32.mrb[0].mxu0
      %2257 = vmatprep.mubr.bf16.mxu0 0
      %2258 = vmatmul.mubr.bf16.gmra.mrb[0].mxu0 %v2128
      %v2259 = vpop.f32.mrb[0].mxu0
      %v2260 = vadd.f32 0.0, %v2259
      %v2261 = vpop.f32.mrb[0].mxu0
      %v2262 = vpop.f32.mrb[0].mxu0
      %v2263 = vadd.f32 0.0, %v2262
      %v2264 = vpop.f32.mrb[0].mxu0
      %2265 = vmatprep.mubr.bf16.mxu0 0
      %2266 = vmatmul.mubr.bf16.gmra.mrb[0].mxu0 %v2131
      %v2267 = vpop.f32.mrb[0].mxu0
      %v2268 = vadd.f32 0.0, %v2267
      %v2269 = vpop.f32.mrb[0].mxu0
      %v2270 = vpop.f32.mrb[0].mxu0
      %v2271 = vadd.f32 0.0, %v2270
      %v2272 = vpop.f32.mrb[0].mxu0
      %2273 = vmatprep.mubr.bf16.mxu0 0
      %2274 = vmatmul.mubr.bf16.gmra.mrb[0].mxu0 %v2134
      %v2275 = vpop.f32.mrb[0].mxu0
      %v2276 = vadd.f32 0.0, %v2275
      %v2277 = vpop.f32.mrb[0].mxu0
      %v2278 = vpop.f32.mrb[0].mxu0
      %v2279 = vadd.f32 0.0, %v2278
      %v2280 = vpop.f32.mrb[0].mxu0
      %2281 = vmatprep.mubr.bf16.mxu0 0
      %2282 = vmatmul.mubr.bf16.gmra.mrb[0].mxu0 %v2137
      %v2283 = vpop.f32.mrb[0].mxu0
      %v2284 = vadd.f32 0.0, %v2283
      %v2285 = vpop.f32.mrb[0].mxu0
      %v2286 = vpop.f32.mrb[0].mxu0
      %v2287 = vadd.f32 0.0, %v2286
      %v2288 = vpop.f32.mrb[0].mxu0
      %2289 = vmatprep.mubr.bf16.mxu0 0
      %2290 = vmatmul.mubr.bf16.gmra.mrb[0].mxu0 %v2140
      %v2291 = vpop.f32.mrb[0].mxu0
      %v2292 = vadd.f32 0.0, %v2291
      %v2293 = vpop.f32.mrb[0].mxu0
      %v2294 = vpop.f32.mrb[0].mxu0
      %v2295 = vadd.f32 0.0, %v2294
      %v2296 = vpop.f32.mrb[0].mxu0
      %2297 = vmatprep.mubr.bf16.mxu0 0
      %2298 = vmatmul.mubr.bf16.gmra.mrb[0].mxu0 %v2143
      %v2299 = vpop.f32.mrb[0].mxu0
      %v2300 = vadd.f32 0.0, %v2299
      %v2301 = vpop.f32.mrb[0].mxu0
      %v2302 = vpop.f32.mrb[0].mxu0
      %v2303 = vadd.f32 0.0, %v2302
      %v2304 = vpop.f32.mrb[0].mxu0
      %2305 = vdwg.mxu0
      %v2306 = vadd.f32 %v1727, %v2180
      %v2307 = vadd.f32 %v1730, %v2183
      %v2308 = vadd.f32 %v1735, %v2188
      %v2309 = vadd.f32 %v1738, %v2191
      %v2310 = vadd.f32 %v1743, %v2196
      %v2311 = vadd.f32 %v1746, %v2199
      %v2312 = vadd.f32 %v1751, %v2204
      %v2313 = vadd.f32 %v1754, %v2207
      %v2314 = vadd.f32 %v1759, %v2212
      %v2315 = vadd.f32 %v1762, %v2215
      %v2316 = vadd.f32 %v1767, %v2220
      %v2317 = vadd.f32 %v1770, %v2223
      %v2318 = vadd.f32 %v1775, %v2228
      %v2319 = vadd.f32 %v1778, %v2231
      %v2320 = vadd.f32 %v1783, %v2236
      %v2321 = vadd.f32 %v1786, %v2239
      %v2322 = vadd.f32 %v1791, %v2244
      %v2323 = vadd.f32 %v1794, %v2247
      %v2324 = vadd.f32 %v1799, %v2252
      %v2325 = vadd.f32 %v1802, %v2255
      %v2326 = vadd.f32 %v1807, %v2260
      %v2327 = vadd.f32 %v1810, %v2263
      %v2328 = vadd.f32 %v1815, %v2268
      %v2329 = vadd.f32 %v1818, %v2271
      %v2330 = vadd.f32 %v1823, %v2276
      %v2331 = vadd.f32 %v1826, %v2279
      %v2332 = vadd.f32 %v1831, %v2284
      %v2333 = vadd.f32 %v1834, %v2287
      %v2334 = vadd.f32 %v1839, %v2292
      %v2335 = vadd.f32 %v1842, %v2295
      %v2336 = vadd.f32 %v1847, %v2300
      %v2337 = vadd.f32 %v1850, %v2303
      %v2338 = vld [vmem:[%s267] sm:$0xf]
      %v2339 = vld [vmem:[%s267 + $0x4] sm:$0xf]
      %v2340 = vld [vmem:[%s267 + $0xc] sm:$0xf]
      %v2341 = vld [vmem:[%s267 + $0x10] sm:$0xf]
      %v2342 = vld [vmem:[%s267 + $0x18] sm:$0xf]
      %v2343 = vld [vmem:[%s267 + $0x1c] sm:$0xf]
      %v2344 = vld [vmem:[%s267 + $0x24] sm:$0xf]
      %v2345 = vld [vmem:[%s267 + $0x28] sm:$0xf]
      %v2346 = vld [vmem:[%s267 + $0x30] sm:$0xf]
      %v2347 = vld [vmem:[%s267 + $0x34] sm:$0xf]
      %v2348 = vld [vmem:[%s267 + $0x3c] sm:$0xf]
      %v2349 = vld [vmem:[%s267 + $0x40] sm:$0xf]
      %v2350 = vld [vmem:[%s267 + $0x48] sm:$0xf]
      %v2351 = vld [vmem:[%s267 + $0x4c] sm:$0xf]
      %v2352 = vld [vmem:[%s267 + $0x54] sm:$0xf]
      %v2353 = vld [vmem:[%s267 + $0x58] sm:$0xf]
      %v2354 = vld [vmem:[%s267 + $0x60] sm:$0xf]
      %v2355 = vld [vmem:[%s267 + $0x64] sm:$0xf]
      %v2356 = vld [vmem:[%s267 + $0x6c] sm:$0xf]
      %v2357 = vld [vmem:[%s267 + $0x70] sm:$0xf]
      %v2358 = vld [vmem:[%s267 + $0x78] sm:$0xf]
      %v2359 = vld [vmem:[%s267 + $0x7c] sm:$0xf]
      %v2360 = vld [vmem:[%s267 + $0x84] sm:$0xf]
      %v2361 = vld [vmem:[%s267 + $0x88] sm:$0xf]
      %v2362 = vld [vmem:[%s267 + $0x90] sm:$0xf]
      %v2363 = vld [vmem:[%s267 + $0x94] sm:$0xf]
      %v2364 = vld [vmem:[%s267 + $0x9c] sm:$0xf]
      %v2365 = vld [vmem:[%s267 + $0xa0] sm:$0xf]
      %v2366 = vld [vmem:[%s267 + $0xa8] sm:$0xf]
      %v2367 = vld [vmem:[%s267 + $0xac] sm:$0xf]
      %v2368 = vld [vmem:[%s267 + $0xb4] sm:$0xf]
      %v2369 = vld [vmem:[%s267 + $0xb8] sm:$0xf]
      %s2370 = scalar_lea.vmem %s1, 96
      %v2371 = vld [vmem:[%s2370] sm:$0xf]
      %v2372 = vld [vmem:[%s2370 + $0x4] sm:$0xf]
      %v2373 = vld [vmem:[%s2370 + $0x8] sm:$0xf]
      %v2374 = vld [vmem:[%s2370 + $0xc] sm:$0xf]
      %v2375 = vld [vmem:[%s2370 + $0x10] sm:$0xf]
      %v2376 = vld [vmem:[%s2370 + $0x14] sm:$0xf]
      %v2377 = vld [vmem:[%s2370 + $0x18] sm:$0xf]
      %v2378 = vld [vmem:[%s2370 + $0x1c] sm:$0xf]
      %v2411 = vunpack.c.l.b16 %v2338
      %v2412 = vunpack.c.l.b16 %v2339
      %v2413 = vunpack.c.l.b16 %v2340
      %v2414 = vunpack.c.l.b16 %v2341
      %v2415 = vunpack.c.l.b16 %v2342
      %v2416 = vunpack.c.l.b16 %v2343
      %v2417 = vunpack.c.l.b16 %v2344
      %v2418 = vunpack.c.l.b16 %v2345
      %v2419 = vunpack.c.l.b16 %v2346
      %v2420 = vunpack.c.l.b16 %v2347
      %v2421 = vunpack.c.l.b16 %v2348
      %v2422 = vunpack.c.l.b16 %v2349
      %v2423 = vunpack.c.l.b16 %v2350
      %v2424 = vunpack.c.l.b16 %v2351
      %v2425 = vunpack.c.l.b16 %v2352
      %v2426 = vunpack.c.l.b16 %v2353
      %v2427 = vunpack.c.l.b16 %v2354
      %v2428 = vunpack.c.l.b16 %v2355
      %v2429 = vunpack.c.l.b16 %v2356
      %v2430 = vunpack.c.l.b16 %v2357
      %v2431 = vunpack.c.l.b16 %v2358
      %v2432 = vunpack.c.l.b16 %v2359
      %v2433 = vunpack.c.l.b16 %v2360
      %v2434 = vunpack.c.l.b16 %v2361
      %v2435 = vunpack.c.l.b16 %v2362
      %v2436 = vunpack.c.l.b16 %v2363
      %v2437 = vunpack.c.l.b16 %v2364
      %v2438 = vunpack.c.l.b16 %v2365
      %v2439 = vunpack.c.l.b16 %v2366
      %v2440 = vunpack.c.l.b16 %v2367
      %v2441 = vunpack.c.l.b16 %v2368
      %v2442 = vunpack.c.l.b16 %v2369
      %v2443 = vpack.c.b16 %v2412, %v2411
      %v2444 = vpack.c.b16 %v2414, %v2413
      %v2445 = vpack.c.b16 %v2416, %v2415
      %v2446 = vpack.c.b16 %v2418, %v2417
      %v2447 = vpack.c.b16 %v2420, %v2419
      %v2448 = vpack.c.b16 %v2422, %v2421
      %v2449 = vpack.c.b16 %v2424, %v2423
      %v2450 = vpack.c.b16 %v2426, %v2425
      %v2451 = vpack.c.b16 %v2428, %v2427
      %v2452 = vpack.c.b16 %v2430, %v2429
      %v2453 = vpack.c.b16 %v2432, %v2431
      %v2454 = vpack.c.b16 %v2434, %v2433
      %v2455 = vpack.c.b16 %v2436, %v2435
      %v2456 = vpack.c.b16 %v2438, %v2437
      %v2457 = vpack.c.b16 %v2440, %v2439
      %v2458 = vpack.c.b16 %v2442, %v2441
      %v2467 = vunpack.c.l.b16 %v2371
      %v2468 = vunpack.c.l.b16 %v2372
      %v2469 = vunpack.c.l.b16 %v2373
      %v2470 = vunpack.c.l.b16 %v2374
      %v2471 = vunpack.c.l.b16 %v2375
      %v2472 = vunpack.c.l.b16 %v2376
      %v2473 = vunpack.c.l.b16 %v2377
      %v2474 = vunpack.c.l.b16 %v2378
      %v2475 = vpack.c.b16 %v2468, %v2467
      %v2476 = vpack.c.b16 %v2470, %v2469
      %v2477 = vpack.c.b16 %v2472, %v2471
      %v2478 = vpack.c.b16 %v2474, %v2473
      %v2484 = vsel %vm1330, %v2443, 0
      %v2487 = vsel %vm1330, %v2444, 0
      %v2490 = vsel %vm1330, %v2445, 0
      %v2493 = vsel %vm1330, %v2446, 0
      %v2496 = vsel %vm1330, %v2447, 0
      %v2499 = vsel %vm1330, %v2448, 0
      %v2502 = vsel %vm1330, %v2449, 0
      %v2505 = vsel %vm1330, %v2450, 0
      %v2508 = vsel %vm1330, %v2451, 0
      %v2511 = vsel %vm1330, %v2452, 0
      %v2514 = vsel %vm1330, %v2453, 0
      %v2517 = vsel %vm1330, %v2454, 0
      %v2520 = vsel %vm1330, %v2455, 0
      %v2523 = vsel %vm1330, %v2456, 0
      %v2526 = vsel %vm1330, %v2457, 0
      %v2529 = vsel %vm1330, %v2458, 0
      %2531 = vmatprep.subr.bf16.mxu0 0
      %2532 = vmatpush1.bf16.msra.mxu0 %v2475
      %2533 = vmatprep.subr.bf16.mxu0 0
      %2534 = vmatpush1.bf16.msra.mxu0 %v2476
      %2535 = vmatprep.subr.bf16.mxu0 0
      %2536 = vmatpush1.bf16.msra.mxu0 %v2477
      %2537 = vmatprep.subr.bf16.mxu0 0
      %2538 = vmatpush1.bf16.msra.mxu0 %v2478
      %2539 = vmatprep.subr.bf16.mxu0 0
      %2540 = vmatpush1.bf16.msra.mxu0 0
      %2541 = vmatprep.subr.bf16.mxu0 0
      %2542 = vmatpush1.bf16.msra.mxu0 0
      %2543 = vmatprep.subr.bf16.mxu0 0
      %2544 = vmatpush1.bf16.msra.mxu0 0
      %2545 = vmatprep.subr.bf16.mxu0 0
      %2546 = vmatpush1.bf16.msra.mxu0 0
      %2547 = vmatprep.subr.bf16.mxu0 0
      %2548 = vmatpush1.bf16.msra.mxu0 0
      %2549 = vmatprep.subr.bf16.mxu0 0
      %2550 = vmatpush1.bf16.msra.mxu0 0
      %2551 = vmatprep.subr.bf16.mxu0 0
      %2552 = vmatpush1.bf16.msra.mxu0 0
      %2553 = vmatprep.subr.bf16.mxu0 0
      %2554 = vmatpush1.bf16.msra.mxu0 0
      %2555 = vmatprep.subr.bf16.mxu0 0
      %2556 = vmatpush1.bf16.msra.mxu0 0
      %2557 = vmatprep.subr.bf16.mxu0 0
      %2558 = vmatpush1.bf16.msra.mxu0 0
      %2559 = vmatprep.subr.bf16.mxu0 0
      %2560 = vmatpush1.bf16.msra.mxu0 0
      %2561 = vmatprep.subr.bf16.mxu0 0
      %2562 = vmatpush1.bf16.msra.mxu0 0
      %2563 = vmatprep.mubr.bf16.mxu0 0
      %2564 = vmatmul.mubr.bf16.gmra.mrb[0].mxu0 %v2484
      %v2565 = vpop.f32.mrb[0].mxu0
      %v2566 = vadd.f32 0.0, %v2565
      %v2567 = vpop.f32.mrb[0].mxu0
      %v2568 = vpop.f32.mrb[0].mxu0
      %v2569 = vadd.f32 0.0, %v2568
      %v2570 = vpop.f32.mrb[0].mxu0
      %2571 = vmatprep.mubr.bf16.mxu0 0
      %2572 = vmatmul.mubr.bf16.gmra.mrb[0].mxu0 %v2487
      %v2573 = vpop.f32.mrb[0].mxu0
      %v2574 = vadd.f32 0.0, %v2573
      %v2575 = vpop.f32.mrb[0].mxu0
      %v2576 = vpop.f32.mrb[0].mxu0
      %v2577 = vadd.f32 0.0, %v2576
      %v2578 = vpop.f32.mrb[0].mxu0
      %2579 = vmatprep.mubr.bf16.mxu0 0
      %2580 = vmatmul.mubr.bf16.gmra.mrb[0].mxu0 %v2490
      %v2581 = vpop.f32.mrb[0].mxu0
      %v2582 = vadd.f32 0.0, %v2581
      %v2583 = vpop.f32.mrb[0].mxu0
      %v2584 = vpop.f32.mrb[0].mxu0
      %v2585 = vadd.f32 0.0, %v2584
      %v2586 = vpop.f32.mrb[0].mxu0
      %2587 = vmatprep.mubr.bf16.mxu0 0
      %2588 = vmatmul.mubr.bf16.gmra.mrb[0].mxu0 %v2493
      %v2589 = vpop.f32.mrb[0].mxu0
      %v2590 = vadd.f32 0.0, %v2589
      %v2591 = vpop.f32.mrb[0].mxu0
      %v2592 = vpop.f32.mrb[0].mxu0
      %v2593 = vadd.f32 0.0, %v2592
      %v2594 = vpop.f32.mrb[0].mxu0
      %2595 = vmatprep.mubr.bf16.mxu0 0
      %2596 = vmatmul.mubr.bf16.gmra.mrb[0].mxu0 %v2496
      %v2597 = vpop.f32.mrb[0].mxu0
      %v2598 = vadd.f32 0.0, %v2597
      %v2599 = vpop.f32.mrb[0].mxu0
      %v2600 = vpop.f32.mrb[0].mxu0
      %v2601 = vadd.f32 0.0, %v2600
      %v2602 = vpop.f32.mrb[0].mxu0
      %2603 = vmatprep.mubr.bf16.mxu0 0
      %2604 = vmatmul.mubr.bf16.gmra.mrb[0].mxu0 %v2499
      %v2605 = vpop.f32.mrb[0].mxu0
      %v2606 = vadd.f32 0.0, %v2605
      %v2607 = vpop.f32.mrb[0].mxu0
      %v2608 = vpop.f32.mrb[0].mxu0
      %v2609 = vadd.f32 0.0, %v2608
      %v2610 = vpop.f32.mrb[0].mxu0
      %2611 = vmatprep.mubr.bf16.mxu0 0
      %2612 = vmatmul.mubr.bf16.gmra.mrb[0].mxu0 %v2502
      %v2613 = vpop.f32.mrb[0].mxu0
      %v2614 = vadd.f32 0.0, %v2613
      %v2615 = vpop.f32.mrb[0].mxu0
      %v2616 = vpop.f32.mrb[0].mxu0
      %v2617 = vadd.f32 0.0, %v2616
      %v2618 = vpop.f32.mrb[0].mxu0
      %2619 = vmatprep.mubr.bf16.mxu0 0
      %2620 = vmatmul.mubr.bf16.gmra.mrb[0].mxu0 %v2505
      %v2621 = vpop.f32.mrb[0].mxu0
      %v2622 = vadd.f32 0.0, %v2621
      %v2623 = vpop.f32.mrb[0].mxu0
      %v2624 = vpop.f32.mrb[0].mxu0
      %v2625 = vadd.f32 0.0, %v2624
      %v2626 = vpop.f32.mrb[0].mxu0
      %2627 = vmatprep.mubr.bf16.mxu0 0
      %2628 = vmatmul.mubr.bf16.gmra.mrb[0].mxu0 %v2508
      %v2629 = vpop.f32.mrb[0].mxu0
      %v2630 = vadd.f32 0.0, %v2629
      %v2631 = vpop.f32.mrb[0].mxu0
      %v2632 = vpop.f32.mrb[0].mxu0
      %v2633 = vadd.f32 0.0, %v2632
      %v2634 = vpop.f32.mrb[0].mxu0
      %2635 = vmatprep.mubr.bf16.mxu0 0
      %2636 = vmatmul.mubr.bf16.gmra.mrb[0].mxu0 %v2511
      %v2637 = vpop.f32.mrb[0].mxu0
      %v2638 = vadd.f32 0.0, %v2637
      %v2639 = vpop.f32.mrb[0].mxu0
      %v2640 = vpop.f32.mrb[0].mxu0
      %v2641 = vadd.f32 0.0, %v2640
      %v2642 = vpop.f32.mrb[0].mxu0
      %2643 = vmatprep.mubr.bf16.mxu0 0
      %2644 = vmatmul.mubr.bf16.gmra.mrb[0].mxu0 %v2514
      %v2645 = vpop.f32.mrb[0].mxu0
      %v2646 = vadd.f32 0.0, %v2645
      %v2647 = vpop.f32.mrb[0].mxu0
      %v2648 = vpop.f32.mrb[0].mxu0
      %v2649 = vadd.f32 0.0, %v2648
      %v2650 = vpop.f32.mrb[0].mxu0
      %2651 = vmatprep.mubr.bf16.mxu0 0
      %2652 = vmatmul.mubr.bf16.gmra.mrb[0].mxu0 %v2517
      %v2653 = vpop.f32.mrb[0].mxu0
      %v2654 = vadd.f32 0.0, %v2653
      %v2655 = vpop.f32.mrb[0].mxu0
      %v2656 = vpop.f32.mrb[0].mxu0
      %v2657 = vadd.f32 0.0, %v2656
      %v2658 = vpop.f32.mrb[0].mxu0
      %2659 = vmatprep.mubr.bf16.mxu0 0
      %2660 = vmatmul.mubr.bf16.gmra.mrb[0].mxu0 %v2520
      %v2661 = vpop.f32.mrb[0].mxu0
      %v2662 = vadd.f32 0.0, %v2661
      %v2663 = vpop.f32.mrb[0].mxu0
      %v2664 = vpop.f32.mrb[0].mxu0
      %v2665 = vadd.f32 0.0, %v2664
      %v2666 = vpop.f32.mrb[0].mxu0
      %2667 = vmatprep.mubr.bf16.mxu0 0
      %2668 = vmatmul.mubr.bf16.gmra.mrb[0].mxu0 %v2523
      %v2669 = vpop.f32.mrb[0].mxu0
      %v2670 = vadd.f32 0.0, %v2669
      %v2671 = vpop.f32.mrb[0].mxu0
      %v2672 = vpop.f32.mrb[0].mxu0
      %v2673 = vadd.f32 0.0, %v2672
      %v2674 = vpop.f32.mrb[0].mxu0
      %2675 = vmatprep.mubr.bf16.mxu0 0
      %2676 = vmatmul.mubr.bf16.gmra.mrb[0].mxu0 %v2526
      %v2677 = vpop.f32.mrb[0].mxu0
      %v2678 = vadd.f32 0.0, %v2677
      %v2679 = vpop.f32.mrb[0].mxu0
      %v2680 = vpop.f32.mrb[0].mxu0
      %v2681 = vadd.f32 0.0, %v2680
      %v2682 = vpop.f32.mrb[0].mxu0
      %2683 = vmatprep.mubr.bf16.mxu0 0
      %2684 = vmatmul.mubr.bf16.gmra.mrb[0].mxu0 %v2529
      %v2685 = vpop.f32.mrb[0].mxu0
      %v2686 = vadd.f32 0.0, %v2685
      %v2687 = vpop.f32.mrb[0].mxu0
      %v2688 = vpop.f32.mrb[0].mxu0
      %v2689 = vadd.f32 0.0, %v2688
      %v2690 = vpop.f32.mrb[0].mxu0
      %2691 = vdwg.mxu0
      %v2692 = vadd.f32 %v2306, %v2566
      %v2693 = vadd.f32 %v2307, %v2569
      %v2694 = vadd.f32 %v2308, %v2574
      %v2695 = vadd.f32 %v2309, %v2577
      %v2696 = vadd.f32 %v2310, %v2582
      %v2697 = vadd.f32 %v2311, %v2585
      %v2698 = vadd.f32 %v2312, %v2590
      %v2699 = vadd.f32 %v2313, %v2593
      %v2700 = vadd.f32 %v2314, %v2598
      %v2701 = vadd.f32 %v2315, %v2601
      %v2702 = vadd.f32 %v2316, %v2606
      %v2703 = vadd.f32 %v2317, %v2609
      %v2704 = vadd.f32 %v2318, %v2614
      %v2705 = vadd.f32 %v2319, %v2617
      %v2706 = vadd.f32 %v2320, %v2622
      %v2707 = vadd.f32 %v2321, %v2625
      %v2708 = vadd.f32 %v2322, %v2630
      %v2709 = vadd.f32 %v2323, %v2633
      %v2710 = vadd.f32 %v2324, %v2638
      %v2711 = vadd.f32 %v2325, %v2641
      %v2712 = vadd.f32 %v2326, %v2646
      %v2713 = vadd.f32 %v2327, %v2649
      %v2714 = vadd.f32 %v2328, %v2654
      %v2715 = vadd.f32 %v2329, %v2657
      %v2716 = vadd.f32 %v2330, %v2662
      %v2717 = vadd.f32 %v2331, %v2665
      %v2718 = vadd.f32 %v2332, %v2670
      %v2719 = vadd.f32 %v2333, %v2673
      %v2720 = vadd.f32 %v2334, %v2678
      %v2721 = vadd.f32 %v2335, %v2681
      %v2722 = vadd.f32 %v2336, %v2686
      %v2723 = vadd.f32 %v2337, %v2689
      %v2724 = vld [vmem:[%s267] sm:$0xf]
      %v2725 = vld [vmem:[%s267 + $0x4] sm:$0xf]
      %v2726 = vld [vmem:[%s267 + $0x8] sm:$0x1]
      %v2727 = vld [vmem:[%s267 + $0xc] sm:$0xf]
      %v2728 = vld [vmem:[%s267 + $0x10] sm:$0xf]
      %v2729 = vld [vmem:[%s267 + $0x14] sm:$0x1]
      %v2730 = vld [vmem:[%s267 + $0x18] sm:$0xf]
      %v2731 = vld [vmem:[%s267 + $0x1c] sm:$0xf]
      %v2732 = vld [vmem:[%s267 + $0x20] sm:$0x1]
      %v2733 = vld [vmem:[%s267 + $0x24] sm:$0xf]
      %v2734 = vld [vmem:[%s267 + $0x28] sm:$0xf]
      %v2735 = vld [vmem:[%s267 + $0x2c] sm:$0x1]
      %v2736 = vld [vmem:[%s267 + $0x30] sm:$0xf]
      %v2737 = vld [vmem:[%s267 + $0x34] sm:$0xf]
      %v2738 = vld [vmem:[%s267 + $0x38] sm:$0x1]
      %v2739 = vld [vmem:[%s267 + $0x3c] sm:$0xf]
      %v2740 = vld [vmem:[%s267 + $0x40] sm:$0xf]
      %v2741 = vld [vmem:[%s267 + $0x44] sm:$0x1]
      %v2742 = vld [vmem:[%s267 + $0x48] sm:$0xf]
      %v2743 = vld [vmem:[%s267 + $0x4c] sm:$0xf]
      %v2744 = vld [vmem:[%s267 + $0x50] sm:$0x1]
      %v2745 = vld [vmem:[%s267 + $0x54] sm:$0xf]
      %v2746 = vld [vmem:[%s267 + $0x58] sm:$0xf]
      %v2747 = vld [vmem:[%s267 + $0x5c] sm:$0x1]
      %v2748 = vld [vmem:[%s267 + $0x60] sm:$0xf]
      %v2749 = vld [vmem:[%s267 + $0x64] sm:$0xf]
      %v2750 = vld [vmem:[%s267 + $0x68] sm:$0x1]
      %v2751 = vld [vmem:[%s267 + $0x6c] sm:$0xf]
      %v2752 = vld [vmem:[%s267 + $0x70] sm:$0xf]
      %v2753 = vld [vmem:[%s267 + $0x74] sm:$0x1]
      %v2754 = vld [vmem:[%s267 + $0x78] sm:$0xf]
      %v2755 = vld [vmem:[%s267 + $0x7c] sm:$0xf]
      %v2756 = vld [vmem:[%s267 + $0x80] sm:$0x1]
      %v2757 = vld [vmem:[%s267 + $0x84] sm:$0xf]
      %v2758 = vld [vmem:[%s267 + $0x88] sm:$0xf]
      %v2759 = vld [vmem:[%s267 + $0x8c] sm:$0x1]
      %v2760 = vld [vmem:[%s267 + $0x90] sm:$0xf]
      %v2761 = vld [vmem:[%s267 + $0x94] sm:$0xf]
      %v2762 = vld [vmem:[%s267 + $0x98] sm:$0x1]
      %v2763 = vld [vmem:[%s267 + $0x9c] sm:$0xf]
      %v2764 = vld [vmem:[%s267 + $0xa0] sm:$0xf]
      %v2765 = vld [vmem:[%s267 + $0xa4] sm:$0x1]
      %v2766 = vld [vmem:[%s267 + $0xa8] sm:$0xf]
      %v2767 = vld [vmem:[%s267 + $0xac] sm:$0xf]
      %v2768 = vld [vmem:[%s267 + $0xb0] sm:$0x1]
      %v2769 = vld [vmem:[%s267 + $0xb4] sm:$0xf]
      %v2770 = vld [vmem:[%s267 + $0xb8] sm:$0xf]
      %v2771 = vld [vmem:[%s267 + $0xbc] sm:$0x1]
      %v2773 = vshrl.u32 %v2724, 16
      %v2775 = vrot.slane %v2773, 4
      %v2776 = vshll.u32 %v2724, 16
      %v2778 = vrot.slane %v2776, 5
      %v2779 = vor.u32 %v2775, %v2778
      %v2780 = vrot.slane %v2779, 4
      %v2782 = vshll.u32 %v2725, 16
      %v2784 = vrot.slane %v2782, 5
      %v2785 = vsel %vm864, %v2780, %v2784
      %v2786 = vshrl.u32 %v2725, 16
      %v2788 = vrot.slane %v2786, 4
      %v2789 = vor.u32 %v2788, %v2784
      %v2790 = vrot.slane %v2789, 4
      %v2792 = vshll.u32 %v2726, 16
      %v2794 = vrot.slane %v2792, 5
      %v2795 = vsel %vm864, %v2790, %v2794
      %v2797 = vshrl.u32 %v2727, 16
      %v2799 = vrot.slane %v2797, 4
      %v2800 = vshll.u32 %v2727, 16
      %v2802 = vrot.slane %v2800, 5
      %v2803 = vor.u32 %v2799, %v2802
      %v2804 = vrot.slane %v2803, 4
      %v2806 = vshll.u32 %v2728, 16
      %v2808 = vrot.slane %v2806, 5
      %v2809 = vsel %vm864, %v2804, %v2808
      %v2810 = vshrl.u32 %v2728, 16
      %v2812 = vrot.slane %v2810, 4
      %v2813 = vor.u32 %v2812, %v2808
      %v2814 = vrot.slane %v2813, 4
      %v2816 = vshll.u32 %v2729, 16
      %v2818 = vrot.slane %v2816, 5
      %v2819 = vsel %vm864, %v2814, %v2818
      %v2821 = vshrl.u32 %v2730, 16
      %v2823 = vrot.slane %v2821, 4
      %v2824 = vshll.u32 %v2730, 16
      %v2826 = vrot.slane %v2824, 5
      %v2827 = vor.u32 %v2823, %v2826
      %v2828 = vrot.slane %v2827, 4
      %v2830 = vshll.u32 %v2731, 16
      %v2832 = vrot.slane %v2830, 5
      %v2833 = vsel %vm864, %v2828, %v2832
      %v2834 = vshrl.u32 %v2731, 16
      %v2836 = vrot.slane %v2834, 4
      %v2837 = vor.u32 %v2836, %v2832
      %v2838 = vrot.slane %v2837, 4
      %v2840 = vshll.u32 %v2732, 16
      %v2842 = vrot.slane %v2840, 5
      %v2843 = vsel %vm864, %v2838, %v2842
      %v2845 = vshrl.u32 %v2733, 16
      %v2847 = vrot.slane %v2845, 4
      %v2848 = vshll.u32 %v2733, 16
      %v2850 = vrot.slane %v2848, 5
      %v2851 = vor.u32 %v2847, %v2850
      %v2852 = vrot.slane %v2851, 4
      %v2854 = vshll.u32 %v2734, 16
      %v2856 = vrot.slane %v2854, 5
      %v2857 = vsel %vm864, %v2852, %v2856
      %v2858 = vshrl.u32 %v2734, 16
      %v2860 = vrot.slane %v2858, 4
      %v2861 = vor.u32 %v2860, %v2856
      %v2862 = vrot.slane %v2861, 4
      %v2864 = vshll.u32 %v2735, 16
      %v2866 = vrot.slane %v2864, 5
      %v2867 = vsel %vm864, %v2862, %v2866
      %v2869 = vshrl.u32 %v2736, 16
      %v2871 = vrot.slane %v2869, 4
      %v2872 = vshll.u32 %v2736, 16
      %v2874 = vrot.slane %v2872, 5
      %v2875 = vor.u32 %v2871, %v2874
      %v2876 = vrot.slane %v2875, 4
      %v2878 = vshll.u32 %v2737, 16
      %v2880 = vrot.slane %v2878, 5
      %v2881 = vsel %vm864, %v2876, %v2880
      %v2882 = vshrl.u32 %v2737, 16
      %v2884 = vrot.slane %v2882, 4
      %v2885 = vor.u32 %v2884, %v2880
      %v2886 = vrot.slane %v2885, 4
      %v2888 = vshll.u32 %v2738, 16
      %v2890 = vrot.slane %v2888, 5
      %v2891 = vsel %vm864, %v2886, %v2890
      %v2893 = vshrl.u32 %v2739, 16
      %v2895 = vrot.slane %v2893, 4
      %v2896 = vshll.u32 %v2739, 16
      %v2898 = vrot.slane %v2896, 5
      %v2899 = vor.u32 %v2895, %v2898
      %v2900 = vrot.slane %v2899, 4
      %v2902 = vshll.u32 %v2740, 16
      %v2904 = vrot.slane %v2902, 5
      %v2905 = vsel %vm864, %v2900, %v2904
      %v2906 = vshrl.u32 %v2740, 16
      %v2908 = vrot.slane %v2906, 4
      %v2909 = vor.u32 %v2908, %v2904
      %v2910 = vrot.slane %v2909, 4
      %v2912 = vshll.u32 %v2741, 16
      %v2914 = vrot.slane %v2912, 5
      %v2915 = vsel %vm864, %v2910, %v2914
      %v2917 = vshrl.u32 %v2742, 16
      %v2919 = vrot.slane %v2917, 4
      %v2920 = vshll.u32 %v2742, 16
      %v2922 = vrot.slane %v2920, 5
      %v2923 = vor.u32 %v2919, %v2922
      %v2924 = vrot.slane %v2923, 4
      %v2926 = vshll.u32 %v2743, 16
      %v2928 = vrot.slane %v2926, 5
      %v2929 = vsel %vm864, %v2924, %v2928
      %v2930 = vshrl.u32 %v2743, 16
      %v2932 = vrot.slane %v2930, 4
      %v2933 = vor.u32 %v2932, %v2928
      %v2934 = vrot.slane %v2933, 4
      %v2936 = vshll.u32 %v2744, 16
      %v2938 = vrot.slane %v2936, 5
      %v2939 = vsel %vm864, %v2934, %v2938
      %v2941 = vshrl.u32 %v2745, 16
      %v2943 = vrot.slane %v2941, 4
      %v2944 = vshll.u32 %v2745, 16
      %v2946 = vrot.slane %v2944, 5
      %v2947 = vor.u32 %v2943, %v2946
      %v2948 = vrot.slane %v2947, 4
      %v2950 = vshll.u32 %v2746, 16
      %v2952 = vrot.slane %v2950, 5
      %v2953 = vsel %vm864, %v2948, %v2952
      %v2954 = vshrl.u32 %v2746, 16
      %v2956 = vrot.slane %v2954, 4
      %v2957 = vor.u32 %v2956, %v2952
      %v2958 = vrot.slane %v2957, 4
      %v2960 = vshll.u32 %v2747, 16
      %v2962 = vrot.slane %v2960, 5
      %v2963 = vsel %vm864, %v2958, %v2962
      %v2965 = vshrl.u32 %v2748, 16
      %v2967 = vrot.slane %v2965, 4
      %v2968 = vshll.u32 %v2748, 16
      %v2970 = vrot.slane %v2968, 5
      %v2971 = vor.u32 %v2967, %v2970
      %v2972 = vrot.slane %v2971, 4
      %v2974 = vshll.u32 %v2749, 16
      %v2976 = vrot.slane %v2974, 5
      %v2977 = vsel %vm864, %v2972, %v2976
      %v2978 = vshrl.u32 %v2749, 16
      %v2980 = vrot.slane %v2978, 4
      %v2981 = vor.u32 %v2980, %v2976
      %v2982 = vrot.slane %v2981, 4
      %v2984 = vshll.u32 %v2750, 16
      %v2986 = vrot.slane %v2984, 5
      %v2987 = vsel %vm864, %v2982, %v2986
      %v2989 = vshrl.u32 %v2751, 16
      %v2991 = vrot.slane %v2989, 4
      %v2992 = vshll.u32 %v2751, 16
      %v2994 = vrot.slane %v2992, 5
      %v2995 = vor.u32 %v2991, %v2994
      %v2996 = vrot.slane %v2995, 4
      %v2998 = vshll.u32 %v2752, 16
      %v3000 = vrot.slane %v2998, 5
      %v3001 = vsel %vm864, %v2996, %v3000
      %v3002 = vshrl.u32 %v2752, 16
      %v3004 = vrot.slane %v3002, 4
      %v3005 = vor.u32 %v3004, %v3000
      %v3006 = vrot.slane %v3005, 4
      %v3008 = vshll.u32 %v2753, 16
      %v3010 = vrot.slane %v3008, 5
      %v3011 = vsel %vm864, %v3006, %v3010
      %v3013 = vshrl.u32 %v2754, 16
      %v3015 = vrot.slane %v3013, 4
      %v3016 = vshll.u32 %v2754, 16
      %v3018 = vrot.slane %v3016, 5
      %v3019 = vor.u32 %v3015, %v3018
      %v3020 = vrot.slane %v3019, 4
      %v3022 = vshll.u32 %v2755, 16
      %v3024 = vrot.slane %v3022, 5
      %v3025 = vsel %vm864, %v3020, %v3024
      %v3026 = vshrl.u32 %v2755, 16
      %v3028 = vrot.slane %v3026, 4
      %v3029 = vor.u32 %v3028, %v3024
      %v3030 = vrot.slane %v3029, 4
      %v3032 = vshll.u32 %v2756, 16
      %v3034 = vrot.slane %v3032, 5
      %v3035 = vsel %vm864, %v3030, %v3034
      %v3037 = vshrl.u32 %v2757, 16
      %v3039 = vrot.slane %v3037, 4
      %v3040 = vshll.u32 %v2757, 16
      %v3042 = vrot.slane %v3040, 5
      %v3043 = vor.u32 %v3039, %v3042
      %v3044 = vrot.slane %v3043, 4
      %v3046 = vshll.u32 %v2758, 16
      %v3048 = vrot.slane %v3046, 5
      %v3049 = vsel %vm864, %v3044, %v3048
      %v3050 = vshrl.u32 %v2758, 16
      %v3052 = vrot.slane %v3050, 4
      %v3053 = vor.u32 %v3052, %v3048
      %v3054 = vrot.slane %v3053, 4
      %v3056 = vshll.u32 %v2759, 16
      %v3058 = vrot.slane %v3056, 5
      %v3059 = vsel %vm864, %v3054, %v3058
      %v3061 = vshrl.u32 %v2760, 16
      %v3063 = vrot.slane %v3061, 4
      %v3064 = vshll.u32 %v2760, 16
      %v3066 = vrot.slane %v3064, 5
      %v3067 = vor.u32 %v3063, %v3066
      %v3068 = vrot.slane %v3067, 4
      %v3070 = vshll.u32 %v2761, 16
      %v3072 = vrot.slane %v3070, 5
      %v3073 = vsel %vm864, %v3068, %v3072
      %v3074 = vshrl.u32 %v2761, 16
      %v3076 = vrot.slane %v3074, 4
      %v3077 = vor.u32 %v3076, %v3072
      %v3078 = vrot.slane %v3077, 4
      %v3080 = vshll.u32 %v2762, 16
      %v3082 = vrot.slane %v3080, 5
      %v3083 = vsel %vm864, %v3078, %v3082
      %v3085 = vshrl.u32 %v2763, 16
      %v3087 = vrot.slane %v3085, 4
      %v3088 = vshll.u32 %v2763, 16
      %v3090 = vrot.slane %v3088, 5
      %v3091 = vor.u32 %v3087, %v3090
      %v3092 = vrot.slane %v3091, 4
      %v3094 = vshll.u32 %v2764, 16
      %v3096 = vrot.slane %v3094, 5
      %v3097 = vsel %vm864, %v3092, %v3096
      %v3098 = vshrl.u32 %v2764, 16
      %v3100 = vrot.slane %v3098, 4
      %v3101 = vor.u32 %v3100, %v3096
      %v3102 = vrot.slane %v3101, 4
      %v3104 = vshll.u32 %v2765, 16
      %v3106 = vrot.slane %v3104, 5
      %v3107 = vsel %vm864, %v3102, %v3106
      %v3109 = vshrl.u32 %v2766, 16
      %v3111 = vrot.slane %v3109, 4
      %v3112 = vshll.u32 %v2766, 16
      %v3114 = vrot.slane %v3112, 5
      %v3115 = vor.u32 %v3111, %v3114
      %v3116 = vrot.slane %v3115, 4
      %v3118 = vshll.u32 %v2767, 16
      %v3120 = vrot.slane %v3118, 5
      %v3121 = vsel %vm864, %v3116, %v3120
      %v3122 = vshrl.u32 %v2767, 16
      %v3124 = vrot.slane %v3122, 4
      %v3125 = vor.u32 %v3124, %v3120
      %v3126 = vrot.slane %v3125, 4
      %v3128 = vshll.u32 %v2768, 16
      %v3130 = vrot.slane %v3128, 5
      %v3131 = vsel %vm864, %v3126, %v3130
      %v3133 = vshrl.u32 %v2769, 16
      %v3135 = vrot.slane %v3133, 4
      %v3136 = vshll.u32 %v2769, 16
      %v3138 = vrot.slane %v3136, 5
      %v3139 = vor.u32 %v3135, %v3138
      %v3140 = vrot.slane %v3139, 4
      %v3142 = vshll.u32 %v2770, 16
      %v3144 = vrot.slane %v3142, 5
      %v3145 = vsel %vm864, %v3140, %v3144
      %v3146 = vshrl.u32 %v2770, 16
      %v3148 = vrot.slane %v3146, 4
      %v3149 = vor.u32 %v3148, %v3144
      %v3150 = vrot.slane %v3149, 4
      %v3152 = vshll.u32 %v2771, 16
      %v3154 = vrot.slane %v3152, 5
      %v3155 = vsel %vm864, %v3150, %v3154
      %s3156 = scalar_lea.vmem %s1, 128
      %v3157 = vld [vmem:[%s3156] sm:$0xf]
      %v3158 = vld [vmem:[%s3156 + $0x4] sm:$0xf]
      %v3159 = vld [vmem:[%s3156 + $0x8] sm:$0xf]
      %v3160 = vld [vmem:[%s3156 + $0xc] sm:$0xf]
      %v3161 = vld [vmem:[%s3156 + $0x10] sm:$0xf]
      %v3162 = vld [vmem:[%s3156 + $0x14] sm:$0xf]
      %v3163 = vld [vmem:[%s3156 + $0x18] sm:$0xf]
      %v3164 = vld [vmem:[%s3156 + $0x1c] sm:$0xf]
      %v3165 = vunpack.c.l.b16 %v2785
      %v3166 = vunpack.c.l.b16 %v2795
      %v3167 = vunpack.c.l.b16 %v2809
      %v3168 = vunpack.c.l.b16 %v2819
      %v3169 = vunpack.c.l.b16 %v2833
      %v3170 = vunpack.c.l.b16 %v2843
      %v3171 = vunpack.c.l.b16 %v2857
      %v3172 = vunpack.c.l.b16 %v2867
      %v3173 = vunpack.c.l.b16 %v2881
      %v3174 = vunpack.c.l.b16 %v2891
      %v3175 = vunpack.c.l.b16 %v2905
      %v3176 = vunpack.c.l.b16 %v2915
      %v3177 = vunpack.c.l.b16 %v2929
      %v3178 = vunpack.c.l.b16 %v2939
      %v3179 = vunpack.c.l.b16 %v2953
      %v3180 = vunpack.c.l.b16 %v2963
      %v3181 = vunpack.c.l.b16 %v2977
      %v3182 = vunpack.c.l.b16 %v2987
      %v3183 = vunpack.c.l.b16 %v3001
      %v3184 = vunpack.c.l.b16 %v3011
      %v3185 = vunpack.c.l.b16 %v3025
      %v3186 = vunpack.c.l.b16 %v3035
      %v3187 = vunpack.c.l.b16 %v3049
      %v3188 = vunpack.c.l.b16 %v3059
      %v3189 = vunpack.c.l.b16 %v3073
      %v3190 = vunpack.c.l.b16 %v3083
      %v3191 = vunpack.c.l.b16 %v3097
      %v3192 = vunpack.c.l.b16 %v3107
      %v3193 = vunpack.c.l.b16 %v3121
      %v3194 = vunpack.c.l.b16 %v3131
      %v3195 = vunpack.c.l.b16 %v3145
      %v3196 = vunpack.c.l.b16 %v3155
      %v3197 = vpack.c.b16 %v3166, %v3165
      %v3198 = vpack.c.b16 %v3168, %v3167
      %v3199 = vpack.c.b16 %v3170, %v3169
      %v3200 = vpack.c.b16 %v3172, %v3171
      %v3201 = vpack.c.b16 %v3174, %v3173
      %v3202 = vpack.c.b16 %v3176, %v3175
      %v3203 = vpack.c.b16 %v3178, %v3177
      %v3204 = vpack.c.b16 %v3180, %v3179
      %v3205 = vpack.c.b16 %v3182, %v3181
      %v3206 = vpack.c.b16 %v3184, %v3183
      %v3207 = vpack.c.b16 %v3186, %v3185
      %v3208 = vpack.c.b16 %v3188, %v3187
      %v3209 = vpack.c.b16 %v3190, %v3189
      %v3210 = vpack.c.b16 %v3192, %v3191
      %v3211 = vpack.c.b16 %v3194, %v3193
      %v3212 = vpack.c.b16 %v3196, %v3195
      %v3221 = vunpack.c.l.b16 %v3157
      %v3222 = vunpack.c.l.b16 %v3158
      %v3223 = vunpack.c.l.b16 %v3159
      %v3224 = vunpack.c.l.b16 %v3160
      %v3225 = vunpack.c.l.b16 %v3161
      %v3226 = vunpack.c.l.b16 %v3162
      %v3227 = vunpack.c.l.b16 %v3163
      %v3228 = vunpack.c.l.b16 %v3164
      %v3229 = vpack.c.b16 %v3222, %v3221
      %v3230 = vpack.c.b16 %v3224, %v3223
      %v3231 = vpack.c.b16 %v3226, %v3225
      %v3232 = vpack.c.b16 %v3228, %v3227
      %v3238 = vsel %vm1330, %v3197, 0
      %v3241 = vsel %vm1330, %v3198, 0
      %v3244 = vsel %vm1330, %v3199, 0
      %v3247 = vsel %vm1330, %v3200, 0
      %v3250 = vsel %vm1330, %v3201, 0
      %v3253 = vsel %vm1330, %v3202, 0
      %v3256 = vsel %vm1330, %v3203, 0
      %v3259 = vsel %vm1330, %v3204, 0
      %v3262 = vsel %vm1330, %v3205, 0
      %v3265 = vsel %vm1330, %v3206, 0
      %v3268 = vsel %vm1330, %v3207, 0
      %v3271 = vsel %vm1330, %v3208, 0
      %v3274 = vsel %vm1330, %v3209, 0
      %v3277 = vsel %vm1330, %v3210, 0
      %v3280 = vsel %vm1330, %v3211, 0
      %v3283 = vsel %vm1330, %v3212, 0
      %3285 = vmatprep.subr.bf16.mxu0 0
      %3286 = vmatpush1.bf16.msra.mxu0 %v3229
      %3287 = vmatprep.subr.bf16.mxu0 0
      %3288 = vmatpush1.bf16.msra.mxu0 %v3230
      %3289 = vmatprep.subr.bf16.mxu0 0
      %3290 = vmatpush1.bf16.msra.mxu0 %v3231
      %3291 = vmatprep.subr.bf16.mxu0 0
      %3292 = vmatpush1.bf16.msra.mxu0 %v3232
      %3293 = vmatprep.subr.bf16.mxu0 0
      %3294 = vmatpush1.bf16.msra.mxu0 0
      %3295 = vmatprep.subr.bf16.mxu0 0
      %3296 = vmatpush1.bf16.msra.mxu0 0
      %3297 = vmatprep.subr.bf16.mxu0 0
      %3298 = vmatpush1.bf16.msra.mxu0 0
      %3299 = vmatprep.subr.bf16.mxu0 0
      %3300 = vmatpush1.bf16.msra.mxu0 0
      %3301 = vmatprep.subr.bf16.mxu0 0
      %3302 = vmatpush1.bf16.msra.mxu0 0
      %3303 = vmatprep.subr.bf16.mxu0 0
      %3304 = vmatpush1.bf16.msra.mxu0 0
      %3305 = vmatprep.subr.bf16.mxu0 0
      %3306 = vmatpush1.bf16.msra.mxu0 0
      %3307 = vmatprep.subr.bf16.mxu0 0
      %3308 = vmatpush1.bf16.msra.mxu0 0
      %3309 = vmatprep.subr.bf16.mxu0 0
      %3310 = vmatpush1.bf16.msra.mxu0 0
      %3311 = vmatprep.subr.bf16.mxu0 0
      %3312 = vmatpush1.bf16.msra.mxu0 0
      %3313 = vmatprep.subr.bf16.mxu0 0
      %3314 = vmatpush1.bf16.msra.mxu0 0
      %3315 = vmatprep.subr.bf16.mxu0 0
      %3316 = vmatpush1.bf16.msra.mxu0 0
      %3317 = vmatprep.mubr.bf16.mxu0 0
      %3318 = vmatmul.mubr.bf16.gmra.mrb[0].mxu0 %v3238
      %v3319 = vpop.f32.mrb[0].mxu0
      %v3320 = vadd.f32 0.0, %v3319
      %v3321 = vpop.f32.mrb[0].mxu0
      %v3322 = vpop.f32.mrb[0].mxu0
      %v3323 = vadd.f32 0.0, %v3322
      %v3324 = vpop.f32.mrb[0].mxu0
      %3325 = vmatprep.mubr.bf16.mxu0 0
      %3326 = vmatmul.mubr.bf16.gmra.mrb[0].mxu0 %v3241
      %v3327 = vpop.f32.mrb[0].mxu0
      %v3328 = vadd.f32 0.0, %v3327
      %v3329 = vpop.f32.mrb[0].mxu0
      %v3330 = vpop.f32.mrb[0].mxu0
      %v3331 = vadd.f32 0.0, %v3330
      %v3332 = vpop.f32.mrb[0].mxu0
      %3333 = vmatprep.mubr.bf16.mxu0 0
      %3334 = vmatmul.mubr.bf16.gmra.mrb[0].mxu0 %v3244
      %v3335 = vpop.f32.mrb[0].mxu0
      %v3336 = vadd.f32 0.0, %v3335
      %v3337 = vpop.f32.mrb[0].mxu0
      %v3338 = vpop.f32.mrb[0].mxu0
      %v3339 = vadd.f32 0.0, %v3338
      %v3340 = vpop.f32.mrb[0].mxu0
      %3341 = vmatprep.mubr.bf16.mxu0 0
      %3342 = vmatmul.mubr.bf16.gmra.mrb[0].mxu0 %v3247
      %v3343 = vpop.f32.mrb[0].mxu0
      %v3344 = vadd.f32 0.0, %v3343
      %v3345 = vpop.f32.mrb[0].mxu0
      %v3346 = vpop.f32.mrb[0].mxu0
      %v3347 = vadd.f32 0.0, %v3346
      %v3348 = vpop.f32.mrb[0].mxu0
      %3349 = vmatprep.mubr.bf16.mxu0 0
      %3350 = vmatmul.mubr.bf16.gmra.mrb[0].mxu0 %v3250
      %v3351 = vpop.f32.mrb[0].mxu0
      %v3352 = vadd.f32 0.0, %v3351
      %v3353 = vpop.f32.mrb[0].mxu0
      %v3354 = vpop.f32.mrb[0].mxu0
      %v3355 = vadd.f32 0.0, %v3354
      %v3356 = vpop.f32.mrb[0].mxu0
      %3357 = vmatprep.mubr.bf16.mxu0 0
      %3358 = vmatmul.mubr.bf16.gmra.mrb[0].mxu0 %v3253
      %v3359 = vpop.f32.mrb[0].mxu0
      %v3360 = vadd.f32 0.0, %v3359
      %v3361 = vpop.f32.mrb[0].mxu0
      %v3362 = vpop.f32.mrb[0].mxu0
      %v3363 = vadd.f32 0.0, %v3362
      %v3364 = vpop.f32.mrb[0].mxu0
      %3365 = vmatprep.mubr.bf16.mxu0 0
      %3366 = vmatmul.mubr.bf16.gmra.mrb[0].mxu0 %v3256
      %v3367 = vpop.f32.mrb[0].mxu0
      %v3368 = vadd.f32 0.0, %v3367
      %v3369 = vpop.f32.mrb[0].mxu0
      %v3370 = vpop.f32.mrb[0].mxu0
      %v3371 = vadd.f32 0.0, %v3370
      %v3372 = vpop.f32.mrb[0].mxu0
      %3373 = vmatprep.mubr.bf16.mxu0 0
      %3374 = vmatmul.mubr.bf16.gmra.mrb[0].mxu0 %v3259
      %v3375 = vpop.f32.mrb[0].mxu0
      %v3376 = vadd.f32 0.0, %v3375
      %v3377 = vpop.f32.mrb[0].mxu0
      %v3378 = vpop.f32.mrb[0].mxu0
      %v3379 = vadd.f32 0.0, %v3378
      %v3380 = vpop.f32.mrb[0].mxu0
      %3381 = vmatprep.mubr.bf16.mxu0 0
      %3382 = vmatmul.mubr.bf16.gmra.mrb[0].mxu0 %v3262
      %v3383 = vpop.f32.mrb[0].mxu0
      %v3384 = vadd.f32 0.0, %v3383
      %v3385 = vpop.f32.mrb[0].mxu0
      %v3386 = vpop.f32.mrb[0].mxu0
      %v3387 = vadd.f32 0.0, %v3386
      %v3388 = vpop.f32.mrb[0].mxu0
      %3389 = vmatprep.mubr.bf16.mxu0 0
      %3390 = vmatmul.mubr.bf16.gmra.mrb[0].mxu0 %v3265
      %v3391 = vpop.f32.mrb[0].mxu0
      %v3392 = vadd.f32 0.0, %v3391
      %v3393 = vpop.f32.mrb[0].mxu0
      %v3394 = vpop.f32.mrb[0].mxu0
      %v3395 = vadd.f32 0.0, %v3394
      %v3396 = vpop.f32.mrb[0].mxu0
      %3397 = vmatprep.mubr.bf16.mxu0 0
      %3398 = vmatmul.mubr.bf16.gmra.mrb[0].mxu0 %v3268
      %v3399 = vpop.f32.mrb[0].mxu0
      %v3400 = vadd.f32 0.0, %v3399
      %v3401 = vpop.f32.mrb[0].mxu0
      %v3402 = vpop.f32.mrb[0].mxu0
      %v3403 = vadd.f32 0.0, %v3402
      %v3404 = vpop.f32.mrb[0].mxu0
      %3405 = vmatprep.mubr.bf16.mxu0 0
      %3406 = vmatmul.mubr.bf16.gmra.mrb[0].mxu0 %v3271
      %v3407 = vpop.f32.mrb[0].mxu0
      %v3408 = vadd.f32 0.0, %v3407
      %v3409 = vpop.f32.mrb[0].mxu0
      %v3410 = vpop.f32.mrb[0].mxu0
      %v3411 = vadd.f32 0.0, %v3410
      %v3412 = vpop.f32.mrb[0].mxu0
      %3413 = vmatprep.mubr.bf16.mxu0 0
      %3414 = vmatmul.mubr.bf16.gmra.mrb[0].mxu0 %v3274
      %v3415 = vpop.f32.mrb[0].mxu0
      %v3416 = vadd.f32 0.0, %v3415
      %v3417 = vpop.f32.mrb[0].mxu0
      %v3418 = vpop.f32.mrb[0].mxu0
      %v3419 = vadd.f32 0.0, %v3418
      %v3420 = vpop.f32.mrb[0].mxu0
      %3421 = vmatprep.mubr.bf16.mxu0 0
      %3422 = vmatmul.mubr.bf16.gmra.mrb[0].mxu0 %v3277
      %v3423 = vpop.f32.mrb[0].mxu0
      %v3424 = vadd.f32 0.0, %v3423
      %v3425 = vpop.f32.mrb[0].mxu0
      %v3426 = vpop.f32.mrb[0].mxu0
      %v3427 = vadd.f32 0.0, %v3426
      %v3428 = vpop.f32.mrb[0].mxu0
      %3429 = vmatprep.mubr.bf16.mxu0 0
      %3430 = vmatmul.mubr.bf16.gmra.mrb[0].mxu0 %v3280
      %v3431 = vpop.f32.mrb[0].mxu0
      %v3432 = vadd.f32 0.0, %v3431
      %v3433 = vpop.f32.mrb[0].mxu0
      %v3434 = vpop.f32.mrb[0].mxu0
      %v3435 = vadd.f32 0.0, %v3434
      %v3436 = vpop.f32.mrb[0].mxu0
      %3437 = vmatprep.mubr.bf16.mxu0 0
      %3438 = vmatmul.mubr.bf16.gmra.mrb[0].mxu0 %v3283
      %v3439 = vpop.f32.mrb[0].mxu0
      %v3440 = vadd.f32 0.0, %v3439
      %v3441 = vpop.f32.mrb[0].mxu0
      %v3442 = vpop.f32.mrb[0].mxu0
      %v3443 = vadd.f32 0.0, %v3442
      %v3444 = vpop.f32.mrb[0].mxu0
      %3445 = vdwg.mxu0
      %v3446 = vadd.f32 %v2692, %v3320
      %v3447 = vadd.f32 %v2693, %v3323
      %v3448 = vadd.f32 %v2694, %v3328
      %v3449 = vadd.f32 %v2695, %v3331
      %v3450 = vadd.f32 %v2696, %v3336
      %v3451 = vadd.f32 %v2697, %v3339
      %v3452 = vadd.f32 %v2698, %v3344
      %v3453 = vadd.f32 %v2699, %v3347
      %v3454 = vadd.f32 %v2700, %v3352
      %v3455 = vadd.f32 %v2701, %v3355
      %v3456 = vadd.f32 %v2702, %v3360
      %v3457 = vadd.f32 %v2703, %v3363
      %v3458 = vadd.f32 %v2704, %v3368
      %v3459 = vadd.f32 %v2705, %v3371
      %v3460 = vadd.f32 %v2706, %v3376
      %v3461 = vadd.f32 %v2707, %v3379
      %v3462 = vadd.f32 %v2708, %v3384
      %v3463 = vadd.f32 %v2709, %v3387
      %v3464 = vadd.f32 %v2710, %v3392
      %v3465 = vadd.f32 %v2711, %v3395
      %v3466 = vadd.f32 %v2712, %v3400
      %v3467 = vadd.f32 %v2713, %v3403
      %v3468 = vadd.f32 %v2714, %v3408
      %v3469 = vadd.f32 %v2715, %v3411
      %v3470 = vadd.f32 %v2716, %v3416
      %v3471 = vadd.f32 %v2717, %v3419
      %v3472 = vadd.f32 %v2718, %v3424
      %v3473 = vadd.f32 %v2719, %v3427
      %v3474 = vadd.f32 %v2720, %v3432
      %v3475 = vadd.f32 %v2721, %v3435
      %v3476 = vadd.f32 %v2722, %v3440
      %v3477 = vadd.f32 %v2723, %v3443
      %v3478 = vld [vmem:[%s267] sm:$0xe]
      %v3479 = vld [vmem:[%s267 + $0xc] sm:$0xe]
      %v3480 = vld [vmem:[%s267 + $0x18] sm:$0xe]
      %v3481 = vld [vmem:[%s267 + $0x24] sm:$0xe]
      %v3482 = vld [vmem:[%s267 + $0x30] sm:$0xe]
      %v3483 = vld [vmem:[%s267 + $0x3c] sm:$0xe]
      %v3484 = vld [vmem:[%s267 + $0x48] sm:$0xe]
      %v3485 = vld [vmem:[%s267 + $0x54] sm:$0xe]
      %v3486 = vld [vmem:[%s267 + $0x60] sm:$0xe]
      %v3487 = vld [vmem:[%s267 + $0x6c] sm:$0xe]
      %v3488 = vld [vmem:[%s267 + $0x78] sm:$0xe]
      %v3489 = vld [vmem:[%s267 + $0x84] sm:$0xe]
      %v3490 = vld [vmem:[%s267 + $0x90] sm:$0xe]
      %v3491 = vld [vmem:[%s267 + $0x9c] sm:$0xe]
      %v3492 = vld [vmem:[%s267 + $0xa8] sm:$0xe]
      %v3493 = vld [vmem:[%s267 + $0xb4] sm:$0xe]
      %v3542 = vrot.slane %v3478, 5
      %v3543 = vrot.slane %v3542, 4
      %v3544 = vrot.slane %v2725, 5
      %v3545 = vsel %vm1903, %v3543, %v3544
      %v3546 = vrot.slane %v3544, 4
      %v3547 = vrot.slane %v2726, 5
      %v3548 = vsel %vm1903, %v3546, %v3547
      %v3549 = vrot.slane %v3479, 5
      %v3550 = vrot.slane %v3549, 4
      %v3551 = vrot.slane %v2728, 5
      %v3552 = vsel %vm1903, %v3550, %v3551
      %v3553 = vrot.slane %v3551, 4
      %v3554 = vrot.slane %v2729, 5
      %v3555 = vsel %vm1903, %v3553, %v3554
      %v3556 = vrot.slane %v3480, 5
      %v3557 = vrot.slane %v3556, 4
      %v3558 = vrot.slane %v2731, 5
      %v3559 = vsel %vm1903, %v3557, %v3558
      %v3560 = vrot.slane %v3558, 4
      %v3561 = vrot.slane %v2732, 5
      %v3562 = vsel %vm1903, %v3560, %v3561
      %v3563 = vrot.slane %v3481, 5
      %v3564 = vrot.slane %v3563, 4
      %v3565 = vrot.slane %v2734, 5
      %v3566 = vsel %vm1903, %v3564, %v3565
      %v3567 = vrot.slane %v3565, 4
      %v3568 = vrot.slane %v2735, 5
      %v3569 = vsel %vm1903, %v3567, %v3568
      %v3570 = vrot.slane %v3482, 5
      %v3571 = vrot.slane %v3570, 4
      %v3572 = vrot.slane %v2737, 5
      %v3573 = vsel %vm1903, %v3571, %v3572
      %v3574 = vrot.slane %v3572, 4
      %v3575 = vrot.slane %v2738, 5
      %v3576 = vsel %vm1903, %v3574, %v3575
      %v3577 = vrot.slane %v3483, 5
      %v3578 = vrot.slane %v3577, 4
      %v3579 = vrot.slane %v2740, 5
      %v3580 = vsel %vm1903, %v3578, %v3579
      %v3581 = vrot.slane %v3579, 4
      %v3582 = vrot.slane %v2741, 5
      %v3583 = vsel %vm1903, %v3581, %v3582
      %v3584 = vrot.slane %v3484, 5
      %v3585 = vrot.slane %v3584, 4
      %v3586 = vrot.slane %v2743, 5
      %v3587 = vsel %vm1903, %v3585, %v3586
      %v3588 = vrot.slane %v3586, 4
      %v3589 = vrot.slane %v2744, 5
      %v3590 = vsel %vm1903, %v3588, %v3589
      %v3591 = vrot.slane %v3485, 5
      %v3592 = vrot.slane %v3591, 4
      %v3593 = vrot.slane %v2746, 5
      %v3594 = vsel %vm1903, %v3592, %v3593
      %v3595 = vrot.slane %v3593, 4
      %v3596 = vrot.slane %v2747, 5
      %v3597 = vsel %vm1903, %v3595, %v3596
      %v3598 = vrot.slane %v3486, 5
      %v3599 = vrot.slane %v3598, 4
      %v3600 = vrot.slane %v2749, 5
      %v3601 = vsel %vm1903, %v3599, %v3600
      %v3602 = vrot.slane %v3600, 4
      %v3603 = vrot.slane %v2750, 5
      %v3604 = vsel %vm1903, %v3602, %v3603
      %v3605 = vrot.slane %v3487, 5
      %v3606 = vrot.slane %v3605, 4
      %v3607 = vrot.slane %v2752, 5
      %v3608 = vsel %vm1903, %v3606, %v3607
      %v3609 = vrot.slane %v3607, 4
      %v3610 = vrot.slane %v2753, 5
      %v3611 = vsel %vm1903, %v3609, %v3610
      %v3612 = vrot.slane %v3488, 5
      %v3613 = vrot.slane %v3612, 4
      %v3614 = vrot.slane %v2755, 5
      %v3615 = vsel %vm1903, %v3613, %v3614
      %v3616 = vrot.slane %v3614, 4
      %v3617 = vrot.slane %v2756, 5
      %v3618 = vsel %vm1903, %v3616, %v3617
      %v3619 = vrot.slane %v3489, 5
      %v3620 = vrot.slane %v3619, 4
      %v3621 = vrot.slane %v2758, 5
      %v3622 = vsel %vm1903, %v3620, %v3621
      %v3623 = vrot.slane %v3621, 4
      %v3624 = vrot.slane %v2759, 5
      %v3625 = vsel %vm1903, %v3623, %v3624
      %v3626 = vrot.slane %v3490, 5
      %v3627 = vrot.slane %v3626, 4
      %v3628 = vrot.slane %v2761, 5
      %v3629 = vsel %vm1903, %v3627, %v3628
      %v3630 = vrot.slane %v3628, 4
      %v3631 = vrot.slane %v2762, 5
      %v3632 = vsel %vm1903, %v3630, %v3631
      %v3633 = vrot.slane %v3491, 5
      %v3634 = vrot.slane %v3633, 4
      %v3635 = vrot.slane %v2764, 5
      %v3636 = vsel %vm1903, %v3634, %v3635
      %v3637 = vrot.slane %v3635, 4
      %v3638 = vrot.slane %v2765, 5
      %v3639 = vsel %vm1903, %v3637, %v3638
      %v3640 = vrot.slane %v3492, 5
      %v3641 = vrot.slane %v3640, 4
      %v3642 = vrot.slane %v2767, 5
      %v3643 = vsel %vm1903, %v3641, %v3642
      %v3644 = vrot.slane %v3642, 4
      %v3645 = vrot.slane %v2768, 5
      %v3646 = vsel %vm1903, %v3644, %v3645
      %v3647 = vrot.slane %v3493, 5
      %v3648 = vrot.slane %v3647, 4
      %v3649 = vrot.slane %v2770, 5
      %v3650 = vsel %vm1903, %v3648, %v3649
      %v3651 = vrot.slane %v3649, 4
      %v3652 = vrot.slane %v2771, 5
      %v3653 = vsel %vm1903, %v3651, %v3652
      %s3654 = scalar_lea.vmem %s1, 160
      %v3655 = vld [vmem:[%s3654] sm:$0xf]
      %v3656 = vld [vmem:[%s3654 + $0x4] sm:$0xf]
      %v3657 = vld [vmem:[%s3654 + $0x8] sm:$0xf]
      %v3658 = vld [vmem:[%s3654 + $0xc] sm:$0xf]
      %v3659 = vld [vmem:[%s3654 + $0x10] sm:$0xf]
      %v3660 = vld [vmem:[%s3654 + $0x14] sm:$0xf]
      %v3661 = vld [vmem:[%s3654 + $0x18] sm:$0xf]
      %v3662 = vld [vmem:[%s3654 + $0x1c] sm:$0xf]
      %v3663 = vunpack.c.l.b16 %v3545
      %v3664 = vunpack.c.l.b16 %v3548
      %v3665 = vunpack.c.l.b16 %v3552
      %v3666 = vunpack.c.l.b16 %v3555
      %v3667 = vunpack.c.l.b16 %v3559
      %v3668 = vunpack.c.l.b16 %v3562
      %v3669 = vunpack.c.l.b16 %v3566
      %v3670 = vunpack.c.l.b16 %v3569
      %v3671 = vunpack.c.l.b16 %v3573
      %v3672 = vunpack.c.l.b16 %v3576
      %v3673 = vunpack.c.l.b16 %v3580
      %v3674 = vunpack.c.l.b16 %v3583
      %v3675 = vunpack.c.l.b16 %v3587
      %v3676 = vunpack.c.l.b16 %v3590
      %v3677 = vunpack.c.l.b16 %v3594
      %v3678 = vunpack.c.l.b16 %v3597
      %v3679 = vunpack.c.l.b16 %v3601
      %v3680 = vunpack.c.l.b16 %v3604
      %v3681 = vunpack.c.l.b16 %v3608
      %v3682 = vunpack.c.l.b16 %v3611
      %v3683 = vunpack.c.l.b16 %v3615
      %v3684 = vunpack.c.l.b16 %v3618
      %v3685 = vunpack.c.l.b16 %v3622
      %v3686 = vunpack.c.l.b16 %v3625
      %v3687 = vunpack.c.l.b16 %v3629
      %v3688 = vunpack.c.l.b16 %v3632
      %v3689 = vunpack.c.l.b16 %v3636
      %v3690 = vunpack.c.l.b16 %v3639
      %v3691 = vunpack.c.l.b16 %v3643
      %v3692 = vunpack.c.l.b16 %v3646
      %v3693 = vunpack.c.l.b16 %v3650
      %v3694 = vunpack.c.l.b16 %v3653
      %v3695 = vpack.c.b16 %v3664, %v3663
      %v3696 = vpack.c.b16 %v3666, %v3665
      %v3697 = vpack.c.b16 %v3668, %v3667
      %v3698 = vpack.c.b16 %v3670, %v3669
      %v3699 = vpack.c.b16 %v3672, %v3671
      %v3700 = vpack.c.b16 %v3674, %v3673
      %v3701 = vpack.c.b16 %v3676, %v3675
      %v3702 = vpack.c.b16 %v3678, %v3677
      %v3703 = vpack.c.b16 %v3680, %v3679
      %v3704 = vpack.c.b16 %v3682, %v3681
      %v3705 = vpack.c.b16 %v3684, %v3683
      %v3706 = vpack.c.b16 %v3686, %v3685
      %v3707 = vpack.c.b16 %v3688, %v3687
      %v3708 = vpack.c.b16 %v3690, %v3689
      %v3709 = vpack.c.b16 %v3692, %v3691
      %v3710 = vpack.c.b16 %v3694, %v3693
      %v3719 = vunpack.c.l.b16 %v3655
      %v3720 = vunpack.c.l.b16 %v3656
      %v3721 = vunpack.c.l.b16 %v3657
      %v3722 = vunpack.c.l.b16 %v3658
      %v3723 = vunpack.c.l.b16 %v3659
      %v3724 = vunpack.c.l.b16 %v3660
      %v3725 = vunpack.c.l.b16 %v3661
      %v3726 = vunpack.c.l.b16 %v3662
      %v3727 = vpack.c.b16 %v3720, %v3719
      %v3728 = vpack.c.b16 %v3722, %v3721
      %v3729 = vpack.c.b16 %v3724, %v3723
      %v3730 = vpack.c.b16 %v3726, %v3725
      %v3736 = vsel %vm1330, %v3695, 0
      %v3739 = vsel %vm1330, %v3696, 0
      %v3742 = vsel %vm1330, %v3697, 0
      %v3745 = vsel %vm1330, %v3698, 0
      %v3748 = vsel %vm1330, %v3699, 0
      %v3751 = vsel %vm1330, %v3700, 0
      %v3754 = vsel %vm1330, %v3701, 0
      %v3757 = vsel %vm1330, %v3702, 0
      %v3760 = vsel %vm1330, %v3703, 0
      %v3763 = vsel %vm1330, %v3704, 0
      %v3766 = vsel %vm1330, %v3705, 0
      %v3769 = vsel %vm1330, %v3706, 0
      %v3772 = vsel %vm1330, %v3707, 0
      %v3775 = vsel %vm1330, %v3708, 0
      %v3778 = vsel %vm1330, %v3709, 0
      %v3781 = vsel %vm1330, %v3710, 0
      %3783 = vmatprep.subr.bf16.mxu0 0
      %3784 = vmatpush1.bf16.msra.mxu0 %v3727
      %3785 = vmatprep.subr.bf16.mxu0 0
      %3786 = vmatpush1.bf16.msra.mxu0 %v3728
      %3787 = vmatprep.subr.bf16.mxu0 0
      %3788 = vmatpush1.bf16.msra.mxu0 %v3729
      %3789 = vmatprep.subr.bf16.mxu0 0
      %3790 = vmatpush1.bf16.msra.mxu0 %v3730
      %3791 = vmatprep.subr.bf16.mxu0 0
      %3792 = vmatpush1.bf16.msra.mxu0 0
      %3793 = vmatprep.subr.bf16.mxu0 0
      %3794 = vmatpush1.bf16.msra.mxu0 0
      %3795 = vmatprep.subr.bf16.mxu0 0
      %3796 = vmatpush1.bf16.msra.mxu0 0
      %3797 = vmatprep.subr.bf16.mxu0 0
      %3798 = vmatpush1.bf16.msra.mxu0 0
      %3799 = vmatprep.subr.bf16.mxu0 0
      %3800 = vmatpush1.bf16.msra.mxu0 0
      %3801 = vmatprep.subr.bf16.mxu0 0
      %3802 = vmatpush1.bf16.msra.mxu0 0
      %3803 = vmatprep.subr.bf16.mxu0 0
      %3804 = vmatpush1.bf16.msra.mxu0 0
      %3805 = vmatprep.subr.bf16.mxu0 0
      %3806 = vmatpush1.bf16.msra.mxu0 0
      %3807 = vmatprep.subr.bf16.mxu0 0
      %3808 = vmatpush1.bf16.msra.mxu0 0
      %3809 = vmatprep.subr.bf16.mxu0 0
      %3810 = vmatpush1.bf16.msra.mxu0 0
      %3811 = vmatprep.subr.bf16.mxu0 0
      %3812 = vmatpush1.bf16.msra.mxu0 0
      %3813 = vmatprep.subr.bf16.mxu0 0
      %3814 = vmatpush1.bf16.msra.mxu0 0
      %3815 = vmatprep.mubr.bf16.mxu0 0
      %3816 = vmatmul.mubr.bf16.gmra.mrb[0].mxu0 %v3736
      %v3817 = vpop.f32.mrb[0].mxu0
      %v3818 = vadd.f32 0.0, %v3817
      %v3819 = vpop.f32.mrb[0].mxu0
      %v3820 = vpop.f32.mrb[0].mxu0
      %v3821 = vadd.f32 0.0, %v3820
      %v3822 = vpop.f32.mrb[0].mxu0
      %3823 = vmatprep.mubr.bf16.mxu0 0
      %3824 = vmatmul.mubr.bf16.gmra.mrb[0].mxu0 %v3739
      %v3825 = vpop.f32.mrb[0].mxu0
      %v3826 = vadd.f32 0.0, %v3825
      %v3827 = vpop.f32.mrb[0].mxu0
      %v3828 = vpop.f32.mrb[0].mxu0
      %v3829 = vadd.f32 0.0, %v3828
      %v3830 = vpop.f32.mrb[0].mxu0
      %3831 = vmatprep.mubr.bf16.mxu0 0
      %3832 = vmatmul.mubr.bf16.gmra.mrb[0].mxu0 %v3742
      %v3833 = vpop.f32.mrb[0].mxu0
      %v3834 = vadd.f32 0.0, %v3833
      %v3835 = vpop.f32.mrb[0].mxu0
      %v3836 = vpop.f32.mrb[0].mxu0
      %v3837 = vadd.f32 0.0, %v3836
      %v3838 = vpop.f32.mrb[0].mxu0
      %3839 = vmatprep.mubr.bf16.mxu0 0
      %3840 = vmatmul.mubr.bf16.gmra.mrb[0].mxu0 %v3745
      %v3841 = vpop.f32.mrb[0].mxu0
      %v3842 = vadd.f32 0.0, %v3841
      %v3843 = vpop.f32.mrb[0].mxu0
      %v3844 = vpop.f32.mrb[0].mxu0
      %v3845 = vadd.f32 0.0, %v3844
      %v3846 = vpop.f32.mrb[0].mxu0
      %3847 = vmatprep.mubr.bf16.mxu0 0
      %3848 = vmatmul.mubr.bf16.gmra.mrb[0].mxu0 %v3748
      %v3849 = vpop.f32.mrb[0].mxu0
      %v3850 = vadd.f32 0.0, %v3849
      %v3851 = vpop.f32.mrb[0].mxu0
      %v3852 = vpop.f32.mrb[0].mxu0
      %v3853 = vadd.f32 0.0, %v3852
      %v3854 = vpop.f32.mrb[0].mxu0
      %3855 = vmatprep.mubr.bf16.mxu0 0
      %3856 = vmatmul.mubr.bf16.gmra.mrb[0].mxu0 %v3751
      %v3857 = vpop.f32.mrb[0].mxu0
      %v3858 = vadd.f32 0.0, %v3857
      %v3859 = vpop.f32.mrb[0].mxu0
      %v3860 = vpop.f32.mrb[0].mxu0
      %v3861 = vadd.f32 0.0, %v3860
      %v3862 = vpop.f32.mrb[0].mxu0
      %3863 = vmatprep.mubr.bf16.mxu0 0
      %3864 = vmatmul.mubr.bf16.gmra.mrb[0].mxu0 %v3754
      %v3865 = vpop.f32.mrb[0].mxu0
      %v3866 = vadd.f32 0.0, %v3865
      %v3867 = vpop.f32.mrb[0].mxu0
      %v3868 = vpop.f32.mrb[0].mxu0
      %v3869 = vadd.f32 0.0, %v3868
      %v3870 = vpop.f32.mrb[0].mxu0
      %3871 = vmatprep.mubr.bf16.mxu0 0
      %3872 = vmatmul.mubr.bf16.gmra.mrb[0].mxu0 %v3757
      %v3873 = vpop.f32.mrb[0].mxu0
      %v3874 = vadd.f32 0.0, %v3873
      %v3875 = vpop.f32.mrb[0].mxu0
      %v3876 = vpop.f32.mrb[0].mxu0
      %v3877 = vadd.f32 0.0, %v3876
      %v3878 = vpop.f32.mrb[0].mxu0
      %3879 = vmatprep.mubr.bf16.mxu0 0
      %3880 = vmatmul.mubr.bf16.gmra.mrb[0].mxu0 %v3760
      %v3881 = vpop.f32.mrb[0].mxu0
      %v3882 = vadd.f32 0.0, %v3881
      %v3883 = vpop.f32.mrb[0].mxu0
      %v3884 = vpop.f32.mrb[0].mxu0
      %v3885 = vadd.f32 0.0, %v3884
      %v3886 = vpop.f32.mrb[0].mxu0
      %3887 = vmatprep.mubr.bf16.mxu0 0
      %3888 = vmatmul.mubr.bf16.gmra.mrb[0].mxu0 %v3763
      %v3889 = vpop.f32.mrb[0].mxu0
      %v3890 = vadd.f32 0.0, %v3889
      %v3891 = vpop.f32.mrb[0].mxu0
      %v3892 = vpop.f32.mrb[0].mxu0
      %v3893 = vadd.f32 0.0, %v3892
      %v3894 = vpop.f32.mrb[0].mxu0
      %3895 = vmatprep.mubr.bf16.mxu0 0
      %3896 = vmatmul.mubr.bf16.gmra.mrb[0].mxu0 %v3766
      %v3897 = vpop.f32.mrb[0].mxu0
      %v3898 = vadd.f32 0.0, %v3897
      %v3899 = vpop.f32.mrb[0].mxu0
      %v3900 = vpop.f32.mrb[0].mxu0
      %v3901 = vadd.f32 0.0, %v3900
      %v3902 = vpop.f32.mrb[0].mxu0
      %3903 = vmatprep.mubr.bf16.mxu0 0
      %3904 = vmatmul.mubr.bf16.gmra.mrb[0].mxu0 %v3769
      %v3905 = vpop.f32.mrb[0].mxu0
      %v3906 = vadd.f32 0.0, %v3905
      %v3907 = vpop.f32.mrb[0].mxu0
      %v3908 = vpop.f32.mrb[0].mxu0
      %v3909 = vadd.f32 0.0, %v3908
      %v3910 = vpop.f32.mrb[0].mxu0
      %3911 = vmatprep.mubr.bf16.mxu0 0
      %3912 = vmatmul.mubr.bf16.gmra.mrb[0].mxu0 %v3772
      %v3913 = vpop.f32.mrb[0].mxu0
      %v3914 = vadd.f32 0.0, %v3913
      %v3915 = vpop.f32.mrb[0].mxu0
      %v3916 = vpop.f32.mrb[0].mxu0
      %v3917 = vadd.f32 0.0, %v3916
      %v3918 = vpop.f32.mrb[0].mxu0
      %3919 = vmatprep.mubr.bf16.mxu0 0
      %3920 = vmatmul.mubr.bf16.gmra.mrb[0].mxu0 %v3775
      %v3921 = vpop.f32.mrb[0].mxu0
      %v3922 = vadd.f32 0.0, %v3921
      %v3923 = vpop.f32.mrb[0].mxu0
      %v3924 = vpop.f32.mrb[0].mxu0
      %v3925 = vadd.f32 0.0, %v3924
      %v3926 = vpop.f32.mrb[0].mxu0
      %3927 = vmatprep.mubr.bf16.mxu0 0
      %3928 = vmatmul.mubr.bf16.gmra.mrb[0].mxu0 %v3778
      %v3929 = vpop.f32.mrb[0].mxu0
      %v3930 = vadd.f32 0.0, %v3929
      %v3931 = vpop.f32.mrb[0].mxu0
      %v3932 = vpop.f32.mrb[0].mxu0
      %v3933 = vadd.f32 0.0, %v3932
      %v3934 = vpop.f32.mrb[0].mxu0
      %3935 = vmatprep.mubr.bf16.mxu0 0
      %3936 = vmatmul.mubr.bf16.gmra.mrb[0].mxu0 %v3781
      %v3937 = vpop.f32.mrb[0].mxu0
      %v3938 = vadd.f32 0.0, %v3937
      %v3939 = vpop.f32.mrb[0].mxu0
      %v3940 = vpop.f32.mrb[0].mxu0
      %v3941 = vadd.f32 0.0, %v3940
      %v3942 = vpop.f32.mrb[0].mxu0
      %3943 = vdwg.mxu0
      %v3944 = vadd.f32 %v3446, %v3818
      %v3945 = vadd.f32 %v3447, %v3821
      %v3946 = vadd.f32 %v3448, %v3826
      %v3947 = vadd.f32 %v3449, %v3829
      %v3948 = vadd.f32 %v3450, %v3834
      %v3949 = vadd.f32 %v3451, %v3837
      %v3950 = vadd.f32 %v3452, %v3842
      %v3951 = vadd.f32 %v3453, %v3845
      %v3952 = vadd.f32 %v3454, %v3850
      %v3953 = vadd.f32 %v3455, %v3853
      %v3954 = vadd.f32 %v3456, %v3858
      %v3955 = vadd.f32 %v3457, %v3861
      %v3956 = vadd.f32 %v3458, %v3866
      %v3957 = vadd.f32 %v3459, %v3869
      %v3958 = vadd.f32 %v3460, %v3874
      %v3959 = vadd.f32 %v3461, %v3877
      %v3960 = vadd.f32 %v3462, %v3882
      %v3961 = vadd.f32 %v3463, %v3885
      %v3962 = vadd.f32 %v3464, %v3890
      %v3963 = vadd.f32 %v3465, %v3893
      %v3964 = vadd.f32 %v3466, %v3898
      %v3965 = vadd.f32 %v3467, %v3901
      %v3966 = vadd.f32 %v3468, %v3906
      %v3967 = vadd.f32 %v3469, %v3909
      %v3968 = vadd.f32 %v3470, %v3914
      %v3969 = vadd.f32 %v3471, %v3917
      %v3970 = vadd.f32 %v3472, %v3922
      %v3971 = vadd.f32 %v3473, %v3925
      %v3972 = vadd.f32 %v3474, %v3930
      %v3973 = vadd.f32 %v3475, %v3933
      %v3974 = vadd.f32 %v3476, %v3938
      %v3975 = vadd.f32 %v3477, %v3941
      %s3976 = scalar_lea.vmem [#allocation2], 24
      %v3977 = vld [vmem:[%s3976] sm:$0xf]
      %v3978 = vld [vmem:[%s3976 + $0x4] sm:$0xf]
      %v3979 = vld [vmem:[%s3976 + $0xc] sm:$0xf]
      %v3980 = vld [vmem:[%s3976 + $0x10] sm:$0xf]
      %v3981 = vld [vmem:[%s3976 + $0x18] sm:$0xf]
      %v3982 = vld [vmem:[%s3976 + $0x1c] sm:$0xf]
      %v3983 = vld [vmem:[%s3976 + $0x24] sm:$0xf]
      %v3984 = vld [vmem:[%s3976 + $0x28] sm:$0xf]
      %v3985 = vld [vmem:[%s3976 + $0x30] sm:$0xf]
      %v3986 = vld [vmem:[%s3976 + $0x34] sm:$0xf]
      %v3987 = vld [vmem:[%s3976 + $0x3c] sm:$0xf]
      %v3988 = vld [vmem:[%s3976 + $0x40] sm:$0xf]
      %v3989 = vld [vmem:[%s3976 + $0x48] sm:$0xf]
      %v3990 = vld [vmem:[%s3976 + $0x4c] sm:$0xf]
      %v3991 = vld [vmem:[%s3976 + $0x54] sm:$0xf]
      %v3992 = vld [vmem:[%s3976 + $0x58] sm:$0xf]
      %v3993 = vld [vmem:[%s3976 + $0x60] sm:$0xf]
      %v3994 = vld [vmem:[%s3976 + $0x64] sm:$0xf]
      %v3995 = vld [vmem:[%s3976 + $0x6c] sm:$0xf]
      %v3996 = vld [vmem:[%s3976 + $0x70] sm:$0xf]
      %v3997 = vld [vmem:[%s3976 + $0x78] sm:$0xf]
      %v3998 = vld [vmem:[%s3976 + $0x7c] sm:$0xf]
      %v3999 = vld [vmem:[%s3976 + $0x84] sm:$0xf]
      %v4000 = vld [vmem:[%s3976 + $0x88] sm:$0xf]
      %v4001 = vld [vmem:[%s3976 + $0x90] sm:$0xf]
      %v4002 = vld [vmem:[%s3976 + $0x94] sm:$0xf]
      %v4003 = vld [vmem:[%s3976 + $0x9c] sm:$0xf]
      %v4004 = vld [vmem:[%s3976 + $0xa0] sm:$0xf]
      %v4005 = vld [vmem:[%s3976 + $0xa8] sm:$0xf]
      %v4006 = vld [vmem:[%s3976 + $0xac] sm:$0xf]
      %v4007 = vld [vmem:[%s3976 + $0xb4] sm:$0xf]
      %v4008 = vld [vmem:[%s3976 + $0xb8] sm:$0xf]
      %s4009 = scalar_lea.vmem %s1, 192
      %v4010 = vld [vmem:[%s4009] sm:$0xf]
      %v4011 = vld [vmem:[%s4009 + $0x4] sm:$0xf]
      %v4012 = vld [vmem:[%s4009 + $0x8] sm:$0xf]
      %v4013 = vld [vmem:[%s4009 + $0xc] sm:$0xf]
      %v4014 = vld [vmem:[%s4009 + $0x10] sm:$0xf]
      %v4015 = vld [vmem:[%s4009 + $0x14] sm:$0xf]
      %v4016 = vld [vmem:[%s4009 + $0x18] sm:$0xf]
      %v4017 = vld [vmem:[%s4009 + $0x1c] sm:$0xf]
      %v4050 = vunpack.c.l.b16 %v3977
      %v4051 = vunpack.c.l.b16 %v3978
      %v4052 = vunpack.c.l.b16 %v3979
      %v4053 = vunpack.c.l.b16 %v3980
      %v4054 = vunpack.c.l.b16 %v3981
      %v4055 = vunpack.c.l.b16 %v3982
      %v4056 = vunpack.c.l.b16 %v3983
      %v4057 = vunpack.c.l.b16 %v3984
      %v4058 = vunpack.c.l.b16 %v3985
      %v4059 = vunpack.c.l.b16 %v3986
      %v4060 = vunpack.c.l.b16 %v3987
      %v4061 = vunpack.c.l.b16 %v3988
      %v4062 = vunpack.c.l.b16 %v3989
      %v4063 = vunpack.c.l.b16 %v3990
      %v4064 = vunpack.c.l.b16 %v3991
      %v4065 = vunpack.c.l.b16 %v3992
      %v4066 = vunpack.c.l.b16 %v3993
      %v4067 = vunpack.c.l.b16 %v3994
      %v4068 = vunpack.c.l.b16 %v3995
      %v4069 = vunpack.c.l.b16 %v3996
      %v4070 = vunpack.c.l.b16 %v3997
      %v4071 = vunpack.c.l.b16 %v3998
      %v4072 = vunpack.c.l.b16 %v3999
      %v4073 = vunpack.c.l.b16 %v4000
      %v4074 = vunpack.c.l.b16 %v4001
      %v4075 = vunpack.c.l.b16 %v4002
      %v4076 = vunpack.c.l.b16 %v4003
      %v4077 = vunpack.c.l.b16 %v4004
      %v4078 = vunpack.c.l.b16 %v4005
      %v4079 = vunpack.c.l.b16 %v4006
      %v4080 = vunpack.c.l.b16 %v4007
      %v4081 = vunpack.c.l.b16 %v4008
      %v4082 = vpack.c.b16 %v4051, %v4050
      %v4083 = vpack.c.b16 %v4053, %v4052
      %v4084 = vpack.c.b16 %v4055, %v4054
      %v4085 = vpack.c.b16 %v4057, %v4056
      %v4086 = vpack.c.b16 %v4059, %v4058
      %v4087 = vpack.c.b16 %v4061, %v4060
      %v4088 = vpack.c.b16 %v4063, %v4062
      %v4089 = vpack.c.b16 %v4065, %v4064
      %v4090 = vpack.c.b16 %v4067, %v4066
      %v4091 = vpack.c.b16 %v4069, %v4068
      %v4092 = vpack.c.b16 %v4071, %v4070
      %v4093 = vpack.c.b16 %v4073, %v4072
      %v4094 = vpack.c.b16 %v4075, %v4074
      %v4095 = vpack.c.b16 %v4077, %v4076
      %v4096 = vpack.c.b16 %v4079, %v4078
      %v4097 = vpack.c.b16 %v4081, %v4080
      %v4106 = vunpack.c.l.b16 %v4010
      %v4107 = vunpack.c.l.b16 %v4011
      %v4108 = vunpack.c.l.b16 %v4012
      %v4109 = vunpack.c.l.b16 %v4013
      %v4110 = vunpack.c.l.b16 %v4014
      %v4111 = vunpack.c.l.b16 %v4015
      %v4112 = vunpack.c.l.b16 %v4016
      %v4113 = vunpack.c.l.b16 %v4017
      %v4114 = vpack.c.b16 %v4107, %v4106
      %v4115 = vpack.c.b16 %v4109, %v4108
      %v4116 = vpack.c.b16 %v4111, %v4110
      %v4117 = vpack.c.b16 %v4113, %v4112
      %v4123 = vsel %vm1330, %v4082, 0
      %v4126 = vsel %vm1330, %v4083, 0
      %v4129 = vsel %vm1330, %v4084, 0
      %v4132 = vsel %vm1330, %v4085, 0
      %v4135 = vsel %vm1330, %v4086, 0
      %v4138 = vsel %vm1330, %v4087, 0
      %v4141 = vsel %vm1330, %v4088, 0
      %v4144 = vsel %vm1330, %v4089, 0
      %v4147 = vsel %vm1330, %v4090, 0
      %v4150 = vsel %vm1330, %v4091, 0
      %v4153 = vsel %vm1330, %v4092, 0
      %v4156 = vsel %vm1330, %v4093, 0
      %v4159 = vsel %vm1330, %v4094, 0
      %v4162 = vsel %vm1330, %v4095, 0
      %v4165 = vsel %vm1330, %v4096, 0
      %v4168 = vsel %vm1330, %v4097, 0
      %4170 = vmatprep.subr.bf16.mxu0 0
      %4171 = vmatpush1.bf16.msra.mxu0 %v4114
      %4172 = vmatprep.subr.bf16.mxu0 0
      %4173 = vmatpush1.bf16.msra.mxu0 %v4115
      %4174 = vmatprep.subr.bf16.mxu0 0
      %4175 = vmatpush1.bf16.msra.mxu0 %v4116
      %4176 = vmatprep.subr.bf16.mxu0 0
      %4177 = vmatpush1.bf16.msra.mxu0 %v4117
      %4178 = vmatprep.subr.bf16.mxu0 0
      %4179 = vmatpush1.bf16.msra.mxu0 0
      %4180 = vmatprep.subr.bf16.mxu0 0
      %4181 = vmatpush1.bf16.msra.mxu0 0
      %4182 = vmatprep.subr.bf16.mxu0 0
      %4183 = vmatpush1.bf16.msra.mxu0 0
      %4184 = vmatprep.subr.bf16.mxu0 0
      %4185 = vmatpush1.bf16.msra.mxu0 0
      %4186 = vmatprep.subr.bf16.mxu0 0
      %4187 = vmatpush1.bf16.msra.mxu0 0
      %4188 = vmatprep.subr.bf16.mxu0 0
      %4189 = vmatpush1.bf16.msra.mxu0 0
      %4190 = vmatprep.subr.bf16.mxu0 0
      %4191 = vmatpush1.bf16.msra.mxu0 0
      %4192 = vmatprep.subr.bf16.mxu0 0
      %4193 = vmatpush1.bf16.msra.mxu0 0
      %4194 = vmatprep.subr.bf16.mxu0 0
      %4195 = vmatpush1.bf16.msra.mxu0 0
      %4196 = vmatprep.subr.bf16.mxu0 0
      %4197 = vmatpush1.bf16.msra.mxu0 0
      %4198 = vmatprep.subr.bf16.mxu0 0
      %4199 = vmatpush1.bf16.msra.mxu0 0
      %4200 = vmatprep.subr.bf16.mxu0 0
      %4201 = vmatpush1.bf16.msra.mxu0 0
      %4202 = vmatprep.mubr.bf16.mxu0 0
      %4203 = vmatmul.mubr.bf16.gmra.mrb[0].mxu0 %v4123
      %v4204 = vpop.f32.mrb[0].mxu0
      %v4205 = vadd.f32 0.0, %v4204
      %v4206 = vpop.f32.mrb[0].mxu0
      %v4207 = vpop.f32.mrb[0].mxu0
      %v4208 = vadd.f32 0.0, %v4207
      %v4209 = vpop.f32.mrb[0].mxu0
      %4210 = vmatprep.mubr.bf16.mxu0 0
      %4211 = vmatmul.mubr.bf16.gmra.mrb[0].mxu0 %v4126
      %v4212 = vpop.f32.mrb[0].mxu0
      %v4213 = vadd.f32 0.0, %v4212
      %v4214 = vpop.f32.mrb[0].mxu0
      %v4215 = vpop.f32.mrb[0].mxu0
      %v4216 = vadd.f32 0.0, %v4215
      %v4217 = vpop.f32.mrb[0].mxu0
      %4218 = vmatprep.mubr.bf16.mxu0 0
      %4219 = vmatmul.mubr.bf16.gmra.mrb[0].mxu0 %v4129
      %v4220 = vpop.f32.mrb[0].mxu0
      %v4221 = vadd.f32 0.0, %v4220
      %v4222 = vpop.f32.mrb[0].mxu0
      %v4223 = vpop.f32.mrb[0].mxu0
      %v4224 = vadd.f32 0.0, %v4223
      %v4225 = vpop.f32.mrb[0].mxu0
      %4226 = vmatprep.mubr.bf16.mxu0 0
      %4227 = vmatmul.mubr.bf16.gmra.mrb[0].mxu0 %v4132
      %v4228 = vpop.f32.mrb[0].mxu0
      %v4229 = vadd.f32 0.0, %v4228
      %v4230 = vpop.f32.mrb[0].mxu0
      %v4231 = vpop.f32.mrb[0].mxu0
      %v4232 = vadd.f32 0.0, %v4231
      %v4233 = vpop.f32.mrb[0].mxu0
      %4234 = vmatprep.mubr.bf16.mxu0 0
      %4235 = vmatmul.mubr.bf16.gmra.mrb[0].mxu0 %v4135
      %v4236 = vpop.f32.mrb[0].mxu0
      %v4237 = vadd.f32 0.0, %v4236
      %v4238 = vpop.f32.mrb[0].mxu0
      %v4239 = vpop.f32.mrb[0].mxu0
      %v4240 = vadd.f32 0.0, %v4239
      %v4241 = vpop.f32.mrb[0].mxu0
      %4242 = vmatprep.mubr.bf16.mxu0 0
      %4243 = vmatmul.mubr.bf16.gmra.mrb[0].mxu0 %v4138
      %v4244 = vpop.f32.mrb[0].mxu0
      %v4245 = vadd.f32 0.0, %v4244
      %v4246 = vpop.f32.mrb[0].mxu0
      %v4247 = vpop.f32.mrb[0].mxu0
      %v4248 = vadd.f32 0.0, %v4247
      %v4249 = vpop.f32.mrb[0].mxu0
      %4250 = vmatprep.mubr.bf16.mxu0 0
      %4251 = vmatmul.mubr.bf16.gmra.mrb[0].mxu0 %v4141
      %v4252 = vpop.f32.mrb[0].mxu0
      %v4253 = vadd.f32 0.0, %v4252
      %v4254 = vpop.f32.mrb[0].mxu0
      %v4255 = vpop.f32.mrb[0].mxu0
      %v4256 = vadd.f32 0.0, %v4255
      %v4257 = vpop.f32.mrb[0].mxu0
      %4258 = vmatprep.mubr.bf16.mxu0 0
      %4259 = vmatmul.mubr.bf16.gmra.mrb[0].mxu0 %v4144
      %v4260 = vpop.f32.mrb[0].mxu0
      %v4261 = vadd.f32 0.0, %v4260
      %v4262 = vpop.f32.mrb[0].mxu0
      %v4263 = vpop.f32.mrb[0].mxu0
      %v4264 = vadd.f32 0.0, %v4263
      %v4265 = vpop.f32.mrb[0].mxu0
      %4266 = vmatprep.mubr.bf16.mxu0 0
      %4267 = vmatmul.mubr.bf16.gmra.mrb[0].mxu0 %v4147
      %v4268 = vpop.f32.mrb[0].mxu0
      %v4269 = vadd.f32 0.0, %v4268
      %v4270 = vpop.f32.mrb[0].mxu0
      %v4271 = vpop.f32.mrb[0].mxu0
      %v4272 = vadd.f32 0.0, %v4271
      %v4273 = vpop.f32.mrb[0].mxu0
      %4274 = vmatprep.mubr.bf16.mxu0 0
      %4275 = vmatmul.mubr.bf16.gmra.mrb[0].mxu0 %v4150
      %v4276 = vpop.f32.mrb[0].mxu0
      %v4277 = vadd.f32 0.0, %v4276
      %v4278 = vpop.f32.mrb[0].mxu0
      %v4279 = vpop.f32.mrb[0].mxu0
      %v4280 = vadd.f32 0.0, %v4279
      %v4281 = vpop.f32.mrb[0].mxu0
      %4282 = vmatprep.mubr.bf16.mxu0 0
      %4283 = vmatmul.mubr.bf16.gmra.mrb[0].mxu0 %v4153
      %v4284 = vpop.f32.mrb[0].mxu0
      %v4285 = vadd.f32 0.0, %v4284
      %v4286 = vpop.f32.mrb[0].mxu0
      %v4287 = vpop.f32.mrb[0].mxu0
      %v4288 = vadd.f32 0.0, %v4287
      %v4289 = vpop.f32.mrb[0].mxu0
      %4290 = vmatprep.mubr.bf16.mxu0 0
      %4291 = vmatmul.mubr.bf16.gmra.mrb[0].mxu0 %v4156
      %v4292 = vpop.f32.mrb[0].mxu0
      %v4293 = vadd.f32 0.0, %v4292
      %v4294 = vpop.f32.mrb[0].mxu0
      %v4295 = vpop.f32.mrb[0].mxu0
      %v4296 = vadd.f32 0.0, %v4295
      %v4297 = vpop.f32.mrb[0].mxu0
      %4298 = vmatprep.mubr.bf16.mxu0 0
      %4299 = vmatmul.mubr.bf16.gmra.mrb[0].mxu0 %v4159
      %v4300 = vpop.f32.mrb[0].mxu0
      %v4301 = vadd.f32 0.0, %v4300
      %v4302 = vpop.f32.mrb[0].mxu0
      %v4303 = vpop.f32.mrb[0].mxu0
      %v4304 = vadd.f32 0.0, %v4303
      %v4305 = vpop.f32.mrb[0].mxu0
      %4306 = vmatprep.mubr.bf16.mxu0 0
      %4307 = vmatmul.mubr.bf16.gmra.mrb[0].mxu0 %v4162
      %v4308 = vpop.f32.mrb[0].mxu0
      %v4309 = vadd.f32 0.0, %v4308
      %v4310 = vpop.f32.mrb[0].mxu0
      %v4311 = vpop.f32.mrb[0].mxu0
      %v4312 = vadd.f32 0.0, %v4311
      %v4313 = vpop.f32.mrb[0].mxu0
      %4314 = vmatprep.mubr.bf16.mxu0 0
      %4315 = vmatmul.mubr.bf16.gmra.mrb[0].mxu0 %v4165
      %v4316 = vpop.f32.mrb[0].mxu0
      %v4317 = vadd.f32 0.0, %v4316
      %v4318 = vpop.f32.mrb[0].mxu0
      %v4319 = vpop.f32.mrb[0].mxu0
      %v4320 = vadd.f32 0.0, %v4319
      %v4321 = vpop.f32.mrb[0].mxu0
      %4322 = vmatprep.mubr.bf16.mxu0 0
      %4323 = vmatmul.mubr.bf16.gmra.mrb[0].mxu0 %v4168
      %v4324 = vpop.f32.mrb[0].mxu0
      %v4325 = vadd.f32 0.0, %v4324
      %v4326 = vpop.f32.mrb[0].mxu0
      %v4327 = vpop.f32.mrb[0].mxu0
      %v4328 = vadd.f32 0.0, %v4327
      %v4329 = vpop.f32.mrb[0].mxu0
      %4330 = vdwg.mxu0
      %v4331 = vadd.f32 %v3944, %v4205
      %v4332 = vadd.f32 %v3945, %v4208
      %v4333 = vadd.f32 %v3946, %v4213
      %v4334 = vadd.f32 %v3947, %v4216
      %v4335 = vadd.f32 %v3948, %v4221
      %v4336 = vadd.f32 %v3949, %v4224
      %v4337 = vadd.f32 %v3950, %v4229
      %v4338 = vadd.f32 %v3951, %v4232
      %v4339 = vadd.f32 %v3952, %v4237
      %v4340 = vadd.f32 %v3953, %v4240
      %v4341 = vadd.f32 %v3954, %v4245
      %v4342 = vadd.f32 %v3955, %v4248
      %v4343 = vadd.f32 %v3956, %v4253
      %v4344 = vadd.f32 %v3957, %v4256
      %v4345 = vadd.f32 %v3958, %v4261
      %v4346 = vadd.f32 %v3959, %v4264
      %v4347 = vadd.f32 %v3960, %v4269
      %v4348 = vadd.f32 %v3961, %v4272
      %v4349 = vadd.f32 %v3962, %v4277
      %v4350 = vadd.f32 %v3963, %v4280
      %v4351 = vadd.f32 %v3964, %v4285
      %v4352 = vadd.f32 %v3965, %v4288
      %v4353 = vadd.f32 %v3966, %v4293
      %v4354 = vadd.f32 %v3967, %v4296
      %v4355 = vadd.f32 %v3968, %v4301
      %v4356 = vadd.f32 %v3969, %v4304
      %v4357 = vadd.f32 %v3970, %v4309
      %v4358 = vadd.f32 %v3971, %v4312
      %v4359 = vadd.f32 %v3972, %v4317
      %v4360 = vadd.f32 %v3973, %v4320
      %v4361 = vadd.f32 %v3974, %v4325
      %v4362 = vadd.f32 %v3975, %v4328
      %v4363 = vld [vmem:[%s3976] sm:$0xf]
      %v4364 = vld [vmem:[%s3976 + $0x4] sm:$0xf]
      %v4365 = vld [vmem:[%s3976 + $0x8] sm:$0x1]
      %v4366 = vld [vmem:[%s3976 + $0xc] sm:$0xf]
      %v4367 = vld [vmem:[%s3976 + $0x10] sm:$0xf]
      %v4368 = vld [vmem:[%s3976 + $0x14] sm:$0x1]
      %v4369 = vld [vmem:[%s3976 + $0x18] sm:$0xf]
      %v4370 = vld [vmem:[%s3976 + $0x1c] sm:$0xf]
      %v4371 = vld [vmem:[%s3976 + $0x20] sm:$0x1]
      %v4372 = vld [vmem:[%s3976 + $0x24] sm:$0xf]
      %v4373 = vld [vmem:[%s3976 + $0x28] sm:$0xf]
      %v4374 = vld [vmem:[%s3976 + $0x2c] sm:$0x1]
      %v4375 = vld [vmem:[%s3976 + $0x30] sm:$0xf]
      %v4376 = vld [vmem:[%s3976 + $0x34] sm:$0xf]
      %v4377 = vld [vmem:[%s3976 + $0x38] sm:$0x1]
      %v4378 = vld [vmem:[%s3976 + $0x3c] sm:$0xf]
      %v4379 = vld [vmem:[%s3976 + $0x40] sm:$0xf]
      %v4380 = vld [vmem:[%s3976 + $0x44] sm:$0x1]
      %v4381 = vld [vmem:[%s3976 + $0x48] sm:$0xf]
      %v4382 = vld [vmem:[%s3976 + $0x4c] sm:$0xf]
      %v4383 = vld [vmem:[%s3976 + $0x50] sm:$0x1]
      %v4384 = vld [vmem:[%s3976 + $0x54] sm:$0xf]
      %v4385 = vld [vmem:[%s3976 + $0x58] sm:$0xf]
      %v4386 = vld [vmem:[%s3976 + $0x5c] sm:$0x1]
      %v4387 = vld [vmem:[%s3976 + $0x60] sm:$0xf]
      %v4388 = vld [vmem:[%s3976 + $0x64] sm:$0xf]
      %v4389 = vld [vmem:[%s3976 + $0x68] sm:$0x1]
      %v4390 = vld [vmem:[%s3976 + $0x6c] sm:$0xf]
      %v4391 = vld [vmem:[%s3976 + $0x70] sm:$0xf]
      %v4392 = vld [vmem:[%s3976 + $0x74] sm:$0x1]
      %v4393 = vld [vmem:[%s3976 + $0x78] sm:$0xf]
      %v4394 = vld [vmem:[%s3976 + $0x7c] sm:$0xf]
      %v4395 = vld [vmem:[%s3976 + $0x80] sm:$0x1]
      %v4396 = vld [vmem:[%s3976 + $0x84] sm:$0xf]
      %v4397 = vld [vmem:[%s3976 + $0x88] sm:$0xf]
      %v4398 = vld [vmem:[%s3976 + $0x8c] sm:$0x1]
      %v4399 = vld [vmem:[%s3976 + $0x90] sm:$0xf]
      %v4400 = vld [vmem:[%s3976 + $0x94] sm:$0xf]
      %v4401 = vld [vmem:[%s3976 + $0x98] sm:$0x1]
      %v4402 = vld [vmem:[%s3976 + $0x9c] sm:$0xf]
      %v4403 = vld [vmem:[%s3976 + $0xa0] sm:$0xf]
      %v4404 = vld [vmem:[%s3976 + $0xa4] sm:$0x1]
      %v4405 = vld [vmem:[%s3976 + $0xa8] sm:$0xf]
      %v4406 = vld [vmem:[%s3976 + $0xac] sm:$0xf]
      %v4407 = vld [vmem:[%s3976 + $0xb0] sm:$0x1]
      %v4408 = vld [vmem:[%s3976 + $0xb4] sm:$0xf]
      %v4409 = vld [vmem:[%s3976 + $0xb8] sm:$0xf]
      %v4410 = vld [vmem:[%s3976 + $0xbc] sm:$0x1]
      %v4412 = vshrl.u32 %v4363, 16
      %v4414 = vrot.slane %v4412, 4
      %v4415 = vshll.u32 %v4363, 16
      %v4417 = vrot.slane %v4415, 5
      %v4418 = vor.u32 %v4414, %v4417
      %v4419 = vrot.slane %v4418, 4
      %v4421 = vshll.u32 %v4364, 16
      %v4423 = vrot.slane %v4421, 5
      %v4424 = vsel %vm864, %v4419, %v4423
      %v4425 = vshrl.u32 %v4364, 16
      %v4427 = vrot.slane %v4425, 4
      %v4428 = vor.u32 %v4427, %v4423
      %v4429 = vrot.slane %v4428, 4
      %v4431 = vshll.u32 %v4365, 16
      %v4433 = vrot.slane %v4431, 5
      %v4434 = vsel %vm864, %v4429, %v4433
      %v4436 = vshrl.u32 %v4366, 16
      %v4438 = vrot.slane %v4436, 4
      %v4439 = vshll.u32 %v4366, 16
      %v4441 = vrot.slane %v4439, 5
      %v4442 = vor.u32 %v4438, %v4441
      %v4443 = vrot.slane %v4442, 4
      %v4445 = vshll.u32 %v4367, 16
      %v4447 = vrot.slane %v4445, 5
      %v4448 = vsel %vm864, %v4443, %v4447
      %v4449 = vshrl.u32 %v4367, 16
      %v4451 = vrot.slane %v4449, 4
      %v4452 = vor.u32 %v4451, %v4447
      %v4453 = vrot.slane %v4452, 4
      %v4455 = vshll.u32 %v4368, 16
      %v4457 = vrot.slane %v4455, 5
      %v4458 = vsel %vm864, %v4453, %v4457
      %v4460 = vshrl.u32 %v4369, 16
      %v4462 = vrot.slane %v4460, 4
      %v4463 = vshll.u32 %v4369, 16
      %v4465 = vrot.slane %v4463, 5
      %v4466 = vor.u32 %v4462, %v4465
      %v4467 = vrot.slane %v4466, 4
      %v4469 = vshll.u32 %v4370, 16
      %v4471 = vrot.slane %v4469, 5
      %v4472 = vsel %vm864, %v4467, %v4471
      %v4473 = vshrl.u32 %v4370, 16
      %v4475 = vrot.slane %v4473, 4
      %v4476 = vor.u32 %v4475, %v4471
      %v4477 = vrot.slane %v4476, 4
      %v4479 = vshll.u32 %v4371, 16
      %v4481 = vrot.slane %v4479, 5
      %v4482 = vsel %vm864, %v4477, %v4481
      %v4484 = vshrl.u32 %v4372, 16
      %v4486 = vrot.slane %v4484, 4
      %v4487 = vshll.u32 %v4372, 16
      %v4489 = vrot.slane %v4487, 5
      %v4490 = vor.u32 %v4486, %v4489
      %v4491 = vrot.slane %v4490, 4
      %v4493 = vshll.u32 %v4373, 16
      %v4495 = vrot.slane %v4493, 5
      %v4496 = vsel %vm864, %v4491, %v4495
      %v4497 = vshrl.u32 %v4373, 16
      %v4499 = vrot.slane %v4497, 4
      %v4500 = vor.u32 %v4499, %v4495
      %v4501 = vrot.slane %v4500, 4
      %v4503 = vshll.u32 %v4374, 16
      %v4505 = vrot.slane %v4503, 5
      %v4506 = vsel %vm864, %v4501, %v4505
      %v4508 = vshrl.u32 %v4375, 16
      %v4510 = vrot.slane %v4508, 4
      %v4511 = vshll.u32 %v4375, 16
      %v4513 = vrot.slane %v4511, 5
      %v4514 = vor.u32 %v4510, %v4513
      %v4515 = vrot.slane %v4514, 4
      %v4517 = vshll.u32 %v4376, 16
      %v4519 = vrot.slane %v4517, 5
      %v4520 = vsel %vm864, %v4515, %v4519
      %v4521 = vshrl.u32 %v4376, 16
      %v4523 = vrot.slane %v4521, 4
      %v4524 = vor.u32 %v4523, %v4519
      %v4525 = vrot.slane %v4524, 4
      %v4527 = vshll.u32 %v4377, 16
      %v4529 = vrot.slane %v4527, 5
      %v4530 = vsel %vm864, %v4525, %v4529
      %v4532 = vshrl.u32 %v4378, 16
      %v4534 = vrot.slane %v4532, 4
      %v4535 = vshll.u32 %v4378, 16
      %v4537 = vrot.slane %v4535, 5
      %v4538 = vor.u32 %v4534, %v4537
      %v4539 = vrot.slane %v4538, 4
      %v4541 = vshll.u32 %v4379, 16
      %v4543 = vrot.slane %v4541, 5
      %v4544 = vsel %vm864, %v4539, %v4543
      %v4545 = vshrl.u32 %v4379, 16
      %v4547 = vrot.slane %v4545, 4
      %v4548 = vor.u32 %v4547, %v4543
      %v4549 = vrot.slane %v4548, 4
      %v4551 = vshll.u32 %v4380, 16
      %v4553 = vrot.slane %v4551, 5
      %v4554 = vsel %vm864, %v4549, %v4553
      %v4556 = vshrl.u32 %v4381, 16
      %v4558 = vrot.slane %v4556, 4
      %v4559 = vshll.u32 %v4381, 16
      %v4561 = vrot.slane %v4559, 5
      %v4562 = vor.u32 %v4558, %v4561
      %v4563 = vrot.slane %v4562, 4
      %v4565 = vshll.u32 %v4382, 16
      %v4567 = vrot.slane %v4565, 5
      %v4568 = vsel %vm864, %v4563, %v4567
      %v4569 = vshrl.u32 %v4382, 16
      %v4571 = vrot.slane %v4569, 4
      %v4572 = vor.u32 %v4571, %v4567
      %v4573 = vrot.slane %v4572, 4
      %v4575 = vshll.u32 %v4383, 16
      %v4577 = vrot.slane %v4575, 5
      %v4578 = vsel %vm864, %v4573, %v4577
      %v4580 = vshrl.u32 %v4384, 16
      %v4582 = vrot.slane %v4580, 4
      %v4583 = vshll.u32 %v4384, 16
      %v4585 = vrot.slane %v4583, 5
      %v4586 = vor.u32 %v4582, %v4585
      %v4587 = vrot.slane %v4586, 4
      %v4589 = vshll.u32 %v4385, 16
      %v4591 = vrot.slane %v4589, 5
      %v4592 = vsel %vm864, %v4587, %v4591
      %v4593 = vshrl.u32 %v4385, 16
      %v4595 = vrot.slane %v4593, 4
      %v4596 = vor.u32 %v4595, %v4591
      %v4597 = vrot.slane %v4596, 4
      %v4599 = vshll.u32 %v4386, 16
      %v4601 = vrot.slane %v4599, 5
      %v4602 = vsel %vm864, %v4597, %v4601
      %v4604 = vshrl.u32 %v4387, 16
      %v4606 = vrot.slane %v4604, 4
      %v4607 = vshll.u32 %v4387, 16
      %v4609 = vrot.slane %v4607, 5
      %v4610 = vor.u32 %v4606, %v4609
      %v4611 = vrot.slane %v4610, 4
      %v4613 = vshll.u32 %v4388, 16
      %v4615 = vrot.slane %v4613, 5
      %v4616 = vsel %vm864, %v4611, %v4615
      %v4617 = vshrl.u32 %v4388, 16
      %v4619 = vrot.slane %v4617, 4
      %v4620 = vor.u32 %v4619, %v4615
      %v4621 = vrot.slane %v4620, 4
      %v4623 = vshll.u32 %v4389, 16
      %v4625 = vrot.slane %v4623, 5
      %v4626 = vsel %vm864, %v4621, %v4625
      %v4628 = vshrl.u32 %v4390, 16
      %v4630 = vrot.slane %v4628, 4
      %v4631 = vshll.u32 %v4390, 16
      %v4633 = vrot.slane %v4631, 5
      %v4634 = vor.u32 %v4630, %v4633
      %v4635 = vrot.slane %v4634, 4
      %v4637 = vshll.u32 %v4391, 16
      %v4639 = vrot.slane %v4637, 5
      %v4640 = vsel %vm864, %v4635, %v4639
      %v4641 = vshrl.u32 %v4391, 16
      %v4643 = vrot.slane %v4641, 4
      %v4644 = vor.u32 %v4643, %v4639
      %v4645 = vrot.slane %v4644, 4
      %v4647 = vshll.u32 %v4392, 16
      %v4649 = vrot.slane %v4647, 5
      %v4650 = vsel %vm864, %v4645, %v4649
      %v4652 = vshrl.u32 %v4393, 16
      %v4654 = vrot.slane %v4652, 4
      %v4655 = vshll.u32 %v4393, 16
      %v4657 = vrot.slane %v4655, 5
      %v4658 = vor.u32 %v4654, %v4657
      %v4659 = vrot.slane %v4658, 4
      %v4661 = vshll.u32 %v4394, 16
      %v4663 = vrot.slane %v4661, 5
      %v4664 = vsel %vm864, %v4659, %v4663
      %v4665 = vshrl.u32 %v4394, 16
      %v4667 = vrot.slane %v4665, 4
      %v4668 = vor.u32 %v4667, %v4663
      %v4669 = vrot.slane %v4668, 4
      %v4671 = vshll.u32 %v4395, 16
      %v4673 = vrot.slane %v4671, 5
      %v4674 = vsel %vm864, %v4669, %v4673
      %v4676 = vshrl.u32 %v4396, 16
      %v4678 = vrot.slane %v4676, 4
      %v4679 = vshll.u32 %v4396, 16
      %v4681 = vrot.slane %v4679, 5
      %v4682 = vor.u32 %v4678, %v4681
      %v4683 = vrot.slane %v4682, 4
      %v4685 = vshll.u32 %v4397, 16
      %v4687 = vrot.slane %v4685, 5
      %v4688 = vsel %vm864, %v4683, %v4687
      %v4689 = vshrl.u32 %v4397, 16
      %v4691 = vrot.slane %v4689, 4
      %v4692 = vor.u32 %v4691, %v4687
      %v4693 = vrot.slane %v4692, 4
      %v4695 = vshll.u32 %v4398, 16
      %v4697 = vrot.slane %v4695, 5
      %v4698 = vsel %vm864, %v4693, %v4697
      %v4700 = vshrl.u32 %v4399, 16
      %v4702 = vrot.slane %v4700, 4
      %v4703 = vshll.u32 %v4399, 16
      %v4705 = vrot.slane %v4703, 5
      %v4706 = vor.u32 %v4702, %v4705
      %v4707 = vrot.slane %v4706, 4
      %v4709 = vshll.u32 %v4400, 16
      %v4711 = vrot.slane %v4709, 5
      %v4712 = vsel %vm864, %v4707, %v4711
      %v4713 = vshrl.u32 %v4400, 16
      %v4715 = vrot.slane %v4713, 4
      %v4716 = vor.u32 %v4715, %v4711
      %v4717 = vrot.slane %v4716, 4
      %v4719 = vshll.u32 %v4401, 16
      %v4721 = vrot.slane %v4719, 5
      %v4722 = vsel %vm864, %v4717, %v4721
      %v4724 = vshrl.u32 %v4402, 16
      %v4726 = vrot.slane %v4724, 4
      %v4727 = vshll.u32 %v4402, 16
      %v4729 = vrot.slane %v4727, 5
      %v4730 = vor.u32 %v4726, %v4729
      %v4731 = vrot.slane %v4730, 4
      %v4733 = vshll.u32 %v4403, 16
      %v4735 = vrot.slane %v4733, 5
      %v4736 = vsel %vm864, %v4731, %v4735
      %v4737 = vshrl.u32 %v4403, 16
      %v4739 = vrot.slane %v4737, 4
      %v4740 = vor.u32 %v4739, %v4735
      %v4741 = vrot.slane %v4740, 4
      %v4743 = vshll.u32 %v4404, 16
      %v4745 = vrot.slane %v4743, 5
      %v4746 = vsel %vm864, %v4741, %v4745
      %v4748 = vshrl.u32 %v4405, 16
      %v4750 = vrot.slane %v4748, 4
      %v4751 = vshll.u32 %v4405, 16
      %v4753 = vrot.slane %v4751, 5
      %v4754 = vor.u32 %v4750, %v4753
      %v4755 = vrot.slane %v4754, 4
      %v4757 = vshll.u32 %v4406, 16
      %v4759 = vrot.slane %v4757, 5
      %v4760 = vsel %vm864, %v4755, %v4759
      %v4761 = vshrl.u32 %v4406, 16
      %v4763 = vrot.slane %v4761, 4
      %v4764 = vor.u32 %v4763, %v4759
      %v4765 = vrot.slane %v4764, 4
      %v4767 = vshll.u32 %v4407, 16
      %v4769 = vrot.slane %v4767, 5
      %v4770 = vsel %vm864, %v4765, %v4769
      %v4772 = vshrl.u32 %v4408, 16
      %v4774 = vrot.slane %v4772, 4
      %v4775 = vshll.u32 %v4408, 16
      %v4777 = vrot.slane %v4775, 5
      %v4778 = vor.u32 %v4774, %v4777
      %v4779 = vrot.slane %v4778, 4
      %v4781 = vshll.u32 %v4409, 16
      %v4783 = vrot.slane %v4781, 5
      %v4784 = vsel %vm864, %v4779, %v4783
      %v4785 = vshrl.u32 %v4409, 16
      %v4787 = vrot.slane %v4785, 4
      %v4788 = vor.u32 %v4787, %v4783
      %v4789 = vrot.slane %v4788, 4
      %v4791 = vshll.u32 %v4410, 16
      %v4793 = vrot.slane %v4791, 5
      %v4794 = vsel %vm864, %v4789, %v4793
      %s4795 = scalar_lea.vmem %s1, 224
      %v4796 = vld [vmem:[%s4795] sm:$0xf]
      %v4797 = vld [vmem:[%s4795 + $0x4] sm:$0xf]
      %v4798 = vld [vmem:[%s4795 + $0x8] sm:$0xf]
      %v4799 = vld [vmem:[%s4795 + $0xc] sm:$0xf]
      %v4800 = vld [vmem:[%s4795 + $0x10] sm:$0xf]
      %v4801 = vld [vmem:[%s4795 + $0x14] sm:$0xf]
      %v4802 = vld [vmem:[%s4795 + $0x18] sm:$0xf]
      %v4803 = vld [vmem:[%s4795 + $0x1c] sm:$0xf]
      %v4804 = vunpack.c.l.b16 %v4424
      %v4805 = vunpack.c.l.b16 %v4434
      %v4806 = vunpack.c.l.b16 %v4448
      %v4807 = vunpack.c.l.b16 %v4458
      %v4808 = vunpack.c.l.b16 %v4472
      %v4809 = vunpack.c.l.b16 %v4482
      %v4810 = vunpack.c.l.b16 %v4496
      %v4811 = vunpack.c.l.b16 %v4506
      %v4812 = vunpack.c.l.b16 %v4520
      %v4813 = vunpack.c.l.b16 %v4530
      %v4814 = vunpack.c.l.b16 %v4544
      %v4815 = vunpack.c.l.b16 %v4554
      %v4816 = vunpack.c.l.b16 %v4568
      %v4817 = vunpack.c.l.b16 %v4578
      %v4818 = vunpack.c.l.b16 %v4592
      %v4819 = vunpack.c.l.b16 %v4602
      %v4820 = vunpack.c.l.b16 %v4616
      %v4821 = vunpack.c.l.b16 %v4626
      %v4822 = vunpack.c.l.b16 %v4640
      %v4823 = vunpack.c.l.b16 %v4650
      %v4824 = vunpack.c.l.b16 %v4664
      %v4825 = vunpack.c.l.b16 %v4674
      %v4826 = vunpack.c.l.b16 %v4688
      %v4827 = vunpack.c.l.b16 %v4698
      %v4828 = vunpack.c.l.b16 %v4712
      %v4829 = vunpack.c.l.b16 %v4722
      %v4830 = vunpack.c.l.b16 %v4736
      %v4831 = vunpack.c.l.b16 %v4746
      %v4832 = vunpack.c.l.b16 %v4760
      %v4833 = vunpack.c.l.b16 %v4770
      %v4834 = vunpack.c.l.b16 %v4784
      %v4835 = vunpack.c.l.b16 %v4794
      %v4836 = vpack.c.b16 %v4805, %v4804
      %v4837 = vpack.c.b16 %v4807, %v4806
      %v4838 = vpack.c.b16 %v4809, %v4808
      %v4839 = vpack.c.b16 %v4811, %v4810
      %v4840 = vpack.c.b16 %v4813, %v4812
      %v4841 = vpack.c.b16 %v4815, %v4814
      %v4842 = vpack.c.b16 %v4817, %v4816
      %v4843 = vpack.c.b16 %v4819, %v4818
      %v4844 = vpack.c.b16 %v4821, %v4820
      %v4845 = vpack.c.b16 %v4823, %v4822
      %v4846 = vpack.c.b16 %v4825, %v4824
      %v4847 = vpack.c.b16 %v4827, %v4826
      %v4848 = vpack.c.b16 %v4829, %v4828
      %v4849 = vpack.c.b16 %v4831, %v4830
      %v4850 = vpack.c.b16 %v4833, %v4832
      %v4851 = vpack.c.b16 %v4835, %v4834
      %v4860 = vunpack.c.l.b16 %v4796
      %v4861 = vunpack.c.l.b16 %v4797
      %v4862 = vunpack.c.l.b16 %v4798
      %v4863 = vunpack.c.l.b16 %v4799
      %v4864 = vunpack.c.l.b16 %v4800
      %v4865 = vunpack.c.l.b16 %v4801
      %v4866 = vunpack.c.l.b16 %v4802
      %v4867 = vunpack.c.l.b16 %v4803
      %v4868 = vpack.c.b16 %v4861, %v4860
      %v4869 = vpack.c.b16 %v4863, %v4862
      %v4870 = vpack.c.b16 %v4865, %v4864
      %v4871 = vpack.c.b16 %v4867, %v4866
      %v4877 = vsel %vm1330, %v4836, 0
      %v4880 = vsel %vm1330, %v4837, 0
      %v4883 = vsel %vm1330, %v4838, 0
      %v4886 = vsel %vm1330, %v4839, 0
      %v4889 = vsel %vm1330, %v4840, 0
      %v4892 = vsel %vm1330, %v4841, 0
      %v4895 = vsel %vm1330, %v4842, 0
      %v4898 = vsel %vm1330, %v4843, 0
      %v4901 = vsel %vm1330, %v4844, 0
      %v4904 = vsel %vm1330, %v4845, 0
      %v4907 = vsel %vm1330, %v4846, 0
      %v4910 = vsel %vm1330, %v4847, 0
      %v4913 = vsel %vm1330, %v4848, 0
      %v4916 = vsel %vm1330, %v4849, 0
      %v4919 = vsel %vm1330, %v4850, 0
      %v4922 = vsel %vm1330, %v4851, 0
      %4924 = vmatprep.subr.bf16.mxu0 0
      %4925 = vmatpush1.bf16.msra.mxu0 %v4868
      %4926 = vmatprep.subr.bf16.mxu0 0
      %4927 = vmatpush1.bf16.msra.mxu0 %v4869
      %4928 = vmatprep.subr.bf16.mxu0 0
      %4929 = vmatpush1.bf16.msra.mxu0 %v4870
      %4930 = vmatprep.subr.bf16.mxu0 0
      %4931 = vmatpush1.bf16.msra.mxu0 %v4871
      %4932 = vmatprep.subr.bf16.mxu0 0
      %4933 = vmatpush1.bf16.msra.mxu0 0
      %4934 = vmatprep.subr.bf16.mxu0 0
      %4935 = vmatpush1.bf16.msra.mxu0 0
      %4936 = vmatprep.subr.bf16.mxu0 0
      %4937 = vmatpush1.bf16.msra.mxu0 0
      %4938 = vmatprep.subr.bf16.mxu0 0
      %4939 = vmatpush1.bf16.msra.mxu0 0
      %4940 = vmatprep.subr.bf16.mxu0 0
      %4941 = vmatpush1.bf16.msra.mxu0 0
      %4942 = vmatprep.subr.bf16.mxu0 0
      %4943 = vmatpush1.bf16.msra.mxu0 0
      %4944 = vmatprep.subr.bf16.mxu0 0
      %4945 = vmatpush1.bf16.msra.mxu0 0
      %4946 = vmatprep.subr.bf16.mxu0 0
      %4947 = vmatpush1.bf16.msra.mxu0 0
      %4948 = vmatprep.subr.bf16.mxu0 0
      %4949 = vmatpush1.bf16.msra.mxu0 0
      %4950 = vmatprep.subr.bf16.mxu0 0
      %4951 = vmatpush1.bf16.msra.mxu0 0
      %4952 = vmatprep.subr.bf16.mxu0 0
      %4953 = vmatpush1.bf16.msra.mxu0 0
      %4954 = vmatprep.subr.bf16.mxu0 0
      %4955 = vmatpush1.bf16.msra.mxu0 0
      %4956 = vmatprep.mubr.bf16.mxu0 0
      %4957 = vmatmul.mubr.bf16.gmra.mrb[0].mxu0 %v4877
      %v4958 = vpop.f32.mrb[0].mxu0
      %v4959 = vadd.f32 0.0, %v4958
      %v4960 = vpop.f32.mrb[0].mxu0
      %v4961 = vpop.f32.mrb[0].mxu0
      %v4962 = vadd.f32 0.0, %v4961
      %v4963 = vpop.f32.mrb[0].mxu0
      %4964 = vmatprep.mubr.bf16.mxu0 0
      %4965 = vmatmul.mubr.bf16.gmra.mrb[0].mxu0 %v4880
      %v4966 = vpop.f32.mrb[0].mxu0
      %v4967 = vadd.f32 0.0, %v4966
      %v4968 = vpop.f32.mrb[0].mxu0
      %v4969 = vpop.f32.mrb[0].mxu0
      %v4970 = vadd.f32 0.0, %v4969
      %v4971 = vpop.f32.mrb[0].mxu0
      %4972 = vmatprep.mubr.bf16.mxu0 0
      %4973 = vmatmul.mubr.bf16.gmra.mrb[0].mxu0 %v4883
      %v4974 = vpop.f32.mrb[0].mxu0
      %v4975 = vadd.f32 0.0, %v4974
      %v4976 = vpop.f32.mrb[0].mxu0
      %v4977 = vpop.f32.mrb[0].mxu0
      %v4978 = vadd.f32 0.0, %v4977
      %v4979 = vpop.f32.mrb[0].mxu0
      %4980 = vmatprep.mubr.bf16.mxu0 0
      %4981 = vmatmul.mubr.bf16.gmra.mrb[0].mxu0 %v4886
      %v4982 = vpop.f32.mrb[0].mxu0
      %v4983 = vadd.f32 0.0, %v4982
      %v4984 = vpop.f32.mrb[0].mxu0
      %v4985 = vpop.f32.mrb[0].mxu0
      %v4986 = vadd.f32 0.0, %v4985
      %v4987 = vpop.f32.mrb[0].mxu0
      %4988 = vmatprep.mubr.bf16.mxu0 0
      %4989 = vmatmul.mubr.bf16.gmra.mrb[0].mxu0 %v4889
      %v4990 = vpop.f32.mrb[0].mxu0
      %v4991 = vadd.f32 0.0, %v4990
      %v4992 = vpop.f32.mrb[0].mxu0
      %v4993 = vpop.f32.mrb[0].mxu0
      %v4994 = vadd.f32 0.0, %v4993
      %v4995 = vpop.f32.mrb[0].mxu0
      %4996 = vmatprep.mubr.bf16.mxu0 0
      %4997 = vmatmul.mubr.bf16.gmra.mrb[0].mxu0 %v4892
      %v4998 = vpop.f32.mrb[0].mxu0
      %v4999 = vadd.f32 0.0, %v4998
      %v5000 = vpop.f32.mrb[0].mxu0
      %v5001 = vpop.f32.mrb[0].mxu0
      %v5002 = vadd.f32 0.0, %v5001
      %v5003 = vpop.f32.mrb[0].mxu0
      %5004 = vmatprep.mubr.bf16.mxu0 0
      %5005 = vmatmul.mubr.bf16.gmra.mrb[0].mxu0 %v4895
      %v5006 = vpop.f32.mrb[0].mxu0
      %v5007 = vadd.f32 0.0, %v5006
      %v5008 = vpop.f32.mrb[0].mxu0
      %v5009 = vpop.f32.mrb[0].mxu0
      %v5010 = vadd.f32 0.0, %v5009
      %v5011 = vpop.f32.mrb[0].mxu0
      %5012 = vmatprep.mubr.bf16.mxu0 0
      %5013 = vmatmul.mubr.bf16.gmra.mrb[0].mxu0 %v4898
      %v5014 = vpop.f32.mrb[0].mxu0
      %v5015 = vadd.f32 0.0, %v5014
      %v5016 = vpop.f32.mrb[0].mxu0
      %v5017 = vpop.f32.mrb[0].mxu0
      %v5018 = vadd.f32 0.0, %v5017
      %v5019 = vpop.f32.mrb[0].mxu0
      %5020 = vmatprep.mubr.bf16.mxu0 0
      %5021 = vmatmul.mubr.bf16.gmra.mrb[0].mxu0 %v4901
      %v5022 = vpop.f32.mrb[0].mxu0
      %v5023 = vadd.f32 0.0, %v5022
      %v5024 = vpop.f32.mrb[0].mxu0
      %v5025 = vpop.f32.mrb[0].mxu0
      %v5026 = vadd.f32 0.0, %v5025
      %v5027 = vpop.f32.mrb[0].mxu0
      %5028 = vmatprep.mubr.bf16.mxu0 0
      %5029 = vmatmul.mubr.bf16.gmra.mrb[0].mxu0 %v4904
      %v5030 = vpop.f32.mrb[0].mxu0
      %v5031 = vadd.f32 0.0, %v5030
      %v5032 = vpop.f32.mrb[0].mxu0
      %v5033 = vpop.f32.mrb[0].mxu0
      %v5034 = vadd.f32 0.0, %v5033
      %v5035 = vpop.f32.mrb[0].mxu0
      %5036 = vmatprep.mubr.bf16.mxu0 0
      %5037 = vmatmul.mubr.bf16.gmra.mrb[0].mxu0 %v4907
      %v5038 = vpop.f32.mrb[0].mxu0
      %v5039 = vadd.f32 0.0, %v5038
      %v5040 = vpop.f32.mrb[0].mxu0
      %v5041 = vpop.f32.mrb[0].mxu0
      %v5042 = vadd.f32 0.0, %v5041
      %v5043 = vpop.f32.mrb[0].mxu0
      %5044 = vmatprep.mubr.bf16.mxu0 0
      %5045 = vmatmul.mubr.bf16.gmra.mrb[0].mxu0 %v4910
      %v5046 = vpop.f32.mrb[0].mxu0
      %v5047 = vadd.f32 0.0, %v5046
      %v5048 = vpop.f32.mrb[0].mxu0
      %v5049 = vpop.f32.mrb[0].mxu0
      %v5050 = vadd.f32 0.0, %v5049
      %v5051 = vpop.f32.mrb[0].mxu0
      %5052 = vmatprep.mubr.bf16.mxu0 0
      %5053 = vmatmul.mubr.bf16.gmra.mrb[0].mxu0 %v4913
      %v5054 = vpop.f32.mrb[0].mxu0
      %v5055 = vadd.f32 0.0, %v5054
      %v5056 = vpop.f32.mrb[0].mxu0
      %v5057 = vpop.f32.mrb[0].mxu0
      %v5058 = vadd.f32 0.0, %v5057
      %v5059 = vpop.f32.mrb[0].mxu0
      %5060 = vmatprep.mubr.bf16.mxu0 0
      %5061 = vmatmul.mubr.bf16.gmra.mrb[0].mxu0 %v4916
      %v5062 = vpop.f32.mrb[0].mxu0
      %v5063 = vadd.f32 0.0, %v5062
      %v5064 = vpop.f32.mrb[0].mxu0
      %v5065 = vpop.f32.mrb[0].mxu0
      %v5066 = vadd.f32 0.0, %v5065
      %v5067 = vpop.f32.mrb[0].mxu0
      %5068 = vmatprep.mubr.bf16.mxu0 0
      %5069 = vmatmul.mubr.bf16.gmra.mrb[0].mxu0 %v4919
      %v5070 = vpop.f32.mrb[0].mxu0
      %v5071 = vadd.f32 0.0, %v5070
      %v5072 = vpop.f32.mrb[0].mxu0
      %v5073 = vpop.f32.mrb[0].mxu0
      %v5074 = vadd.f32 0.0, %v5073
      %v5075 = vpop.f32.mrb[0].mxu0
      %5076 = vmatprep.mubr.bf16.mxu0 0
      %5077 = vmatmul.mubr.bf16.gmra.mrb[0].mxu0 %v4922
      %v5078 = vpop.f32.mrb[0].mxu0
      %v5079 = vadd.f32 0.0, %v5078
      %v5080 = vpop.f32.mrb[0].mxu0
      %v5081 = vpop.f32.mrb[0].mxu0
      %v5082 = vadd.f32 0.0, %v5081
      %v5083 = vpop.f32.mrb[0].mxu0
      %5084 = vdwg.mxu0
      %v5085 = vadd.f32 %v4331, %v4959
      %v5086 = vadd.f32 %v4332, %v4962
      %v5087 = vadd.f32 %v4333, %v4967
      %v5088 = vadd.f32 %v4334, %v4970
      %v5089 = vadd.f32 %v4335, %v4975
      %v5090 = vadd.f32 %v4336, %v4978
      %v5091 = vadd.f32 %v4337, %v4983
      %v5092 = vadd.f32 %v4338, %v4986
      %v5093 = vadd.f32 %v4339, %v4991
      %v5094 = vadd.f32 %v4340, %v4994
      %v5095 = vadd.f32 %v4341, %v4999
      %v5096 = vadd.f32 %v4342, %v5002
      %v5097 = vadd.f32 %v4343, %v5007
      %v5098 = vadd.f32 %v4344, %v5010
      %v5099 = vadd.f32 %v4345, %v5015
      %v5100 = vadd.f32 %v4346, %v5018
      %v5101 = vadd.f32 %v4347, %v5023
      %v5102 = vadd.f32 %v4348, %v5026
      %v5103 = vadd.f32 %v4349, %v5031
      %v5104 = vadd.f32 %v4350, %v5034
      %v5105 = vadd.f32 %v4351, %v5039
      %v5106 = vadd.f32 %v4352, %v5042
      %v5107 = vadd.f32 %v4353, %v5047
      %v5108 = vadd.f32 %v4354, %v5050
      %v5109 = vadd.f32 %v4355, %v5055
      %v5110 = vadd.f32 %v4356, %v5058
      %v5111 = vadd.f32 %v4357, %v5063
      %v5112 = vadd.f32 %v4358, %v5066
      %v5113 = vadd.f32 %v4359, %v5071
      %v5114 = vadd.f32 %v4360, %v5074
      %v5115 = vadd.f32 %v4361, %v5079
      %v5116 = vadd.f32 %v4362, %v5082
      %v5117 = vld [vmem:[%s3976] sm:$0xe]
      %v5118 = vld [vmem:[%s3976 + $0xc] sm:$0xe]
      %v5119 = vld [vmem:[%s3976 + $0x18] sm:$0xe]
      %v5120 = vld [vmem:[%s3976 + $0x24] sm:$0xe]
      %v5121 = vld [vmem:[%s3976 + $0x30] sm:$0xe]
      %v5122 = vld [vmem:[%s3976 + $0x3c] sm:$0xe]
      %v5123 = vld [vmem:[%s3976 + $0x48] sm:$0xe]
      %v5124 = vld [vmem:[%s3976 + $0x54] sm:$0xe]
      %v5125 = vld [vmem:[%s3976 + $0x60] sm:$0xe]
      %v5126 = vld [vmem:[%s3976 + $0x6c] sm:$0xe]
      %v5127 = vld [vmem:[%s3976 + $0x78] sm:$0xe]
      %v5128 = vld [vmem:[%s3976 + $0x84] sm:$0xe]
      %v5129 = vld [vmem:[%s3976 + $0x90] sm:$0xe]
      %v5130 = vld [vmem:[%s3976 + $0x9c] sm:$0xe]
      %v5131 = vld [vmem:[%s3976 + $0xa8] sm:$0xe]
      %v5132 = vld [vmem:[%s3976 + $0xb4] sm:$0xe]
      %v5181 = vrot.slane %v5117, 5
      %v5182 = vrot.slane %v5181, 4
      %v5183 = vrot.slane %v4364, 5
      %v5184 = vsel %vm1903, %v5182, %v5183
      %v5185 = vrot.slane %v5183, 4
      %v5186 = vrot.slane %v4365, 5
      %v5187 = vsel %vm1903, %v5185, %v5186
      %v5188 = vrot.slane %v5118, 5
      %v5189 = vrot.slane %v5188, 4
      %v5190 = vrot.slane %v4367, 5
      %v5191 = vsel %vm1903, %v5189, %v5190
      %v5192 = vrot.slane %v5190, 4
      %v5193 = vrot.slane %v4368, 5
      %v5194 = vsel %vm1903, %v5192, %v5193
      %v5195 = vrot.slane %v5119, 5
      %v5196 = vrot.slane %v5195, 4
      %v5197 = vrot.slane %v4370, 5
      %v5198 = vsel %vm1903, %v5196, %v5197
      %v5199 = vrot.slane %v5197, 4
      %v5200 = vrot.slane %v4371, 5
      %v5201 = vsel %vm1903, %v5199, %v5200
      %v5202 = vrot.slane %v5120, 5
      %v5203 = vrot.slane %v5202, 4
      %v5204 = vrot.slane %v4373, 5
      %v5205 = vsel %vm1903, %v5203, %v5204
      %v5206 = vrot.slane %v5204, 4
      %v5207 = vrot.slane %v4374, 5
      %v5208 = vsel %vm1903, %v5206, %v5207
      %v5209 = vrot.slane %v5121, 5
      %v5210 = vrot.slane %v5209, 4
      %v5211 = vrot.slane %v4376, 5
      %v5212 = vsel %vm1903, %v5210, %v5211
      %v5213 = vrot.slane %v5211, 4
      %v5214 = vrot.slane %v4377, 5
      %v5215 = vsel %vm1903, %v5213, %v5214
      %v5216 = vrot.slane %v5122, 5
      %v5217 = vrot.slane %v5216, 4
      %v5218 = vrot.slane %v4379, 5
      %v5219 = vsel %vm1903, %v5217, %v5218
      %v5220 = vrot.slane %v5218, 4
      %v5221 = vrot.slane %v4380, 5
      %v5222 = vsel %vm1903, %v5220, %v5221
      %v5223 = vrot.slane %v5123, 5
      %v5224 = vrot.slane %v5223, 4
      %v5225 = vrot.slane %v4382, 5
      %v5226 = vsel %vm1903, %v5224, %v5225
      %v5227 = vrot.slane %v5225, 4
      %v5228 = vrot.slane %v4383, 5
      %v5229 = vsel %vm1903, %v5227, %v5228
      %v5230 = vrot.slane %v5124, 5
      %v5231 = vrot.slane %v5230, 4
      %v5232 = vrot.slane %v4385, 5
      %v5233 = vsel %vm1903, %v5231, %v5232
      %v5234 = vrot.slane %v5232, 4
      %v5235 = vrot.slane %v4386, 5
      %v5236 = vsel %vm1903, %v5234, %v5235
      %v5237 = vrot.slane %v5125, 5
      %v5238 = vrot.slane %v5237, 4
      %v5239 = vrot.slane %v4388, 5
      %v5240 = vsel %vm1903, %v5238, %v5239
      %v5241 = vrot.slane %v5239, 4
      %v5242 = vrot.slane %v4389, 5
      %v5243 = vsel %vm1903, %v5241, %v5242
      %v5244 = vrot.slane %v5126, 5
      %v5245 = vrot.slane %v5244, 4
      %v5246 = vrot.slane %v4391, 5
      %v5247 = vsel %vm1903, %v5245, %v5246
      %v5248 = vrot.slane %v5246, 4
      %v5249 = vrot.slane %v4392, 5
      %v5250 = vsel %vm1903, %v5248, %v5249
      %v5251 = vrot.slane %v5127, 5
      %v5252 = vrot.slane %v5251, 4
      %v5253 = vrot.slane %v4394, 5
      %v5254 = vsel %vm1903, %v5252, %v5253
      %v5255 = vrot.slane %v5253, 4
      %v5256 = vrot.slane %v4395, 5
      %v5257 = vsel %vm1903, %v5255, %v5256
      %v5258 = vrot.slane %v5128, 5
      %v5259 = vrot.slane %v5258, 4
      %v5260 = vrot.slane %v4397, 5
      %v5261 = vsel %vm1903, %v5259, %v5260
      %v5262 = vrot.slane %v5260, 4
      %v5263 = vrot.slane %v4398, 5
      %v5264 = vsel %vm1903, %v5262, %v5263
      %v5265 = vrot.slane %v5129, 5
      %v5266 = vrot.slane %v5265, 4
      %v5267 = vrot.slane %v4400, 5
      %v5268 = vsel %vm1903, %v5266, %v5267
      %v5269 = vrot.slane %v5267, 4
      %v5270 = vrot.slane %v4401, 5
      %v5271 = vsel %vm1903, %v5269, %v5270
      %v5272 = vrot.slane %v5130, 5
      %v5273 = vrot.slane %v5272, 4
      %v5274 = vrot.slane %v4403, 5
      %v5275 = vsel %vm1903, %v5273, %v5274
      %v5276 = vrot.slane %v5274, 4
      %v5277 = vrot.slane %v4404, 5
      %v5278 = vsel %vm1903, %v5276, %v5277
      %v5279 = vrot.slane %v5131, 5
      %v5280 = vrot.slane %v5279, 4
      %v5281 = vrot.slane %v4406, 5
      %v5282 = vsel %vm1903, %v5280, %v5281
      %v5283 = vrot.slane %v5281, 4
      %v5284 = vrot.slane %v4407, 5
      %v5285 = vsel %vm1903, %v5283, %v5284
      %v5286 = vrot.slane %v5132, 5
      %v5287 = vrot.slane %v5286, 4
      %v5288 = vrot.slane %v4409, 5
      %v5289 = vsel %vm1903, %v5287, %v5288
      %v5290 = vrot.slane %v5288, 4
      %v5291 = vrot.slane %v4410, 5
      %v5292 = vsel %vm1903, %v5290, %v5291
      %s5293 = scalar_lea.vmem %s1, 256
      %v5294 = vld [vmem:[%s5293] sm:$0xf]
      %v5295 = vld [vmem:[%s5293 + $0x4] sm:$0xf]
      %v5296 = vld [vmem:[%s5293 + $0x8] sm:$0xf]
      %v5297 = vld [vmem:[%s5293 + $0xc] sm:$0xf]
      %v5298 = vld [vmem:[%s5293 + $0x10] sm:$0xf]
      %v5299 = vld [vmem:[%s5293 + $0x14] sm:$0xf]
      %v5300 = vld [vmem:[%s5293 + $0x18] sm:$0xf]
      %v5301 = vld [vmem:[%s5293 + $0x1c] sm:$0xf]
      %v5302 = vunpack.c.l.b16 %v5184
      %v5303 = vunpack.c.l.b16 %v5187
      %v5304 = vunpack.c.l.b16 %v5191
      %v5305 = vunpack.c.l.b16 %v5194
      %v5306 = vunpack.c.l.b16 %v5198
      %v5307 = vunpack.c.l.b16 %v5201
      %v5308 = vunpack.c.l.b16 %v5205
      %v5309 = vunpack.c.l.b16 %v5208
      %v5310 = vunpack.c.l.b16 %v5212
      %v5311 = vunpack.c.l.b16 %v5215
      %v5312 = vunpack.c.l.b16 %v5219
      %v5313 = vunpack.c.l.b16 %v5222
      %v5314 = vunpack.c.l.b16 %v5226
      %v5315 = vunpack.c.l.b16 %v5229
      %v5316 = vunpack.c.l.b16 %v5233
      %v5317 = vunpack.c.l.b16 %v5236
      %v5318 = vunpack.c.l.b16 %v5240
      %v5319 = vunpack.c.l.b16 %v5243
      %v5320 = vunpack.c.l.b16 %v5247
      %v5321 = vunpack.c.l.b16 %v5250
      %v5322 = vunpack.c.l.b16 %v5254
      %v5323 = vunpack.c.l.b16 %v5257
      %v5324 = vunpack.c.l.b16 %v5261
      %v5325 = vunpack.c.l.b16 %v5264
      %v5326 = vunpack.c.l.b16 %v5268
      %v5327 = vunpack.c.l.b16 %v5271
      %v5328 = vunpack.c.l.b16 %v5275
      %v5329 = vunpack.c.l.b16 %v5278
      %v5330 = vunpack.c.l.b16 %v5282
      %v5331 = vunpack.c.l.b16 %v5285
      %v5332 = vunpack.c.l.b16 %v5289
      %v5333 = vunpack.c.l.b16 %v5292
      %v5334 = vpack.c.b16 %v5303, %v5302
      %v5335 = vpack.c.b16 %v5305, %v5304
      %v5336 = vpack.c.b16 %v5307, %v5306
      %v5337 = vpack.c.b16 %v5309, %v5308
      %v5338 = vpack.c.b16 %v5311, %v5310
      %v5339 = vpack.c.b16 %v5313, %v5312
      %v5340 = vpack.c.b16 %v5315, %v5314
      %v5341 = vpack.c.b16 %v5317, %v5316
      %v5342 = vpack.c.b16 %v5319, %v5318
      %v5343 = vpack.c.b16 %v5321, %v5320
      %v5344 = vpack.c.b16 %v5323, %v5322
      %v5345 = vpack.c.b16 %v5325, %v5324
      %v5346 = vpack.c.b16 %v5327, %v5326
      %v5347 = vpack.c.b16 %v5329, %v5328
      %v5348 = vpack.c.b16 %v5331, %v5330
      %v5349 = vpack.c.b16 %v5333, %v5332
      %v5358 = vunpack.c.l.b16 %v5294
      %v5359 = vunpack.c.l.b16 %v5295
      %v5360 = vunpack.c.l.b16 %v5296
      %v5361 = vunpack.c.l.b16 %v5297
      %v5362 = vunpack.c.l.b16 %v5298
      %v5363 = vunpack.c.l.b16 %v5299
      %v5364 = vunpack.c.l.b16 %v5300
      %v5365 = vunpack.c.l.b16 %v5301
      %v5366 = vpack.c.b16 %v5359, %v5358
      %v5367 = vpack.c.b16 %v5361, %v5360
      %v5368 = vpack.c.b16 %v5363, %v5362
      %v5369 = vpack.c.b16 %v5365, %v5364
      %v5375 = vsel %vm1330, %v5334, 0
      %v5378 = vsel %vm1330, %v5335, 0
      %v5381 = vsel %vm1330, %v5336, 0
      %v5384 = vsel %vm1330, %v5337, 0
      %v5387 = vsel %vm1330, %v5338, 0
      %v5390 = vsel %vm1330, %v5339, 0
      %v5393 = vsel %vm1330, %v5340, 0
      %v5396 = vsel %vm1330, %v5341, 0
      %v5399 = vsel %vm1330, %v5342, 0
      %v5402 = vsel %vm1330, %v5343, 0
      %v5405 = vsel %vm1330, %v5344, 0
      %v5408 = vsel %vm1330, %v5345, 0
      %v5411 = vsel %vm1330, %v5346, 0
      %v5414 = vsel %vm1330, %v5347, 0
      %v5417 = vsel %vm1330, %v5348, 0
      %v5420 = vsel %vm1330, %v5349, 0
      %5422 = vmatprep.subr.bf16.mxu0 0
      %5423 = vmatpush1.bf16.msra.mxu0 %v5366
      %5424 = vmatprep.subr.bf16.mxu0 0
      %5425 = vmatpush1.bf16.msra.mxu0 %v5367
      %5426 = vmatprep.subr.bf16.mxu0 0
      %5427 = vmatpush1.bf16.msra.mxu0 %v5368
      %5428 = vmatprep.subr.bf16.mxu0 0
      %5429 = vmatpush1.bf16.msra.mxu0 %v5369
      %5430 = vmatprep.subr.bf16.mxu0 0
      %5431 = vmatpush1.bf16.msra.mxu0 0
      %5432 = vmatprep.subr.bf16.mxu0 0
      %5433 = vmatpush1.bf16.msra.mxu0 0
      %5434 = vmatprep.subr.bf16.mxu0 0
      %5435 = vmatpush1.bf16.msra.mxu0 0
      %5436 = vmatprep.subr.bf16.mxu0 0
      %5437 = vmatpush1.bf16.msra.mxu0 0
      %5438 = vmatprep.subr.bf16.mxu0 0
      %5439 = vmatpush1.bf16.msra.mxu0 0
      %5440 = vmatprep.subr.bf16.mxu0 0
      %5441 = vmatpush1.bf16.msra.mxu0 0
      %5442 = vmatprep.subr.bf16.mxu0 0
      %5443 = vmatpush1.bf16.msra.mxu0 0
      %5444 = vmatprep.subr.bf16.mxu0 0
      %5445 = vmatpush1.bf16.msra.mxu0 0
      %5446 = vmatprep.subr.bf16.mxu0 0
      %5447 = vmatpush1.bf16.msra.mxu0 0
      %5448 = vmatprep.subr.bf16.mxu0 0
      %5449 = vmatpush1.bf16.msra.mxu0 0
      %5450 = vmatprep.subr.bf16.mxu0 0
      %5451 = vmatpush1.bf16.msra.mxu0 0
      %5452 = vmatprep.subr.bf16.mxu0 0
      %5453 = vmatpush1.bf16.msra.mxu0 0
      %5454 = vmatprep.mubr.bf16.mxu0 0
      %5455 = vmatmul.mubr.bf16.gmra.mrb[0].mxu0 %v5375
      %v5456 = vpop.f32.mrb[0].mxu0
      %v5457 = vadd.f32 0.0, %v5456
      %v5458 = vpop.f32.mrb[0].mxu0
      %v5459 = vpop.f32.mrb[0].mxu0
      %v5460 = vadd.f32 0.0, %v5459
      %v5461 = vpop.f32.mrb[0].mxu0
      %5462 = vmatprep.mubr.bf16.mxu0 0
      %5463 = vmatmul.mubr.bf16.gmra.mrb[0].mxu0 %v5378
      %v5464 = vpop.f32.mrb[0].mxu0
      %v5465 = vadd.f32 0.0, %v5464
      %v5466 = vpop.f32.mrb[0].mxu0
      %v5467 = vpop.f32.mrb[0].mxu0
      %v5468 = vadd.f32 0.0, %v5467
      %v5469 = vpop.f32.mrb[0].mxu0
      %5470 = vmatprep.mubr.bf16.mxu0 0
      %5471 = vmatmul.mubr.bf16.gmra.mrb[0].mxu0 %v5381
      %v5472 = vpop.f32.mrb[0].mxu0
      %v5473 = vadd.f32 0.0, %v5472
      %v5474 = vpop.f32.mrb[0].mxu0
      %v5475 = vpop.f32.mrb[0].mxu0
      %v5476 = vadd.f32 0.0, %v5475
      %v5477 = vpop.f32.mrb[0].mxu0
      %5478 = vmatprep.mubr.bf16.mxu0 0
      %5479 = vmatmul.mubr.bf16.gmra.mrb[0].mxu0 %v5384
      %v5480 = vpop.f32.mrb[0].mxu0
      %v5481 = vadd.f32 0.0, %v5480
      %v5482 = vpop.f32.mrb[0].mxu0
      %v5483 = vpop.f32.mrb[0].mxu0
      %v5484 = vadd.f32 0.0, %v5483
      %v5485 = vpop.f32.mrb[0].mxu0
      %5486 = vmatprep.mubr.bf16.mxu0 0
      %5487 = vmatmul.mubr.bf16.gmra.mrb[0].mxu0 %v5387
      %v5488 = vpop.f32.mrb[0].mxu0
      %v5489 = vadd.f32 0.0, %v5488
      %v5490 = vpop.f32.mrb[0].mxu0
      %v5491 = vpop.f32.mrb[0].mxu0
      %v5492 = vadd.f32 0.0, %v5491
      %v5493 = vpop.f32.mrb[0].mxu0
      %5494 = vmatprep.mubr.bf16.mxu0 0
      %5495 = vmatmul.mubr.bf16.gmra.mrb[0].mxu0 %v5390
      %v5496 = vpop.f32.mrb[0].mxu0
      %v5497 = vadd.f32 0.0, %v5496
      %v5498 = vpop.f32.mrb[0].mxu0
      %v5499 = vpop.f32.mrb[0].mxu0
      %v5500 = vadd.f32 0.0, %v5499
      %v5501 = vpop.f32.mrb[0].mxu0
      %5502 = vmatprep.mubr.bf16.mxu0 0
      %5503 = vmatmul.mubr.bf16.gmra.mrb[0].mxu0 %v5393
      %v5504 = vpop.f32.mrb[0].mxu0
      %v5505 = vadd.f32 0.0, %v5504
      %v5506 = vpop.f32.mrb[0].mxu0
      %v5507 = vpop.f32.mrb[0].mxu0
      %v5508 = vadd.f32 0.0, %v5507
      %v5509 = vpop.f32.mrb[0].mxu0
      %5510 = vmatprep.mubr.bf16.mxu0 0
      %5511 = vmatmul.mubr.bf16.gmra.mrb[0].mxu0 %v5396
      %v5512 = vpop.f32.mrb[0].mxu0
      %v5513 = vadd.f32 0.0, %v5512
      %v5514 = vpop.f32.mrb[0].mxu0
      %v5515 = vpop.f32.mrb[0].mxu0
      %v5516 = vadd.f32 0.0, %v5515
      %v5517 = vpop.f32.mrb[0].mxu0
      %5518 = vmatprep.mubr.bf16.mxu0 0
      %5519 = vmatmul.mubr.bf16.gmra.mrb[0].mxu0 %v5399
      %v5520 = vpop.f32.mrb[0].mxu0
      %v5521 = vadd.f32 0.0, %v5520
      %v5522 = vpop.f32.mrb[0].mxu0
      %v5523 = vpop.f32.mrb[0].mxu0
      %v5524 = vadd.f32 0.0, %v5523
      %v5525 = vpop.f32.mrb[0].mxu0
      %5526 = vmatprep.mubr.bf16.mxu0 0
      %5527 = vmatmul.mubr.bf16.gmra.mrb[0].mxu0 %v5402
      %v5528 = vpop.f32.mrb[0].mxu0
      %v5529 = vadd.f32 0.0, %v5528
      %v5530 = vpop.f32.mrb[0].mxu0
      %v5531 = vpop.f32.mrb[0].mxu0
      %v5532 = vadd.f32 0.0, %v5531
      %v5533 = vpop.f32.mrb[0].mxu0
      %5534 = vmatprep.mubr.bf16.mxu0 0
      %5535 = vmatmul.mubr.bf16.gmra.mrb[0].mxu0 %v5405
      %v5536 = vpop.f32.mrb[0].mxu0
      %v5537 = vadd.f32 0.0, %v5536
      %v5538 = vpop.f32.mrb[0].mxu0
      %v5539 = vpop.f32.mrb[0].mxu0
      %v5540 = vadd.f32 0.0, %v5539
      %v5541 = vpop.f32.mrb[0].mxu0
      %5542 = vmatprep.mubr.bf16.mxu0 0
      %5543 = vmatmul.mubr.bf16.gmra.mrb[0].mxu0 %v5408
      %v5544 = vpop.f32.mrb[0].mxu0
      %v5545 = vadd.f32 0.0, %v5544
      %v5546 = vpop.f32.mrb[0].mxu0
      %v5547 = vpop.f32.mrb[0].mxu0
      %v5548 = vadd.f32 0.0, %v5547
      %v5549 = vpop.f32.mrb[0].mxu0
      %5550 = vmatprep.mubr.bf16.mxu0 0
      %5551 = vmatmul.mubr.bf16.gmra.mrb[0].mxu0 %v5411
      %v5552 = vpop.f32.mrb[0].mxu0
      %v5553 = vadd.f32 0.0, %v5552
      %v5554 = vpop.f32.mrb[0].mxu0
      %v5555 = vpop.f32.mrb[0].mxu0
      %v5556 = vadd.f32 0.0, %v5555
      %v5557 = vpop.f32.mrb[0].mxu0
      %5558 = vmatprep.mubr.bf16.mxu0 0
      %5559 = vmatmul.mubr.bf16.gmra.mrb[0].mxu0 %v5414
      %v5560 = vpop.f32.mrb[0].mxu0
      %v5561 = vadd.f32 0.0, %v5560
      %v5562 = vpop.f32.mrb[0].mxu0
      %v5563 = vpop.f32.mrb[0].mxu0
      %v5564 = vadd.f32 0.0, %v5563
      %v5565 = vpop.f32.mrb[0].mxu0
      %5566 = vmatprep.mubr.bf16.mxu0 0
      %5567 = vmatmul.mubr.bf16.gmra.mrb[0].mxu0 %v5417
      %v5568 = vpop.f32.mrb[0].mxu0
      %v5569 = vadd.f32 0.0, %v5568
      %v5570 = vpop.f32.mrb[0].mxu0
      %v5571 = vpop.f32.mrb[0].mxu0
      %v5572 = vadd.f32 0.0, %v5571
      %v5573 = vpop.f32.mrb[0].mxu0
      %5574 = vmatprep.mubr.bf16.mxu0 0
      %5575 = vmatmul.mubr.bf16.gmra.mrb[0].mxu0 %v5420
      %v5576 = vpop.f32.mrb[0].mxu0
      %v5577 = vadd.f32 0.0, %v5576
      %v5578 = vpop.f32.mrb[0].mxu0
      %v5579 = vpop.f32.mrb[0].mxu0
      %v5580 = vadd.f32 0.0, %v5579
      %v5581 = vpop.f32.mrb[0].mxu0
      %5582 = vdwg.mxu0
      %v5583 = vadd.f32 %v5085, %v5457
      %v5584 = vadd.f32 %v5086, %v5460
      %v5585 = vadd.f32 %v5087, %v5465
      %v5586 = vadd.f32 %v5088, %v5468
      %v5587 = vadd.f32 %v5089, %v5473
      %v5588 = vadd.f32 %v5090, %v5476
      %v5589 = vadd.f32 %v5091, %v5481
      %v5590 = vadd.f32 %v5092, %v5484
      %v5591 = vadd.f32 %v5093, %v5489
      %v5592 = vadd.f32 %v5094, %v5492
      %v5593 = vadd.f32 %v5095, %v5497
      %v5594 = vadd.f32 %v5096, %v5500
      %v5595 = vadd.f32 %v5097, %v5505
      %v5596 = vadd.f32 %v5098, %v5508
      %v5597 = vadd.f32 %v5099, %v5513
      %v5598 = vadd.f32 %v5100, %v5516
      %v5599 = vadd.f32 %v5101, %v5521
      %v5600 = vadd.f32 %v5102, %v5524
      %v5601 = vadd.f32 %v5103, %v5529
      %v5602 = vadd.f32 %v5104, %v5532
      %v5603 = vadd.f32 %v5105, %v5537
      %v5604 = vadd.f32 %v5106, %v5540
      %v5605 = vadd.f32 %v5107, %v5545
      %v5606 = vadd.f32 %v5108, %v5548
      %v5607 = vadd.f32 %v5109, %v5553
      %v5608 = vadd.f32 %v5110, %v5556
      %v5609 = vadd.f32 %v5111, %v5561
      %v5610 = vadd.f32 %v5112, %v5564
      %v5611 = vadd.f32 %v5113, %v5569
      %v5612 = vadd.f32 %v5114, %v5572
      %v5613 = vadd.f32 %v5115, %v5577
      %v5614 = vadd.f32 %v5116, %v5580
      %v5616 = vlaneseq
      %v5617 = vshrl.u32 %v5616, 7
      %v5618 = vsub.s32 0, %v5617
      %v5619 = vrot.slane %v805, %v5618
      %v5621 = vadd.f32 %v5583, %v5619
      %v5622 = vadd.f32 %v5584, %v5619
      %v5623 = vadd.f32 %v5585, %v5619
      %v5624 = vadd.f32 %v5586, %v5619
      %v5625 = vadd.f32 %v5587, %v5619
      %v5626 = vadd.f32 %v5588, %v5619
      %v5627 = vadd.f32 %v5589, %v5619
      %v5628 = vadd.f32 %v5590, %v5619
      %v5629 = vadd.f32 %v5591, %v5619
      %v5630 = vadd.f32 %v5592, %v5619
      %v5631 = vadd.f32 %v5593, %v5619
      %v5632 = vadd.f32 %v5594, %v5619
      %v5633 = vadd.f32 %v5595, %v5619
      %v5634 = vadd.f32 %v5596, %v5619
      %v5635 = vadd.f32 %v5597, %v5619
      %v5636 = vadd.f32 %v5598, %v5619
      %v5637 = vadd.f32 %v5599, %v5619
      %v5638 = vadd.f32 %v5600, %v5619
      %v5639 = vadd.f32 %v5601, %v5619
      %v5640 = vadd.f32 %v5602, %v5619
      %v5641 = vadd.f32 %v5603, %v5619
      %v5642 = vadd.f32 %v5604, %v5619
      %v5643 = vadd.f32 %v5605, %v5619
      %v5644 = vadd.f32 %v5606, %v5619
      %v5645 = vadd.f32 %v5607, %v5619
      %v5646 = vadd.f32 %v5608, %v5619
      %v5647 = vadd.f32 %v5609, %v5619
      %v5648 = vadd.f32 %v5610, %v5619
      %v5649 = vadd.f32 %v5611, %v5619
      %v5650 = vadd.f32 %v5612, %v5619
      %v5651 = vadd.f32 %v5613, %v5619
      %v5652 = vadd.f32 %v5614, %v5619
      %v5653 = vmax.f32 %v5621, 0.0
      %v5654 = vmax.f32 %v5622, 0.0
      %v5655 = vmax.f32 %v5623, 0.0
      %v5656 = vmax.f32 %v5624, 0.0
      %v5657 = vmax.f32 %v5625, 0.0
      %v5658 = vmax.f32 %v5626, 0.0
      %v5659 = vmax.f32 %v5627, 0.0
      %v5660 = vmax.f32 %v5628, 0.0
      %v5661 = vmax.f32 %v5629, 0.0
      %v5662 = vmax.f32 %v5630, 0.0
      %v5663 = vmax.f32 %v5631, 0.0
      %v5664 = vmax.f32 %v5632, 0.0
      %v5665 = vmax.f32 %v5633, 0.0
      %v5666 = vmax.f32 %v5634, 0.0
      %v5667 = vmax.f32 %v5635, 0.0
      %v5668 = vmax.f32 %v5636, 0.0
      %v5669 = vmax.f32 %v5637, 0.0
      %v5670 = vmax.f32 %v5638, 0.0
      %v5671 = vmax.f32 %v5639, 0.0
      %v5672 = vmax.f32 %v5640, 0.0
      %v5673 = vmax.f32 %v5641, 0.0
      %v5674 = vmax.f32 %v5642, 0.0
      %v5675 = vmax.f32 %v5643, 0.0
      %v5676 = vmax.f32 %v5644, 0.0
      %v5677 = vmax.f32 %v5645, 0.0
      %v5678 = vmax.f32 %v5646, 0.0
      %v5679 = vmax.f32 %v5647, 0.0
      %v5680 = vmax.f32 %v5648, 0.0
      %v5681 = vmax.f32 %v5649, 0.0
      %v5682 = vmax.f32 %v5650, 0.0
      %v5683 = vmax.f32 %v5651, 0.0
      %v5684 = vmax.f32 %v5652, 0.0
      %v5685 = vpack.c.bf16 %v5654, %v5653
      %v5686 = vpack.c.bf16 %v5656, %v5655
      %v5687 = vpack.c.bf16 %v5658, %v5657
      %v5688 = vpack.c.bf16 %v5660, %v5659
      %v5689 = vpack.c.bf16 %v5662, %v5661
      %v5690 = vpack.c.bf16 %v5664, %v5663
      %v5691 = vpack.c.bf16 %v5666, %v5665
      %v5692 = vpack.c.bf16 %v5668, %v5667
      %v5693 = vpack.c.bf16 %v5670, %v5669
      %v5694 = vpack.c.bf16 %v5672, %v5671
      %v5695 = vpack.c.bf16 %v5674, %v5673
      %v5696 = vpack.c.bf16 %v5676, %v5675
      %v5697 = vpack.c.bf16 %v5678, %v5677
      %v5698 = vpack.c.bf16 %v5680, %v5679
      %v5699 = vpack.c.bf16 %v5682, %v5681
      %v5700 = vpack.c.bf16 %v5684, %v5683
      %5701 = vst [vmem:[#allocation3] sm:$0xf] 0
      %5702 = vst [vmem:[#allocation3 + $0x4] sm:$0xf] 0
      %5703 = vst [vmem:[#allocation3 + $0x8] sm:$0x1] 0
      %s5704 = scalar_lea.vmem [#allocation3], 204
      %5705 = vst [vmem:[%s5704] sm:$0xf] 0
      %5706 = vst [vmem:[%s5704 + $0x4] sm:$0xf] 0
      %5707 = vst [vmem:[%s5704 + $0x8] sm:$0x1] 0
      %s5708 = scalar_lea.vmem [#allocation3], 12
      %vm5709 = vcmask 1040384
      %vm5710 = vmand %vm5709, %vm269
      %v5711 = vld [vmem:[%s5708] sm:$0x1]
      %v5712 = vsel %vm5710, 0, %v5711
      %5713 = vst [vmem:[%s5708] sm:$0x1] %v5712
      %v5714 = vld [vmem:[%s5708 + $0xc] sm:$0x1]
      %v5715 = vsel %vm5710, 0, %v5714
      %5716 = vst [vmem:[%s5708 + $0xc] sm:$0x1] %v5715
      %v5717 = vld [vmem:[%s5708 + $0x18] sm:$0x1]
      %v5718 = vsel %vm5710, 0, %v5717
      %5719 = vst [vmem:[%s5708 + $0x18] sm:$0x1] %v5718
      %v5720 = vld [vmem:[%s5708 + $0x24] sm:$0x1]
      %v5721 = vsel %vm5710, 0, %v5720
      %5722 = vst [vmem:[%s5708 + $0x24] sm:$0x1] %v5721
      %v5723 = vld [vmem:[%s5708 + $0x30] sm:$0x1]
      %v5724 = vsel %vm5710, 0, %v5723
      %5725 = vst [vmem:[%s5708 + $0x30] sm:$0x1] %v5724
      %v5726 = vld [vmem:[%s5708 + $0x3c] sm:$0x1]
      %v5727 = vsel %vm5710, 0, %v5726
      %5728 = vst [vmem:[%s5708 + $0x3c] sm:$0x1] %v5727
      %v5729 = vld [vmem:[%s5708 + $0x48] sm:$0x1]
      %v5730 = vsel %vm5710, 0, %v5729
      %5731 = vst [vmem:[%s5708 + $0x48] sm:$0x1] %v5730
      %v5732 = vld [vmem:[%s5708 + $0x54] sm:$0x1]
      %v5733 = vsel %vm5710, 0, %v5732
      %5734 = vst [vmem:[%s5708 + $0x54] sm:$0x1] %v5733
      %v5735 = vld [vmem:[%s5708 + $0x60] sm:$0x1]
      %v5736 = vsel %vm5710, 0, %v5735
      %5737 = vst [vmem:[%s5708 + $0x60] sm:$0x1] %v5736
      %v5738 = vld [vmem:[%s5708 + $0x6c] sm:$0x1]
      %v5739 = vsel %vm5710, 0, %v5738
      %5740 = vst [vmem:[%s5708 + $0x6c] sm:$0x1] %v5739
      %v5741 = vld [vmem:[%s5708 + $0x78] sm:$0x1]
      %v5742 = vsel %vm5710, 0, %v5741
      %5743 = vst [vmem:[%s5708 + $0x78] sm:$0x1] %v5742
      %v5744 = vld [vmem:[%s5708 + $0x84] sm:$0x1]
      %v5745 = vsel %vm5710, 0, %v5744
      %5746 = vst [vmem:[%s5708 + $0x84] sm:$0x1] %v5745
      %v5747 = vld [vmem:[%s5708 + $0x90] sm:$0x1]
      %v5748 = vsel %vm5710, 0, %v5747
      %5749 = vst [vmem:[%s5708 + $0x90] sm:$0x1] %v5748
      %v5750 = vld [vmem:[%s5708 + $0x9c] sm:$0x1]
      %v5751 = vsel %vm5710, 0, %v5750
      %5752 = vst [vmem:[%s5708 + $0x9c] sm:$0x1] %v5751
      %v5753 = vld [vmem:[%s5708 + $0xa8] sm:$0x1]
      %v5754 = vsel %vm5710, 0, %v5753
      %5755 = vst [vmem:[%s5708 + $0xa8] sm:$0x1] %v5754
      %v5756 = vld [vmem:[%s5708 + $0xb4] sm:$0x1]
      %v5757 = vsel %vm5710, 0, %v5756
      %5758 = vst [vmem:[%s5708 + $0xb4] sm:$0x1] %v5757
      %vm5759 = vmand %vm5709, %vm319
      %v5760 = vld [vmem:[%s5708 + $0x8] sm:$0x1]
      %v5761 = vsel %vm5759, 0, %v5760
      %5762 = vst [vmem:[%s5708 + $0x8] sm:$0x1] %v5761
      %v5763 = vld [vmem:[%s5708 + $0x14] sm:$0x1]
      %v5764 = vsel %vm5759, 0, %v5763
      %5765 = vst [vmem:[%s5708 + $0x14] sm:$0x1] %v5764
      %v5766 = vld [vmem:[%s5708 + $0x20] sm:$0x1]
      %v5767 = vsel %vm5759, 0, %v5766
      %5768 = vst [vmem:[%s5708 + $0x20] sm:$0x1] %v5767
      %v5769 = vld [vmem:[%s5708 + $0x2c] sm:$0x1]
      %v5770 = vsel %vm5759, 0, %v5769
      %5771 = vst [vmem:[%s5708 + $0x2c] sm:$0x1] %v5770
      %v5772 = vld [vmem:[%s5708 + $0x38] sm:$0x1]
      %v5773 = vsel %vm5759, 0, %v5772
      %5774 = vst [vmem:[%s5708 + $0x38] sm:$0x1] %v5773
      %v5775 = vld [vmem:[%s5708 + $0x44] sm:$0x1]
      %v5776 = vsel %vm5759, 0, %v5775
      %5777 = vst [vmem:[%s5708 + $0x44] sm:$0x1] %v5776
      %v5778 = vld [vmem:[%s5708 + $0x50] sm:$0x1]
      %v5779 = vsel %vm5759, 0, %v5778
      %5780 = vst [vmem:[%s5708 + $0x50] sm:$0x1] %v5779
      %v5781 = vld [vmem:[%s5708 + $0x5c] sm:$0x1]
      %v5782 = vsel %vm5759, 0, %v5781
      %5783 = vst [vmem:[%s5708 + $0x5c] sm:$0x1] %v5782
      %v5784 = vld [vmem:[%s5708 + $0x68] sm:$0x1]
      %v5785 = vsel %vm5759, 0, %v5784
      %5786 = vst [vmem:[%s5708 + $0x68] sm:$0x1] %v5785
      %v5787 = vld [vmem:[%s5708 + $0x74] sm:$0x1]
      %v5788 = vsel %vm5759, 0, %v5787
      %5789 = vst [vmem:[%s5708 + $0x74] sm:$0x1] %v5788
      %v5790 = vld [vmem:[%s5708 + $0x80] sm:$0x1]
      %v5791 = vsel %vm5759, 0, %v5790
      %5792 = vst [vmem:[%s5708 + $0x80] sm:$0x1] %v5791
      %v5793 = vld [vmem:[%s5708 + $0x8c] sm:$0x1]
      %v5794 = vsel %vm5759, 0, %v5793
      %5795 = vst [vmem:[%s5708 + $0x8c] sm:$0x1] %v5794
      %v5796 = vld [vmem:[%s5708 + $0x98] sm:$0x1]
      %v5797 = vsel %vm5759, 0, %v5796
      %5798 = vst [vmem:[%s5708 + $0x98] sm:$0x1] %v5797
      %v5799 = vld [vmem:[%s5708 + $0xa4] sm:$0x1]
      %v5800 = vsel %vm5759, 0, %v5799
      %5801 = vst [vmem:[%s5708 + $0xa4] sm:$0x1] %v5800
      %v5802 = vld [vmem:[%s5708 + $0xb0] sm:$0x1]
      %v5803 = vsel %vm5759, 0, %v5802
      %5804 = vst [vmem:[%s5708 + $0xb0] sm:$0x1] %v5803
      %v5805 = vld [vmem:[%s5708 + $0xbc] sm:$0x1]
      %v5806 = vsel %vm5759, 0, %v5805
      %5807 = vst [vmem:[%s5708 + $0xbc] sm:$0x1] %v5806
      %v5824 = vunpack.c.l.b16 %v5685
      %v5825 = vunpack.c.h.b16 %v5685
      %v5826 = vunpack.c.l.b16 %v5686
      %v5827 = vunpack.c.h.b16 %v5686
      %v5828 = vunpack.c.l.b16 %v5687
      %v5829 = vunpack.c.h.b16 %v5687
      %v5830 = vunpack.c.l.b16 %v5688
      %v5831 = vunpack.c.h.b16 %v5688
      %v5832 = vunpack.c.l.b16 %v5689
      %v5833 = vunpack.c.h.b16 %v5689
      %v5834 = vunpack.c.l.b16 %v5690
      %v5835 = vunpack.c.h.b16 %v5690
      %v5836 = vunpack.c.l.b16 %v5691
      %v5837 = vunpack.c.h.b16 %v5691
      %v5838 = vunpack.c.l.b16 %v5692
      %v5839 = vunpack.c.h.b16 %v5692
      %v5840 = vunpack.c.l.b16 %v5693
      %v5841 = vunpack.c.h.b16 %v5693
      %v5842 = vunpack.c.l.b16 %v5694
      %v5843 = vunpack.c.h.b16 %v5694
      %v5844 = vunpack.c.l.b16 %v5695
      %v5845 = vunpack.c.h.b16 %v5695
      %v5846 = vunpack.c.l.b16 %v5696
      %v5847 = vunpack.c.h.b16 %v5696
      %v5848 = vunpack.c.l.b16 %v5697
      %v5849 = vunpack.c.h.b16 %v5697
      %v5850 = vunpack.c.l.b16 %v5698
      %v5851 = vunpack.c.h.b16 %v5698
      %v5852 = vunpack.c.l.b16 %v5699
      %v5853 = vunpack.c.h.b16 %v5699
      %v5854 = vunpack.c.l.b16 %v5700
      %v5855 = vunpack.c.h.b16 %v5700
      %v5856 = vpack.c.b16 %v5824, %v5824
      %v5857 = vpack.c.b16 %v5825, %v5825
      %v5858 = vpack.c.b16 %v5826, %v5826
      %v5859 = vpack.c.b16 %v5827, %v5827
      %v5860 = vpack.c.b16 %v5828, %v5828
      %v5861 = vpack.c.b16 %v5829, %v5829
      %v5862 = vpack.c.b16 %v5830, %v5830
      %v5863 = vpack.c.b16 %v5831, %v5831
      %v5864 = vpack.c.b16 %v5832, %v5832
      %v5865 = vpack.c.b16 %v5833, %v5833
      %v5866 = vpack.c.b16 %v5834, %v5834
      %v5867 = vpack.c.b16 %v5835, %v5835
      %v5868 = vpack.c.b16 %v5836, %v5836
      %v5869 = vpack.c.b16 %v5837, %v5837
      %v5870 = vpack.c.b16 %v5838, %v5838
      %v5871 = vpack.c.b16 %v5839, %v5839
      %v5872 = vpack.c.b16 %v5840, %v5840
      %v5873 = vpack.c.b16 %v5841, %v5841
      %v5874 = vpack.c.b16 %v5842, %v5842
      %v5875 = vpack.c.b16 %v5843, %v5843
      %v5876 = vpack.c.b16 %v5844, %v5844
      %v5877 = vpack.c.b16 %v5845, %v5845
      %v5878 = vpack.c.b16 %v5846, %v5846
      %v5879 = vpack.c.b16 %v5847, %v5847
      %v5880 = vpack.c.b16 %v5848, %v5848
      %v5881 = vpack.c.b16 %v5849, %v5849
      %v5882 = vpack.c.b16 %v5850, %v5850
      %v5883 = vpack.c.b16 %v5851, %v5851
      %v5884 = vpack.c.b16 %v5852, %v5852
      %v5885 = vpack.c.b16 %v5853, %v5853
      %v5886 = vpack.c.b16 %v5854, %v5854
      %v5887 = vpack.c.b16 %v5855, %v5855
      %v5889 = vshrl.u32 %v5856, 16
      %v5891 = vrot.slane %v5889, 7
      %v5892 = vshll.u32 %v5856, 16
      %v5894 = vor.u32 %v5891, %v5892
      %v5895 = vrot.slane %v5891, 4
      %v5897 = vshrl.u32 %v5857, 16
      %v5899 = vrot.slane %v5897, 7
      %v5900 = vshll.u32 %v5857, 16
      %v5902 = vor.u32 %v5899, %v5900
      %v5903 = vsel %vm370, %v5895, %v5902
      %v5904 = vrot.slane %v5899, 4
      %v5906 = vshrl.u32 %v5858, 16
      %v5908 = vrot.slane %v5906, 7
      %v5909 = vshll.u32 %v5858, 16
      %v5911 = vor.u32 %v5908, %v5909
      %v5912 = vrot.slane %v5908, 4
      %v5914 = vshrl.u32 %v5859, 16
      %v5916 = vrot.slane %v5914, 7
      %v5917 = vshll.u32 %v5859, 16
      %v5919 = vor.u32 %v5916, %v5917
      %v5920 = vsel %vm370, %v5912, %v5919
      %v5921 = vrot.slane %v5916, 4
      %v5923 = vshrl.u32 %v5860, 16
      %v5925 = vrot.slane %v5923, 7
      %v5926 = vshll.u32 %v5860, 16
      %v5928 = vor.u32 %v5925, %v5926
      %v5929 = vrot.slane %v5925, 4
      %v5931 = vshrl.u32 %v5861, 16
      %v5933 = vrot.slane %v5931, 7
      %v5934 = vshll.u32 %v5861, 16
      %v5936 = vor.u32 %v5933, %v5934
      %v5937 = vsel %vm370, %v5929, %v5936
      %v5938 = vrot.slane %v5933, 4
      %v5940 = vshrl.u32 %v5862, 16
      %v5942 = vrot.slane %v5940, 7
      %v5943 = vshll.u32 %v5862, 16
      %v5945 = vor.u32 %v5942, %v5943
      %v5946 = vrot.slane %v5942, 4
      %v5948 = vshrl.u32 %v5863, 16
      %v5950 = vrot.slane %v5948, 7
      %v5951 = vshll.u32 %v5863, 16
      %v5953 = vor.u32 %v5950, %v5951
      %v5954 = vsel %vm370, %v5946, %v5953
      %v5955 = vrot.slane %v5950, 4
      %v5957 = vshrl.u32 %v5864, 16
      %v5959 = vrot.slane %v5957, 7
      %v5960 = vshll.u32 %v5864, 16
      %v5962 = vor.u32 %v5959, %v5960
      %v5963 = vrot.slane %v5959, 4
      %v5965 = vshrl.u32 %v5865, 16
      %v5967 = vrot.slane %v5965, 7
      %v5968 = vshll.u32 %v5865, 16
      %v5970 = vor.u32 %v5967, %v5968
      %v5971 = vsel %vm370, %v5963, %v5970
      %v5972 = vrot.slane %v5967, 4
      %v5974 = vshrl.u32 %v5866, 16
      %v5976 = vrot.slane %v5974, 7
      %v5977 = vshll.u32 %v5866, 16
      %v5979 = vor.u32 %v5976, %v5977
      %v5980 = vrot.slane %v5976, 4
      %v5982 = vshrl.u32 %v5867, 16
      %v5984 = vrot.slane %v5982, 7
      %v5985 = vshll.u32 %v5867, 16
      %v5987 = vor.u32 %v5984, %v5985
      %v5988 = vsel %vm370, %v5980, %v5987
      %v5989 = vrot.slane %v5984, 4
      %v5991 = vshrl.u32 %v5868, 16
      %v5993 = vrot.slane %v5991, 7
      %v5994 = vshll.u32 %v5868, 16
      %v5996 = vor.u32 %v5993, %v5994
      %v5997 = vrot.slane %v5993, 4
      %v5999 = vshrl.u32 %v5869, 16
      %v6001 = vrot.slane %v5999, 7
      %v6002 = vshll.u32 %v5869, 16
      %v6004 = vor.u32 %v6001, %v6002
      %v6005 = vsel %vm370, %v5997, %v6004
      %v6006 = vrot.slane %v6001, 4
      %v6008 = vshrl.u32 %v5870, 16
      %v6010 = vrot.slane %v6008, 7
      %v6011 = vshll.u32 %v5870, 16
      %v6013 = vor.u32 %v6010, %v6011
      %v6014 = vrot.slane %v6010, 4
      %v6016 = vshrl.u32 %v5871, 16
      %v6018 = vrot.slane %v6016, 7
      %v6019 = vshll.u32 %v5871, 16
      %v6021 = vor.u32 %v6018, %v6019
      %v6022 = vsel %vm370, %v6014, %v6021
      %v6023 = vrot.slane %v6018, 4
      %v6025 = vshrl.u32 %v5872, 16
      %v6027 = vrot.slane %v6025, 7
      %v6028 = vshll.u32 %v5872, 16
      %v6030 = vor.u32 %v6027, %v6028
      %v6031 = vrot.slane %v6027, 4
      %v6033 = vshrl.u32 %v5873, 16
      %v6035 = vrot.slane %v6033, 7
      %v6036 = vshll.u32 %v5873, 16
      %v6038 = vor.u32 %v6035, %v6036
      %v6039 = vsel %vm370, %v6031, %v6038
      %v6040 = vrot.slane %v6035, 4
      %v6042 = vshrl.u32 %v5874, 16
      %v6044 = vrot.slane %v6042, 7
      %v6045 = vshll.u32 %v5874, 16
      %v6047 = vor.u32 %v6044, %v6045
      %v6048 = vrot.slane %v6044, 4
      %v6050 = vshrl.u32 %v5875, 16
      %v6052 = vrot.slane %v6050, 7
      %v6053 = vshll.u32 %v5875, 16
      %v6055 = vor.u32 %v6052, %v6053
      %v6056 = vsel %vm370, %v6048, %v6055
      %v6057 = vrot.slane %v6052, 4
      %v6059 = vshrl.u32 %v5876, 16
      %v6061 = vrot.slane %v6059, 7
      %v6062 = vshll.u32 %v5876, 16
      %v6064 = vor.u32 %v6061, %v6062
      %v6065 = vrot.slane %v6061, 4
      %v6067 = vshrl.u32 %v5877, 16
      %v6069 = vrot.slane %v6067, 7
      %v6070 = vshll.u32 %v5877, 16
      %v6072 = vor.u32 %v6069, %v6070
      %v6073 = vsel %vm370, %v6065, %v6072
      %v6074 = vrot.slane %v6069, 4
      %v6076 = vshrl.u32 %v5878, 16
      %v6078 = vrot.slane %v6076, 7
      %v6079 = vshll.u32 %v5878, 16
      %v6081 = vor.u32 %v6078, %v6079
      %v6082 = vrot.slane %v6078, 4
      %v6084 = vshrl.u32 %v5879, 16
      %v6086 = vrot.slane %v6084, 7
      %v6087 = vshll.u32 %v5879, 16
      %v6089 = vor.u32 %v6086, %v6087
      %v6090 = vsel %vm370, %v6082, %v6089
      %v6091 = vrot.slane %v6086, 4
      %v6093 = vshrl.u32 %v5880, 16
      %v6095 = vrot.slane %v6093, 7
      %v6096 = vshll.u32 %v5880, 16
      %v6098 = vor.u32 %v6095, %v6096
      %v6099 = vrot.slane %v6095, 4
      %v6101 = vshrl.u32 %v5881, 16
      %v6103 = vrot.slane %v6101, 7
      %v6104 = vshll.u32 %v5881, 16
      %v6106 = vor.u32 %v6103, %v6104
      %v6107 = vsel %vm370, %v6099, %v6106
      %v6108 = vrot.slane %v6103, 4
      %v6110 = vshrl.u32 %v5882, 16
      %v6112 = vrot.slane %v6110, 7
      %v6113 = vshll.u32 %v5882, 16
      %v6115 = vor.u32 %v6112, %v6113
      %v6116 = vrot.slane %v6112, 4
      %v6118 = vshrl.u32 %v5883, 16
      %v6120 = vrot.slane %v6118, 7
      %v6121 = vshll.u32 %v5883, 16
      %v6123 = vor.u32 %v6120, %v6121
      %v6124 = vsel %vm370, %v6116, %v6123
      %v6125 = vrot.slane %v6120, 4
      %v6127 = vshrl.u32 %v5884, 16
      %v6129 = vrot.slane %v6127, 7
      %v6130 = vshll.u32 %v5884, 16
      %v6132 = vor.u32 %v6129, %v6130
      %v6133 = vrot.slane %v6129, 4
      %v6135 = vshrl.u32 %v5885, 16
      %v6137 = vrot.slane %v6135, 7
      %v6138 = vshll.u32 %v5885, 16
      %v6140 = vor.u32 %v6137, %v6138
      %v6141 = vsel %vm370, %v6133, %v6140
      %v6142 = vrot.slane %v6137, 4
      %v6144 = vshrl.u32 %v5886, 16
      %v6146 = vrot.slane %v6144, 7
      %v6147 = vshll.u32 %v5886, 16
      %v6149 = vor.u32 %v6146, %v6147
      %v6150 = vrot.slane %v6146, 4
      %v6152 = vshrl.u32 %v5887, 16
      %v6154 = vrot.slane %v6152, 7
      %v6155 = vshll.u32 %v5887, 16
      %v6157 = vor.u32 %v6154, %v6155
      %v6158 = vsel %vm370, %v6150, %v6157
      %v6159 = vrot.slane %v6154, 4
      %vm6208 = vcmask 1043456
      %vm6209 = vmand %vm6208, %vm319
      %v6210 = vld [vmem:[%s5708] sm:$0xf]
      %v6211 = vsel %vm6209, %v5894, %v6210
      %6212 = vst [vmem:[%s5708] sm:$0xf] %v6211
      %6213 = vst [vmem:[%s5708 + $0x4] sm:$0xf] %v5903
      %v6214 = vld [vmem:[%s5708 + $0x8] sm:$0x1]
      %v6215 = vsel %vm5710, %v5904, %v6214
      %6216 = vst [vmem:[%s5708 + $0x8] sm:$0x1] %v6215
      %v6217 = vld [vmem:[%s5708 + $0xc] sm:$0xf]
      %v6218 = vsel %vm6209, %v5911, %v6217
      %6219 = vst [vmem:[%s5708 + $0xc] sm:$0xf] %v6218
      %6220 = vst [vmem:[%s5708 + $0x10] sm:$0xf] %v5920
      %v6221 = vld [vmem:[%s5708 + $0x14] sm:$0x1]
      %v6222 = vsel %vm5710, %v5921, %v6221
      %6223 = vst [vmem:[%s5708 + $0x14] sm:$0x1] %v6222
      %v6224 = vld [vmem:[%s5708 + $0x18] sm:$0xf]
      %v6225 = vsel %vm6209, %v5928, %v6224
      %6226 = vst [vmem:[%s5708 + $0x18] sm:$0xf] %v6225
      %6227 = vst [vmem:[%s5708 + $0x1c] sm:$0xf] %v5937
      %v6228 = vld [vmem:[%s5708 + $0x20] sm:$0x1]
      %v6229 = vsel %vm5710, %v5938, %v6228
      %6230 = vst [vmem:[%s5708 + $0x20] sm:$0x1] %v6229
      %v6231 = vld [vmem:[%s5708 + $0x24] sm:$0xf]
      %v6232 = vsel %vm6209, %v5945, %v6231
      %6233 = vst [vmem:[%s5708 + $0x24] sm:$0xf] %v6232
      %6234 = vst [vmem:[%s5708 + $0x28] sm:$0xf] %v5954
      %v6235 = vld [vmem:[%s5708 + $0x2c] sm:$0x1]
      %v6236 = vsel %vm5710, %v5955, %v6235
      %6237 = vst [vmem:[%s5708 + $0x2c] sm:$0x1] %v6236
      %v6238 = vld [vmem:[%s5708 + $0x30] sm:$0xf]
      %v6239 = vsel %vm6209, %v5962, %v6238
      %6240 = vst [vmem:[%s5708 + $0x30] sm:$0xf] %v6239
      %6241 = vst [vmem:[%s5708 + $0x34] sm:$0xf] %v5971
      %v6242 = vld [vmem:[%s5708 + $0x38] sm:$0x1]
      %v6243 = vsel %vm5710, %v5972, %v6242
      %6244 = vst [vmem:[%s5708 + $0x38] sm:$0x1] %v6243
      %v6245 = vld [vmem:[%s5708 + $0x3c] sm:$0xf]
      %v6246 = vsel %vm6209, %v5979, %v6245
      %6247 = vst [vmem:[%s5708 + $0x3c] sm:$0xf] %v6246
      %6248 = vst [vmem:[%s5708 + $0x40] sm:$0xf] %v5988
      %v6249 = vld [vmem:[%s5708 + $0x44] sm:$0x1]
      %v6250 = vsel %vm5710, %v5989, %v6249
      %6251 = vst [vmem:[%s5708 + $0x44] sm:$0x1] %v6250
      %v6252 = vld [vmem:[%s5708 + $0x48] sm:$0xf]
      %v6253 = vsel %vm6209, %v5996, %v6252
      %6254 = vst [vmem:[%s5708 + $0x48] sm:$0xf] %v6253
      %6255 = vst [vmem:[%s5708 + $0x4c] sm:$0xf] %v6005
      %v6256 = vld [vmem:[%s5708 + $0x50] sm:$0x1]
      %v6257 = vsel %vm5710, %v6006, %v6256
      %6258 = vst [vmem:[%s5708 + $0x50] sm:$0x1] %v6257
      %v6259 = vld [vmem:[%s5708 + $0x54] sm:$0xf]
      %v6260 = vsel %vm6209, %v6013, %v6259
      %6261 = vst [vmem:[%s5708 + $0x54] sm:$0xf] %v6260
      %6262 = vst [vmem:[%s5708 + $0x58] sm:$0xf] %v6022
      %v6263 = vld [vmem:[%s5708 + $0x5c] sm:$0x1]
      %v6264 = vsel %vm5710, %v6023, %v6263
      %6265 = vst [vmem:[%s5708 + $0x5c] sm:$0x1] %v6264
      %v6266 = vld [vmem:[%s5708 + $0x60] sm:$0xf]
      %v6267 = vsel %vm6209, %v6030, %v6266
      %6268 = vst [vmem:[%s5708 + $0x60] sm:$0xf] %v6267
      %6269 = vst [vmem:[%s5708 + $0x64] sm:$0xf] %v6039
      %v6270 = vld [vmem:[%s5708 + $0x68] sm:$0x1]
      %v6271 = vsel %vm5710, %v6040, %v6270
      %6272 = vst [vmem:[%s5708 + $0x68] sm:$0x1] %v6271
      %v6273 = vld [vmem:[%s5708 + $0x6c] sm:$0xf]
      %v6274 = vsel %vm6209, %v6047, %v6273
      %6275 = vst [vmem:[%s5708 + $0x6c] sm:$0xf] %v6274
      %6276 = vst [vmem:[%s5708 + $0x70] sm:$0xf] %v6056
      %v6277 = vld [vmem:[%s5708 + $0x74] sm:$0x1]
      %v6278 = vsel %vm5710, %v6057, %v6277
      %6279 = vst [vmem:[%s5708 + $0x74] sm:$0x1] %v6278
      %v6280 = vld [vmem:[%s5708 + $0x78] sm:$0xf]
      %v6281 = vsel %vm6209, %v6064, %v6280
      %6282 = vst [vmem:[%s5708 + $0x78] sm:$0xf] %v6281
      %6283 = vst [vmem:[%s5708 + $0x7c] sm:$0xf] %v6073
      %v6284 = vld [vmem:[%s5708 + $0x80] sm:$0x1]
      %v6285 = vsel %vm5710, %v6074, %v6284
      %6286 = vst [vmem:[%s5708 + $0x80] sm:$0x1] %v6285
      %v6287 = vld [vmem:[%s5708 + $0x84] sm:$0xf]
      %v6288 = vsel %vm6209, %v6081, %v6287
      %6289 = vst [vmem:[%s5708 + $0x84] sm:$0xf] %v6288
      %6290 = vst [vmem:[%s5708 + $0x88] sm:$0xf] %v6090
      %v6291 = vld [vmem:[%s5708 + $0x8c] sm:$0x1]
      %v6292 = vsel %vm5710, %v6091, %v6291
      %6293 = vst [vmem:[%s5708 + $0x8c] sm:$0x1] %v6292
      %v6294 = vld [vmem:[%s5708 + $0x90] sm:$0xf]
      %v6295 = vsel %vm6209, %v6098, %v6294
      %6296 = vst [vmem:[%s5708 + $0x90] sm:$0xf] %v6295
      %6297 = vst [vmem:[%s5708 + $0x94] sm:$0xf] %v6107
      %v6298 = vld [vmem:[%s5708 + $0x98] sm:$0x1]
      %v6299 = vsel %vm5710, %v6108, %v6298
      %6300 = vst [vmem:[%s5708 + $0x98] sm:$0x1] %v6299
      %v6301 = vld [vmem:[%s5708 + $0x9c] sm:$0xf]
      %v6302 = vsel %vm6209, %v6115, %v6301
      %6303 = vst [vmem:[%s5708 + $0x9c] sm:$0xf] %v6302
      %6304 = vst [vmem:[%s5708 + $0xa0] sm:$0xf] %v6124
      %v6305 = vld [vmem:[%s5708 + $0xa4] sm:$0x1]
      %v6306 = vsel %vm5710, %v6125, %v6305
      %6307 = vst [vmem:[%s5708 + $0xa4] sm:$0x1] %v6306
      %v6308 = vld [vmem:[%s5708 + $0xa8] sm:$0xf]
      %v6309 = vsel %vm6209, %v6132, %v6308
      %6310 = vst [vmem:[%s5708 + $0xa8] sm:$0xf] %v6309
      %6311 = vst [vmem:[%s5708 + $0xac] sm:$0xf] %v6141
      %v6312 = vld [vmem:[%s5708 + $0xb0] sm:$0x1]
      %v6313 = vsel %vm5710, %v6142, %v6312
      %6314 = vst [vmem:[%s5708 + $0xb0] sm:$0x1] %v6313
      %v6315 = vld [vmem:[%s5708 + $0xb4] sm:$0xf]
      %v6316 = vsel %vm6209, %v6149, %v6315
      %6317 = vst [vmem:[%s5708 + $0xb4] sm:$0xf] %v6316
      %6318 = vst [vmem:[%s5708 + $0xb8] sm:$0xf] %v6158
      %v6319 = vld [vmem:[%s5708 + $0xbc] sm:$0x1]
      %v6320 = vsel %vm5710, %v6159, %v6319
      %6321 = vst [vmem:[%s5708 + $0xbc] sm:$0x1] %v6320
      %v6322 = vld [vmem:[%s4] sm:$0x1]
      %v6323 = vld [vmem:[#allocation3] sm:$0xf]
      %v6324 = vld [vmem:[#allocation3 + $0x4] sm:$0xf]
      %v6325 = vld [vmem:[#allocation3 + $0xc] sm:$0xf]
      %v6326 = vld [vmem:[#allocation3 + $0x10] sm:$0xf]
      %v6327 = vld [vmem:[#allocation3 + $0x18] sm:$0xf]
      %v6328 = vld [vmem:[#allocation3 + $0x1c] sm:$0xf]
      %v6329 = vld [vmem:[#allocation3 + $0x24] sm:$0xf]
      %v6330 = vld [vmem:[#allocation3 + $0x28] sm:$0xf]
      %v6331 = vld [vmem:[#allocation3 + $0x30] sm:$0xf]
      %v6332 = vld [vmem:[#allocation3 + $0x34] sm:$0xf]
      %v6333 = vld [vmem:[#allocation3 + $0x3c] sm:$0xf]
      %v6334 = vld [vmem:[#allocation3 + $0x40] sm:$0xf]
      %v6335 = vld [vmem:[#allocation3 + $0x48] sm:$0xf]
      %v6336 = vld [vmem:[#allocation3 + $0x4c] sm:$0xf]
      %v6337 = vld [vmem:[#allocation3 + $0x54] sm:$0xf]
      %v6338 = vld [vmem:[#allocation3 + $0x58] sm:$0xf]
      %v6339 = vld [vmem:[#allocation3 + $0x60] sm:$0xf]
      %v6340 = vld [vmem:[#allocation3 + $0x64] sm:$0xf]
      %v6341 = vld [vmem:[#allocation3 + $0x6c] sm:$0xf]
      %v6342 = vld [vmem:[#allocation3 + $0x70] sm:$0xf]
      %v6343 = vld [vmem:[#allocation3 + $0x78] sm:$0xf]
      %v6344 = vld [vmem:[#allocation3 + $0x7c] sm:$0xf]
      %v6345 = vld [vmem:[#allocation3 + $0x84] sm:$0xf]
      %v6346 = vld [vmem:[#allocation3 + $0x88] sm:$0xf]
      %v6347 = vld [vmem:[#allocation3 + $0x90] sm:$0xf]
      %v6348 = vld [vmem:[#allocation3 + $0x94] sm:$0xf]
      %v6349 = vld [vmem:[#allocation3 + $0x9c] sm:$0xf]
      %v6350 = vld [vmem:[#allocation3 + $0xa0] sm:$0xf]
      %v6351 = vld [vmem:[#allocation3 + $0xa8] sm:$0xf]
      %v6352 = vld [vmem:[#allocation3 + $0xac] sm:$0xf]
      %v6353 = vld [vmem:[#allocation3 + $0xb4] sm:$0xf]
      %v6354 = vld [vmem:[#allocation3 + $0xb8] sm:$0xf]
      %v6355 = vld [vmem:[%s3] sm:$0xf]
      %v6356 = vld [vmem:[%s3 + $0x4] sm:$0xf]
      %v6357 = vld [vmem:[%s3 + $0x8] sm:$0xf]
      %v6358 = vld [vmem:[%s3 + $0xc] sm:$0xf]
      %v6359 = vld [vmem:[%s3 + $0x10] sm:$0xf]
      %v6360 = vld [vmem:[%s3 + $0x14] sm:$0xf]
      %v6361 = vld [vmem:[%s3 + $0x18] sm:$0xf]
      %v6362 = vld [vmem:[%s3 + $0x1c] sm:$0xf]
      %v6363 = vld [vmem:[%s3 + $0x20] sm:$0xf]
      %v6364 = vld [vmem:[%s3 + $0x24] sm:$0xf]
      %v6365 = vld [vmem:[%s3 + $0x28] sm:$0xf]
      %v6366 = vld [vmem:[%s3 + $0x2c] sm:$0xf]
      %v6367 = vld [vmem:[%s3 + $0x30] sm:$0xf]
      %v6368 = vld [vmem:[%s3 + $0x34] sm:$0xf]
      %v6369 = vld [vmem:[%s3 + $0x38] sm:$0xf]
      %v6370 = vld [vmem:[%s3 + $0x3c] sm:$0xf]
      %v6371 = vld [vmem:[#allocation3 + $0x8] sm:$0x1]
      %v6372 = vld [vmem:[#allocation3 + $0x14] sm:$0x1]
      %v6373 = vld [vmem:[#allocation3 + $0x20] sm:$0x1]
      %v6374 = vld [vmem:[#allocation3 + $0x2c] sm:$0x1]
      %v6375 = vld [vmem:[#allocation3 + $0x38] sm:$0x1]
      %v6376 = vld [vmem:[#allocation3 + $0x44] sm:$0x1]
      %v6377 = vld [vmem:[#allocation3 + $0x50] sm:$0x1]
      %v6378 = vld [vmem:[#allocation3 + $0x5c] sm:$0x1]
      %v6379 = vld [vmem:[#allocation3 + $0x68] sm:$0x1]
      %v6380 = vld [vmem:[#allocation3 + $0x74] sm:$0x1]
      %v6381 = vld [vmem:[#allocation3 + $0x80] sm:$0x1]
      %v6382 = vld [vmem:[#allocation3 + $0x8c] sm:$0x1]
      %v6383 = vld [vmem:[#allocation3 + $0x98] sm:$0x1]
      %v6384 = vld [vmem:[#allocation3 + $0xa4] sm:$0x1]
      %v6385 = vld [vmem:[#allocation3 + $0xb0] sm:$0x1]
      %v6386 = vld [vmem:[#allocation3 + $0xbc] sm:$0x1]
      %v6388 = vshrl.u32 %v6323, 16
      %v6390 = vrot.slane %v6388, 4
      %v6391 = vshll.u32 %v6323, 16
      %v6393 = vrot.slane %v6391, 5
      %v6394 = vor.u32 %v6390, %v6393
      %v6395 = vrot.slane %v6394, 4
      %v6397 = vshll.u32 %v6324, 16
      %v6399 = vrot.slane %v6397, 5
      %v6400 = vsel %vm864, %v6395, %v6399
      %v6401 = vshrl.u32 %v6324, 16
      %v6403 = vrot.slane %v6401, 4
      %v6404 = vor.u32 %v6403, %v6399
      %v6405 = vrot.slane %v6404, 4
      %v6407 = vshll.u32 %v6371, 16
      %v6409 = vrot.slane %v6407, 5
      %v6410 = vsel %vm864, %v6405, %v6409
      %v6412 = vshrl.u32 %v6325, 16
      %v6414 = vrot.slane %v6412, 4
      %v6415 = vshll.u32 %v6325, 16
      %v6417 = vrot.slane %v6415, 5
      %v6418 = vor.u32 %v6414, %v6417
      %v6419 = vrot.slane %v6418, 4
      %v6421 = vshll.u32 %v6326, 16
      %v6423 = vrot.slane %v6421, 5
      %v6424 = vsel %vm864, %v6419, %v6423
      %v6425 = vshrl.u32 %v6326, 16
      %v6427 = vrot.slane %v6425, 4
      %v6428 = vor.u32 %v6427, %v6423
      %v6429 = vrot.slane %v6428, 4
      %v6431 = vshll.u32 %v6372, 16
      %v6433 = vrot.slane %v6431, 5
      %v6434 = vsel %vm864, %v6429, %v6433
      %v6436 = vshrl.u32 %v6327, 16
      %v6438 = vrot.slane %v6436, 4
      %v6439 = vshll.u32 %v6327, 16
      %v6441 = vrot.slane %v6439, 5
      %v6442 = vor.u32 %v6438, %v6441
      %v6443 = vrot.slane %v6442, 4
      %v6445 = vshll.u32 %v6328, 16
      %v6447 = vrot.slane %v6445, 5
      %v6448 = vsel %vm864, %v6443, %v6447
      %v6449 = vshrl.u32 %v6328, 16
      %v6451 = vrot.slane %v6449, 4
      %v6452 = vor.u32 %v6451, %v6447
      %v6453 = vrot.slane %v6452, 4
      %v6455 = vshll.u32 %v6373, 16
      %v6457 = vrot.slane %v6455, 5
      %v6458 = vsel %vm864, %v6453, %v6457
      %v6460 = vshrl.u32 %v6329, 16
      %v6462 = vrot.slane %v6460, 4
      %v6463 = vshll.u32 %v6329, 16
      %v6465 = vrot.slane %v6463, 5
      %v6466 = vor.u32 %v6462, %v6465
      %v6467 = vrot.slane %v6466, 4
      %v6469 = vshll.u32 %v6330, 16
      %v6471 = vrot.slane %v6469, 5
      %v6472 = vsel %vm864, %v6467, %v6471
      %v6473 = vshrl.u32 %v6330, 16
      %v6475 = vrot.slane %v6473, 4
      %v6476 = vor.u32 %v6475, %v6471
      %v6477 = vrot.slane %v6476, 4
      %v6479 = vshll.u32 %v6374, 16
      %v6481 = vrot.slane %v6479, 5
      %v6482 = vsel %vm864, %v6477, %v6481
      %v6484 = vshrl.u32 %v6331, 16
      %v6486 = vrot.slane %v6484, 4
      %v6487 = vshll.u32 %v6331, 16
      %v6489 = vrot.slane %v6487, 5
      %v6490 = vor.u32 %v6486, %v6489
      %v6491 = vrot.slane %v6490, 4
      %v6493 = vshll.u32 %v6332, 16
      %v6495 = vrot.slane %v6493, 5
      %v6496 = vsel %vm864, %v6491, %v6495
      %v6497 = vshrl.u32 %v6332, 16
      %v6499 = vrot.slane %v6497, 4
      %v6500 = vor.u32 %v6499, %v6495
      %v6501 = vrot.slane %v6500, 4
      %v6503 = vshll.u32 %v6375, 16
      %v6505 = vrot.slane %v6503, 5
      %v6506 = vsel %vm864, %v6501, %v6505
      %v6508 = vshrl.u32 %v6333, 16
      %v6510 = vrot.slane %v6508, 4
      %v6511 = vshll.u32 %v6333, 16
      %v6513 = vrot.slane %v6511, 5
      %v6514 = vor.u32 %v6510, %v6513
      %v6515 = vrot.slane %v6514, 4
      %v6517 = vshll.u32 %v6334, 16
      %v6519 = vrot.slane %v6517, 5
      %v6520 = vsel %vm864, %v6515, %v6519
      %v6521 = vshrl.u32 %v6334, 16
      %v6523 = vrot.slane %v6521, 4
      %v6524 = vor.u32 %v6523, %v6519
      %v6525 = vrot.slane %v6524, 4
      %v6527 = vshll.u32 %v6376, 16
      %v6529 = vrot.slane %v6527, 5
      %v6530 = vsel %vm864, %v6525, %v6529
      %v6532 = vshrl.u32 %v6335, 16
      %v6534 = vrot.slane %v6532, 4
      %v6535 = vshll.u32 %v6335, 16
      %v6537 = vrot.slane %v6535, 5
      %v6538 = vor.u32 %v6534, %v6537
      %v6539 = vrot.slane %v6538, 4
      %v6541 = vshll.u32 %v6336, 16
      %v6543 = vrot.slane %v6541, 5
      %v6544 = vsel %vm864, %v6539, %v6543
      %v6545 = vshrl.u32 %v6336, 16
      %v6547 = vrot.slane %v6545, 4
      %v6548 = vor.u32 %v6547, %v6543
      %v6549 = vrot.slane %v6548, 4
      %v6551 = vshll.u32 %v6377, 16
      %v6553 = vrot.slane %v6551, 5
      %v6554 = vsel %vm864, %v6549, %v6553
      %v6556 = vshrl.u32 %v6337, 16
      %v6558 = vrot.slane %v6556, 4
      %v6559 = vshll.u32 %v6337, 16
      %v6561 = vrot.slane %v6559, 5
      %v6562 = vor.u32 %v6558, %v6561
      %v6563 = vrot.slane %v6562, 4
      %v6565 = vshll.u32 %v6338, 16
      %v6567 = vrot.slane %v6565, 5
      %v6568 = vsel %vm864, %v6563, %v6567
      %v6569 = vshrl.u32 %v6338, 16
      %v6571 = vrot.slane %v6569, 4
      %v6572 = vor.u32 %v6571, %v6567
      %v6573 = vrot.slane %v6572, 4
      %v6575 = vshll.u32 %v6378, 16
      %v6577 = vrot.slane %v6575, 5
      %v6578 = vsel %vm864, %v6573, %v6577
      %v6580 = vshrl.u32 %v6339, 16
      %v6582 = vrot.slane %v6580, 4
      %v6583 = vshll.u32 %v6339, 16
      %v6585 = vrot.slane %v6583, 5
      %v6586 = vor.u32 %v6582, %v6585
      %v6587 = vrot.slane %v6586, 4
      %v6589 = vshll.u32 %v6340, 16
      %v6591 = vrot.slane %v6589, 5
      %v6592 = vsel %vm864, %v6587, %v6591
      %v6593 = vshrl.u32 %v6340, 16
      %v6595 = vrot.slane %v6593, 4
      %v6596 = vor.u32 %v6595, %v6591
      %v6597 = vrot.slane %v6596, 4
      %v6599 = vshll.u32 %v6379, 16
      %v6601 = vrot.slane %v6599, 5
      %v6602 = vsel %vm864, %v6597, %v6601
      %v6604 = vshrl.u32 %v6341, 16
      %v6606 = vrot.slane %v6604, 4
      %v6607 = vshll.u32 %v6341, 16
      %v6609 = vrot.slane %v6607, 5
      %v6610 = vor.u32 %v6606, %v6609
      %v6611 = vrot.slane %v6610, 4
      %v6613 = vshll.u32 %v6342, 16
      %v6615 = vrot.slane %v6613, 5
      %v6616 = vsel %vm864, %v6611, %v6615
      %v6617 = vshrl.u32 %v6342, 16
      %v6619 = vrot.slane %v6617, 4
      %v6620 = vor.u32 %v6619, %v6615
      %v6621 = vrot.slane %v6620, 4
      %v6623 = vshll.u32 %v6380, 16
      %v6625 = vrot.slane %v6623, 5
      %v6626 = vsel %vm864, %v6621, %v6625
      %v6628 = vshrl.u32 %v6343, 16
      %v6630 = vrot.slane %v6628, 4
      %v6631 = vshll.u32 %v6343, 16
      %v6633 = vrot.slane %v6631, 5
      %v6634 = vor.u32 %v6630, %v6633
      %v6635 = vrot.slane %v6634, 4
      %v6637 = vshll.u32 %v6344, 16
      %v6639 = vrot.slane %v6637, 5
      %v6640 = vsel %vm864, %v6635, %v6639
      %v6641 = vshrl.u32 %v6344, 16
      %v6643 = vrot.slane %v6641, 4
      %v6644 = vor.u32 %v6643, %v6639
      %v6645 = vrot.slane %v6644, 4
      %v6647 = vshll.u32 %v6381, 16
      %v6649 = vrot.slane %v6647, 5
      %v6650 = vsel %vm864, %v6645, %v6649
      %v6652 = vshrl.u32 %v6345, 16
      %v6654 = vrot.slane %v6652, 4
      %v6655 = vshll.u32 %v6345, 16
      %v6657 = vrot.slane %v6655, 5
      %v6658 = vor.u32 %v6654, %v6657
      %v6659 = vrot.slane %v6658, 4
      %v6661 = vshll.u32 %v6346, 16
      %v6663 = vrot.slane %v6661, 5
      %v6664 = vsel %vm864, %v6659, %v6663
      %v6665 = vshrl.u32 %v6346, 16
      %v6667 = vrot.slane %v6665, 4
      %v6668 = vor.u32 %v6667, %v6663
      %v6669 = vrot.slane %v6668, 4
      %v6671 = vshll.u32 %v6382, 16
      %v6673 = vrot.slane %v6671, 5
      %v6674 = vsel %vm864, %v6669, %v6673
      %v6676 = vshrl.u32 %v6347, 16
      %v6678 = vrot.slane %v6676, 4
      %v6679 = vshll.u32 %v6347, 16
      %v6681 = vrot.slane %v6679, 5
      %v6682 = vor.u32 %v6678, %v6681
      %v6683 = vrot.slane %v6682, 4
      %v6685 = vshll.u32 %v6348, 16
      %v6687 = vrot.slane %v6685, 5
      %v6688 = vsel %vm864, %v6683, %v6687
      %v6689 = vshrl.u32 %v6348, 16
      %v6691 = vrot.slane %v6689, 4
      %v6692 = vor.u32 %v6691, %v6687
      %v6693 = vrot.slane %v6692, 4
      %v6695 = vshll.u32 %v6383, 16
      %v6697 = vrot.slane %v6695, 5
      %v6698 = vsel %vm864, %v6693, %v6697
      %v6700 = vshrl.u32 %v6349, 16
      %v6702 = vrot.slane %v6700, 4
      %v6703 = vshll.u32 %v6349, 16
      %v6705 = vrot.slane %v6703, 5
      %v6706 = vor.u32 %v6702, %v6705
      %v6707 = vrot.slane %v6706, 4
      %v6709 = vshll.u32 %v6350, 16
      %v6711 = vrot.slane %v6709, 5
      %v6712 = vsel %vm864, %v6707, %v6711
      %v6713 = vshrl.u32 %v6350, 16
      %v6715 = vrot.slane %v6713, 4
      %v6716 = vor.u32 %v6715, %v6711
      %v6717 = vrot.slane %v6716, 4
      %v6719 = vshll.u32 %v6384, 16
      %v6721 = vrot.slane %v6719, 5
      %v6722 = vsel %vm864, %v6717, %v6721
      %v6724 = vshrl.u32 %v6351, 16
      %v6726 = vrot.slane %v6724, 4
      %v6727 = vshll.u32 %v6351, 16
      %v6729 = vrot.slane %v6727, 5
      %v6730 = vor.u32 %v6726, %v6729
      %v6731 = vrot.slane %v6730, 4
      %v6733 = vshll.u32 %v6352, 16
      %v6735 = vrot.slane %v6733, 5
      %v6736 = vsel %vm864, %v6731, %v6735
      %v6737 = vshrl.u32 %v6352, 16
      %v6739 = vrot.slane %v6737, 4
      %v6740 = vor.u32 %v6739, %v6735
      %v6741 = vrot.slane %v6740, 4
      %v6743 = vshll.u32 %v6385, 16
      %v6745 = vrot.slane %v6743, 5
      %v6746 = vsel %vm864, %v6741, %v6745
      %v6748 = vshrl.u32 %v6353, 16
      %v6750 = vrot.slane %v6748, 4
      %v6751 = vshll.u32 %v6353, 16
      %v6753 = vrot.slane %v6751, 5
      %v6754 = vor.u32 %v6750, %v6753
      %v6755 = vrot.slane %v6754, 4
      %v6757 = vshll.u32 %v6354, 16
      %v6759 = vrot.slane %v6757, 5
      %v6760 = vsel %vm864, %v6755, %v6759
      %v6761 = vshrl.u32 %v6354, 16
      %v6763 = vrot.slane %v6761, 4
      %v6764 = vor.u32 %v6763, %v6759
      %v6765 = vrot.slane %v6764, 4
      %v6767 = vshll.u32 %v6386, 16
      %v6769 = vrot.slane %v6767, 5
      %v6770 = vsel %vm864, %v6765, %v6769
      %s6771 = scalar_lea.vmem %s3, 64
      %v6772 = vld [vmem:[%s6771] sm:$0xf]
      %v6773 = vld [vmem:[%s6771 + $0x4] sm:$0xf]
      %v6774 = vld [vmem:[%s6771 + $0x8] sm:$0xf]
      %v6775 = vld [vmem:[%s6771 + $0xc] sm:$0xf]
      %v6776 = vld [vmem:[%s6771 + $0x10] sm:$0xf]
      %v6777 = vld [vmem:[%s6771 + $0x14] sm:$0xf]
      %v6778 = vld [vmem:[%s6771 + $0x18] sm:$0xf]
      %v6779 = vld [vmem:[%s6771 + $0x1c] sm:$0xf]
      %v6780 = vld [vmem:[%s6771 + $0x20] sm:$0xf]
      %v6781 = vld [vmem:[%s6771 + $0x24] sm:$0xf]
      %v6782 = vld [vmem:[%s6771 + $0x28] sm:$0xf]
      %v6783 = vld [vmem:[%s6771 + $0x2c] sm:$0xf]
      %v6784 = vld [vmem:[%s6771 + $0x30] sm:$0xf]
      %v6785 = vld [vmem:[%s6771 + $0x34] sm:$0xf]
      %v6786 = vld [vmem:[%s6771 + $0x38] sm:$0xf]
      %v6787 = vld [vmem:[%s6771 + $0x3c] sm:$0xf]
      %v6788 = vunpack.c.l.b16 %v6400
      %v6789 = vunpack.c.l.b16 %v6410
      %v6790 = vunpack.c.l.b16 %v6424
      %v6791 = vunpack.c.l.b16 %v6434
      %v6792 = vunpack.c.l.b16 %v6448
      %v6793 = vunpack.c.l.b16 %v6458
      %v6794 = vunpack.c.l.b16 %v6472
      %v6795 = vunpack.c.l.b16 %v6482
      %v6796 = vunpack.c.l.b16 %v6496
      %v6797 = vunpack.c.l.b16 %v6506
      %v6798 = vunpack.c.l.b16 %v6520
      %v6799 = vunpack.c.l.b16 %v6530
      %v6800 = vunpack.c.l.b16 %v6544
      %v6801 = vunpack.c.l.b16 %v6554
      %v6802 = vunpack.c.l.b16 %v6568
      %v6803 = vunpack.c.l.b16 %v6578
      %v6804 = vunpack.c.l.b16 %v6592
      %v6805 = vunpack.c.l.b16 %v6602
      %v6806 = vunpack.c.l.b16 %v6616
      %v6807 = vunpack.c.l.b16 %v6626
      %v6808 = vunpack.c.l.b16 %v6640
      %v6809 = vunpack.c.l.b16 %v6650
      %v6810 = vunpack.c.l.b16 %v6664
      %v6811 = vunpack.c.l.b16 %v6674
      %v6812 = vunpack.c.l.b16 %v6688
      %v6813 = vunpack.c.l.b16 %v6698
      %v6814 = vunpack.c.l.b16 %v6712
      %v6815 = vunpack.c.l.b16 %v6722
      %v6816 = vunpack.c.l.b16 %v6736
      %v6817 = vunpack.c.l.b16 %v6746
      %v6818 = vunpack.c.l.b16 %v6760
      %v6819 = vunpack.c.l.b16 %v6770
      %v6820 = vpack.c.b16 %v6789, %v6788
      %v6821 = vpack.c.b16 %v6791, %v6790
      %v6822 = vpack.c.b16 %v6793, %v6792
      %v6823 = vpack.c.b16 %v6795, %v6794
      %v6824 = vpack.c.b16 %v6797, %v6796
      %v6825 = vpack.c.b16 %v6799, %v6798
      %v6826 = vpack.c.b16 %v6801, %v6800
      %v6827 = vpack.c.b16 %v6803, %v6802
      %v6828 = vpack.c.b16 %v6805, %v6804
      %v6829 = vpack.c.b16 %v6807, %v6806
      %v6830 = vpack.c.b16 %v6809, %v6808
      %v6831 = vpack.c.b16 %v6811, %v6810
      %v6832 = vpack.c.b16 %v6813, %v6812
      %v6833 = vpack.c.b16 %v6815, %v6814
      %v6834 = vpack.c.b16 %v6817, %v6816
      %v6835 = vpack.c.b16 %v6819, %v6818
      %v6868 = vunpack.c.l.b16 %v6772
      %v6869 = vunpack.c.l.b16 %v6773
      %v6870 = vunpack.c.l.b16 %v6774
      %v6871 = vunpack.c.l.b16 %v6775
      %v6872 = vunpack.c.l.b16 %v6776
      %v6873 = vunpack.c.l.b16 %v6777
      %v6874 = vunpack.c.l.b16 %v6778
      %v6875 = vunpack.c.l.b16 %v6779
      %v6876 = vunpack.c.l.b16 %v6780
      %v6877 = vunpack.c.l.b16 %v6781
      %v6878 = vunpack.c.l.b16 %v6782
      %v6879 = vunpack.c.l.b16 %v6783
      %v6880 = vunpack.c.l.b16 %v6784
      %v6881 = vunpack.c.l.b16 %v6785
      %v6882 = vunpack.c.l.b16 %v6786
      %v6883 = vunpack.c.l.b16 %v6787
      %v6884 = vpack.c.b16 %v6869, %v6868
      %v6885 = vpack.c.b16 %v6871, %v6870
      %v6886 = vpack.c.b16 %v6873, %v6872
      %v6887 = vpack.c.b16 %v6875, %v6874
      %v6888 = vpack.c.b16 %v6877, %v6876
      %v6889 = vpack.c.b16 %v6879, %v6878
      %v6890 = vpack.c.b16 %v6881, %v6880
      %v6891 = vpack.c.b16 %v6883, %v6882
      %6900 = vmatprep.subr.bf16.mxu0 0
      %6901 = vmatpush1.bf16.msra.mxu0 %v6884
      %6902 = vmatprep.subr.bf16.mxu0 0
      %6903 = vmatpush1.bf16.msra.mxu0 %v6885
      %6904 = vmatprep.subr.bf16.mxu0 0
      %6905 = vmatpush1.bf16.msra.mxu0 %v6886
      %6906 = vmatprep.subr.bf16.mxu0 0
      %6907 = vmatpush1.bf16.msra.mxu0 %v6887
      %6908 = vmatprep.subr.bf16.mxu0 0
      %6909 = vmatpush1.bf16.msra.mxu0 %v6888
      %6910 = vmatprep.subr.bf16.mxu0 0
      %6911 = vmatpush1.bf16.msra.mxu0 %v6889
      %6912 = vmatprep.subr.bf16.mxu0 0
      %6913 = vmatpush1.bf16.msra.mxu0 %v6890
      %6914 = vmatprep.subr.bf16.mxu0 0
      %6915 = vmatpush1.bf16.msra.mxu0 %v6891
      %6916 = vmatprep.subr.bf16.mxu0 0
      %6917 = vmatpush1.bf16.msra.mxu0 0
      %6918 = vmatprep.subr.bf16.mxu0 0
      %6919 = vmatpush1.bf16.msra.mxu0 0
      %6920 = vmatprep.subr.bf16.mxu0 0
      %6921 = vmatpush1.bf16.msra.mxu0 0
      %6922 = vmatprep.subr.bf16.mxu0 0
      %6923 = vmatpush1.bf16.msra.mxu0 0
      %6924 = vmatprep.subr.bf16.mxu0 0
      %6925 = vmatpush1.bf16.msra.mxu0 0
      %6926 = vmatprep.subr.bf16.mxu0 0
      %6927 = vmatpush1.bf16.msra.mxu0 0
      %6928 = vmatprep.subr.bf16.mxu0 0
      %6929 = vmatpush1.bf16.msra.mxu0 0
      %6930 = vmatprep.subr.bf16.mxu0 0
      %6931 = vmatpush1.bf16.msra.mxu0 0
      %6932 = vmatprep.mubr.bf16.mxu0 0
      %6933 = vmatmul.mubr.bf16.gmra.mrb[0].mxu0 %v6820
      %v6934 = vpop.f32.mrb[0].mxu0
      %v6935 = vadd.f32 0.0, %v6934
      %v6936 = vpop.f32.mrb[0].mxu0
      %v6937 = vpop.f32.mrb[0].mxu0
      %v6938 = vadd.f32 0.0, %v6937
      %v6939 = vpop.f32.mrb[0].mxu0
      %6940 = vmatprep.mubr.bf16.mxu0 0
      %6941 = vmatmul.mubr.bf16.gmra.mrb[0].mxu0 %v6821
      %v6942 = vpop.f32.mrb[0].mxu0
      %v6943 = vadd.f32 0.0, %v6942
      %v6944 = vpop.f32.mrb[0].mxu0
      %v6945 = vpop.f32.mrb[0].mxu0
      %v6946 = vadd.f32 0.0, %v6945
      %v6947 = vpop.f32.mrb[0].mxu0
      %6948 = vmatprep.mubr.bf16.mxu0 0
      %6949 = vmatmul.mubr.bf16.gmra.mrb[0].mxu0 %v6822
      %v6950 = vpop.f32.mrb[0].mxu0
      %v6951 = vadd.f32 0.0, %v6950
      %v6952 = vpop.f32.mrb[0].mxu0
      %v6953 = vpop.f32.mrb[0].mxu0
      %v6954 = vadd.f32 0.0, %v6953
      %v6955 = vpop.f32.mrb[0].mxu0
      %6956 = vmatprep.mubr.bf16.mxu0 0
      %6957 = vmatmul.mubr.bf16.gmra.mrb[0].mxu0 %v6823
      %v6958 = vpop.f32.mrb[0].mxu0
      %v6959 = vadd.f32 0.0, %v6958
      %v6960 = vpop.f32.mrb[0].mxu0
      %v6961 = vpop.f32.mrb[0].mxu0
      %v6962 = vadd.f32 0.0, %v6961
      %v6963 = vpop.f32.mrb[0].mxu0
      %6964 = vmatprep.mubr.bf16.mxu0 0
      %6965 = vmatmul.mubr.bf16.gmra.mrb[0].mxu0 %v6824
      %v6966 = vpop.f32.mrb[0].mxu0
      %v6967 = vadd.f32 0.0, %v6966
      %v6968 = vpop.f32.mrb[0].mxu0
      %v6969 = vpop.f32.mrb[0].mxu0
      %v6970 = vadd.f32 0.0, %v6969
      %v6971 = vpop.f32.mrb[0].mxu0
      %6972 = vmatprep.mubr.bf16.mxu0 0
      %6973 = vmatmul.mubr.bf16.gmra.mrb[0].mxu0 %v6825
      %v6974 = vpop.f32.mrb[0].mxu0
      %v6975 = vadd.f32 0.0, %v6974
      %v6976 = vpop.f32.mrb[0].mxu0
      %v6977 = vpop.f32.mrb[0].mxu0
      %v6978 = vadd.f32 0.0, %v6977
      %v6979 = vpop.f32.mrb[0].mxu0
      %6980 = vmatprep.mubr.bf16.mxu0 0
      %6981 = vmatmul.mubr.bf16.gmra.mrb[0].mxu0 %v6826
      %v6982 = vpop.f32.mrb[0].mxu0
      %v6983 = vadd.f32 0.0, %v6982
      %v6984 = vpop.f32.mrb[0].mxu0
      %v6985 = vpop.f32.mrb[0].mxu0
      %v6986 = vadd.f32 0.0, %v6985
      %v6987 = vpop.f32.mrb[0].mxu0
      %6988 = vmatprep.mubr.bf16.mxu0 0
      %6989 = vmatmul.mubr.bf16.gmra.mrb[0].mxu0 %v6827
      %v6990 = vpop.f32.mrb[0].mxu0
      %v6991 = vadd.f32 0.0, %v6990
      %v6992 = vpop.f32.mrb[0].mxu0
      %v6993 = vpop.f32.mrb[0].mxu0
      %v6994 = vadd.f32 0.0, %v6993
      %v6995 = vpop.f32.mrb[0].mxu0
      %6996 = vmatprep.mubr.bf16.mxu0 0
      %6997 = vmatmul.mubr.bf16.gmra.mrb[0].mxu0 %v6828
      %v6998 = vpop.f32.mrb[0].mxu0
      %v6999 = vadd.f32 0.0, %v6998
      %v7000 = vpop.f32.mrb[0].mxu0
      %v7001 = vpop.f32.mrb[0].mxu0
      %v7002 = vadd.f32 0.0, %v7001
      %v7003 = vpop.f32.mrb[0].mxu0
      %7004 = vmatprep.mubr.bf16.mxu0 0
      %7005 = vmatmul.mubr.bf16.gmra.mrb[0].mxu0 %v6829
      %v7006 = vpop.f32.mrb[0].mxu0
      %v7007 = vadd.f32 0.0, %v7006
      %v7008 = vpop.f32.mrb[0].mxu0
      %v7009 = vpop.f32.mrb[0].mxu0
      %v7010 = vadd.f32 0.0, %v7009
      %v7011 = vpop.f32.mrb[0].mxu0
      %7012 = vmatprep.mubr.bf16.mxu0 0
      %7013 = vmatmul.mubr.bf16.gmra.mrb[0].mxu0 %v6830
      %v7014 = vpop.f32.mrb[0].mxu0
      %v7015 = vadd.f32 0.0, %v7014
      %v7016 = vpop.f32.mrb[0].mxu0
      %v7017 = vpop.f32.mrb[0].mxu0
      %v7018 = vadd.f32 0.0, %v7017
      %v7019 = vpop.f32.mrb[0].mxu0
      %7020 = vmatprep.mubr.bf16.mxu0 0
      %7021 = vmatmul.mubr.bf16.gmra.mrb[0].mxu0 %v6831
      %v7022 = vpop.f32.mrb[0].mxu0
      %v7023 = vadd.f32 0.0, %v7022
      %v7024 = vpop.f32.mrb[0].mxu0
      %v7025 = vpop.f32.mrb[0].mxu0
      %v7026 = vadd.f32 0.0, %v7025
      %v7027 = vpop.f32.mrb[0].mxu0
      %7028 = vmatprep.mubr.bf16.mxu0 0
      %7029 = vmatmul.mubr.bf16.gmra.mrb[0].mxu0 %v6832
      %v7030 = vpop.f32.mrb[0].mxu0
      %v7031 = vadd.f32 0.0, %v7030
      %v7032 = vpop.f32.mrb[0].mxu0
      %v7033 = vpop.f32.mrb[0].mxu0
      %v7034 = vadd.f32 0.0, %v7033
      %v7035 = vpop.f32.mrb[0].mxu0
      %7036 = vmatprep.mubr.bf16.mxu0 0
      %7037 = vmatmul.mubr.bf16.gmra.mrb[0].mxu0 %v6833
      %v7038 = vpop.f32.mrb[0].mxu0
      %v7039 = vadd.f32 0.0, %v7038
      %v7040 = vpop.f32.mrb[0].mxu0
      %v7041 = vpop.f32.mrb[0].mxu0
      %v7042 = vadd.f32 0.0, %v7041
      %v7043 = vpop.f32.mrb[0].mxu0
      %7044 = vmatprep.mubr.bf16.mxu0 0
      %7045 = vmatmul.mubr.bf16.gmra.mrb[0].mxu0 %v6834
      %v7046 = vpop.f32.mrb[0].mxu0
      %v7047 = vadd.f32 0.0, %v7046
      %v7048 = vpop.f32.mrb[0].mxu0
      %v7049 = vpop.f32.mrb[0].mxu0
      %v7050 = vadd.f32 0.0, %v7049
      %v7051 = vpop.f32.mrb[0].mxu0
      %7052 = vmatprep.mubr.bf16.mxu0 0
      %7053 = vmatmul.mubr.bf16.gmra.mrb[0].mxu0 %v6835
      %v7054 = vpop.f32.mrb[0].mxu0
      %v7055 = vadd.f32 0.0, %v7054
      %v7056 = vpop.f32.mrb[0].mxu0
      %v7057 = vpop.f32.mrb[0].mxu0
      %v7058 = vadd.f32 0.0, %v7057
      %v7059 = vpop.f32.mrb[0].mxu0
      %7060 = vdwg.mxu0
      %v7093 = vunpack.c.l.b16 %v6323
      %v7094 = vunpack.c.l.b16 %v6324
      %v7095 = vunpack.c.l.b16 %v6325
      %v7096 = vunpack.c.l.b16 %v6326
      %v7097 = vunpack.c.l.b16 %v6327
      %v7098 = vunpack.c.l.b16 %v6328
      %v7099 = vunpack.c.l.b16 %v6329
      %v7100 = vunpack.c.l.b16 %v6330
      %v7101 = vunpack.c.l.b16 %v6331
      %v7102 = vunpack.c.l.b16 %v6332
      %v7103 = vunpack.c.l.b16 %v6333
      %v7104 = vunpack.c.l.b16 %v6334
      %v7105 = vunpack.c.l.b16 %v6335
      %v7106 = vunpack.c.l.b16 %v6336
      %v7107 = vunpack.c.l.b16 %v6337
      %v7108 = vunpack.c.l.b16 %v6338
      %v7109 = vunpack.c.l.b16 %v6339
      %v7110 = vunpack.c.l.b16 %v6340
      %v7111 = vunpack.c.l.b16 %v6341
      %v7112 = vunpack.c.l.b16 %v6342
      %v7113 = vunpack.c.l.b16 %v6343
      %v7114 = vunpack.c.l.b16 %v6344
      %v7115 = vunpack.c.l.b16 %v6345
      %v7116 = vunpack.c.l.b16 %v6346
      %v7117 = vunpack.c.l.b16 %v6347
      %v7118 = vunpack.c.l.b16 %v6348
      %v7119 = vunpack.c.l.b16 %v6349
      %v7120 = vunpack.c.l.b16 %v6350
      %v7121 = vunpack.c.l.b16 %v6351
      %v7122 = vunpack.c.l.b16 %v6352
      %v7123 = vunpack.c.l.b16 %v6353
      %v7124 = vunpack.c.l.b16 %v6354
      %v7125 = vpack.c.b16 %v7094, %v7093
      %v7126 = vpack.c.b16 %v7096, %v7095
      %v7127 = vpack.c.b16 %v7098, %v7097
      %v7128 = vpack.c.b16 %v7100, %v7099
      %v7129 = vpack.c.b16 %v7102, %v7101
      %v7130 = vpack.c.b16 %v7104, %v7103
      %v7131 = vpack.c.b16 %v7106, %v7105
      %v7132 = vpack.c.b16 %v7108, %v7107
      %v7133 = vpack.c.b16 %v7110, %v7109
      %v7134 = vpack.c.b16 %v7112, %v7111
      %v7135 = vpack.c.b16 %v7114, %v7113
      %v7136 = vpack.c.b16 %v7116, %v7115
      %v7137 = vpack.c.b16 %v7118, %v7117
      %v7138 = vpack.c.b16 %v7120, %v7119
      %v7139 = vpack.c.b16 %v7122, %v7121
      %v7140 = vpack.c.b16 %v7124, %v7123
      %v7173 = vunpack.c.l.b16 %v6355
      %v7174 = vunpack.c.l.b16 %v6356
      %v7175 = vunpack.c.l.b16 %v6357
      %v7176 = vunpack.c.l.b16 %v6358
      %v7177 = vunpack.c.l.b16 %v6359
      %v7178 = vunpack.c.l.b16 %v6360
      %v7179 = vunpack.c.l.b16 %v6361
      %v7180 = vunpack.c.l.b16 %v6362
      %v7181 = vunpack.c.l.b16 %v6363
      %v7182 = vunpack.c.l.b16 %v6364
      %v7183 = vunpack.c.l.b16 %v6365
      %v7184 = vunpack.c.l.b16 %v6366
      %v7185 = vunpack.c.l.b16 %v6367
      %v7186 = vunpack.c.l.b16 %v6368
      %v7187 = vunpack.c.l.b16 %v6369
      %v7188 = vunpack.c.l.b16 %v6370
      %v7189 = vpack.c.b16 %v7174, %v7173
      %v7190 = vpack.c.b16 %v7176, %v7175
      %v7191 = vpack.c.b16 %v7178, %v7177
      %v7192 = vpack.c.b16 %v7180, %v7179
      %v7193 = vpack.c.b16 %v7182, %v7181
      %v7194 = vpack.c.b16 %v7184, %v7183
      %v7195 = vpack.c.b16 %v7186, %v7185
      %v7196 = vpack.c.b16 %v7188, %v7187
      %7205 = vmatprep.subr.bf16.mxu0 0
      %7206 = vmatpush1.bf16.msra.mxu0 %v7189
      %7207 = vmatprep.subr.bf16.mxu0 0
      %7208 = vmatpush1.bf16.msra.mxu0 %v7190
      %7209 = vmatprep.subr.bf16.mxu0 0
      %7210 = vmatpush1.bf16.msra.mxu0 %v7191
      %7211 = vmatprep.subr.bf16.mxu0 0
      %7212 = vmatpush1.bf16.msra.mxu0 %v7192
      %7213 = vmatprep.subr.bf16.mxu0 0
      %7214 = vmatpush1.bf16.msra.mxu0 %v7193
      %7215 = vmatprep.subr.bf16.mxu0 0
      %7216 = vmatpush1.bf16.msra.mxu0 %v7194
      %7217 = vmatprep.subr.bf16.mxu0 0
      %7218 = vmatpush1.bf16.msra.mxu0 %v7195
      %7219 = vmatprep.subr.bf16.mxu0 0
      %7220 = vmatpush1.bf16.msra.mxu0 %v7196
      %7221 = vmatprep.subr.bf16.mxu0 0
      %7222 = vmatpush1.bf16.msra.mxu0 0
      %7223 = vmatprep.subr.bf16.mxu0 0
      %7224 = vmatpush1.bf16.msra.mxu0 0
      %7225 = vmatprep.subr.bf16.mxu0 0
      %7226 = vmatpush1.bf16.msra.mxu0 0
      %7227 = vmatprep.subr.bf16.mxu0 0
      %7228 = vmatpush1.bf16.msra.mxu0 0
      %7229 = vmatprep.subr.bf16.mxu0 0
      %7230 = vmatpush1.bf16.msra.mxu0 0
      %7231 = vmatprep.subr.bf16.mxu0 0
      %7232 = vmatpush1.bf16.msra.mxu0 0
      %7233 = vmatprep.subr.bf16.mxu0 0
      %7234 = vmatpush1.bf16.msra.mxu0 0
      %7235 = vmatprep.subr.bf16.mxu0 0
      %7236 = vmatpush1.bf16.msra.mxu0 0
      %7237 = vmatprep.mubr.bf16.mxu0 0
      %7238 = vmatmul.mubr.bf16.gmra.mrb[0].mxu0 %v7125
      %v7239 = vpop.f32.mrb[0].mxu0
      %v7240 = vadd.f32 %v6935, %v7239
      %v7241 = vpop.f32.mrb[0].mxu0
      %v7242 = vpop.f32.mrb[0].mxu0
      %v7243 = vadd.f32 %v6938, %v7242
      %v7244 = vpop.f32.mrb[0].mxu0
      %7245 = vmatprep.mubr.bf16.mxu0 0
      %7246 = vmatmul.mubr.bf16.gmra.mrb[0].mxu0 %v7126
      %v7247 = vpop.f32.mrb[0].mxu0
      %v7248 = vadd.f32 %v6943, %v7247
      %v7249 = vpop.f32.mrb[0].mxu0
      %v7250 = vpop.f32.mrb[0].mxu0
      %v7251 = vadd.f32 %v6946, %v7250
      %v7252 = vpop.f32.mrb[0].mxu0
      %7253 = vmatprep.mubr.bf16.mxu0 0
      %7254 = vmatmul.mubr.bf16.gmra.mrb[0].mxu0 %v7127
      %v7255 = vpop.f32.mrb[0].mxu0
      %v7256 = vadd.f32 %v6951, %v7255
      %v7257 = vpop.f32.mrb[0].mxu0
      %v7258 = vpop.f32.mrb[0].mxu0
      %v7259 = vadd.f32 %v6954, %v7258
      %v7260 = vpop.f32.mrb[0].mxu0
      %7261 = vmatprep.mubr.bf16.mxu0 0
      %7262 = vmatmul.mubr.bf16.gmra.mrb[0].mxu0 %v7128
      %v7263 = vpop.f32.mrb[0].mxu0
      %v7264 = vadd.f32 %v6959, %v7263
      %v7265 = vpop.f32.mrb[0].mxu0
      %v7266 = vpop.f32.mrb[0].mxu0
      %v7267 = vadd.f32 %v6962, %v7266
      %v7268 = vpop.f32.mrb[0].mxu0
      %7269 = vmatprep.mubr.bf16.mxu0 0
      %7270 = vmatmul.mubr.bf16.gmra.mrb[0].mxu0 %v7129
      %v7271 = vpop.f32.mrb[0].mxu0
      %v7272 = vadd.f32 %v6967, %v7271
      %v7273 = vpop.f32.mrb[0].mxu0
      %v7274 = vpop.f32.mrb[0].mxu0
      %v7275 = vadd.f32 %v6970, %v7274
      %v7276 = vpop.f32.mrb[0].mxu0
      %7277 = vmatprep.mubr.bf16.mxu0 0
      %7278 = vmatmul.mubr.bf16.gmra.mrb[0].mxu0 %v7130
      %v7279 = vpop.f32.mrb[0].mxu0
      %v7280 = vadd.f32 %v6975, %v7279
      %v7281 = vpop.f32.mrb[0].mxu0
      %v7282 = vpop.f32.mrb[0].mxu0
      %v7283 = vadd.f32 %v6978, %v7282
      %v7284 = vpop.f32.mrb[0].mxu0
      %7285 = vmatprep.mubr.bf16.mxu0 0
      %7286 = vmatmul.mubr.bf16.gmra.mrb[0].mxu0 %v7131
      %v7287 = vpop.f32.mrb[0].mxu0
      %v7288 = vadd.f32 %v6983, %v7287
      %v7289 = vpop.f32.mrb[0].mxu0
      %v7290 = vpop.f32.mrb[0].mxu0
      %v7291 = vadd.f32 %v6986, %v7290
      %v7292 = vpop.f32.mrb[0].mxu0
      %7293 = vmatprep.mubr.bf16.mxu0 0
      %7294 = vmatmul.mubr.bf16.gmra.mrb[0].mxu0 %v7132
      %v7295 = vpop.f32.mrb[0].mxu0
      %v7296 = vadd.f32 %v6991, %v7295
      %v7297 = vpop.f32.mrb[0].mxu0
      %v7298 = vpop.f32.mrb[0].mxu0
      %v7299 = vadd.f32 %v6994, %v7298
      %v7300 = vpop.f32.mrb[0].mxu0
      %7301 = vmatprep.mubr.bf16.mxu0 0
      %7302 = vmatmul.mubr.bf16.gmra.mrb[0].mxu0 %v7133
      %v7303 = vpop.f32.mrb[0].mxu0
      %v7304 = vadd.f32 %v6999, %v7303
      %v7305 = vpop.f32.mrb[0].mxu0
      %v7306 = vpop.f32.mrb[0].mxu0
      %v7307 = vadd.f32 %v7002, %v7306
      %v7308 = vpop.f32.mrb[0].mxu0
      %7309 = vmatprep.mubr.bf16.mxu0 0
      %7310 = vmatmul.mubr.bf16.gmra.mrb[0].mxu0 %v7134
      %v7311 = vpop.f32.mrb[0].mxu0
      %v7312 = vadd.f32 %v7007, %v7311
      %v7313 = vpop.f32.mrb[0].mxu0
      %v7314 = vpop.f32.mrb[0].mxu0
      %v7315 = vadd.f32 %v7010, %v7314
      %v7316 = vpop.f32.mrb[0].mxu0
      %7317 = vmatprep.mubr.bf16.mxu0 0
      %7318 = vmatmul.mubr.bf16.gmra.mrb[0].mxu0 %v7135
      %v7319 = vpop.f32.mrb[0].mxu0
      %v7320 = vadd.f32 %v7015, %v7319
      %v7321 = vpop.f32.mrb[0].mxu0
      %v7322 = vpop.f32.mrb[0].mxu0
      %v7323 = vadd.f32 %v7018, %v7322
      %v7324 = vpop.f32.mrb[0].mxu0
      %7325 = vmatprep.mubr.bf16.mxu0 0
      %7326 = vmatmul.mubr.bf16.gmra.mrb[0].mxu0 %v7136
      %v7327 = vpop.f32.mrb[0].mxu0
      %v7328 = vadd.f32 %v7023, %v7327
      %v7329 = vpop.f32.mrb[0].mxu0
      %v7330 = vpop.f32.mrb[0].mxu0
      %v7331 = vadd.f32 %v7026, %v7330
      %v7332 = vpop.f32.mrb[0].mxu0
      %7333 = vmatprep.mubr.bf16.mxu0 0
      %7334 = vmatmul.mubr.bf16.gmra.mrb[0].mxu0 %v7137
      %v7335 = vpop.f32.mrb[0].mxu0
      %v7336 = vadd.f32 %v7031, %v7335
      %v7337 = vpop.f32.mrb[0].mxu0
      %v7338 = vpop.f32.mrb[0].mxu0
      %v7339 = vadd.f32 %v7034, %v7338
      %v7340 = vpop.f32.mrb[0].mxu0
      %7341 = vmatprep.mubr.bf16.mxu0 0
      %7342 = vmatmul.mubr.bf16.gmra.mrb[0].mxu0 %v7138
      %v7343 = vpop.f32.mrb[0].mxu0
      %v7344 = vadd.f32 %v7039, %v7343
      %v7345 = vpop.f32.mrb[0].mxu0
      %v7346 = vpop.f32.mrb[0].mxu0
      %v7347 = vadd.f32 %v7042, %v7346
      %v7348 = vpop.f32.mrb[0].mxu0
      %7349 = vmatprep.mubr.bf16.mxu0 0
      %7350 = vmatmul.mubr.bf16.gmra.mrb[0].mxu0 %v7139
      %v7351 = vpop.f32.mrb[0].mxu0
      %v7352 = vadd.f32 %v7047, %v7351
      %v7353 = vpop.f32.mrb[0].mxu0
      %v7354 = vpop.f32.mrb[0].mxu0
      %v7355 = vadd.f32 %v7050, %v7354
      %v7356 = vpop.f32.mrb[0].mxu0
      %7357 = vmatprep.mubr.bf16.mxu0 0
      %7358 = vmatmul.mubr.bf16.gmra.mrb[0].mxu0 %v7140
      %v7359 = vpop.f32.mrb[0].mxu0
      %v7360 = vadd.f32 %v7055, %v7359
      %v7361 = vpop.f32.mrb[0].mxu0
      %v7362 = vpop.f32.mrb[0].mxu0
      %v7363 = vadd.f32 %v7058, %v7362
      %v7364 = vpop.f32.mrb[0].mxu0
      %7365 = vdwg.mxu0
      %v7366 = vld [vmem:[#allocation3] sm:$0xe]
      %v7367 = vld [vmem:[#allocation3 + $0xc] sm:$0xe]
      %v7368 = vld [vmem:[#allocation3 + $0x18] sm:$0xe]
      %v7369 = vld [vmem:[#allocation3 + $0x24] sm:$0xe]
      %v7370 = vld [vmem:[#allocation3 + $0x30] sm:$0xe]
      %v7371 = vld [vmem:[#allocation3 + $0x3c] sm:$0xe]
      %v7372 = vld [vmem:[#allocation3 + $0x48] sm:$0xe]
      %v7373 = vld [vmem:[#allocation3 + $0x54] sm:$0xe]
      %v7374 = vld [vmem:[#allocation3 + $0x60] sm:$0xe]
      %v7375 = vld [vmem:[#allocation3 + $0x6c] sm:$0xe]
      %v7376 = vld [vmem:[#allocation3 + $0x78] sm:$0xe]
      %v7377 = vld [vmem:[#allocation3 + $0x84] sm:$0xe]
      %v7378 = vld [vmem:[#allocation3 + $0x90] sm:$0xe]
      %v7379 = vld [vmem:[#allocation3 + $0x9c] sm:$0xe]
      %v7380 = vld [vmem:[#allocation3 + $0xa8] sm:$0xe]
      %v7381 = vld [vmem:[#allocation3 + $0xb4] sm:$0xe]
      %v7414 = vrot.slane %v7366, 5
      %v7415 = vrot.slane %v7414, 4
      %v7416 = vrot.slane %v6324, 5
      %v7417 = vsel %vm1903, %v7415, %v7416
      %v7418 = vrot.slane %v7416, 4
      %v7419 = vrot.slane %v6371, 5
      %v7420 = vsel %vm1903, %v7418, %v7419
      %v7421 = vrot.slane %v7367, 5
      %v7422 = vrot.slane %v7421, 4
      %v7423 = vrot.slane %v6326, 5
      %v7424 = vsel %vm1903, %v7422, %v7423
      %v7425 = vrot.slane %v7423, 4
      %v7426 = vrot.slane %v6372, 5
      %v7427 = vsel %vm1903, %v7425, %v7426
      %v7428 = vrot.slane %v7368, 5
      %v7429 = vrot.slane %v7428, 4
      %v7430 = vrot.slane %v6328, 5
      %v7431 = vsel %vm1903, %v7429, %v7430
      %v7432 = vrot.slane %v7430, 4
      %v7433 = vrot.slane %v6373, 5
      %v7434 = vsel %vm1903, %v7432, %v7433
      %v7435 = vrot.slane %v7369, 5
      %v7436 = vrot.slane %v7435, 4
      %v7437 = vrot.slane %v6330, 5
      %v7438 = vsel %vm1903, %v7436, %v7437
      %v7439 = vrot.slane %v7437, 4
      %v7440 = vrot.slane %v6374, 5
      %v7441 = vsel %vm1903, %v7439, %v7440
      %v7442 = vrot.slane %v7370, 5
      %v7443 = vrot.slane %v7442, 4
      %v7444 = vrot.slane %v6332, 5
      %v7445 = vsel %vm1903, %v7443, %v7444
      %v7446 = vrot.slane %v7444, 4
      %v7447 = vrot.slane %v6375, 5
      %v7448 = vsel %vm1903, %v7446, %v7447
      %v7449 = vrot.slane %v7371, 5
      %v7450 = vrot.slane %v7449, 4
      %v7451 = vrot.slane %v6334, 5
      %v7452 = vsel %vm1903, %v7450, %v7451
      %v7453 = vrot.slane %v7451, 4
      %v7454 = vrot.slane %v6376, 5
      %v7455 = vsel %vm1903, %v7453, %v7454
      %v7456 = vrot.slane %v7372, 5
      %v7457 = vrot.slane %v7456, 4
      %v7458 = vrot.slane %v6336, 5
      %v7459 = vsel %vm1903, %v7457, %v7458
      %v7460 = vrot.slane %v7458, 4
      %v7461 = vrot.slane %v6377, 5
      %v7462 = vsel %vm1903, %v7460, %v7461
      %v7463 = vrot.slane %v7373, 5
      %v7464 = vrot.slane %v7463, 4
      %v7465 = vrot.slane %v6338, 5
      %v7466 = vsel %vm1903, %v7464, %v7465
      %v7467 = vrot.slane %v7465, 4
      %v7468 = vrot.slane %v6378, 5
      %v7469 = vsel %vm1903, %v7467, %v7468
      %v7470 = vrot.slane %v7374, 5
      %v7471 = vrot.slane %v7470, 4
      %v7472 = vrot.slane %v6340, 5
      %v7473 = vsel %vm1903, %v7471, %v7472
      %v7474 = vrot.slane %v7472, 4
      %v7475 = vrot.slane %v6379, 5
      %v7476 = vsel %vm1903, %v7474, %v7475
      %v7477 = vrot.slane %v7375, 5
      %v7478 = vrot.slane %v7477, 4
      %v7479 = vrot.slane %v6342, 5
      %v7480 = vsel %vm1903, %v7478, %v7479
      %v7481 = vrot.slane %v7479, 4
      %v7482 = vrot.slane %v6380, 5
      %v7483 = vsel %vm1903, %v7481, %v7482
      %v7484 = vrot.slane %v7376, 5
      %v7485 = vrot.slane %v7484, 4
      %v7486 = vrot.slane %v6344, 5
      %v7487 = vsel %vm1903, %v7485, %v7486
      %v7488 = vrot.slane %v7486, 4
      %v7489 = vrot.slane %v6381, 5
      %v7490 = vsel %vm1903, %v7488, %v7489
      %v7491 = vrot.slane %v7377, 5
      %v7492 = vrot.slane %v7491, 4
      %v7493 = vrot.slane %v6346, 5
      %v7494 = vsel %vm1903, %v7492, %v7493
      %v7495 = vrot.slane %v7493, 4
      %v7496 = vrot.slane %v6382, 5
      %v7497 = vsel %vm1903, %v7495, %v7496
      %v7498 = vrot.slane %v7378, 5
      %v7499 = vrot.slane %v7498, 4
      %v7500 = vrot.slane %v6348, 5
      %v7501 = vsel %vm1903, %v7499, %v7500
      %v7502 = vrot.slane %v7500, 4
      %v7503 = vrot.slane %v6383, 5
      %v7504 = vsel %vm1903, %v7502, %v7503
      %v7505 = vrot.slane %v7379, 5
      %v7506 = vrot.slane %v7505, 4
      %v7507 = vrot.slane %v6350, 5
      %v7508 = vsel %vm1903, %v7506, %v7507
      %v7509 = vrot.slane %v7507, 4
      %v7510 = vrot.slane %v6384, 5
      %v7511 = vsel %vm1903, %v7509, %v7510
      %v7512 = vrot.slane %v7380, 5
      %v7513 = vrot.slane %v7512, 4
      %v7514 = vrot.slane %v6352, 5
      %v7515 = vsel %vm1903, %v7513, %v7514
      %v7516 = vrot.slane %v7514, 4
      %v7517 = vrot.slane %v6385, 5
      %v7518 = vsel %vm1903, %v7516, %v7517
      %v7519 = vrot.slane %v7381, 5
      %v7520 = vrot.slane %v7519, 4
      %v7521 = vrot.slane %v6354, 5
      %v7522 = vsel %vm1903, %v7520, %v7521
      %v7523 = vrot.slane %v7521, 4
      %v7524 = vrot.slane %v6386, 5
      %v7525 = vsel %vm1903, %v7523, %v7524
      %s7526 = scalar_lea.vmem %s3, 128
      %v7527 = vld [vmem:[%s7526] sm:$0xf]
      %v7528 = vld [vmem:[%s7526 + $0x4] sm:$0xf]
      %v7529 = vld [vmem:[%s7526 + $0x8] sm:$0xf]
      %v7530 = vld [vmem:[%s7526 + $0xc] sm:$0xf]
      %v7531 = vld [vmem:[%s7526 + $0x10] sm:$0xf]
      %v7532 = vld [vmem:[%s7526 + $0x14] sm:$0xf]
      %v7533 = vld [vmem:[%s7526 + $0x18] sm:$0xf]
      %v7534 = vld [vmem:[%s7526 + $0x1c] sm:$0xf]
      %v7535 = vld [vmem:[%s7526 + $0x20] sm:$0xf]
      %v7536 = vld [vmem:[%s7526 + $0x24] sm:$0xf]
      %v7537 = vld [vmem:[%s7526 + $0x28] sm:$0xf]
      %v7538 = vld [vmem:[%s7526 + $0x2c] sm:$0xf]
      %v7539 = vld [vmem:[%s7526 + $0x30] sm:$0xf]
      %v7540 = vld [vmem:[%s7526 + $0x34] sm:$0xf]
      %v7541 = vld [vmem:[%s7526 + $0x38] sm:$0xf]
      %v7542 = vld [vmem:[%s7526 + $0x3c] sm:$0xf]
      %v7543 = vunpack.c.l.b16 %v7417
      %v7544 = vunpack.c.l.b16 %v7420
      %v7545 = vunpack.c.l.b16 %v7424
      %v7546 = vunpack.c.l.b16 %v7427
      %v7547 = vunpack.c.l.b16 %v7431
      %v7548 = vunpack.c.l.b16 %v7434
      %v7549 = vunpack.c.l.b16 %v7438
      %v7550 = vunpack.c.l.b16 %v7441
      %v7551 = vunpack.c.l.b16 %v7445
      %v7552 = vunpack.c.l.b16 %v7448
      %v7553 = vunpack.c.l.b16 %v7452
      %v7554 = vunpack.c.l.b16 %v7455
      %v7555 = vunpack.c.l.b16 %v7459
      %v7556 = vunpack.c.l.b16 %v7462
      %v7557 = vunpack.c.l.b16 %v7466
      %v7558 = vunpack.c.l.b16 %v7469
      %v7559 = vunpack.c.l.b16 %v7473
      %v7560 = vunpack.c.l.b16 %v7476
      %v7561 = vunpack.c.l.b16 %v7480
      %v7562 = vunpack.c.l.b16 %v7483
      %v7563 = vunpack.c.l.b16 %v7487
      %v7564 = vunpack.c.l.b16 %v7490
      %v7565 = vunpack.c.l.b16 %v7494
      %v7566 = vunpack.c.l.b16 %v7497
      %v7567 = vunpack.c.l.b16 %v7501
      %v7568 = vunpack.c.l.b16 %v7504
      %v7569 = vunpack.c.l.b16 %v7508
      %v7570 = vunpack.c.l.b16 %v7511
      %v7571 = vunpack.c.l.b16 %v7515
      %v7572 = vunpack.c.l.b16 %v7518
      %v7573 = vunpack.c.l.b16 %v7522
      %v7574 = vunpack.c.l.b16 %v7525
      %v7575 = vpack.c.b16 %v7544, %v7543
      %v7576 = vpack.c.b16 %v7546, %v7545
      %v7577 = vpack.c.b16 %v7548, %v7547
      %v7578 = vpack.c.b16 %v7550, %v7549
      %v7579 = vpack.c.b16 %v7552, %v7551
      %v7580 = vpack.c.b16 %v7554, %v7553
      %v7581 = vpack.c.b16 %v7556, %v7555
      %v7582 = vpack.c.b16 %v7558, %v7557
      %v7583 = vpack.c.b16 %v7560, %v7559
      %v7584 = vpack.c.b16 %v7562, %v7561
      %v7585 = vpack.c.b16 %v7564, %v7563
      %v7586 = vpack.c.b16 %v7566, %v7565
      %v7587 = vpack.c.b16 %v7568, %v7567
      %v7588 = vpack.c.b16 %v7570, %v7569
      %v7589 = vpack.c.b16 %v7572, %v7571
      %v7590 = vpack.c.b16 %v7574, %v7573
      %v7623 = vunpack.c.l.b16 %v7527
      %v7624 = vunpack.c.l.b16 %v7528
      %v7625 = vunpack.c.l.b16 %v7529
      %v7626 = vunpack.c.l.b16 %v7530
      %v7627 = vunpack.c.l.b16 %v7531
      %v7628 = vunpack.c.l.b16 %v7532
      %v7629 = vunpack.c.l.b16 %v7533
      %v7630 = vunpack.c.l.b16 %v7534
      %v7631 = vunpack.c.l.b16 %v7535
      %v7632 = vunpack.c.l.b16 %v7536
      %v7633 = vunpack.c.l.b16 %v7537
      %v7634 = vunpack.c.l.b16 %v7538
      %v7635 = vunpack.c.l.b16 %v7539
      %v7636 = vunpack.c.l.b16 %v7540
      %v7637 = vunpack.c.l.b16 %v7541
      %v7638 = vunpack.c.l.b16 %v7542
      %v7639 = vpack.c.b16 %v7624, %v7623
      %v7640 = vpack.c.b16 %v7626, %v7625
      %v7641 = vpack.c.b16 %v7628, %v7627
      %v7642 = vpack.c.b16 %v7630, %v7629
      %v7643 = vpack.c.b16 %v7632, %v7631
      %v7644 = vpack.c.b16 %v7634, %v7633
      %v7645 = vpack.c.b16 %v7636, %v7635
      %v7646 = vpack.c.b16 %v7638, %v7637
      %7655 = vmatprep.subr.bf16.mxu0 0
      %7656 = vmatpush1.bf16.msra.mxu0 %v7639
      %7657 = vmatprep.subr.bf16.mxu0 0
      %7658 = vmatpush1.bf16.msra.mxu0 %v7640
      %7659 = vmatprep.subr.bf16.mxu0 0
      %7660 = vmatpush1.bf16.msra.mxu0 %v7641
      %7661 = vmatprep.subr.bf16.mxu0 0
      %7662 = vmatpush1.bf16.msra.mxu0 %v7642
      %7663 = vmatprep.subr.bf16.mxu0 0
      %7664 = vmatpush1.bf16.msra.mxu0 %v7643
      %7665 = vmatprep.subr.bf16.mxu0 0
      %7666 = vmatpush1.bf16.msra.mxu0 %v7644
      %7667 = vmatprep.subr.bf16.mxu0 0
      %7668 = vmatpush1.bf16.msra.mxu0 %v7645
      %7669 = vmatprep.subr.bf16.mxu0 0
      %7670 = vmatpush1.bf16.msra.mxu0 %v7646
      %7671 = vmatprep.subr.bf16.mxu0 0
      %7672 = vmatpush1.bf16.msra.mxu0 0
      %7673 = vmatprep.subr.bf16.mxu0 0
      %7674 = vmatpush1.bf16.msra.mxu0 0
      %7675 = vmatprep.subr.bf16.mxu0 0
      %7676 = vmatpush1.bf16.msra.mxu0 0
      %7677 = vmatprep.subr.bf16.mxu0 0
      %7678 = vmatpush1.bf16.msra.mxu0 0
      %7679 = vmatprep.subr.bf16.mxu0 0
      %7680 = vmatpush1.bf16.msra.mxu0 0
      %7681 = vmatprep.subr.bf16.mxu0 0
      %7682 = vmatpush1.bf16.msra.mxu0 0
      %7683 = vmatprep.subr.bf16.mxu0 0
      %7684 = vmatpush1.bf16.msra.mxu0 0
      %7685 = vmatprep.subr.bf16.mxu0 0
      %7686 = vmatpush1.bf16.msra.mxu0 0
      %7687 = vmatprep.mubr.bf16.mxu0 0
      %7688 = vmatmul.mubr.bf16.gmra.mrb[0].mxu0 %v7575
      %v7689 = vpop.f32.mrb[0].mxu0
      %v7690 = vadd.f32 0.0, %v7689
      %v7691 = vpop.f32.mrb[0].mxu0
      %v7692 = vpop.f32.mrb[0].mxu0
      %v7693 = vadd.f32 0.0, %v7692
      %v7694 = vpop.f32.mrb[0].mxu0
      %7695 = vmatprep.mubr.bf16.mxu0 0
      %7696 = vmatmul.mubr.bf16.gmra.mrb[0].mxu0 %v7576
      %v7697 = vpop.f32.mrb[0].mxu0
      %v7698 = vadd.f32 0.0, %v7697
      %v7699 = vpop.f32.mrb[0].mxu0
      %v7700 = vpop.f32.mrb[0].mxu0
      %v7701 = vadd.f32 0.0, %v7700
      %v7702 = vpop.f32.mrb[0].mxu0
      %7703 = vmatprep.mubr.bf16.mxu0 0
      %7704 = vmatmul.mubr.bf16.gmra.mrb[0].mxu0 %v7577
      %v7705 = vpop.f32.mrb[0].mxu0
      %v7706 = vadd.f32 0.0, %v7705
      %v7707 = vpop.f32.mrb[0].mxu0
      %v7708 = vpop.f32.mrb[0].mxu0
      %v7709 = vadd.f32 0.0, %v7708
      %v7710 = vpop.f32.mrb[0].mxu0
      %7711 = vmatprep.mubr.bf16.mxu0 0
      %7712 = vmatmul.mubr.bf16.gmra.mrb[0].mxu0 %v7578
      %v7713 = vpop.f32.mrb[0].mxu0
      %v7714 = vadd.f32 0.0, %v7713
      %v7715 = vpop.f32.mrb[0].mxu0
      %v7716 = vpop.f32.mrb[0].mxu0
      %v7717 = vadd.f32 0.0, %v7716
      %v7718 = vpop.f32.mrb[0].mxu0
      %7719 = vmatprep.mubr.bf16.mxu0 0
      %7720 = vmatmul.mubr.bf16.gmra.mrb[0].mxu0 %v7579
      %v7721 = vpop.f32.mrb[0].mxu0
      %v7722 = vadd.f32 0.0, %v7721
      %v7723 = vpop.f32.mrb[0].mxu0
      %v7724 = vpop.f32.mrb[0].mxu0
      %v7725 = vadd.f32 0.0, %v7724
      %v7726 = vpop.f32.mrb[0].mxu0
      %7727 = vmatprep.mubr.bf16.mxu0 0
      %7728 = vmatmul.mubr.bf16.gmra.mrb[0].mxu0 %v7580
      %v7729 = vpop.f32.mrb[0].mxu0
      %v7730 = vadd.f32 0.0, %v7729
      %v7731 = vpop.f32.mrb[0].mxu0
      %v7732 = vpop.f32.mrb[0].mxu0
      %v7733 = vadd.f32 0.0, %v7732
      %v7734 = vpop.f32.mrb[0].mxu0
      %7735 = vmatprep.mubr.bf16.mxu0 0
      %7736 = vmatmul.mubr.bf16.gmra.mrb[0].mxu0 %v7581
      %v7737 = vpop.f32.mrb[0].mxu0
      %v7738 = vadd.f32 0.0, %v7737
      %v7739 = vpop.f32.mrb[0].mxu0
      %v7740 = vpop.f32.mrb[0].mxu0
      %v7741 = vadd.f32 0.0, %v7740
      %v7742 = vpop.f32.mrb[0].mxu0
      %7743 = vmatprep.mubr.bf16.mxu0 0
      %7744 = vmatmul.mubr.bf16.gmra.mrb[0].mxu0 %v7582
      %v7745 = vpop.f32.mrb[0].mxu0
      %v7746 = vadd.f32 0.0, %v7745
      %v7747 = vpop.f32.mrb[0].mxu0
      %v7748 = vpop.f32.mrb[0].mxu0
      %v7749 = vadd.f32 0.0, %v7748
      %v7750 = vpop.f32.mrb[0].mxu0
      %7751 = vmatprep.mubr.bf16.mxu0 0
      %7752 = vmatmul.mubr.bf16.gmra.mrb[0].mxu0 %v7583
      %v7753 = vpop.f32.mrb[0].mxu0
      %v7754 = vadd.f32 0.0, %v7753
      %v7755 = vpop.f32.mrb[0].mxu0
      %v7756 = vpop.f32.mrb[0].mxu0
      %v7757 = vadd.f32 0.0, %v7756
      %v7758 = vpop.f32.mrb[0].mxu0
      %7759 = vmatprep.mubr.bf16.mxu0 0
      %7760 = vmatmul.mubr.bf16.gmra.mrb[0].mxu0 %v7584
      %v7761 = vpop.f32.mrb[0].mxu0
      %v7762 = vadd.f32 0.0, %v7761
      %v7763 = vpop.f32.mrb[0].mxu0
      %v7764 = vpop.f32.mrb[0].mxu0
      %v7765 = vadd.f32 0.0, %v7764
      %v7766 = vpop.f32.mrb[0].mxu0
      %7767 = vmatprep.mubr.bf16.mxu0 0
      %7768 = vmatmul.mubr.bf16.gmra.mrb[0].mxu0 %v7585
      %v7769 = vpop.f32.mrb[0].mxu0
      %v7770 = vadd.f32 0.0, %v7769
      %v7771 = vpop.f32.mrb[0].mxu0
      %v7772 = vpop.f32.mrb[0].mxu0
      %v7773 = vadd.f32 0.0, %v7772
      %v7774 = vpop.f32.mrb[0].mxu0
      %7775 = vmatprep.mubr.bf16.mxu0 0
      %7776 = vmatmul.mubr.bf16.gmra.mrb[0].mxu0 %v7586
      %v7777 = vpop.f32.mrb[0].mxu0
      %v7778 = vadd.f32 0.0, %v7777
      %v7779 = vpop.f32.mrb[0].mxu0
      %v7780 = vpop.f32.mrb[0].mxu0
      %v7781 = vadd.f32 0.0, %v7780
      %v7782 = vpop.f32.mrb[0].mxu0
      %7783 = vmatprep.mubr.bf16.mxu0 0
      %7784 = vmatmul.mubr.bf16.gmra.mrb[0].mxu0 %v7587
      %v7785 = vpop.f32.mrb[0].mxu0
      %v7786 = vadd.f32 0.0, %v7785
      %v7787 = vpop.f32.mrb[0].mxu0
      %v7788 = vpop.f32.mrb[0].mxu0
      %v7789 = vadd.f32 0.0, %v7788
      %v7790 = vpop.f32.mrb[0].mxu0
      %7791 = vmatprep.mubr.bf16.mxu0 0
      %7792 = vmatmul.mubr.bf16.gmra.mrb[0].mxu0 %v7588
      %v7793 = vpop.f32.mrb[0].mxu0
      %v7794 = vadd.f32 0.0, %v7793
      %v7795 = vpop.f32.mrb[0].mxu0
      %v7796 = vpop.f32.mrb[0].mxu0
      %v7797 = vadd.f32 0.0, %v7796
      %v7798 = vpop.f32.mrb[0].mxu0
      %7799 = vmatprep.mubr.bf16.mxu0 0
      %7800 = vmatmul.mubr.bf16.gmra.mrb[0].mxu0 %v7589
      %v7801 = vpop.f32.mrb[0].mxu0
      %v7802 = vadd.f32 0.0, %v7801
      %v7803 = vpop.f32.mrb[0].mxu0
      %v7804 = vpop.f32.mrb[0].mxu0
      %v7805 = vadd.f32 0.0, %v7804
      %v7806 = vpop.f32.mrb[0].mxu0
      %7807 = vmatprep.mubr.bf16.mxu0 0
      %7808 = vmatmul.mubr.bf16.gmra.mrb[0].mxu0 %v7590
      %v7809 = vpop.f32.mrb[0].mxu0
      %v7810 = vadd.f32 0.0, %v7809
      %v7811 = vpop.f32.mrb[0].mxu0
      %v7812 = vpop.f32.mrb[0].mxu0
      %v7813 = vadd.f32 0.0, %v7812
      %v7814 = vpop.f32.mrb[0].mxu0
      %7815 = vdwg.mxu0
      %v7816 = vadd.f32 %v7240, %v7690
      %v7817 = vadd.f32 %v7243, %v7693
      %v7818 = vadd.f32 %v7248, %v7698
      %v7819 = vadd.f32 %v7251, %v7701
      %v7820 = vadd.f32 %v7256, %v7706
      %v7821 = vadd.f32 %v7259, %v7709
      %v7822 = vadd.f32 %v7264, %v7714
      %v7823 = vadd.f32 %v7267, %v7717
      %v7824 = vadd.f32 %v7272, %v7722
      %v7825 = vadd.f32 %v7275, %v7725
      %v7826 = vadd.f32 %v7280, %v7730
      %v7827 = vadd.f32 %v7283, %v7733
      %v7828 = vadd.f32 %v7288, %v7738
      %v7829 = vadd.f32 %v7291, %v7741
      %v7830 = vadd.f32 %v7296, %v7746
      %v7831 = vadd.f32 %v7299, %v7749
      %v7832 = vadd.f32 %v7304, %v7754
      %v7833 = vadd.f32 %v7307, %v7757
      %v7834 = vadd.f32 %v7312, %v7762
      %v7835 = vadd.f32 %v7315, %v7765
      %v7836 = vadd.f32 %v7320, %v7770
      %v7837 = vadd.f32 %v7323, %v7773
      %v7838 = vadd.f32 %v7328, %v7778
      %v7839 = vadd.f32 %v7331, %v7781
      %v7840 = vadd.f32 %v7336, %v7786
      %v7841 = vadd.f32 %v7339, %v7789
      %v7842 = vadd.f32 %v7344, %v7794
      %v7843 = vadd.f32 %v7347, %v7797
      %v7844 = vadd.f32 %v7352, %v7802
      %v7845 = vadd.f32 %v7355, %v7805
      %v7846 = vadd.f32 %v7360, %v7810
      %v7847 = vadd.f32 %v7363, %v7813
      %v7848 = vld [vmem:[%s5708] sm:$0xf]
      %v7849 = vld [vmem:[%s5708 + $0x4] sm:$0xf]
      %v7850 = vld [vmem:[%s5708 + $0xc] sm:$0xf]
      %v7851 = vld [vmem:[%s5708 + $0x10] sm:$0xf]
      %v7852 = vld [vmem:[%s5708 + $0x18] sm:$0xf]
      %v7853 = vld [vmem:[%s5708 + $0x1c] sm:$0xf]
      %v7854 = vld [vmem:[%s5708 + $0x24] sm:$0xf]
      %v7855 = vld [vmem:[%s5708 + $0x28] sm:$0xf]
      %v7856 = vld [vmem:[%s5708 + $0x30] sm:$0xf]
      %v7857 = vld [vmem:[%s5708 + $0x34] sm:$0xf]
      %v7858 = vld [vmem:[%s5708 + $0x3c] sm:$0xf]
      %v7859 = vld [vmem:[%s5708 + $0x40] sm:$0xf]
      %v7860 = vld [vmem:[%s5708 + $0x48] sm:$0xf]
      %v7861 = vld [vmem:[%s5708 + $0x4c] sm:$0xf]
      %v7862 = vld [vmem:[%s5708 + $0x54] sm:$0xf]
      %v7863 = vld [vmem:[%s5708 + $0x58] sm:$0xf]
      %v7864 = vld [vmem:[%s5708 + $0x60] sm:$0xf]
      %v7865 = vld [vmem:[%s5708 + $0x64] sm:$0xf]
      %v7866 = vld [vmem:[%s5708 + $0x6c] sm:$0xf]
      %v7867 = vld [vmem:[%s5708 + $0x70] sm:$0xf]
      %v7868 = vld [vmem:[%s5708 + $0x78] sm:$0xf]
      %v7869 = vld [vmem:[%s5708 + $0x7c] sm:$0xf]
      %v7870 = vld [vmem:[%s5708 + $0x84] sm:$0xf]
      %v7871 = vld [vmem:[%s5708 + $0x88] sm:$0xf]
      %v7872 = vld [vmem:[%s5708 + $0x90] sm:$0xf]
      %v7873 = vld [vmem:[%s5708 + $0x94] sm:$0xf]
      %v7874 = vld [vmem:[%s5708 + $0x9c] sm:$0xf]
      %v7875 = vld [vmem:[%s5708 + $0xa0] sm:$0xf]
      %v7876 = vld [vmem:[%s5708 + $0xa8] sm:$0xf]
      %v7877 = vld [vmem:[%s5708 + $0xac] sm:$0xf]
      %v7878 = vld [vmem:[%s5708 + $0xb4] sm:$0xf]
      %v7879 = vld [vmem:[%s5708 + $0xb8] sm:$0xf]
      %s7880 = scalar_lea.vmem %s3, 192
      %v7881 = vld [vmem:[%s7880] sm:$0xf]
      %v7882 = vld [vmem:[%s7880 + $0x4] sm:$0xf]
      %v7883 = vld [vmem:[%s7880 + $0x8] sm:$0xf]
      %v7884 = vld [vmem:[%s7880 + $0xc] sm:$0xf]
      %v7885 = vld [vmem:[%s7880 + $0x10] sm:$0xf]
      %v7886 = vld [vmem:[%s7880 + $0x14] sm:$0xf]
      %v7887 = vld [vmem:[%s7880 + $0x18] sm:$0xf]
      %v7888 = vld [vmem:[%s7880 + $0x1c] sm:$0xf]
      %v7889 = vld [vmem:[%s7880 + $0x20] sm:$0xf]
      %v7890 = vld [vmem:[%s7880 + $0x24] sm:$0xf]
      %v7891 = vld [vmem:[%s7880 + $0x28] sm:$0xf]
      %v7892 = vld [vmem:[%s7880 + $0x2c] sm:$0xf]
      %v7893 = vld [vmem:[%s7880 + $0x30] sm:$0xf]
      %v7894 = vld [vmem:[%s7880 + $0x34] sm:$0xf]
      %v7895 = vld [vmem:[%s7880 + $0x38] sm:$0xf]
      %v7896 = vld [vmem:[%s7880 + $0x3c] sm:$0xf]
      %v7929 = vunpack.c.l.b16 %v7848
      %v7930 = vunpack.c.l.b16 %v7849
      %v7931 = vunpack.c.l.b16 %v7850
      %v7932 = vunpack.c.l.b16 %v7851
      %v7933 = vunpack.c.l.b16 %v7852
      %v7934 = vunpack.c.l.b16 %v7853
      %v7935 = vunpack.c.l.b16 %v7854
      %v7936 = vunpack.c.l.b16 %v7855
      %v7937 = vunpack.c.l.b16 %v7856
      %v7938 = vunpack.c.l.b16 %v7857
      %v7939 = vunpack.c.l.b16 %v7858
      %v7940 = vunpack.c.l.b16 %v7859
      %v7941 = vunpack.c.l.b16 %v7860
      %v7942 = vunpack.c.l.b16 %v7861
      %v7943 = vunpack.c.l.b16 %v7862
      %v7944 = vunpack.c.l.b16 %v7863
      %v7945 = vunpack.c.l.b16 %v7864
      %v7946 = vunpack.c.l.b16 %v7865
      %v7947 = vunpack.c.l.b16 %v7866
      %v7948 = vunpack.c.l.b16 %v7867
      %v7949 = vunpack.c.l.b16 %v7868
      %v7950 = vunpack.c.l.b16 %v7869
      %v7951 = vunpack.c.l.b16 %v7870
      %v7952 = vunpack.c.l.b16 %v7871
      %v7953 = vunpack.c.l.b16 %v7872
      %v7954 = vunpack.c.l.b16 %v7873
      %v7955 = vunpack.c.l.b16 %v7874
      %v7956 = vunpack.c.l.b16 %v7875
      %v7957 = vunpack.c.l.b16 %v7876
      %v7958 = vunpack.c.l.b16 %v7877
      %v7959 = vunpack.c.l.b16 %v7878
      %v7960 = vunpack.c.l.b16 %v7879
      %v7961 = vpack.c.b16 %v7930, %v7929
      %v7962 = vpack.c.b16 %v7932, %v7931
      %v7963 = vpack.c.b16 %v7934, %v7933
      %v7964 = vpack.c.b16 %v7936, %v7935
      %v7965 = vpack.c.b16 %v7938, %v7937
      %v7966 = vpack.c.b16 %v7940, %v7939
      %v7967 = vpack.c.b16 %v7942, %v7941
      %v7968 = vpack.c.b16 %v7944, %v7943
      %v7969 = vpack.c.b16 %v7946, %v7945
      %v7970 = vpack.c.b16 %v7948, %v7947
      %v7971 = vpack.c.b16 %v7950, %v7949
      %v7972 = vpack.c.b16 %v7952, %v7951
      %v7973 = vpack.c.b16 %v7954, %v7953
      %v7974 = vpack.c.b16 %v7956, %v7955
      %v7975 = vpack.c.b16 %v7958, %v7957
      %v7976 = vpack.c.b16 %v7960, %v7959
      %v8009 = vunpack.c.l.b16 %v7881
      %v8010 = vunpack.c.l.b16 %v7882
      %v8011 = vunpack.c.l.b16 %v7883
      %v8012 = vunpack.c.l.b16 %v7884
      %v8013 = vunpack.c.l.b16 %v7885
      %v8014 = vunpack.c.l.b16 %v7886
      %v8015 = vunpack.c.l.b16 %v7887
      %v8016 = vunpack.c.l.b16 %v7888
      %v8017 = vunpack.c.l.b16 %v7889
      %v8018 = vunpack.c.l.b16 %v7890
      %v8019 = vunpack.c.l.b16 %v7891
      %v8020 = vunpack.c.l.b16 %v7892
      %v8021 = vunpack.c.l.b16 %v7893
      %v8022 = vunpack.c.l.b16 %v7894
      %v8023 = vunpack.c.l.b16 %v7895
      %v8024 = vunpack.c.l.b16 %v7896
      %v8025 = vpack.c.b16 %v8010, %v8009
      %v8026 = vpack.c.b16 %v8012, %v8011
      %v8027 = vpack.c.b16 %v8014, %v8013
      %v8028 = vpack.c.b16 %v8016, %v8015
      %v8029 = vpack.c.b16 %v8018, %v8017
      %v8030 = vpack.c.b16 %v8020, %v8019
      %v8031 = vpack.c.b16 %v8022, %v8021
      %v8032 = vpack.c.b16 %v8024, %v8023
      %8041 = vmatprep.subr.bf16.mxu0 0
      %8042 = vmatpush1.bf16.msra.mxu0 %v8025
      %8043 = vmatprep.subr.bf16.mxu0 0
      %8044 = vmatpush1.bf16.msra.mxu0 %v8026
      %8045 = vmatprep.subr.bf16.mxu0 0
      %8046 = vmatpush1.bf16.msra.mxu0 %v8027
      %8047 = vmatprep.subr.bf16.mxu0 0
      %8048 = vmatpush1.bf16.msra.mxu0 %v8028
      %8049 = vmatprep.subr.bf16.mxu0 0
      %8050 = vmatpush1.bf16.msra.mxu0 %v8029
      %8051 = vmatprep.subr.bf16.mxu0 0
      %8052 = vmatpush1.bf16.msra.mxu0 %v8030
      %8053 = vmatprep.subr.bf16.mxu0 0
      %8054 = vmatpush1.bf16.msra.mxu0 %v8031
      %8055 = vmatprep.subr.bf16.mxu0 0
      %8056 = vmatpush1.bf16.msra.mxu0 %v8032
      %8057 = vmatprep.subr.bf16.mxu0 0
      %8058 = vmatpush1.bf16.msra.mxu0 0
      %8059 = vmatprep.subr.bf16.mxu0 0
      %8060 = vmatpush1.bf16.msra.mxu0 0
      %8061 = vmatprep.subr.bf16.mxu0 0
      %8062 = vmatpush1.bf16.msra.mxu0 0
      %8063 = vmatprep.subr.bf16.mxu0 0
      %8064 = vmatpush1.bf16.msra.mxu0 0
      %8065 = vmatprep.subr.bf16.mxu0 0
      %8066 = vmatpush1.bf16.msra.mxu0 0
      %8067 = vmatprep.subr.bf16.mxu0 0
      %8068 = vmatpush1.bf16.msra.mxu0 0
      %8069 = vmatprep.subr.bf16.mxu0 0
      %8070 = vmatpush1.bf16.msra.mxu0 0
      %8071 = vmatprep.subr.bf16.mxu0 0
      %8072 = vmatpush1.bf16.msra.mxu0 0
      %8073 = vmatprep.mubr.bf16.mxu0 0
      %8074 = vmatmul.mubr.bf16.gmra.mrb[0].mxu0 %v7961
      %v8075 = vpop.f32.mrb[0].mxu0
      %v8076 = vadd.f32 0.0, %v8075
      %v8077 = vpop.f32.mrb[0].mxu0
      %v8078 = vpop.f32.mrb[0].mxu0
      %v8079 = vadd.f32 0.0, %v8078
      %v8080 = vpop.f32.mrb[0].mxu0
      %8081 = vmatprep.mubr.bf16.mxu0 0
      %8082 = vmatmul.mubr.bf16.gmra.mrb[0].mxu0 %v7962
      %v8083 = vpop.f32.mrb[0].mxu0
      %v8084 = vadd.f32 0.0, %v8083
      %v8085 = vpop.f32.mrb[0].mxu0
      %v8086 = vpop.f32.mrb[0].mxu0
      %v8087 = vadd.f32 0.0, %v8086
      %v8088 = vpop.f32.mrb[0].mxu0
      %8089 = vmatprep.mubr.bf16.mxu0 0
      %8090 = vmatmul.mubr.bf16.gmra.mrb[0].mxu0 %v7963
      %v8091 = vpop.f32.mrb[0].mxu0
      %v8092 = vadd.f32 0.0, %v8091
      %v8093 = vpop.f32.mrb[0].mxu0
      %v8094 = vpop.f32.mrb[0].mxu0
      %v8095 = vadd.f32 0.0, %v8094
      %v8096 = vpop.f32.mrb[0].mxu0
      %8097 = vmatprep.mubr.bf16.mxu0 0
      %8098 = vmatmul.mubr.bf16.gmra.mrb[0].mxu0 %v7964
      %v8099 = vpop.f32.mrb[0].mxu0
      %v8100 = vadd.f32 0.0, %v8099
      %v8101 = vpop.f32.mrb[0].mxu0
      %v8102 = vpop.f32.mrb[0].mxu0
      %v8103 = vadd.f32 0.0, %v8102
      %v8104 = vpop.f32.mrb[0].mxu0
      %8105 = vmatprep.mubr.bf16.mxu0 0
      %8106 = vmatmul.mubr.bf16.gmra.mrb[0].mxu0 %v7965
      %v8107 = vpop.f32.mrb[0].mxu0
      %v8108 = vadd.f32 0.0, %v8107
      %v8109 = vpop.f32.mrb[0].mxu0
      %v8110 = vpop.f32.mrb[0].mxu0
      %v8111 = vadd.f32 0.0, %v8110
      %v8112 = vpop.f32.mrb[0].mxu0
      %8113 = vmatprep.mubr.bf16.mxu0 0
      %8114 = vmatmul.mubr.bf16.gmra.mrb[0].mxu0 %v7966
      %v8115 = vpop.f32.mrb[0].mxu0
      %v8116 = vadd.f32 0.0, %v8115
      %v8117 = vpop.f32.mrb[0].mxu0
      %v8118 = vpop.f32.mrb[0].mxu0
      %v8119 = vadd.f32 0.0, %v8118
      %v8120 = vpop.f32.mrb[0].mxu0
      %8121 = vmatprep.mubr.bf16.mxu0 0
      %8122 = vmatmul.mubr.bf16.gmra.mrb[0].mxu0 %v7967
      %v8123 = vpop.f32.mrb[0].mxu0
      %v8124 = vadd.f32 0.0, %v8123
      %v8125 = vpop.f32.mrb[0].mxu0
      %v8126 = vpop.f32.mrb[0].mxu0
      %v8127 = vadd.f32 0.0, %v8126
      %v8128 = vpop.f32.mrb[0].mxu0
      %8129 = vmatprep.mubr.bf16.mxu0 0
      %8130 = vmatmul.mubr.bf16.gmra.mrb[0].mxu0 %v7968
      %v8131 = vpop.f32.mrb[0].mxu0
      %v8132 = vadd.f32 0.0, %v8131
      %v8133 = vpop.f32.mrb[0].mxu0
      %v8134 = vpop.f32.mrb[0].mxu0
      %v8135 = vadd.f32 0.0, %v8134
      %v8136 = vpop.f32.mrb[0].mxu0
      %8137 = vmatprep.mubr.bf16.mxu0 0
      %8138 = vmatmul.mubr.bf16.gmra.mrb[0].mxu0 %v7969
      %v8139 = vpop.f32.mrb[0].mxu0
      %v8140 = vadd.f32 0.0, %v8139
      %v8141 = vpop.f32.mrb[0].mxu0
      %v8142 = vpop.f32.mrb[0].mxu0
      %v8143 = vadd.f32 0.0, %v8142
      %v8144 = vpop.f32.mrb[0].mxu0
      %8145 = vmatprep.mubr.bf16.mxu0 0
      %8146 = vmatmul.mubr.bf16.gmra.mrb[0].mxu0 %v7970
      %v8147 = vpop.f32.mrb[0].mxu0
      %v8148 = vadd.f32 0.0, %v8147
      %v8149 = vpop.f32.mrb[0].mxu0
      %v8150 = vpop.f32.mrb[0].mxu0
      %v8151 = vadd.f32 0.0, %v8150
      %v8152 = vpop.f32.mrb[0].mxu0
      %8153 = vmatprep.mubr.bf16.mxu0 0
      %8154 = vmatmul.mubr.bf16.gmra.mrb[0].mxu0 %v7971
      %v8155 = vpop.f32.mrb[0].mxu0
      %v8156 = vadd.f32 0.0, %v8155
      %v8157 = vpop.f32.mrb[0].mxu0
      %v8158 = vpop.f32.mrb[0].mxu0
      %v8159 = vadd.f32 0.0, %v8158
      %v8160 = vpop.f32.mrb[0].mxu0
      %8161 = vmatprep.mubr.bf16.mxu0 0
      %8162 = vmatmul.mubr.bf16.gmra.mrb[0].mxu0 %v7972
      %v8163 = vpop.f32.mrb[0].mxu0
      %v8164 = vadd.f32 0.0, %v8163
      %v8165 = vpop.f32.mrb[0].mxu0
      %v8166 = vpop.f32.mrb[0].mxu0
      %v8167 = vadd.f32 0.0, %v8166
      %v8168 = vpop.f32.mrb[0].mxu0
      %8169 = vmatprep.mubr.bf16.mxu0 0
      %8170 = vmatmul.mubr.bf16.gmra.mrb[0].mxu0 %v7973
      %v8171 = vpop.f32.mrb[0].mxu0
      %v8172 = vadd.f32 0.0, %v8171
      %v8173 = vpop.f32.mrb[0].mxu0
      %v8174 = vpop.f32.mrb[0].mxu0
      %v8175 = vadd.f32 0.0, %v8174
      %v8176 = vpop.f32.mrb[0].mxu0
      %8177 = vmatprep.mubr.bf16.mxu0 0
      %8178 = vmatmul.mubr.bf16.gmra.mrb[0].mxu0 %v7974
      %v8179 = vpop.f32.mrb[0].mxu0
      %v8180 = vadd.f32 0.0, %v8179
      %v8181 = vpop.f32.mrb[0].mxu0
      %v8182 = vpop.f32.mrb[0].mxu0
      %v8183 = vadd.f32 0.0, %v8182
      %v8184 = vpop.f32.mrb[0].mxu0
      %8185 = vmatprep.mubr.bf16.mxu0 0
      %8186 = vmatmul.mubr.bf16.gmra.mrb[0].mxu0 %v7975
      %v8187 = vpop.f32.mrb[0].mxu0
      %v8188 = vadd.f32 0.0, %v8187
      %v8189 = vpop.f32.mrb[0].mxu0
      %v8190 = vpop.f32.mrb[0].mxu0
      %v8191 = vadd.f32 0.0, %v8190
      %v8192 = vpop.f32.mrb[0].mxu0
      %8193 = vmatprep.mubr.bf16.mxu0 0
      %8194 = vmatmul.mubr.bf16.gmra.mrb[0].mxu0 %v7976
      %v8195 = vpop.f32.mrb[0].mxu0
      %v8196 = vadd.f32 0.0, %v8195
      %v8197 = vpop.f32.mrb[0].mxu0
      %v8198 = vpop.f32.mrb[0].mxu0
      %v8199 = vadd.f32 0.0, %v8198
      %v8200 = vpop.f32.mrb[0].mxu0
      %8201 = vdwg.mxu0
      %v8202 = vadd.f32 %v7816, %v8076
      %v8203 = vadd.f32 %v7817, %v8079
      %v8204 = vadd.f32 %v7818, %v8084
      %v8205 = vadd.f32 %v7819, %v8087
      %v8206 = vadd.f32 %v7820, %v8092
      %v8207 = vadd.f32 %v7821, %v8095
      %v8208 = vadd.f32 %v7822, %v8100
      %v8209 = vadd.f32 %v7823, %v8103
      %v8210 = vadd.f32 %v7824, %v8108
      %v8211 = vadd.f32 %v7825, %v8111
      %v8212 = vadd.f32 %v7826, %v8116
      %v8213 = vadd.f32 %v7827, %v8119
      %v8214 = vadd.f32 %v7828, %v8124
      %v8215 = vadd.f32 %v7829, %v8127
      %v8216 = vadd.f32 %v7830, %v8132
      %v8217 = vadd.f32 %v7831, %v8135
      %v8218 = vadd.f32 %v7832, %v8140
      %v8219 = vadd.f32 %v7833, %v8143
      %v8220 = vadd.f32 %v7834, %v8148
      %v8221 = vadd.f32 %v7835, %v8151
      %v8222 = vadd.f32 %v7836, %v8156
      %v8223 = vadd.f32 %v7837, %v8159
      %v8224 = vadd.f32 %v7838, %v8164
      %v8225 = vadd.f32 %v7839, %v8167
      %v8226 = vadd.f32 %v7840, %v8172
      %v8227 = vadd.f32 %v7841, %v8175
      %v8228 = vadd.f32 %v7842, %v8180
      %v8229 = vadd.f32 %v7843, %v8183
      %v8230 = vadd.f32 %v7844, %v8188
      %v8231 = vadd.f32 %v7845, %v8191
      %v8232 = vadd.f32 %v7846, %v8196
      %v8233 = vadd.f32 %v7847, %v8199
      %v8234 = vld [vmem:[%s5708] sm:$0xf]
      %v8235 = vld [vmem:[%s5708 + $0x4] sm:$0xf]
      %v8236 = vld [vmem:[%s5708 + $0x8] sm:$0x1]
      %v8237 = vld [vmem:[%s5708 + $0xc] sm:$0xf]
      %v8238 = vld [vmem:[%s5708 + $0x10] sm:$0xf]
      %v8239 = vld [vmem:[%s5708 + $0x14] sm:$0x1]
      %v8240 = vld [vmem:[%s5708 + $0x18] sm:$0xf]
      %v8241 = vld [vmem:[%s5708 + $0x1c] sm:$0xf]
      %v8242 = vld [vmem:[%s5708 + $0x20] sm:$0x1]
      %v8243 = vld [vmem:[%s5708 + $0x24] sm:$0xf]
      %v8244 = vld [vmem:[%s5708 + $0x28] sm:$0xf]
      %v8245 = vld [vmem:[%s5708 + $0x2c] sm:$0x1]
      %v8246 = vld [vmem:[%s5708 + $0x30] sm:$0xf]
      %v8247 = vld [vmem:[%s5708 + $0x34] sm:$0xf]
      %v8248 = vld [vmem:[%s5708 + $0x38] sm:$0x1]
      %v8249 = vld [vmem:[%s5708 + $0x3c] sm:$0xf]
      %v8250 = vld [vmem:[%s5708 + $0x40] sm:$0xf]
      %v8251 = vld [vmem:[%s5708 + $0x44] sm:$0x1]
      %v8252 = vld [vmem:[%s5708 + $0x48] sm:$0xf]
      %v8253 = vld [vmem:[%s5708 + $0x4c] sm:$0xf]
      %v8254 = vld [vmem:[%s5708 + $0x50] sm:$0x1]
      %v8255 = vld [vmem:[%s5708 + $0x54] sm:$0xf]
      %v8256 = vld [vmem:[%s5708 + $0x58] sm:$0xf]
      %v8257 = vld [vmem:[%s5708 + $0x5c] sm:$0x1]
      %v8258 = vld [vmem:[%s5708 + $0x60] sm:$0xf]
      %v8259 = vld [vmem:[%s5708 + $0x64] sm:$0xf]
      %v8260 = vld [vmem:[%s5708 + $0x68] sm:$0x1]
      %v8261 = vld [vmem:[%s5708 + $0x6c] sm:$0xf]
      %v8262 = vld [vmem:[%s5708 + $0x70] sm:$0xf]
      %v8263 = vld [vmem:[%s5708 + $0x74] sm:$0x1]
      %v8264 = vld [vmem:[%s5708 + $0x78] sm:$0xf]
      %v8265 = vld [vmem:[%s5708 + $0x7c] sm:$0xf]
      %v8266 = vld [vmem:[%s5708 + $0x80] sm:$0x1]
      %v8267 = vld [vmem:[%s5708 + $0x84] sm:$0xf]
      %v8268 = vld [vmem:[%s5708 + $0x88] sm:$0xf]
      %v8269 = vld [vmem:[%s5708 + $0x8c] sm:$0x1]
      %v8270 = vld [vmem:[%s5708 + $0x90] sm:$0xf]
      %v8271 = vld [vmem:[%s5708 + $0x94] sm:$0xf]
      %v8272 = vld [vmem:[%s5708 + $0x98] sm:$0x1]
      %v8273 = vld [vmem:[%s5708 + $0x9c] sm:$0xf]
      %v8274 = vld [vmem:[%s5708 + $0xa0] sm:$0xf]
      %v8275 = vld [vmem:[%s5708 + $0xa4] sm:$0x1]
      %v8276 = vld [vmem:[%s5708 + $0xa8] sm:$0xf]
      %v8277 = vld [vmem:[%s5708 + $0xac] sm:$0xf]
      %v8278 = vld [vmem:[%s5708 + $0xb0] sm:$0x1]
      %v8279 = vld [vmem:[%s5708 + $0xb4] sm:$0xf]
      %v8280 = vld [vmem:[%s5708 + $0xb8] sm:$0xf]
      %v8281 = vld [vmem:[%s5708 + $0xbc] sm:$0x1]
      %v8283 = vshrl.u32 %v8234, 16
      %v8285 = vrot.slane %v8283, 4
      %v8286 = vshll.u32 %v8234, 16
      %v8288 = vrot.slane %v8286, 5
      %v8289 = vor.u32 %v8285, %v8288
      %v8290 = vrot.slane %v8289, 4
      %v8292 = vshll.u32 %v8235, 16
      %v8294 = vrot.slane %v8292, 5
      %v8295 = vsel %vm864, %v8290, %v8294
      %v8296 = vshrl.u32 %v8235, 16
      %v8298 = vrot.slane %v8296, 4
      %v8299 = vor.u32 %v8298, %v8294
      %v8300 = vrot.slane %v8299, 4
      %v8302 = vshll.u32 %v8236, 16
      %v8304 = vrot.slane %v8302, 5
      %v8305 = vsel %vm864, %v8300, %v8304
      %v8307 = vshrl.u32 %v8237, 16
      %v8309 = vrot.slane %v8307, 4
      %v8310 = vshll.u32 %v8237, 16
      %v8312 = vrot.slane %v8310, 5
      %v8313 = vor.u32 %v8309, %v8312
      %v8314 = vrot.slane %v8313, 4
      %v8316 = vshll.u32 %v8238, 16
      %v8318 = vrot.slane %v8316, 5
      %v8319 = vsel %vm864, %v8314, %v8318
      %v8320 = vshrl.u32 %v8238, 16
      %v8322 = vrot.slane %v8320, 4
      %v8323 = vor.u32 %v8322, %v8318
      %v8324 = vrot.slane %v8323, 4
      %v8326 = vshll.u32 %v8239, 16
      %v8328 = vrot.slane %v8326, 5
      %v8329 = vsel %vm864, %v8324, %v8328
      %v8331 = vshrl.u32 %v8240, 16
      %v8333 = vrot.slane %v8331, 4
      %v8334 = vshll.u32 %v8240, 16
      %v8336 = vrot.slane %v8334, 5
      %v8337 = vor.u32 %v8333, %v8336
      %v8338 = vrot.slane %v8337, 4
      %v8340 = vshll.u32 %v8241, 16
      %v8342 = vrot.slane %v8340, 5
      %v8343 = vsel %vm864, %v8338, %v8342
      %v8344 = vshrl.u32 %v8241, 16
      %v8346 = vrot.slane %v8344, 4
      %v8347 = vor.u32 %v8346, %v8342
      %v8348 = vrot.slane %v8347, 4
      %v8350 = vshll.u32 %v8242, 16
      %v8352 = vrot.slane %v8350, 5
      %v8353 = vsel %vm864, %v8348, %v8352
      %v8355 = vshrl.u32 %v8243, 16
      %v8357 = vrot.slane %v8355, 4
      %v8358 = vshll.u32 %v8243, 16
      %v8360 = vrot.slane %v8358, 5
      %v8361 = vor.u32 %v8357, %v8360
      %v8362 = vrot.slane %v8361, 4
      %v8364 = vshll.u32 %v8244, 16
      %v8366 = vrot.slane %v8364, 5
      %v8367 = vsel %vm864, %v8362, %v8366
      %v8368 = vshrl.u32 %v8244, 16
      %v8370 = vrot.slane %v8368, 4
      %v8371 = vor.u32 %v8370, %v8366
      %v8372 = vrot.slane %v8371, 4
      %v8374 = vshll.u32 %v8245, 16
      %v8376 = vrot.slane %v8374, 5
      %v8377 = vsel %vm864, %v8372, %v8376
      %v8379 = vshrl.u32 %v8246, 16
      %v8381 = vrot.slane %v8379, 4
      %v8382 = vshll.u32 %v8246, 16
      %v8384 = vrot.slane %v8382, 5
      %v8385 = vor.u32 %v8381, %v8384
      %v8386 = vrot.slane %v8385, 4
      %v8388 = vshll.u32 %v8247, 16
      %v8390 = vrot.slane %v8388, 5
      %v8391 = vsel %vm864, %v8386, %v8390
      %v8392 = vshrl.u32 %v8247, 16
      %v8394 = vrot.slane %v8392, 4
      %v8395 = vor.u32 %v8394, %v8390
      %v8396 = vrot.slane %v8395, 4
      %v8398 = vshll.u32 %v8248, 16
      %v8400 = vrot.slane %v8398, 5
      %v8401 = vsel %vm864, %v8396, %v8400
      %v8403 = vshrl.u32 %v8249, 16
      %v8405 = vrot.slane %v8403, 4
      %v8406 = vshll.u32 %v8249, 16
      %v8408 = vrot.slane %v8406, 5
      %v8409 = vor.u32 %v8405, %v8408
      %v8410 = vrot.slane %v8409, 4
      %v8412 = vshll.u32 %v8250, 16
      %v8414 = vrot.slane %v8412, 5
      %v8415 = vsel %vm864, %v8410, %v8414
      %v8416 = vshrl.u32 %v8250, 16
      %v8418 = vrot.slane %v8416, 4
      %v8419 = vor.u32 %v8418, %v8414
      %v8420 = vrot.slane %v8419, 4
      %v8422 = vshll.u32 %v8251, 16
      %v8424 = vrot.slane %v8422, 5
      %v8425 = vsel %vm864, %v8420, %v8424
      %v8427 = vshrl.u32 %v8252, 16
      %v8429 = vrot.slane %v8427, 4
      %v8430 = vshll.u32 %v8252, 16
      %v8432 = vrot.slane %v8430, 5
      %v8433 = vor.u32 %v8429, %v8432
      %v8434 = vrot.slane %v8433, 4
      %v8436 = vshll.u32 %v8253, 16
      %v8438 = vrot.slane %v8436, 5
      %v8439 = vsel %vm864, %v8434, %v8438
      %v8440 = vshrl.u32 %v8253, 16
      %v8442 = vrot.slane %v8440, 4
      %v8443 = vor.u32 %v8442, %v8438
      %v8444 = vrot.slane %v8443, 4
      %v8446 = vshll.u32 %v8254, 16
      %v8448 = vrot.slane %v8446, 5
      %v8449 = vsel %vm864, %v8444, %v8448
      %v8451 = vshrl.u32 %v8255, 16
      %v8453 = vrot.slane %v8451, 4
      %v8454 = vshll.u32 %v8255, 16
      %v8456 = vrot.slane %v8454, 5
      %v8457 = vor.u32 %v8453, %v8456
      %v8458 = vrot.slane %v8457, 4
      %v8460 = vshll.u32 %v8256, 16
      %v8462 = vrot.slane %v8460, 5
      %v8463 = vsel %vm864, %v8458, %v8462
      %v8464 = vshrl.u32 %v8256, 16
      %v8466 = vrot.slane %v8464, 4
      %v8467 = vor.u32 %v8466, %v8462
      %v8468 = vrot.slane %v8467, 4
      %v8470 = vshll.u32 %v8257, 16
      %v8472 = vrot.slane %v8470, 5
      %v8473 = vsel %vm864, %v8468, %v8472
      %v8475 = vshrl.u32 %v8258, 16
      %v8477 = vrot.slane %v8475, 4
      %v8478 = vshll.u32 %v8258, 16
      %v8480 = vrot.slane %v8478, 5
      %v8481 = vor.u32 %v8477, %v8480
      %v8482 = vrot.slane %v8481, 4
      %v8484 = vshll.u32 %v8259, 16
      %v8486 = vrot.slane %v8484, 5
      %v8487 = vsel %vm864, %v8482, %v8486
      %v8488 = vshrl.u32 %v8259, 16
      %v8490 = vrot.slane %v8488, 4
      %v8491 = vor.u32 %v8490, %v8486
      %v8492 = vrot.slane %v8491, 4
      %v8494 = vshll.u32 %v8260, 16
      %v8496 = vrot.slane %v8494, 5
      %v8497 = vsel %vm864, %v8492, %v8496
      %v8499 = vshrl.u32 %v8261, 16
      %v8501 = vrot.slane %v8499, 4
      %v8502 = vshll.u32 %v8261, 16
      %v8504 = vrot.slane %v8502, 5
      %v8505 = vor.u32 %v8501, %v8504
      %v8506 = vrot.slane %v8505, 4
      %v8508 = vshll.u32 %v8262, 16
      %v8510 = vrot.slane %v8508, 5
      %v8511 = vsel %vm864, %v8506, %v8510
      %v8512 = vshrl.u32 %v8262, 16
      %v8514 = vrot.slane %v8512, 4
      %v8515 = vor.u32 %v8514, %v8510
      %v8516 = vrot.slane %v8515, 4
      %v8518 = vshll.u32 %v8263, 16
      %v8520 = vrot.slane %v8518, 5
      %v8521 = vsel %vm864, %v8516, %v8520
      %v8523 = vshrl.u32 %v8264, 16
      %v8525 = vrot.slane %v8523, 4
      %v8526 = vshll.u32 %v8264, 16
      %v8528 = vrot.slane %v8526, 5
      %v8529 = vor.u32 %v8525, %v8528
      %v8530 = vrot.slane %v8529, 4
      %v8532 = vshll.u32 %v8265, 16
      %v8534 = vrot.slane %v8532, 5
      %v8535 = vsel %vm864, %v8530, %v8534
      %v8536 = vshrl.u32 %v8265, 16
      %v8538 = vrot.slane %v8536, 4
      %v8539 = vor.u32 %v8538, %v8534
      %v8540 = vrot.slane %v8539, 4
      %v8542 = vshll.u32 %v8266, 16
      %v8544 = vrot.slane %v8542, 5
      %v8545 = vsel %vm864, %v8540, %v8544
      %v8547 = vshrl.u32 %v8267, 16
      %v8549 = vrot.slane %v8547, 4
      %v8550 = vshll.u32 %v8267, 16
      %v8552 = vrot.slane %v8550, 5
      %v8553 = vor.u32 %v8549, %v8552
      %v8554 = vrot.slane %v8553, 4
      %v8556 = vshll.u32 %v8268, 16
      %v8558 = vrot.slane %v8556, 5
      %v8559 = vsel %vm864, %v8554, %v8558
      %v8560 = vshrl.u32 %v8268, 16
      %v8562 = vrot.slane %v8560, 4
      %v8563 = vor.u32 %v8562, %v8558
      %v8564 = vrot.slane %v8563, 4
      %v8566 = vshll.u32 %v8269, 16
      %v8568 = vrot.slane %v8566, 5
      %v8569 = vsel %vm864, %v8564, %v8568
      %v8571 = vshrl.u32 %v8270, 16
      %v8573 = vrot.slane %v8571, 4
      %v8574 = vshll.u32 %v8270, 16
      %v8576 = vrot.slane %v8574, 5
      %v8577 = vor.u32 %v8573, %v8576
      %v8578 = vrot.slane %v8577, 4
      %v8580 = vshll.u32 %v8271, 16
      %v8582 = vrot.slane %v8580, 5
      %v8583 = vsel %vm864, %v8578, %v8582
      %v8584 = vshrl.u32 %v8271, 16
      %v8586 = vrot.slane %v8584, 4
      %v8587 = vor.u32 %v8586, %v8582
      %v8588 = vrot.slane %v8587, 4
      %v8590 = vshll.u32 %v8272, 16
      %v8592 = vrot.slane %v8590, 5
      %v8593 = vsel %vm864, %v8588, %v8592
      %v8595 = vshrl.u32 %v8273, 16
      %v8597 = vrot.slane %v8595, 4
      %v8598 = vshll.u32 %v8273, 16
      %v8600 = vrot.slane %v8598, 5
      %v8601 = vor.u32 %v8597, %v8600
      %v8602 = vrot.slane %v8601, 4
      %v8604 = vshll.u32 %v8274, 16
      %v8606 = vrot.slane %v8604, 5
      %v8607 = vsel %vm864, %v8602, %v8606
      %v8608 = vshrl.u32 %v8274, 16
      %v8610 = vrot.slane %v8608, 4
      %v8611 = vor.u32 %v8610, %v8606
      %v8612 = vrot.slane %v8611, 4
      %v8614 = vshll.u32 %v8275, 16
      %v8616 = vrot.slane %v8614, 5
      %v8617 = vsel %vm864, %v8612, %v8616
      %v8619 = vshrl.u32 %v8276, 16
      %v8621 = vrot.slane %v8619, 4
      %v8622 = vshll.u32 %v8276, 16
      %v8624 = vrot.slane %v8622, 5
      %v8625 = vor.u32 %v8621, %v8624
      %v8626 = vrot.slane %v8625, 4
      %v8628 = vshll.u32 %v8277, 16
      %v8630 = vrot.slane %v8628, 5
      %v8631 = vsel %vm864, %v8626, %v8630
      %v8632 = vshrl.u32 %v8277, 16
      %v8634 = vrot.slane %v8632, 4
      %v8635 = vor.u32 %v8634, %v8630
      %v8636 = vrot.slane %v8635, 4
      %v8638 = vshll.u32 %v8278, 16
      %v8640 = vrot.slane %v8638, 5
      %v8641 = vsel %vm864, %v8636, %v8640
      %v8643 = vshrl.u32 %v8279, 16
      %v8645 = vrot.slane %v8643, 4
      %v8646 = vshll.u32 %v8279, 16
      %v8648 = vrot.slane %v8646, 5
      %v8649 = vor.u32 %v8645, %v8648
      %v8650 = vrot.slane %v8649, 4
      %v8652 = vshll.u32 %v8280, 16
      %v8654 = vrot.slane %v8652, 5
      %v8655 = vsel %vm864, %v8650, %v8654
      %v8656 = vshrl.u32 %v8280, 16
      %v8658 = vrot.slane %v8656, 4
      %v8659 = vor.u32 %v8658, %v8654
      %v8660 = vrot.slane %v8659, 4
      %v8662 = vshll.u32 %v8281, 16
      %v8664 = vrot.slane %v8662, 5
      %v8665 = vsel %vm864, %v8660, %v8664
      %s8666 = scalar_lea.vmem %s3, 256
      %v8667 = vld [vmem:[%s8666] sm:$0xf]
      %v8668 = vld [vmem:[%s8666 + $0x4] sm:$0xf]
      %v8669 = vld [vmem:[%s8666 + $0x8] sm:$0xf]
      %v8670 = vld [vmem:[%s8666 + $0xc] sm:$0xf]
      %v8671 = vld [vmem:[%s8666 + $0x10] sm:$0xf]
      %v8672 = vld [vmem:[%s8666 + $0x14] sm:$0xf]
      %v8673 = vld [vmem:[%s8666 + $0x18] sm:$0xf]
      %v8674 = vld [vmem:[%s8666 + $0x1c] sm:$0xf]
      %v8675 = vld [vmem:[%s8666 + $0x20] sm:$0xf]
      %v8676 = vld [vmem:[%s8666 + $0x24] sm:$0xf]
      %v8677 = vld [vmem:[%s8666 + $0x28] sm:$0xf]
      %v8678 = vld [vmem:[%s8666 + $0x2c] sm:$0xf]
      %v8679 = vld [vmem:[%s8666 + $0x30] sm:$0xf]
      %v8680 = vld [vmem:[%s8666 + $0x34] sm:$0xf]
      %v8681 = vld [vmem:[%s8666 + $0x38] sm:$0xf]
      %v8682 = vld [vmem:[%s8666 + $0x3c] sm:$0xf]
      %v8683 = vunpack.c.l.b16 %v8295
      %v8684 = vunpack.c.l.b16 %v8305
      %v8685 = vunpack.c.l.b16 %v8319
      %v8686 = vunpack.c.l.b16 %v8329
      %v8687 = vunpack.c.l.b16 %v8343
      %v8688 = vunpack.c.l.b16 %v8353
      %v8689 = vunpack.c.l.b16 %v8367
      %v8690 = vunpack.c.l.b16 %v8377
      %v8691 = vunpack.c.l.b16 %v8391
      %v8692 = vunpack.c.l.b16 %v8401
      %v8693 = vunpack.c.l.b16 %v8415
      %v8694 = vunpack.c.l.b16 %v8425
      %v8695 = vunpack.c.l.b16 %v8439
      %v8696 = vunpack.c.l.b16 %v8449
      %v8697 = vunpack.c.l.b16 %v8463
      %v8698 = vunpack.c.l.b16 %v8473
      %v8699 = vunpack.c.l.b16 %v8487
      %v8700 = vunpack.c.l.b16 %v8497
      %v8701 = vunpack.c.l.b16 %v8511
      %v8702 = vunpack.c.l.b16 %v8521
      %v8703 = vunpack.c.l.b16 %v8535
      %v8704 = vunpack.c.l.b16 %v8545
      %v8705 = vunpack.c.l.b16 %v8559
      %v8706 = vunpack.c.l.b16 %v8569
      %v8707 = vunpack.c.l.b16 %v8583
      %v8708 = vunpack.c.l.b16 %v8593
      %v8709 = vunpack.c.l.b16 %v8607
      %v8710 = vunpack.c.l.b16 %v8617
      %v8711 = vunpack.c.l.b16 %v8631
      %v8712 = vunpack.c.l.b16 %v8641
      %v8713 = vunpack.c.l.b16 %v8655
      %v8714 = vunpack.c.l.b16 %v8665
      %v8715 = vpack.c.b16 %v8684, %v8683
      %v8716 = vpack.c.b16 %v8686, %v8685
      %v8717 = vpack.c.b16 %v8688, %v8687
      %v8718 = vpack.c.b16 %v8690, %v8689
      %v8719 = vpack.c.b16 %v8692, %v8691
      %v8720 = vpack.c.b16 %v8694, %v8693
      %v8721 = vpack.c.b16 %v8696, %v8695
      %v8722 = vpack.c.b16 %v8698, %v8697
      %v8723 = vpack.c.b16 %v8700, %v8699
      %v8724 = vpack.c.b16 %v8702, %v8701
      %v8725 = vpack.c.b16 %v8704, %v8703
      %v8726 = vpack.c.b16 %v8706, %v8705
      %v8727 = vpack.c.b16 %v8708, %v8707
      %v8728 = vpack.c.b16 %v8710, %v8709
      %v8729 = vpack.c.b16 %v8712, %v8711
      %v8730 = vpack.c.b16 %v8714, %v8713
      %v8763 = vunpack.c.l.b16 %v8667
      %v8764 = vunpack.c.l.b16 %v8668
      %v8765 = vunpack.c.l.b16 %v8669
      %v8766 = vunpack.c.l.b16 %v8670
      %v8767 = vunpack.c.l.b16 %v8671
      %v8768 = vunpack.c.l.b16 %v8672
      %v8769 = vunpack.c.l.b16 %v8673
      %v8770 = vunpack.c.l.b16 %v8674
      %v8771 = vunpack.c.l.b16 %v8675
      %v8772 = vunpack.c.l.b16 %v8676
      %v8773 = vunpack.c.l.b16 %v8677
      %v8774 = vunpack.c.l.b16 %v8678
      %v8775 = vunpack.c.l.b16 %v8679
      %v8776 = vunpack.c.l.b16 %v8680
      %v8777 = vunpack.c.l.b16 %v8681
      %v8778 = vunpack.c.l.b16 %v8682
      %v8779 = vpack.c.b16 %v8764, %v8763
      %v8780 = vpack.c.b16 %v8766, %v8765
      %v8781 = vpack.c.b16 %v8768, %v8767
      %v8782 = vpack.c.b16 %v8770, %v8769
      %v8783 = vpack.c.b16 %v8772, %v8771
      %v8784 = vpack.c.b16 %v8774, %v8773
      %v8785 = vpack.c.b16 %v8776, %v8775
      %v8786 = vpack.c.b16 %v8778, %v8777
      %8795 = vmatprep.subr.bf16.mxu0 0
      %8796 = vmatpush1.bf16.msra.mxu0 %v8779
      %8797 = vmatprep.subr.bf16.mxu0 0
      %8798 = vmatpush1.bf16.msra.mxu0 %v8780
      %8799 = vmatprep.subr.bf16.mxu0 0
      %8800 = vmatpush1.bf16.msra.mxu0 %v8781
      %8801 = vmatprep.subr.bf16.mxu0 0
      %8802 = vmatpush1.bf16.msra.mxu0 %v8782
      %8803 = vmatprep.subr.bf16.mxu0 0
      %8804 = vmatpush1.bf16.msra.mxu0 %v8783
      %8805 = vmatprep.subr.bf16.mxu0 0
      %8806 = vmatpush1.bf16.msra.mxu0 %v8784
      %8807 = vmatprep.subr.bf16.mxu0 0
      %8808 = vmatpush1.bf16.msra.mxu0 %v8785
      %8809 = vmatprep.subr.bf16.mxu0 0
      %8810 = vmatpush1.bf16.msra.mxu0 %v8786
      %8811 = vmatprep.subr.bf16.mxu0 0
      %8812 = vmatpush1.bf16.msra.mxu0 0
      %8813 = vmatprep.subr.bf16.mxu0 0
      %8814 = vmatpush1.bf16.msra.mxu0 0
      %8815 = vmatprep.subr.bf16.mxu0 0
      %8816 = vmatpush1.bf16.msra.mxu0 0
      %8817 = vmatprep.subr.bf16.mxu0 0
      %8818 = vmatpush1.bf16.msra.mxu0 0
      %8819 = vmatprep.subr.bf16.mxu0 0
      %8820 = vmatpush1.bf16.msra.mxu0 0
      %8821 = vmatprep.subr.bf16.mxu0 0
      %8822 = vmatpush1.bf16.msra.mxu0 0
      %8823 = vmatprep.subr.bf16.mxu0 0
      %8824 = vmatpush1.bf16.msra.mxu0 0
      %8825 = vmatprep.subr.bf16.mxu0 0
      %8826 = vmatpush1.bf16.msra.mxu0 0
      %8827 = vmatprep.mubr.bf16.mxu0 0
      %8828 = vmatmul.mubr.bf16.gmra.mrb[0].mxu0 %v8715
      %v8829 = vpop.f32.mrb[0].mxu0
      %v8830 = vadd.f32 0.0, %v8829
      %v8831 = vpop.f32.mrb[0].mxu0
      %v8832 = vpop.f32.mrb[0].mxu0
      %v8833 = vadd.f32 0.0, %v8832
      %v8834 = vpop.f32.mrb[0].mxu0
      %8835 = vmatprep.mubr.bf16.mxu0 0
      %8836 = vmatmul.mubr.bf16.gmra.mrb[0].mxu0 %v8716
      %v8837 = vpop.f32.mrb[0].mxu0
      %v8838 = vadd.f32 0.0, %v8837
      %v8839 = vpop.f32.mrb[0].mxu0
      %v8840 = vpop.f32.mrb[0].mxu0
      %v8841 = vadd.f32 0.0, %v8840
      %v8842 = vpop.f32.mrb[0].mxu0
      %8843 = vmatprep.mubr.bf16.mxu0 0
      %8844 = vmatmul.mubr.bf16.gmra.mrb[0].mxu0 %v8717
      %v8845 = vpop.f32.mrb[0].mxu0
      %v8846 = vadd.f32 0.0, %v8845
      %v8847 = vpop.f32.mrb[0].mxu0
      %v8848 = vpop.f32.mrb[0].mxu0
      %v8849 = vadd.f32 0.0, %v8848
      %v8850 = vpop.f32.mrb[0].mxu0
      %8851 = vmatprep.mubr.bf16.mxu0 0
      %8852 = vmatmul.mubr.bf16.gmra.mrb[0].mxu0 %v8718
      %v8853 = vpop.f32.mrb[0].mxu0
      %v8854 = vadd.f32 0.0, %v8853
      %v8855 = vpop.f32.mrb[0].mxu0
      %v8856 = vpop.f32.mrb[0].mxu0
      %v8857 = vadd.f32 0.0, %v8856
      %v8858 = vpop.f32.mrb[0].mxu0
      %8859 = vmatprep.mubr.bf16.mxu0 0
      %8860 = vmatmul.mubr.bf16.gmra.mrb[0].mxu0 %v8719
      %v8861 = vpop.f32.mrb[0].mxu0
      %v8862 = vadd.f32 0.0, %v8861
      %v8863 = vpop.f32.mrb[0].mxu0
      %v8864 = vpop.f32.mrb[0].mxu0
      %v8865 = vadd.f32 0.0, %v8864
      %v8866 = vpop.f32.mrb[0].mxu0
      %8867 = vmatprep.mubr.bf16.mxu0 0
      %8868 = vmatmul.mubr.bf16.gmra.mrb[0].mxu0 %v8720
      %v8869 = vpop.f32.mrb[0].mxu0
      %v8870 = vadd.f32 0.0, %v8869
      %v8871 = vpop.f32.mrb[0].mxu0
      %v8872 = vpop.f32.mrb[0].mxu0
      %v8873 = vadd.f32 0.0, %v8872
      %v8874 = vpop.f32.mrb[0].mxu0
      %8875 = vmatprep.mubr.bf16.mxu0 0
      %8876 = vmatmul.mubr.bf16.gmra.mrb[0].mxu0 %v8721
      %v8877 = vpop.f32.mrb[0].mxu0
      %v8878 = vadd.f32 0.0, %v8877
      %v8879 = vpop.f32.mrb[0].mxu0
      %v8880 = vpop.f32.mrb[0].mxu0
      %v8881 = vadd.f32 0.0, %v8880
      %v8882 = vpop.f32.mrb[0].mxu0
      %8883 = vmatprep.mubr.bf16.mxu0 0
      %8884 = vmatmul.mubr.bf16.gmra.mrb[0].mxu0 %v8722
      %v8885 = vpop.f32.mrb[0].mxu0
      %v8886 = vadd.f32 0.0, %v8885
      %v8887 = vpop.f32.mrb[0].mxu0
      %v8888 = vpop.f32.mrb[0].mxu0
      %v8889 = vadd.f32 0.0, %v8888
      %v8890 = vpop.f32.mrb[0].mxu0
      %8891 = vmatprep.mubr.bf16.mxu0 0
      %8892 = vmatmul.mubr.bf16.gmra.mrb[0].mxu0 %v8723
      %v8893 = vpop.f32.mrb[0].mxu0
      %v8894 = vadd.f32 0.0, %v8893
      %v8895 = vpop.f32.mrb[0].mxu0
      %v8896 = vpop.f32.mrb[0].mxu0
      %v8897 = vadd.f32 0.0, %v8896
      %v8898 = vpop.f32.mrb[0].mxu0
      %8899 = vmatprep.mubr.bf16.mxu0 0
      %8900 = vmatmul.mubr.bf16.gmra.mrb[0].mxu0 %v8724
      %v8901 = vpop.f32.mrb[0].mxu0
      %v8902 = vadd.f32 0.0, %v8901
      %v8903 = vpop.f32.mrb[0].mxu0
      %v8904 = vpop.f32.mrb[0].mxu0
      %v8905 = vadd.f32 0.0, %v8904
      %v8906 = vpop.f32.mrb[0].mxu0
      %8907 = vmatprep.mubr.bf16.mxu0 0
      %8908 = vmatmul.mubr.bf16.gmra.mrb[0].mxu0 %v8725
      %v8909 = vpop.f32.mrb[0].mxu0
      %v8910 = vadd.f32 0.0, %v8909
      %v8911 = vpop.f32.mrb[0].mxu0
      %v8912 = vpop.f32.mrb[0].mxu0
      %v8913 = vadd.f32 0.0, %v8912
      %v8914 = vpop.f32.mrb[0].mxu0
      %8915 = vmatprep.mubr.bf16.mxu0 0
      %8916 = vmatmul.mubr.bf16.gmra.mrb[0].mxu0 %v8726
      %v8917 = vpop.f32.mrb[0].mxu0
      %v8918 = vadd.f32 0.0, %v8917
      %v8919 = vpop.f32.mrb[0].mxu0
      %v8920 = vpop.f32.mrb[0].mxu0
      %v8921 = vadd.f32 0.0, %v8920
      %v8922 = vpop.f32.mrb[0].mxu0
      %8923 = vmatprep.mubr.bf16.mxu0 0
      %8924 = vmatmul.mubr.bf16.gmra.mrb[0].mxu0 %v8727
      %v8925 = vpop.f32.mrb[0].mxu0
      %v8926 = vadd.f32 0.0, %v8925
      %v8927 = vpop.f32.mrb[0].mxu0
      %v8928 = vpop.f32.mrb[0].mxu0
      %v8929 = vadd.f32 0.0, %v8928
      %v8930 = vpop.f32.mrb[0].mxu0
      %8931 = vmatprep.mubr.bf16.mxu0 0
      %8932 = vmatmul.mubr.bf16.gmra.mrb[0].mxu0 %v8728
      %v8933 = vpop.f32.mrb[0].mxu0
      %v8934 = vadd.f32 0.0, %v8933
      %v8935 = vpop.f32.mrb[0].mxu0
      %v8936 = vpop.f32.mrb[0].mxu0
      %v8937 = vadd.f32 0.0, %v8936
      %v8938 = vpop.f32.mrb[0].mxu0
      %8939 = vmatprep.mubr.bf16.mxu0 0
      %8940 = vmatmul.mubr.bf16.gmra.mrb[0].mxu0 %v8729
      %v8941 = vpop.f32.mrb[0].mxu0
      %v8942 = vadd.f32 0.0, %v8941
      %v8943 = vpop.f32.mrb[0].mxu0
      %v8944 = vpop.f32.mrb[0].mxu0
      %v8945 = vadd.f32 0.0, %v8944
      %v8946 = vpop.f32.mrb[0].mxu0
      %8947 = vmatprep.mubr.bf16.mxu0 0
      %8948 = vmatmul.mubr.bf16.gmra.mrb[0].mxu0 %v8730
      %v8949 = vpop.f32.mrb[0].mxu0
      %v8950 = vadd.f32 0.0, %v8949
      %v8951 = vpop.f32.mrb[0].mxu0
      %v8952 = vpop.f32.mrb[0].mxu0
      %v8953 = vadd.f32 0.0, %v8952
      %v8954 = vpop.f32.mrb[0].mxu0
      %8955 = vdwg.mxu0
      %v8956 = vadd.f32 %v8202, %v8830
      %v8957 = vadd.f32 %v8203, %v8833
      %v8958 = vadd.f32 %v8204, %v8838
      %v8959 = vadd.f32 %v8205, %v8841
      %v8960 = vadd.f32 %v8206, %v8846
      %v8961 = vadd.f32 %v8207, %v8849
      %v8962 = vadd.f32 %v8208, %v8854
      %v8963 = vadd.f32 %v8209, %v8857
      %v8964 = vadd.f32 %v8210, %v8862
      %v8965 = vadd.f32 %v8211, %v8865
      %v8966 = vadd.f32 %v8212, %v8870
      %v8967 = vadd.f32 %v8213, %v8873
      %v8968 = vadd.f32 %v8214, %v8878
      %v8969 = vadd.f32 %v8215, %v8881
      %v8970 = vadd.f32 %v8216, %v8886
      %v8971 = vadd.f32 %v8217, %v8889
      %v8972 = vadd.f32 %v8218, %v8894
      %v8973 = vadd.f32 %v8219, %v8897
      %v8974 = vadd.f32 %v8220, %v8902
      %v8975 = vadd.f32 %v8221, %v8905
      %v8976 = vadd.f32 %v8222, %v8910
      %v8977 = vadd.f32 %v8223, %v8913
      %v8978 = vadd.f32 %v8224, %v8918
      %v8979 = vadd.f32 %v8225, %v8921
      %v8980 = vadd.f32 %v8226, %v8926
      %v8981 = vadd.f32 %v8227, %v8929
      %v8982 = vadd.f32 %v8228, %v8934
      %v8983 = vadd.f32 %v8229, %v8937
      %v8984 = vadd.f32 %v8230, %v8942
      %v8985 = vadd.f32 %v8231, %v8945
      %v8986 = vadd.f32 %v8232, %v8950
      %v8987 = vadd.f32 %v8233, %v8953
      %v8988 = vld [vmem:[%s5708] sm:$0xe]
      %v8989 = vld [vmem:[%s5708 + $0xc] sm:$0xe]
      %v8990 = vld [vmem:[%s5708 + $0x18] sm:$0xe]
      %v8991 = vld [vmem:[%s5708 + $0x24] sm:$0xe]
      %v8992 = vld [vmem:[%s5708 + $0x30] sm:$0xe]
      %v8993 = vld [vmem:[%s5708 + $0x3c] sm:$0xe]
      %v8994 = vld [vmem:[%s5708 + $0x48] sm:$0xe]
      %v8995 = vld [vmem:[%s5708 + $0x54] sm:$0xe]
      %v8996 = vld [vmem:[%s5708 + $0x60] sm:$0xe]
      %v8997 = vld [vmem:[%s5708 + $0x6c] sm:$0xe]
      %v8998 = vld [vmem:[%s5708 + $0x78] sm:$0xe]
      %v8999 = vld [vmem:[%s5708 + $0x84] sm:$0xe]
      %v9000 = vld [vmem:[%s5708 + $0x90] sm:$0xe]
      %v9001 = vld [vmem:[%s5708 + $0x9c] sm:$0xe]
      %v9002 = vld [vmem:[%s5708 + $0xa8] sm:$0xe]
      %v9003 = vld [vmem:[%s5708 + $0xb4] sm:$0xe]
      %v9052 = vrot.slane %v8988, 5
      %v9053 = vrot.slane %v9052, 4
      %v9054 = vrot.slane %v8235, 5
      %v9055 = vsel %vm1903, %v9053, %v9054
      %v9056 = vrot.slane %v9054, 4
      %v9057 = vrot.slane %v8236, 5
      %v9058 = vsel %vm1903, %v9056, %v9057
      %v9059 = vrot.slane %v8989, 5
      %v9060 = vrot.slane %v9059, 4
      %v9061 = vrot.slane %v8238, 5
      %v9062 = vsel %vm1903, %v9060, %v9061
      %v9063 = vrot.slane %v9061, 4
      %v9064 = vrot.slane %v8239, 5
      %v9065 = vsel %vm1903, %v9063, %v9064
      %v9066 = vrot.slane %v8990, 5
      %v9067 = vrot.slane %v9066, 4
      %v9068 = vrot.slane %v8241, 5
      %v9069 = vsel %vm1903, %v9067, %v9068
      %v9070 = vrot.slane %v9068, 4
      %v9071 = vrot.slane %v8242, 5
      %v9072 = vsel %vm1903, %v9070, %v9071
      %v9073 = vrot.slane %v8991, 5
      %v9074 = vrot.slane %v9073, 4
      %v9075 = vrot.slane %v8244, 5
      %v9076 = vsel %vm1903, %v9074, %v9075
      %v9077 = vrot.slane %v9075, 4
      %v9078 = vrot.slane %v8245, 5
      %v9079 = vsel %vm1903, %v9077, %v9078
      %v9080 = vrot.slane %v8992, 5
      %v9081 = vrot.slane %v9080, 4
      %v9082 = vrot.slane %v8247, 5
      %v9083 = vsel %vm1903, %v9081, %v9082
      %v9084 = vrot.slane %v9082, 4
      %v9085 = vrot.slane %v8248, 5
      %v9086 = vsel %vm1903, %v9084, %v9085
      %v9087 = vrot.slane %v8993, 5
      %v9088 = vrot.slane %v9087, 4
      %v9089 = vrot.slane %v8250, 5
      %v9090 = vsel %vm1903, %v9088, %v9089
      %v9091 = vrot.slane %v9089, 4
      %v9092 = vrot.slane %v8251, 5
      %v9093 = vsel %vm1903, %v9091, %v9092
      %v9094 = vrot.slane %v8994, 5
      %v9095 = vrot.slane %v9094, 4
      %v9096 = vrot.slane %v8253, 5
      %v9097 = vsel %vm1903, %v9095, %v9096
      %v9098 = vrot.slane %v9096, 4
      %v9099 = vrot.slane %v8254, 5
      %v9100 = vsel %vm1903, %v9098, %v9099
      %v9101 = vrot.slane %v8995, 5
      %v9102 = vrot.slane %v9101, 4
      %v9103 = vrot.slane %v8256, 5
      %v9104 = vsel %vm1903, %v9102, %v9103
      %v9105 = vrot.slane %v9103, 4
      %v9106 = vrot.slane %v8257, 5
      %v9107 = vsel %vm1903, %v9105, %v9106
      %v9108 = vrot.slane %v8996, 5
      %v9109 = vrot.slane %v9108, 4
      %v9110 = vrot.slane %v8259, 5
      %v9111 = vsel %vm1903, %v9109, %v9110
      %v9112 = vrot.slane %v9110, 4
      %v9113 = vrot.slane %v8260, 5
      %v9114 = vsel %vm1903, %v9112, %v9113
      %v9115 = vrot.slane %v8997, 5
      %v9116 = vrot.slane %v9115, 4
      %v9117 = vrot.slane %v8262, 5
      %v9118 = vsel %vm1903, %v9116, %v9117
      %v9119 = vrot.slane %v9117, 4
      %v9120 = vrot.slane %v8263, 5
      %v9121 = vsel %vm1903, %v9119, %v9120
      %v9122 = vrot.slane %v8998, 5
      %v9123 = vrot.slane %v9122, 4
      %v9124 = vrot.slane %v8265, 5
      %v9125 = vsel %vm1903, %v9123, %v9124
      %v9126 = vrot.slane %v9124, 4
      %v9127 = vrot.slane %v8266, 5
      %v9128 = vsel %vm1903, %v9126, %v9127
      %v9129 = vrot.slane %v8999, 5
      %v9130 = vrot.slane %v9129, 4
      %v9131 = vrot.slane %v8268, 5
      %v9132 = vsel %vm1903, %v9130, %v9131
      %v9133 = vrot.slane %v9131, 4
      %v9134 = vrot.slane %v8269, 5
      %v9135 = vsel %vm1903, %v9133, %v9134
      %v9136 = vrot.slane %v9000, 5
      %v9137 = vrot.slane %v9136, 4
      %v9138 = vrot.slane %v8271, 5
      %v9139 = vsel %vm1903, %v9137, %v9138
      %v9140 = vrot.slane %v9138, 4
      %v9141 = vrot.slane %v8272, 5
      %v9142 = vsel %vm1903, %v9140, %v9141
      %v9143 = vrot.slane %v9001, 5
      %v9144 = vrot.slane %v9143, 4
      %v9145 = vrot.slane %v8274, 5
      %v9146 = vsel %vm1903, %v9144, %v9145
      %v9147 = vrot.slane %v9145, 4
      %v9148 = vrot.slane %v8275, 5
      %v9149 = vsel %vm1903, %v9147, %v9148
      %v9150 = vrot.slane %v9002, 5
      %v9151 = vrot.slane %v9150, 4
      %v9152 = vrot.slane %v8277, 5
      %v9153 = vsel %vm1903, %v9151, %v9152
      %v9154 = vrot.slane %v9152, 4
      %v9155 = vrot.slane %v8278, 5
      %v9156 = vsel %vm1903, %v9154, %v9155
      %v9157 = vrot.slane %v9003, 5
      %v9158 = vrot.slane %v9157, 4
      %v9159 = vrot.slane %v8280, 5
      %v9160 = vsel %vm1903, %v9158, %v9159
      %v9161 = vrot.slane %v9159, 4
      %v9162 = vrot.slane %v8281, 5
      %v9163 = vsel %vm1903, %v9161, %v9162
      %s9164 = scalar_lea.vmem %s3, 320
      %v9165 = vld [vmem:[%s9164] sm:$0xf]
      %v9166 = vld [vmem:[%s9164 + $0x4] sm:$0xf]
      %v9167 = vld [vmem:[%s9164 + $0x8] sm:$0xf]
      %v9168 = vld [vmem:[%s9164 + $0xc] sm:$0xf]
      %v9169 = vld [vmem:[%s9164 + $0x10] sm:$0xf]
      %v9170 = vld [vmem:[%s9164 + $0x14] sm:$0xf]
      %v9171 = vld [vmem:[%s9164 + $0x18] sm:$0xf]
      %v9172 = vld [vmem:[%s9164 + $0x1c] sm:$0xf]
      %v9173 = vld [vmem:[%s9164 + $0x20] sm:$0xf]
      %v9174 = vld [vmem:[%s9164 + $0x24] sm:$0xf]
      %v9175 = vld [vmem:[%s9164 + $0x28] sm:$0xf]
      %v9176 = vld [vmem:[%s9164 + $0x2c] sm:$0xf]
      %v9177 = vld [vmem:[%s9164 + $0x30] sm:$0xf]
      %v9178 = vld [vmem:[%s9164 + $0x34] sm:$0xf]
      %v9179 = vld [vmem:[%s9164 + $0x38] sm:$0xf]
      %v9180 = vld [vmem:[%s9164 + $0x3c] sm:$0xf]
      %v9181 = vunpack.c.l.b16 %v9055
      %v9182 = vunpack.c.l.b16 %v9058
      %v9183 = vunpack.c.l.b16 %v9062
      %v9184 = vunpack.c.l.b16 %v9065
      %v9185 = vunpack.c.l.b16 %v9069
      %v9186 = vunpack.c.l.b16 %v9072
      %v9187 = vunpack.c.l.b16 %v9076
      %v9188 = vunpack.c.l.b16 %v9079
      %v9189 = vunpack.c.l.b16 %v9083
      %v9190 = vunpack.c.l.b16 %v9086
      %v9191 = vunpack.c.l.b16 %v9090
      %v9192 = vunpack.c.l.b16 %v9093
      %v9193 = vunpack.c.l.b16 %v9097
      %v9194 = vunpack.c.l.b16 %v9100
      %v9195 = vunpack.c.l.b16 %v9104
      %v9196 = vunpack.c.l.b16 %v9107
      %v9197 = vunpack.c.l.b16 %v9111
      %v9198 = vunpack.c.l.b16 %v9114
      %v9199 = vunpack.c.l.b16 %v9118
      %v9200 = vunpack.c.l.b16 %v9121
      %v9201 = vunpack.c.l.b16 %v9125
      %v9202 = vunpack.c.l.b16 %v9128
      %v9203 = vunpack.c.l.b16 %v9132
      %v9204 = vunpack.c.l.b16 %v9135
      %v9205 = vunpack.c.l.b16 %v9139
      %v9206 = vunpack.c.l.b16 %v9142
      %v9207 = vunpack.c.l.b16 %v9146
      %v9208 = vunpack.c.l.b16 %v9149
      %v9209 = vunpack.c.l.b16 %v9153
      %v9210 = vunpack.c.l.b16 %v9156
      %v9211 = vunpack.c.l.b16 %v9160
      %v9212 = vunpack.c.l.b16 %v9163
      %v9213 = vpack.c.b16 %v9182, %v9181
      %v9214 = vpack.c.b16 %v9184, %v9183
      %v9215 = vpack.c.b16 %v9186, %v9185
      %v9216 = vpack.c.b16 %v9188, %v9187
      %v9217 = vpack.c.b16 %v9190, %v9189
      %v9218 = vpack.c.b16 %v9192, %v9191
      %v9219 = vpack.c.b16 %v9194, %v9193
      %v9220 = vpack.c.b16 %v9196, %v9195
      %v9221 = vpack.c.b16 %v9198, %v9197
      %v9222 = vpack.c.b16 %v9200, %v9199
      %v9223 = vpack.c.b16 %v9202, %v9201
      %v9224 = vpack.c.b16 %v9204, %v9203
      %v9225 = vpack.c.b16 %v9206, %v9205
      %v9226 = vpack.c.b16 %v9208, %v9207
      %v9227 = vpack.c.b16 %v9210, %v9209
      %v9228 = vpack.c.b16 %v9212, %v9211
      %v9261 = vunpack.c.l.b16 %v9165
      %v9262 = vunpack.c.l.b16 %v9166
      %v9263 = vunpack.c.l.b16 %v9167
      %v9264 = vunpack.c.l.b16 %v9168
      %v9265 = vunpack.c.l.b16 %v9169
      %v9266 = vunpack.c.l.b16 %v9170
      %v9267 = vunpack.c.l.b16 %v9171
      %v9268 = vunpack.c.l.b16 %v9172
      %v9269 = vunpack.c.l.b16 %v9173
      %v9270 = vunpack.c.l.b16 %v9174
      %v9271 = vunpack.c.l.b16 %v9175
      %v9272 = vunpack.c.l.b16 %v9176
      %v9273 = vunpack.c.l.b16 %v9177
      %v9274 = vunpack.c.l.b16 %v9178
      %v9275 = vunpack.c.l.b16 %v9179
      %v9276 = vunpack.c.l.b16 %v9180
      %v9277 = vpack.c.b16 %v9262, %v9261
      %v9278 = vpack.c.b16 %v9264, %v9263
      %v9279 = vpack.c.b16 %v9266, %v9265
      %v9280 = vpack.c.b16 %v9268, %v9267
      %v9281 = vpack.c.b16 %v9270, %v9269
      %v9282 = vpack.c.b16 %v9272, %v9271
      %v9283 = vpack.c.b16 %v9274, %v9273
      %v9284 = vpack.c.b16 %v9276, %v9275
      %9293 = vmatprep.subr.bf16.mxu0 0
      %9294 = vmatpush1.bf16.msra.mxu0 %v9277
      %9295 = vmatprep.subr.bf16.mxu0 0
      %9296 = vmatpush1.bf16.msra.mxu0 %v9278
      %9297 = vmatprep.subr.bf16.mxu0 0
      %9298 = vmatpush1.bf16.msra.mxu0 %v9279
      %9299 = vmatprep.subr.bf16.mxu0 0
      %9300 = vmatpush1.bf16.msra.mxu0 %v9280
      %9301 = vmatprep.subr.bf16.mxu0 0
      %9302 = vmatpush1.bf16.msra.mxu0 %v9281
      %9303 = vmatprep.subr.bf16.mxu0 0
      %9304 = vmatpush1.bf16.msra.mxu0 %v9282
      %9305 = vmatprep.subr.bf16.mxu0 0
      %9306 = vmatpush1.bf16.msra.mxu0 %v9283
      %9307 = vmatprep.subr.bf16.mxu0 0
      %9308 = vmatpush1.bf16.msra.mxu0 %v9284
      %9309 = vmatprep.subr.bf16.mxu0 0
      %9310 = vmatpush1.bf16.msra.mxu0 0
      %9311 = vmatprep.subr.bf16.mxu0 0
      %9312 = vmatpush1.bf16.msra.mxu0 0
      %9313 = vmatprep.subr.bf16.mxu0 0
      %9314 = vmatpush1.bf16.msra.mxu0 0
      %9315 = vmatprep.subr.bf16.mxu0 0
      %9316 = vmatpush1.bf16.msra.mxu0 0
      %9317 = vmatprep.subr.bf16.mxu0 0
      %9318 = vmatpush1.bf16.msra.mxu0 0
      %9319 = vmatprep.subr.bf16.mxu0 0
      %9320 = vmatpush1.bf16.msra.mxu0 0
      %9321 = vmatprep.subr.bf16.mxu0 0
      %9322 = vmatpush1.bf16.msra.mxu0 0
      %9323 = vmatprep.subr.bf16.mxu0 0
      %9324 = vmatpush1.bf16.msra.mxu0 0
      %9325 = vmatprep.mubr.bf16.mxu0 0
      %9326 = vmatmul.mubr.bf16.gmra.mrb[0].mxu0 %v9213
      %v9327 = vpop.f32.mrb[0].mxu0
      %v9328 = vadd.f32 0.0, %v9327
      %v9329 = vpop.f32.mrb[0].mxu0
      %v9330 = vpop.f32.mrb[0].mxu0
      %v9331 = vadd.f32 0.0, %v9330
      %v9332 = vpop.f32.mrb[0].mxu0
      %9333 = vmatprep.mubr.bf16.mxu0 0
      %9334 = vmatmul.mubr.bf16.gmra.mrb[0].mxu0 %v9214
      %v9335 = vpop.f32.mrb[0].mxu0
      %v9336 = vadd.f32 0.0, %v9335
      %v9337 = vpop.f32.mrb[0].mxu0
      %v9338 = vpop.f32.mrb[0].mxu0
      %v9339 = vadd.f32 0.0, %v9338
      %v9340 = vpop.f32.mrb[0].mxu0
      %9341 = vmatprep.mubr.bf16.mxu0 0
      %9342 = vmatmul.mubr.bf16.gmra.mrb[0].mxu0 %v9215
      %v9343 = vpop.f32.mrb[0].mxu0
      %v9344 = vadd.f32 0.0, %v9343
      %v9345 = vpop.f32.mrb[0].mxu0
      %v9346 = vpop.f32.mrb[0].mxu0
      %v9347 = vadd.f32 0.0, %v9346
      %v9348 = vpop.f32.mrb[0].mxu0
      %9349 = vmatprep.mubr.bf16.mxu0 0
      %9350 = vmatmul.mubr.bf16.gmra.mrb[0].mxu0 %v9216
      %v9351 = vpop.f32.mrb[0].mxu0
      %v9352 = vadd.f32 0.0, %v9351
      %v9353 = vpop.f32.mrb[0].mxu0
      %v9354 = vpop.f32.mrb[0].mxu0
      %v9355 = vadd.f32 0.0, %v9354
      %v9356 = vpop.f32.mrb[0].mxu0
      %9357 = vmatprep.mubr.bf16.mxu0 0
      %9358 = vmatmul.mubr.bf16.gmra.mrb[0].mxu0 %v9217
      %v9359 = vpop.f32.mrb[0].mxu0
      %v9360 = vadd.f32 0.0, %v9359
      %v9361 = vpop.f32.mrb[0].mxu0
      %v9362 = vpop.f32.mrb[0].mxu0
      %v9363 = vadd.f32 0.0, %v9362
      %v9364 = vpop.f32.mrb[0].mxu0
      %9365 = vmatprep.mubr.bf16.mxu0 0
      %9366 = vmatmul.mubr.bf16.gmra.mrb[0].mxu0 %v9218
      %v9367 = vpop.f32.mrb[0].mxu0
      %v9368 = vadd.f32 0.0, %v9367
      %v9369 = vpop.f32.mrb[0].mxu0
      %v9370 = vpop.f32.mrb[0].mxu0
      %v9371 = vadd.f32 0.0, %v9370
      %v9372 = vpop.f32.mrb[0].mxu0
      %9373 = vmatprep.mubr.bf16.mxu0 0
      %9374 = vmatmul.mubr.bf16.gmra.mrb[0].mxu0 %v9219
      %v9375 = vpop.f32.mrb[0].mxu0
      %v9376 = vadd.f32 0.0, %v9375
      %v9377 = vpop.f32.mrb[0].mxu0
      %v9378 = vpop.f32.mrb[0].mxu0
      %v9379 = vadd.f32 0.0, %v9378
      %v9380 = vpop.f32.mrb[0].mxu0
      %9381 = vmatprep.mubr.bf16.mxu0 0
      %9382 = vmatmul.mubr.bf16.gmra.mrb[0].mxu0 %v9220
      %v9383 = vpop.f32.mrb[0].mxu0
      %v9384 = vadd.f32 0.0, %v9383
      %v9385 = vpop.f32.mrb[0].mxu0
      %v9386 = vpop.f32.mrb[0].mxu0
      %v9387 = vadd.f32 0.0, %v9386
      %v9388 = vpop.f32.mrb[0].mxu0
      %9389 = vmatprep.mubr.bf16.mxu0 0
      %9390 = vmatmul.mubr.bf16.gmra.mrb[0].mxu0 %v9221
      %v9391 = vpop.f32.mrb[0].mxu0
      %v9392 = vadd.f32 0.0, %v9391
      %v9393 = vpop.f32.mrb[0].mxu0
      %v9394 = vpop.f32.mrb[0].mxu0
      %v9395 = vadd.f32 0.0, %v9394
      %v9396 = vpop.f32.mrb[0].mxu0
      %9397 = vmatprep.mubr.bf16.mxu0 0
      %9398 = vmatmul.mubr.bf16.gmra.mrb[0].mxu0 %v9222
      %v9399 = vpop.f32.mrb[0].mxu0
      %v9400 = vadd.f32 0.0, %v9399
      %v9401 = vpop.f32.mrb[0].mxu0
      %v9402 = vpop.f32.mrb[0].mxu0
      %v9403 = vadd.f32 0.0, %v9402
      %v9404 = vpop.f32.mrb[0].mxu0
      %9405 = vmatprep.mubr.bf16.mxu0 0
      %9406 = vmatmul.mubr.bf16.gmra.mrb[0].mxu0 %v9223
      %v9407 = vpop.f32.mrb[0].mxu0
      %v9408 = vadd.f32 0.0, %v9407
      %v9409 = vpop.f32.mrb[0].mxu0
      %v9410 = vpop.f32.mrb[0].mxu0
      %v9411 = vadd.f32 0.0, %v9410
      %v9412 = vpop.f32.mrb[0].mxu0
      %9413 = vmatprep.mubr.bf16.mxu0 0
      %9414 = vmatmul.mubr.bf16.gmra.mrb[0].mxu0 %v9224
      %v9415 = vpop.f32.mrb[0].mxu0
      %v9416 = vadd.f32 0.0, %v9415
      %v9417 = vpop.f32.mrb[0].mxu0
      %v9418 = vpop.f32.mrb[0].mxu0
      %v9419 = vadd.f32 0.0, %v9418
      %v9420 = vpop.f32.mrb[0].mxu0
      %9421 = vmatprep.mubr.bf16.mxu0 0
      %9422 = vmatmul.mubr.bf16.gmra.mrb[0].mxu0 %v9225
      %v9423 = vpop.f32.mrb[0].mxu0
      %v9424 = vadd.f32 0.0, %v9423
      %v9425 = vpop.f32.mrb[0].mxu0
      %v9426 = vpop.f32.mrb[0].mxu0
      %v9427 = vadd.f32 0.0, %v9426
      %v9428 = vpop.f32.mrb[0].mxu0
      %9429 = vmatprep.mubr.bf16.mxu0 0
      %9430 = vmatmul.mubr.bf16.gmra.mrb[0].mxu0 %v9226
      %v9431 = vpop.f32.mrb[0].mxu0
      %v9432 = vadd.f32 0.0, %v9431
      %v9433 = vpop.f32.mrb[0].mxu0
      %v9434 = vpop.f32.mrb[0].mxu0
      %v9435 = vadd.f32 0.0, %v9434
      %v9436 = vpop.f32.mrb[0].mxu0
      %9437 = vmatprep.mubr.bf16.mxu0 0
      %9438 = vmatmul.mubr.bf16.gmra.mrb[0].mxu0 %v9227
      %v9439 = vpop.f32.mrb[0].mxu0
      %v9440 = vadd.f32 0.0, %v9439
      %v9441 = vpop.f32.mrb[0].mxu0
      %v9442 = vpop.f32.mrb[0].mxu0
      %v9443 = vadd.f32 0.0, %v9442
      %v9444 = vpop.f32.mrb[0].mxu0
      %9445 = vmatprep.mubr.bf16.mxu0 0
      %9446 = vmatmul.mubr.bf16.gmra.mrb[0].mxu0 %v9228
      %v9447 = vpop.f32.mrb[0].mxu0
      %v9448 = vadd.f32 0.0, %v9447
      %v9449 = vpop.f32.mrb[0].mxu0
      %v9450 = vpop.f32.mrb[0].mxu0
      %v9451 = vadd.f32 0.0, %v9450
      %v9452 = vpop.f32.mrb[0].mxu0
      %9453 = vdwg.mxu0
      %v9454 = vadd.f32 %v8956, %v9328
      %v9455 = vadd.f32 %v8957, %v9331
      %v9456 = vadd.f32 %v8958, %v9336
      %v9457 = vadd.f32 %v8959, %v9339
      %v9458 = vadd.f32 %v8960, %v9344
      %v9459 = vadd.f32 %v8961, %v9347
      %v9460 = vadd.f32 %v8962, %v9352
      %v9461 = vadd.f32 %v8963, %v9355
      %v9462 = vadd.f32 %v8964, %v9360
      %v9463 = vadd.f32 %v8965, %v9363
      %v9464 = vadd.f32 %v8966, %v9368
      %v9465 = vadd.f32 %v8967, %v9371
      %v9466 = vadd.f32 %v8968, %v9376
      %v9467 = vadd.f32 %v8969, %v9379
      %v9468 = vadd.f32 %v8970, %v9384
      %v9469 = vadd.f32 %v8971, %v9387
      %v9470 = vadd.f32 %v8972, %v9392
      %v9471 = vadd.f32 %v8973, %v9395
      %v9472 = vadd.f32 %v8974, %v9400
      %v9473 = vadd.f32 %v8975, %v9403
      %v9474 = vadd.f32 %v8976, %v9408
      %v9475 = vadd.f32 %v8977, %v9411
      %v9476 = vadd.f32 %v8978, %v9416
      %v9477 = vadd.f32 %v8979, %v9419
      %v9478 = vadd.f32 %v8980, %v9424
      %v9479 = vadd.f32 %v8981, %v9427
      %v9480 = vadd.f32 %v8982, %v9432
      %v9481 = vadd.f32 %v8983, %v9435
      %v9482 = vadd.f32 %v8984, %v9440
      %v9483 = vadd.f32 %v8985, %v9443
      %v9484 = vadd.f32 %v8986, %v9448
      %v9485 = vadd.f32 %v8987, %v9451
      %s9486 = scalar_lea.vmem [#allocation3], 24
      %v9487 = vld [vmem:[%s9486] sm:$0xf]
      %v9488 = vld [vmem:[%s9486 + $0x4] sm:$0xf]
      %v9489 = vld [vmem:[%s9486 + $0xc] sm:$0xf]
      %v9490 = vld [vmem:[%s9486 + $0x10] sm:$0xf]
      %v9491 = vld [vmem:[%s9486 + $0x18] sm:$0xf]
      %v9492 = vld [vmem:[%s9486 + $0x1c] sm:$0xf]
      %v9493 = vld [vmem:[%s9486 + $0x24] sm:$0xf]
      %v9494 = vld [vmem:[%s9486 + $0x28] sm:$0xf]
      %v9495 = vld [vmem:[%s9486 + $0x30] sm:$0xf]
      %v9496 = vld [vmem:[%s9486 + $0x34] sm:$0xf]
      %v9497 = vld [vmem:[%s9486 + $0x3c] sm:$0xf]
      %v9498 = vld [vmem:[%s9486 + $0x40] sm:$0xf]
      %v9499 = vld [vmem:[%s9486 + $0x48] sm:$0xf]
      %v9500 = vld [vmem:[%s9486 + $0x4c] sm:$0xf]
      %v9501 = vld [vmem:[%s9486 + $0x54] sm:$0xf]
      %v9502 = vld [vmem:[%s9486 + $0x58] sm:$0xf]
      %v9503 = vld [vmem:[%s9486 + $0x60] sm:$0xf]
      %v9504 = vld [vmem:[%s9486 + $0x64] sm:$0xf]
      %v9505 = vld [vmem:[%s9486 + $0x6c] sm:$0xf]
      %v9506 = vld [vmem:[%s9486 + $0x70] sm:$0xf]
      %v9507 = vld [vmem:[%s9486 + $0x78] sm:$0xf]
      %v9508 = vld [vmem:[%s9486 + $0x7c] sm:$0xf]
      %v9509 = vld [vmem:[%s9486 + $0x84] sm:$0xf]
      %v9510 = vld [vmem:[%s9486 + $0x88] sm:$0xf]
      %v9511 = vld [vmem:[%s9486 + $0x90] sm:$0xf]
      %v9512 = vld [vmem:[%s9486 + $0x94] sm:$0xf]
      %v9513 = vld [vmem:[%s9486 + $0x9c] sm:$0xf]
      %v9514 = vld [vmem:[%s9486 + $0xa0] sm:$0xf]
      %v9515 = vld [vmem:[%s9486 + $0xa8] sm:$0xf]
      %v9516 = vld [vmem:[%s9486 + $0xac] sm:$0xf]
      %v9517 = vld [vmem:[%s9486 + $0xb4] sm:$0xf]
      %v9518 = vld [vmem:[%s9486 + $0xb8] sm:$0xf]
      %s9519 = scalar_lea.vmem %s3, 384
      %v9520 = vld [vmem:[%s9519] sm:$0xf]
      %v9521 = vld [vmem:[%s9519 + $0x4] sm:$0xf]
      %v9522 = vld [vmem:[%s9519 + $0x8] sm:$0xf]
      %v9523 = vld [vmem:[%s9519 + $0xc] sm:$0xf]
      %v9524 = vld [vmem:[%s9519 + $0x10] sm:$0xf]
      %v9525 = vld [vmem:[%s9519 + $0x14] sm:$0xf]
      %v9526 = vld [vmem:[%s9519 + $0x18] sm:$0xf]
      %v9527 = vld [vmem:[%s9519 + $0x1c] sm:$0xf]
      %v9528 = vld [vmem:[%s9519 + $0x20] sm:$0xf]
      %v9529 = vld [vmem:[%s9519 + $0x24] sm:$0xf]
      %v9530 = vld [vmem:[%s9519 + $0x28] sm:$0xf]
      %v9531 = vld [vmem:[%s9519 + $0x2c] sm:$0xf]
      %v9532 = vld [vmem:[%s9519 + $0x30] sm:$0xf]
      %v9533 = vld [vmem:[%s9519 + $0x34] sm:$0xf]
      %v9534 = vld [vmem:[%s9519 + $0x38] sm:$0xf]
      %v9535 = vld [vmem:[%s9519 + $0x3c] sm:$0xf]
      %v9568 = vunpack.c.l.b16 %v9487
      %v9569 = vunpack.c.l.b16 %v9488
      %v9570 = vunpack.c.l.b16 %v9489
      %v9571 = vunpack.c.l.b16 %v9490
      %v9572 = vunpack.c.l.b16 %v9491
      %v9573 = vunpack.c.l.b16 %v9492
      %v9574 = vunpack.c.l.b16 %v9493
      %v9575 = vunpack.c.l.b16 %v9494
      %v9576 = vunpack.c.l.b16 %v9495
      %v9577 = vunpack.c.l.b16 %v9496
      %v9578 = vunpack.c.l.b16 %v9497
      %v9579 = vunpack.c.l.b16 %v9498
      %v9580 = vunpack.c.l.b16 %v9499
      %v9581 = vunpack.c.l.b16 %v9500
      %v9582 = vunpack.c.l.b16 %v9501
      %v9583 = vunpack.c.l.b16 %v9502
      %v9584 = vunpack.c.l.b16 %v9503
      %v9585 = vunpack.c.l.b16 %v9504
      %v9586 = vunpack.c.l.b16 %v9505
      %v9587 = vunpack.c.l.b16 %v9506
      %v9588 = vunpack.c.l.b16 %v9507
      %v9589 = vunpack.c.l.b16 %v9508
      %v9590 = vunpack.c.l.b16 %v9509
      %v9591 = vunpack.c.l.b16 %v9510
      %v9592 = vunpack.c.l.b16 %v9511
      %v9593 = vunpack.c.l.b16 %v9512
      %v9594 = vunpack.c.l.b16 %v9513
      %v9595 = vunpack.c.l.b16 %v9514
      %v9596 = vunpack.c.l.b16 %v9515
      %v9597 = vunpack.c.l.b16 %v9516
      %v9598 = vunpack.c.l.b16 %v9517
      %v9599 = vunpack.c.l.b16 %v9518
      %v9600 = vpack.c.b16 %v9569, %v9568
      %v9601 = vpack.c.b16 %v9571, %v9570
      %v9602 = vpack.c.b16 %v9573, %v9572
      %v9603 = vpack.c.b16 %v9575, %v9574
      %v9604 = vpack.c.b16 %v9577, %v9576
      %v9605 = vpack.c.b16 %v9579, %v9578
      %v9606 = vpack.c.b16 %v9581, %v9580
      %v9607 = vpack.c.b16 %v9583, %v9582
      %v9608 = vpack.c.b16 %v9585, %v9584
      %v9609 = vpack.c.b16 %v9587, %v9586
      %v9610 = vpack.c.b16 %v9589, %v9588
      %v9611 = vpack.c.b16 %v9591, %v9590
      %v9612 = vpack.c.b16 %v9593, %v9592
      %v9613 = vpack.c.b16 %v9595, %v9594
      %v9614 = vpack.c.b16 %v9597, %v9596
      %v9615 = vpack.c.b16 %v9599, %v9598
      %v9648 = vunpack.c.l.b16 %v9520
      %v9649 = vunpack.c.l.b16 %v9521
      %v9650 = vunpack.c.l.b16 %v9522
      %v9651 = vunpack.c.l.b16 %v9523
      %v9652 = vunpack.c.l.b16 %v9524
      %v9653 = vunpack.c.l.b16 %v9525
      %v9654 = vunpack.c.l.b16 %v9526
      %v9655 = vunpack.c.l.b16 %v9527
      %v9656 = vunpack.c.l.b16 %v9528
      %v9657 = vunpack.c.l.b16 %v9529
      %v9658 = vunpack.c.l.b16 %v9530
      %v9659 = vunpack.c.l.b16 %v9531
      %v9660 = vunpack.c.l.b16 %v9532
      %v9661 = vunpack.c.l.b16 %v9533
      %v9662 = vunpack.c.l.b16 %v9534
      %v9663 = vunpack.c.l.b16 %v9535
      %v9664 = vpack.c.b16 %v9649, %v9648
      %v9665 = vpack.c.b16 %v9651, %v9650
      %v9666 = vpack.c.b16 %v9653, %v9652
      %v9667 = vpack.c.b16 %v9655, %v9654
      %v9668 = vpack.c.b16 %v9657, %v9656
      %v9669 = vpack.c.b16 %v9659, %v9658
      %v9670 = vpack.c.b16 %v9661, %v9660
      %v9671 = vpack.c.b16 %v9663, %v9662
      %9680 = vmatprep.subr.bf16.mxu0 0
      %9681 = vmatpush1.bf16.msra.mxu0 %v9664
      %9682 = vmatprep.subr.bf16.mxu0 0
      %9683 = vmatpush1.bf16.msra.mxu0 %v9665
      %9684 = vmatprep.subr.bf16.mxu0 0
      %9685 = vmatpush1.bf16.msra.mxu0 %v9666
      %9686 = vmatprep.subr.bf16.mxu0 0
      %9687 = vmatpush1.bf16.msra.mxu0 %v9667
      %9688 = vmatprep.subr.bf16.mxu0 0
      %9689 = vmatpush1.bf16.msra.mxu0 %v9668
      %9690 = vmatprep.subr.bf16.mxu0 0
      %9691 = vmatpush1.bf16.msra.mxu0 %v9669
      %9692 = vmatprep.subr.bf16.mxu0 0
      %9693 = vmatpush1.bf16.msra.mxu0 %v9670
      %9694 = vmatprep.subr.bf16.mxu0 0
      %9695 = vmatpush1.bf16.msra.mxu0 %v9671
      %9696 = vmatprep.subr.bf16.mxu0 0
      %9697 = vmatpush1.bf16.msra.mxu0 0
      %9698 = vmatprep.subr.bf16.mxu0 0
      %9699 = vmatpush1.bf16.msra.mxu0 0
      %9700 = vmatprep.subr.bf16.mxu0 0
      %9701 = vmatpush1.bf16.msra.mxu0 0
      %9702 = vmatprep.subr.bf16.mxu0 0
      %9703 = vmatpush1.bf16.msra.mxu0 0
      %9704 = vmatprep.subr.bf16.mxu0 0
      %9705 = vmatpush1.bf16.msra.mxu0 0
      %9706 = vmatprep.subr.bf16.mxu0 0
      %9707 = vmatpush1.bf16.msra.mxu0 0
      %9708 = vmatprep.subr.bf16.mxu0 0
      %9709 = vmatpush1.bf16.msra.mxu0 0
      %9710 = vmatprep.subr.bf16.mxu0 0
      %9711 = vmatpush1.bf16.msra.mxu0 0
      %9712 = vmatprep.mubr.bf16.mxu0 0
      %9713 = vmatmul.mubr.bf16.gmra.mrb[0].mxu0 %v9600
      %v9714 = vpop.f32.mrb[0].mxu0
      %v9715 = vadd.f32 0.0, %v9714
      %v9716 = vpop.f32.mrb[0].mxu0
      %v9717 = vpop.f32.mrb[0].mxu0
      %v9718 = vadd.f32 0.0, %v9717
      %v9719 = vpop.f32.mrb[0].mxu0
      %9720 = vmatprep.mubr.bf16.mxu0 0
      %9721 = vmatmul.mubr.bf16.gmra.mrb[0].mxu0 %v9601
      %v9722 = vpop.f32.mrb[0].mxu0
      %v9723 = vadd.f32 0.0, %v9722
      %v9724 = vpop.f32.mrb[0].mxu0
      %v9725 = vpop.f32.mrb[0].mxu0
      %v9726 = vadd.f32 0.0, %v9725
      %v9727 = vpop.f32.mrb[0].mxu0
      %9728 = vmatprep.mubr.bf16.mxu0 0
      %9729 = vmatmul.mubr.bf16.gmra.mrb[0].mxu0 %v9602
      %v9730 = vpop.f32.mrb[0].mxu0
      %v9731 = vadd.f32 0.0, %v9730
      %v9732 = vpop.f32.mrb[0].mxu0
      %v9733 = vpop.f32.mrb[0].mxu0
      %v9734 = vadd.f32 0.0, %v9733
      %v9735 = vpop.f32.mrb[0].mxu0
      %9736 = vmatprep.mubr.bf16.mxu0 0
      %9737 = vmatmul.mubr.bf16.gmra.mrb[0].mxu0 %v9603
      %v9738 = vpop.f32.mrb[0].mxu0
      %v9739 = vadd.f32 0.0, %v9738
      %v9740 = vpop.f32.mrb[0].mxu0
      %v9741 = vpop.f32.mrb[0].mxu0
      %v9742 = vadd.f32 0.0, %v9741
      %v9743 = vpop.f32.mrb[0].mxu0
      %9744 = vmatprep.mubr.bf16.mxu0 0
      %9745 = vmatmul.mubr.bf16.gmra.mrb[0].mxu0 %v9604
      %v9746 = vpop.f32.mrb[0].mxu0
      %v9747 = vadd.f32 0.0, %v9746
      %v9748 = vpop.f32.mrb[0].mxu0
      %v9749 = vpop.f32.mrb[0].mxu0
      %v9750 = vadd.f32 0.0, %v9749
      %v9751 = vpop.f32.mrb[0].mxu0
      %9752 = vmatprep.mubr.bf16.mxu0 0
      %9753 = vmatmul.mubr.bf16.gmra.mrb[0].mxu0 %v9605
      %v9754 = vpop.f32.mrb[0].mxu0
      %v9755 = vadd.f32 0.0, %v9754
      %v9756 = vpop.f32.mrb[0].mxu0
      %v9757 = vpop.f32.mrb[0].mxu0
      %v9758 = vadd.f32 0.0, %v9757
      %v9759 = vpop.f32.mrb[0].mxu0
      %9760 = vmatprep.mubr.bf16.mxu0 0
      %9761 = vmatmul.mubr.bf16.gmra.mrb[0].mxu0 %v9606
      %v9762 = vpop.f32.mrb[0].mxu0
      %v9763 = vadd.f32 0.0, %v9762
      %v9764 = vpop.f32.mrb[0].mxu0
      %v9765 = vpop.f32.mrb[0].mxu0
      %v9766 = vadd.f32 0.0, %v9765
      %v9767 = vpop.f32.mrb[0].mxu0
      %9768 = vmatprep.mubr.bf16.mxu0 0
      %9769 = vmatmul.mubr.bf16.gmra.mrb[0].mxu0 %v9607
      %v9770 = vpop.f32.mrb[0].mxu0
      %v9771 = vadd.f32 0.0, %v9770
      %v9772 = vpop.f32.mrb[0].mxu0
      %v9773 = vpop.f32.mrb[0].mxu0
      %v9774 = vadd.f32 0.0, %v9773
      %v9775 = vpop.f32.mrb[0].mxu0
      %9776 = vmatprep.mubr.bf16.mxu0 0
      %9777 = vmatmul.mubr.bf16.gmra.mrb[0].mxu0 %v9608
      %v9778 = vpop.f32.mrb[0].mxu0
      %v9779 = vadd.f32 0.0, %v9778
      %v9780 = vpop.f32.mrb[0].mxu0
      %v9781 = vpop.f32.mrb[0].mxu0
      %v9782 = vadd.f32 0.0, %v9781
      %v9783 = vpop.f32.mrb[0].mxu0
      %9784 = vmatprep.mubr.bf16.mxu0 0
      %9785 = vmatmul.mubr.bf16.gmra.mrb[0].mxu0 %v9609
      %v9786 = vpop.f32.mrb[0].mxu0
      %v9787 = vadd.f32 0.0, %v9786
      %v9788 = vpop.f32.mrb[0].mxu0
      %v9789 = vpop.f32.mrb[0].mxu0
      %v9790 = vadd.f32 0.0, %v9789
      %v9791 = vpop.f32.mrb[0].mxu0
      %9792 = vmatprep.mubr.bf16.mxu0 0
      %9793 = vmatmul.mubr.bf16.gmra.mrb[0].mxu0 %v9610
      %v9794 = vpop.f32.mrb[0].mxu0
      %v9795 = vadd.f32 0.0, %v9794
      %v9796 = vpop.f32.mrb[0].mxu0
      %v9797 = vpop.f32.mrb[0].mxu0
      %v9798 = vadd.f32 0.0, %v9797
      %v9799 = vpop.f32.mrb[0].mxu0
      %9800 = vmatprep.mubr.bf16.mxu0 0
      %9801 = vmatmul.mubr.bf16.gmra.mrb[0].mxu0 %v9611
      %v9802 = vpop.f32.mrb[0].mxu0
      %v9803 = vadd.f32 0.0, %v9802
      %v9804 = vpop.f32.mrb[0].mxu0
      %v9805 = vpop.f32.mrb[0].mxu0
      %v9806 = vadd.f32 0.0, %v9805
      %v9807 = vpop.f32.mrb[0].mxu0
      %9808 = vmatprep.mubr.bf16.mxu0 0
      %9809 = vmatmul.mubr.bf16.gmra.mrb[0].mxu0 %v9612
      %v9810 = vpop.f32.mrb[0].mxu0
      %v9811 = vadd.f32 0.0, %v9810
      %v9812 = vpop.f32.mrb[0].mxu0
      %v9813 = vpop.f32.mrb[0].mxu0
      %v9814 = vadd.f32 0.0, %v9813
      %v9815 = vpop.f32.mrb[0].mxu0
      %9816 = vmatprep.mubr.bf16.mxu0 0
      %9817 = vmatmul.mubr.bf16.gmra.mrb[0].mxu0 %v9613
      %v9818 = vpop.f32.mrb[0].mxu0
      %v9819 = vadd.f32 0.0, %v9818
      %v9820 = vpop.f32.mrb[0].mxu0
      %v9821 = vpop.f32.mrb[0].mxu0
      %v9822 = vadd.f32 0.0, %v9821
      %v9823 = vpop.f32.mrb[0].mxu0
      %9824 = vmatprep.mubr.bf16.mxu0 0
      %9825 = vmatmul.mubr.bf16.gmra.mrb[0].mxu0 %v9614
      %v9826 = vpop.f32.mrb[0].mxu0
      %v9827 = vadd.f32 0.0, %v9826
      %v9828 = vpop.f32.mrb[0].mxu0
      %v9829 = vpop.f32.mrb[0].mxu0
      %v9830 = vadd.f32 0.0, %v9829
      %v9831 = vpop.f32.mrb[0].mxu0
      %9832 = vmatprep.mubr.bf16.mxu0 0
      %9833 = vmatmul.mubr.bf16.gmra.mrb[0].mxu0 %v9615
      %v9834 = vpop.f32.mrb[0].mxu0
      %v9835 = vadd.f32 0.0, %v9834
      %v9836 = vpop.f32.mrb[0].mxu0
      %v9837 = vpop.f32.mrb[0].mxu0
      %v9838 = vadd.f32 0.0, %v9837
      %v9839 = vpop.f32.mrb[0].mxu0
      %9840 = vdwg.mxu0
      %v9841 = vadd.f32 %v9454, %v9715
      %v9842 = vadd.f32 %v9455, %v9718
      %v9843 = vadd.f32 %v9456, %v9723
      %v9844 = vadd.f32 %v9457, %v9726
      %v9845 = vadd.f32 %v9458, %v9731
      %v9846 = vadd.f32 %v9459, %v9734
      %v9847 = vadd.f32 %v9460, %v9739
      %v9848 = vadd.f32 %v9461, %v9742
      %v9849 = vadd.f32 %v9462, %v9747
      %v9850 = vadd.f32 %v9463, %v9750
      %v9851 = vadd.f32 %v9464, %v9755
      %v9852 = vadd.f32 %v9465, %v9758
      %v9853 = vadd.f32 %v9466, %v9763
      %v9854 = vadd.f32 %v9467, %v9766
      %v9855 = vadd.f32 %v9468, %v9771
      %v9856 = vadd.f32 %v9469, %v9774
      %v9857 = vadd.f32 %v9470, %v9779
      %v9858 = vadd.f32 %v9471, %v9782
      %v9859 = vadd.f32 %v9472, %v9787
      %v9860 = vadd.f32 %v9473, %v9790
      %v9861 = vadd.f32 %v9474, %v9795
      %v9862 = vadd.f32 %v9475, %v9798
      %v9863 = vadd.f32 %v9476, %v9803
      %v9864 = vadd.f32 %v9477, %v9806
      %v9865 = vadd.f32 %v9478, %v9811
      %v9866 = vadd.f32 %v9479, %v9814
      %v9867 = vadd.f32 %v9480, %v9819
      %v9868 = vadd.f32 %v9481, %v9822
      %v9869 = vadd.f32 %v9482, %v9827
      %v9870 = vadd.f32 %v9483, %v9830
      %v9871 = vadd.f32 %v9484, %v9835
      %v9872 = vadd.f32 %v9485, %v9838
      %v9873 = vld [vmem:[%s9486] sm:$0xf]
      %v9874 = vld [vmem:[%s9486 + $0x4] sm:$0xf]
      %v9875 = vld [vmem:[%s9486 + $0x8] sm:$0x1]
      %v9876 = vld [vmem:[%s9486 + $0xc] sm:$0xf]
      %v9877 = vld [vmem:[%s9486 + $0x10] sm:$0xf]
      %v9878 = vld [vmem:[%s9486 + $0x14] sm:$0x1]
      %v9879 = vld [vmem:[%s9486 + $0x18] sm:$0xf]
      %v9880 = vld [vmem:[%s9486 + $0x1c] sm:$0xf]
      %v9881 = vld [vmem:[%s9486 + $0x20] sm:$0x1]
      %v9882 = vld [vmem:[%s9486 + $0x24] sm:$0xf]
      %v9883 = vld [vmem:[%s9486 + $0x28] sm:$0xf]
      %v9884 = vld [vmem:[%s9486 + $0x2c] sm:$0x1]
      %v9885 = vld [vmem:[%s9486 + $0x30] sm:$0xf]
      %v9886 = vld [vmem:[%s9486 + $0x34] sm:$0xf]
      %v9887 = vld [vmem:[%s9486 + $0x38] sm:$0x1]
      %v9888 = vld [vmem:[%s9486 + $0x3c] sm:$0xf]
      %v9889 = vld [vmem:[%s9486 + $0x40] sm:$0xf]
      %v9890 = vld [vmem:[%s9486 + $0x44] sm:$0x1]
      %v9891 = vld [vmem:[%s9486 + $0x48] sm:$0xf]
      %v9892 = vld [vmem:[%s9486 + $0x4c] sm:$0xf]
      %v9893 = vld [vmem:[%s9486 + $0x50] sm:$0x1]
      %v9894 = vld [vmem:[%s9486 + $0x54] sm:$0xf]
      %v9895 = vld [vmem:[%s9486 + $0x58] sm:$0xf]
      %v9896 = vld [vmem:[%s9486 + $0x5c] sm:$0x1]
      %v9897 = vld [vmem:[%s9486 + $0x60] sm:$0xf]
      %v9898 = vld [vmem:[%s9486 + $0x64] sm:$0xf]
      %v9899 = vld [vmem:[%s9486 + $0x68] sm:$0x1]
      %v9900 = vld [vmem:[%s9486 + $0x6c] sm:$0xf]
      %v9901 = vld [vmem:[%s9486 + $0x70] sm:$0xf]
      %v9902 = vld [vmem:[%s9486 + $0x74] sm:$0x1]
      %v9903 = vld [vmem:[%s9486 + $0x78] sm:$0xf]
      %v9904 = vld [vmem:[%s9486 + $0x7c] sm:$0xf]
      %v9905 = vld [vmem:[%s9486 + $0x80] sm:$0x1]
      %v9906 = vld [vmem:[%s9486 + $0x84] sm:$0xf]
      %v9907 = vld [vmem:[%s9486 + $0x88] sm:$0xf]
      %v9908 = vld [vmem:[%s9486 + $0x8c] sm:$0x1]
      %v9909 = vld [vmem:[%s9486 + $0x90] sm:$0xf]
      %v9910 = vld [vmem:[%s9486 + $0x94] sm:$0xf]
      %v9911 = vld [vmem:[%s9486 + $0x98] sm:$0x1]
      %v9912 = vld [vmem:[%s9486 + $0x9c] sm:$0xf]
      %v9913 = vld [vmem:[%s9486 + $0xa0] sm:$0xf]
      %v9914 = vld [vmem:[%s9486 + $0xa4] sm:$0x1]
      %v9915 = vld [vmem:[%s9486 + $0xa8] sm:$0xf]
      %v9916 = vld [vmem:[%s9486 + $0xac] sm:$0xf]
      %v9917 = vld [vmem:[%s9486 + $0xb0] sm:$0x1]
      %v9918 = vld [vmem:[%s9486 + $0xb4] sm:$0xf]
      %v9919 = vld [vmem:[%s9486 + $0xb8] sm:$0xf]
      %v9920 = vld [vmem:[%s9486 + $0xbc] sm:$0x1]
      %v9922 = vshrl.u32 %v9873, 16
      %v9924 = vrot.slane %v9922, 4
      %v9925 = vshll.u32 %v9873, 16
      %v9927 = vrot.slane %v9925, 5
      %v9928 = vor.u32 %v9924, %v9927
      %v9929 = vrot.slane %v9928, 4
      %v9931 = vshll.u32 %v9874, 16
      %v9933 = vrot.slane %v9931, 5
      %v9934 = vsel %vm864, %v9929, %v9933
      %v9935 = vshrl.u32 %v9874, 16
      %v9937 = vrot.slane %v9935, 4
      %v9938 = vor.u32 %v9937, %v9933
      %v9939 = vrot.slane %v9938, 4
      %v9941 = vshll.u32 %v9875, 16
      %v9943 = vrot.slane %v9941, 5
      %v9944 = vsel %vm864, %v9939, %v9943
      %v9946 = vshrl.u32 %v9876, 16
      %v9948 = vrot.slane %v9946, 4
      %v9949 = vshll.u32 %v9876, 16
      %v9951 = vrot.slane %v9949, 5
      %v9952 = vor.u32 %v9948, %v9951
      %v9953 = vrot.slane %v9952, 4
      %v9955 = vshll.u32 %v9877, 16
      %v9957 = vrot.slane %v9955, 5
      %v9958 = vsel %vm864, %v9953, %v9957
      %v9959 = vshrl.u32 %v9877, 16
      %v9961 = vrot.slane %v9959, 4
      %v9962 = vor.u32 %v9961, %v9957
      %v9963 = vrot.slane %v9962, 4
      %v9965 = vshll.u32 %v9878, 16
      %v9967 = vrot.slane %v9965, 5
      %v9968 = vsel %vm864, %v9963, %v9967
      %v9970 = vshrl.u32 %v9879, 16
      %v9972 = vrot.slane %v9970, 4
      %v9973 = vshll.u32 %v9879, 16
      %v9975 = vrot.slane %v9973, 5
      %v9976 = vor.u32 %v9972, %v9975
      %v9977 = vrot.slane %v9976, 4
      %v9979 = vshll.u32 %v9880, 16
      %v9981 = vrot.slane %v9979, 5
      %v9982 = vsel %vm864, %v9977, %v9981
      %v9983 = vshrl.u32 %v9880, 16
      %v9985 = vrot.slane %v9983, 4
      %v9986 = vor.u32 %v9985, %v9981
      %v9987 = vrot.slane %v9986, 4
      %v9989 = vshll.u32 %v9881, 16
      %v9991 = vrot.slane %v9989, 5
      %v9992 = vsel %vm864, %v9987, %v9991
      %v9994 = vshrl.u32 %v9882, 16
      %v9996 = vrot.slane %v9994, 4
      %v9997 = vshll.u32 %v9882, 16
      %v9999 = vrot.slane %v9997, 5
      %v10000 = vor.u32 %v9996, %v9999
      %v10001 = vrot.slane %v10000, 4
      %v10003 = vshll.u32 %v9883, 16
      %v10005 = vrot.slane %v10003, 5
      %v10006 = vsel %vm864, %v10001, %v10005
      %v10007 = vshrl.u32 %v9883, 16
      %v10009 = vrot.slane %v10007, 4
      %v10010 = vor.u32 %v10009, %v10005
      %v10011 = vrot.slane %v10010, 4
      %v10013 = vshll.u32 %v9884, 16
      %v10015 = vrot.slane %v10013, 5
      %v10016 = vsel %vm864, %v10011, %v10015
      %v10018 = vshrl.u32 %v9885, 16
      %v10020 = vrot.slane %v10018, 4
      %v10021 = vshll.u32 %v9885, 16
      %v10023 = vrot.slane %v10021, 5
      %v10024 = vor.u32 %v10020, %v10023
      %v10025 = vrot.slane %v10024, 4
      %v10027 = vshll.u32 %v9886, 16
      %v10029 = vrot.slane %v10027, 5
      %v10030 = vsel %vm864, %v10025, %v10029
      %v10031 = vshrl.u32 %v9886, 16
      %v10033 = vrot.slane %v10031, 4
      %v10034 = vor.u32 %v10033, %v10029
      %v10035 = vrot.slane %v10034, 4
      %v10037 = vshll.u32 %v9887, 16
      %v10039 = vrot.slane %v10037, 5
      %v10040 = vsel %vm864, %v10035, %v10039
      %v10042 = vshrl.u32 %v9888, 16
      %v10044 = vrot.slane %v10042, 4
      %v10045 = vshll.u32 %v9888, 16
      %v10047 = vrot.slane %v10045, 5
      %v10048 = vor.u32 %v10044, %v10047
      %v10049 = vrot.slane %v10048, 4
      %v10051 = vshll.u32 %v9889, 16
      %v10053 = vrot.slane %v10051, 5
      %v10054 = vsel %vm864, %v10049, %v10053
      %v10055 = vshrl.u32 %v9889, 16
      %v10057 = vrot.slane %v10055, 4
      %v10058 = vor.u32 %v10057, %v10053
      %v10059 = vrot.slane %v10058, 4
      %v10061 = vshll.u32 %v9890, 16
      %v10063 = vrot.slane %v10061, 5
      %v10064 = vsel %vm864, %v10059, %v10063
      %v10066 = vshrl.u32 %v9891, 16
      %v10068 = vrot.slane %v10066, 4
      %v10069 = vshll.u32 %v9891, 16
      %v10071 = vrot.slane %v10069, 5
      %v10072 = vor.u32 %v10068, %v10071
      %v10073 = vrot.slane %v10072, 4
      %v10075 = vshll.u32 %v9892, 16
      %v10077 = vrot.slane %v10075, 5
      %v10078 = vsel %vm864, %v10073, %v10077
      %v10079 = vshrl.u32 %v9892, 16
      %v10081 = vrot.slane %v10079, 4
      %v10082 = vor.u32 %v10081, %v10077
      %v10083 = vrot.slane %v10082, 4
      %v10085 = vshll.u32 %v9893, 16
      %v10087 = vrot.slane %v10085, 5
      %v10088 = vsel %vm864, %v10083, %v10087
      %v10090 = vshrl.u32 %v9894, 16
      %v10092 = vrot.slane %v10090, 4
      %v10093 = vshll.u32 %v9894, 16
      %v10095 = vrot.slane %v10093, 5
      %v10096 = vor.u32 %v10092, %v10095
      %v10097 = vrot.slane %v10096, 4
      %v10099 = vshll.u32 %v9895, 16
      %v10101 = vrot.slane %v10099, 5
      %v10102 = vsel %vm864, %v10097, %v10101
      %v10103 = vshrl.u32 %v9895, 16
      %v10105 = vrot.slane %v10103, 4
      %v10106 = vor.u32 %v10105, %v10101
      %v10107 = vrot.slane %v10106, 4
      %v10109 = vshll.u32 %v9896, 16
      %v10111 = vrot.slane %v10109, 5
      %v10112 = vsel %vm864, %v10107, %v10111
      %v10114 = vshrl.u32 %v9897, 16
      %v10116 = vrot.slane %v10114, 4
      %v10117 = vshll.u32 %v9897, 16
      %v10119 = vrot.slane %v10117, 5
      %v10120 = vor.u32 %v10116, %v10119
      %v10121 = vrot.slane %v10120, 4
      %v10123 = vshll.u32 %v9898, 16
      %v10125 = vrot.slane %v10123, 5
      %v10126 = vsel %vm864, %v10121, %v10125
      %v10127 = vshrl.u32 %v9898, 16
      %v10129 = vrot.slane %v10127, 4
      %v10130 = vor.u32 %v10129, %v10125
      %v10131 = vrot.slane %v10130, 4
      %v10133 = vshll.u32 %v9899, 16
      %v10135 = vrot.slane %v10133, 5
      %v10136 = vsel %vm864, %v10131, %v10135
      %v10138 = vshrl.u32 %v9900, 16
      %v10140 = vrot.slane %v10138, 4
      %v10141 = vshll.u32 %v9900, 16
      %v10143 = vrot.slane %v10141, 5
      %v10144 = vor.u32 %v10140, %v10143
      %v10145 = vrot.slane %v10144, 4
      %v10147 = vshll.u32 %v9901, 16
      %v10149 = vrot.slane %v10147, 5
      %v10150 = vsel %vm864, %v10145, %v10149
      %v10151 = vshrl.u32 %v9901, 16
      %v10153 = vrot.slane %v10151, 4
      %v10154 = vor.u32 %v10153, %v10149
      %v10155 = vrot.slane %v10154, 4
      %v10157 = vshll.u32 %v9902, 16
      %v10159 = vrot.slane %v10157, 5
      %v10160 = vsel %vm864, %v10155, %v10159
      %v10162 = vshrl.u32 %v9903, 16
      %v10164 = vrot.slane %v10162, 4
      %v10165 = vshll.u32 %v9903, 16
      %v10167 = vrot.slane %v10165, 5
      %v10168 = vor.u32 %v10164, %v10167
      %v10169 = vrot.slane %v10168, 4
      %v10171 = vshll.u32 %v9904, 16
      %v10173 = vrot.slane %v10171, 5
      %v10174 = vsel %vm864, %v10169, %v10173
      %v10175 = vshrl.u32 %v9904, 16
      %v10177 = vrot.slane %v10175, 4
      %v10178 = vor.u32 %v10177, %v10173
      %v10179 = vrot.slane %v10178, 4
      %v10181 = vshll.u32 %v9905, 16
      %v10183 = vrot.slane %v10181, 5
      %v10184 = vsel %vm864, %v10179, %v10183
      %v10186 = vshrl.u32 %v9906, 16
      %v10188 = vrot.slane %v10186, 4
      %v10189 = vshll.u32 %v9906, 16
      %v10191 = vrot.slane %v10189, 5
      %v10192 = vor.u32 %v10188, %v10191
      %v10193 = vrot.slane %v10192, 4
      %v10195 = vshll.u32 %v9907, 16
      %v10197 = vrot.slane %v10195, 5
      %v10198 = vsel %vm864, %v10193, %v10197
      %v10199 = vshrl.u32 %v9907, 16
      %v10201 = vrot.slane %v10199, 4
      %v10202 = vor.u32 %v10201, %v10197
      %v10203 = vrot.slane %v10202, 4
      %v10205 = vshll.u32 %v9908, 16
      %v10207 = vrot.slane %v10205, 5
      %v10208 = vsel %vm864, %v10203, %v10207
      %v10210 = vshrl.u32 %v9909, 16
      %v10212 = vrot.slane %v10210, 4
      %v10213 = vshll.u32 %v9909, 16
      %v10215 = vrot.slane %v10213, 5
      %v10216 = vor.u32 %v10212, %v10215
      %v10217 = vrot.slane %v10216, 4
      %v10219 = vshll.u32 %v9910, 16
      %v10221 = vrot.slane %v10219, 5
      %v10222 = vsel %vm864, %v10217, %v10221
      %v10223 = vshrl.u32 %v9910, 16
      %v10225 = vrot.slane %v10223, 4
      %v10226 = vor.u32 %v10225, %v10221
      %v10227 = vrot.slane %v10226, 4
      %v10229 = vshll.u32 %v9911, 16
      %v10231 = vrot.slane %v10229, 5
      %v10232 = vsel %vm864, %v10227, %v10231
      %v10234 = vshrl.u32 %v9912, 16
      %v10236 = vrot.slane %v10234, 4
      %v10237 = vshll.u32 %v9912, 16
      %v10239 = vrot.slane %v10237, 5
      %v10240 = vor.u32 %v10236, %v10239
      %v10241 = vrot.slane %v10240, 4
      %v10243 = vshll.u32 %v9913, 16
      %v10245 = vrot.slane %v10243, 5
      %v10246 = vsel %vm864, %v10241, %v10245
      %v10247 = vshrl.u32 %v9913, 16
      %v10249 = vrot.slane %v10247, 4
      %v10250 = vor.u32 %v10249, %v10245
      %v10251 = vrot.slane %v10250, 4
      %v10253 = vshll.u32 %v9914, 16
      %v10255 = vrot.slane %v10253, 5
      %v10256 = vsel %vm864, %v10251, %v10255
      %v10258 = vshrl.u32 %v9915, 16
      %v10260 = vrot.slane %v10258, 4
      %v10261 = vshll.u32 %v9915, 16
      %v10263 = vrot.slane %v10261, 5
      %v10264 = vor.u32 %v10260, %v10263
      %v10265 = vrot.slane %v10264, 4
      %v10267 = vshll.u32 %v9916, 16
      %v10269 = vrot.slane %v10267, 5
      %v10270 = vsel %vm864, %v10265, %v10269
      %v10271 = vshrl.u32 %v9916, 16
      %v10273 = vrot.slane %v10271, 4
      %v10274 = vor.u32 %v10273, %v10269
      %v10275 = vrot.slane %v10274, 4
      %v10277 = vshll.u32 %v9917, 16
      %v10279 = vrot.slane %v10277, 5
      %v10280 = vsel %vm864, %v10275, %v10279
      %v10282 = vshrl.u32 %v9918, 16
      %v10284 = vrot.slane %v10282, 4
      %v10285 = vshll.u32 %v9918, 16
      %v10287 = vrot.slane %v10285, 5
      %v10288 = vor.u32 %v10284, %v10287
      %v10289 = vrot.slane %v10288, 4
      %v10291 = vshll.u32 %v9919, 16
      %v10293 = vrot.slane %v10291, 5
      %v10294 = vsel %vm864, %v10289, %v10293
      %v10295 = vshrl.u32 %v9919, 16
      %v10297 = vrot.slane %v10295, 4
      %v10298 = vor.u32 %v10297, %v10293
      %v10299 = vrot.slane %v10298, 4
      %v10301 = vshll.u32 %v9920, 16
      %v10303 = vrot.slane %v10301, 5
      %v10304 = vsel %vm864, %v10299, %v10303
      %s10305 = scalar_lea.vmem %s3, 448
      %v10306 = vld [vmem:[%s10305] sm:$0xf]
      %v10307 = vld [vmem:[%s10305 + $0x4] sm:$0xf]
      %v10308 = vld [vmem:[%s10305 + $0x8] sm:$0xf]
      %v10309 = vld [vmem:[%s10305 + $0xc] sm:$0xf]
      %v10310 = vld [vmem:[%s10305 + $0x10] sm:$0xf]
      %v10311 = vld [vmem:[%s10305 + $0x14] sm:$0xf]
      %v10312 = vld [vmem:[%s10305 + $0x18] sm:$0xf]
      %v10313 = vld [vmem:[%s10305 + $0x1c] sm:$0xf]
      %v10314 = vld [vmem:[%s10305 + $0x20] sm:$0xf]
      %v10315 = vld [vmem:[%s10305 + $0x24] sm:$0xf]
      %v10316 = vld [vmem:[%s10305 + $0x28] sm:$0xf]
      %v10317 = vld [vmem:[%s10305 + $0x2c] sm:$0xf]
      %v10318 = vld [vmem:[%s10305 + $0x30] sm:$0xf]
      %v10319 = vld [vmem:[%s10305 + $0x34] sm:$0xf]
      %v10320 = vld [vmem:[%s10305 + $0x38] sm:$0xf]
      %v10321 = vld [vmem:[%s10305 + $0x3c] sm:$0xf]
      %v10322 = vunpack.c.l.b16 %v9934
      %v10323 = vunpack.c.l.b16 %v9944
      %v10324 = vunpack.c.l.b16 %v9958
      %v10325 = vunpack.c.l.b16 %v9968
      %v10326 = vunpack.c.l.b16 %v9982
      %v10327 = vunpack.c.l.b16 %v9992
      %v10328 = vunpack.c.l.b16 %v10006
      %v10329 = vunpack.c.l.b16 %v10016
      %v10330 = vunpack.c.l.b16 %v10030
      %v10331 = vunpack.c.l.b16 %v10040
      %v10332 = vunpack.c.l.b16 %v10054
      %v10333 = vunpack.c.l.b16 %v10064
      %v10334 = vunpack.c.l.b16 %v10078
      %v10335 = vunpack.c.l.b16 %v10088
      %v10336 = vunpack.c.l.b16 %v10102
      %v10337 = vunpack.c.l.b16 %v10112
      %v10338 = vunpack.c.l.b16 %v10126
      %v10339 = vunpack.c.l.b16 %v10136
      %v10340 = vunpack.c.l.b16 %v10150
      %v10341 = vunpack.c.l.b16 %v10160
      %v10342 = vunpack.c.l.b16 %v10174
      %v10343 = vunpack.c.l.b16 %v10184
      %v10344 = vunpack.c.l.b16 %v10198
      %v10345 = vunpack.c.l.b16 %v10208
      %v10346 = vunpack.c.l.b16 %v10222
      %v10347 = vunpack.c.l.b16 %v10232
      %v10348 = vunpack.c.l.b16 %v10246
      %v10349 = vunpack.c.l.b16 %v10256
      %v10350 = vunpack.c.l.b16 %v10270
      %v10351 = vunpack.c.l.b16 %v10280
      %v10352 = vunpack.c.l.b16 %v10294
      %v10353 = vunpack.c.l.b16 %v10304
      %v10354 = vpack.c.b16 %v10323, %v10322
      %v10355 = vpack.c.b16 %v10325, %v10324
      %v10356 = vpack.c.b16 %v10327, %v10326
      %v10357 = vpack.c.b16 %v10329, %v10328
      %v10358 = vpack.c.b16 %v10331, %v10330
      %v10359 = vpack.c.b16 %v10333, %v10332
      %v10360 = vpack.c.b16 %v10335, %v10334
      %v10361 = vpack.c.b16 %v10337, %v10336
      %v10362 = vpack.c.b16 %v10339, %v10338
      %v10363 = vpack.c.b16 %v10341, %v10340
      %v10364 = vpack.c.b16 %v10343, %v10342
      %v10365 = vpack.c.b16 %v10345, %v10344
      %v10366 = vpack.c.b16 %v10347, %v10346
      %v10367 = vpack.c.b16 %v10349, %v10348
      %v10368 = vpack.c.b16 %v10351, %v10350
      %v10369 = vpack.c.b16 %v10353, %v10352
      %v10402 = vunpack.c.l.b16 %v10306
      %v10403 = vunpack.c.l.b16 %v10307
      %v10404 = vunpack.c.l.b16 %v10308
      %v10405 = vunpack.c.l.b16 %v10309
      %v10406 = vunpack.c.l.b16 %v10310
      %v10407 = vunpack.c.l.b16 %v10311
      %v10408 = vunpack.c.l.b16 %v10312
      %v10409 = vunpack.c.l.b16 %v10313
      %v10410 = vunpack.c.l.b16 %v10314
      %v10411 = vunpack.c.l.b16 %v10315
      %v10412 = vunpack.c.l.b16 %v10316
      %v10413 = vunpack.c.l.b16 %v10317
      %v10414 = vunpack.c.l.b16 %v10318
      %v10415 = vunpack.c.l.b16 %v10319
      %v10416 = vunpack.c.l.b16 %v10320
      %v10417 = vunpack.c.l.b16 %v10321
      %v10418 = vpack.c.b16 %v10403, %v10402
      %v10419 = vpack.c.b16 %v10405, %v10404
      %v10420 = vpack.c.b16 %v10407, %v10406
      %v10421 = vpack.c.b16 %v10409, %v10408
      %v10422 = vpack.c.b16 %v10411, %v10410
      %v10423 = vpack.c.b16 %v10413, %v10412
      %v10424 = vpack.c.b16 %v10415, %v10414
      %v10425 = vpack.c.b16 %v10417, %v10416
      %10434 = vmatprep.subr.bf16.mxu0 0
      %10435 = vmatpush1.bf16.msra.mxu0 %v10418
      %10436 = vmatprep.subr.bf16.mxu0 0
      %10437 = vmatpush1.bf16.msra.mxu0 %v10419
      %10438 = vmatprep.subr.bf16.mxu0 0
      %10439 = vmatpush1.bf16.msra.mxu0 %v10420
      %10440 = vmatprep.subr.bf16.mxu0 0
      %10441 = vmatpush1.bf16.msra.mxu0 %v10421
      %10442 = vmatprep.subr.bf16.mxu0 0
      %10443 = vmatpush1.bf16.msra.mxu0 %v10422
      %10444 = vmatprep.subr.bf16.mxu0 0
      %10445 = vmatpush1.bf16.msra.mxu0 %v10423
      %10446 = vmatprep.subr.bf16.mxu0 0
      %10447 = vmatpush1.bf16.msra.mxu0 %v10424
      %10448 = vmatprep.subr.bf16.mxu0 0
      %10449 = vmatpush1.bf16.msra.mxu0 %v10425
      %10450 = vmatprep.subr.bf16.mxu0 0
      %10451 = vmatpush1.bf16.msra.mxu0 0
      %10452 = vmatprep.subr.bf16.mxu0 0
      %10453 = vmatpush1.bf16.msra.mxu0 0
      %10454 = vmatprep.subr.bf16.mxu0 0
      %10455 = vmatpush1.bf16.msra.mxu0 0
      %10456 = vmatprep.subr.bf16.mxu0 0
      %10457 = vmatpush1.bf16.msra.mxu0 0
      %10458 = vmatprep.subr.bf16.mxu0 0
      %10459 = vmatpush1.bf16.msra.mxu0 0
      %10460 = vmatprep.subr.bf16.mxu0 0
      %10461 = vmatpush1.bf16.msra.mxu0 0
      %10462 = vmatprep.subr.bf16.mxu0 0
      %10463 = vmatpush1.bf16.msra.mxu0 0
      %10464 = vmatprep.subr.bf16.mxu0 0
      %10465 = vmatpush1.bf16.msra.mxu0 0
      %10466 = vmatprep.mubr.bf16.mxu0 0
      %10467 = vmatmul.mubr.bf16.gmra.mrb[0].mxu0 %v10354
      %v10468 = vpop.f32.mrb[0].mxu0
      %v10469 = vadd.f32 0.0, %v10468
      %v10470 = vpop.f32.mrb[0].mxu0
      %v10471 = vpop.f32.mrb[0].mxu0
      %v10472 = vadd.f32 0.0, %v10471
      %v10473 = vpop.f32.mrb[0].mxu0
      %10474 = vmatprep.mubr.bf16.mxu0 0
      %10475 = vmatmul.mubr.bf16.gmra.mrb[0].mxu0 %v10355
      %v10476 = vpop.f32.mrb[0].mxu0
      %v10477 = vadd.f32 0.0, %v10476
      %v10478 = vpop.f32.mrb[0].mxu0
      %v10479 = vpop.f32.mrb[0].mxu0
      %v10480 = vadd.f32 0.0, %v10479
      %v10481 = vpop.f32.mrb[0].mxu0
      %10482 = vmatprep.mubr.bf16.mxu0 0
      %10483 = vmatmul.mubr.bf16.gmra.mrb[0].mxu0 %v10356
      %v10484 = vpop.f32.mrb[0].mxu0
      %v10485 = vadd.f32 0.0, %v10484
      %v10486 = vpop.f32.mrb[0].mxu0
      %v10487 = vpop.f32.mrb[0].mxu0
      %v10488 = vadd.f32 0.0, %v10487
      %v10489 = vpop.f32.mrb[0].mxu0
      %10490 = vmatprep.mubr.bf16.mxu0 0
      %10491 = vmatmul.mubr.bf16.gmra.mrb[0].mxu0 %v10357
      %v10492 = vpop.f32.mrb[0].mxu0
      %v10493 = vadd.f32 0.0, %v10492
      %v10494 = vpop.f32.mrb[0].mxu0
      %v10495 = vpop.f32.mrb[0].mxu0
      %v10496 = vadd.f32 0.0, %v10495
      %v10497 = vpop.f32.mrb[0].mxu0
      %10498 = vmatprep.mubr.bf16.mxu0 0
      %10499 = vmatmul.mubr.bf16.gmra.mrb[0].mxu0 %v10358
      %v10500 = vpop.f32.mrb[0].mxu0
      %v10501 = vadd.f32 0.0, %v10500
      %v10502 = vpop.f32.mrb[0].mxu0
      %v10503 = vpop.f32.mrb[0].mxu0
      %v10504 = vadd.f32 0.0, %v10503
      %v10505 = vpop.f32.mrb[0].mxu0
      %10506 = vmatprep.mubr.bf16.mxu0 0
      %10507 = vmatmul.mubr.bf16.gmra.mrb[0].mxu0 %v10359
      %v10508 = vpop.f32.mrb[0].mxu0
      %v10509 = vadd.f32 0.0, %v10508
      %v10510 = vpop.f32.mrb[0].mxu0
      %v10511 = vpop.f32.mrb[0].mxu0
      %v10512 = vadd.f32 0.0, %v10511
      %v10513 = vpop.f32.mrb[0].mxu0
      %10514 = vmatprep.mubr.bf16.mxu0 0
      %10515 = vmatmul.mubr.bf16.gmra.mrb[0].mxu0 %v10360
      %v10516 = vpop.f32.mrb[0].mxu0
      %v10517 = vadd.f32 0.0, %v10516
      %v10518 = vpop.f32.mrb[0].mxu0
      %v10519 = vpop.f32.mrb[0].mxu0
      %v10520 = vadd.f32 0.0, %v10519
      %v10521 = vpop.f32.mrb[0].mxu0
      %10522 = vmatprep.mubr.bf16.mxu0 0
      %10523 = vmatmul.mubr.bf16.gmra.mrb[0].mxu0 %v10361
      %v10524 = vpop.f32.mrb[0].mxu0
      %v10525 = vadd.f32 0.0, %v10524
      %v10526 = vpop.f32.mrb[0].mxu0
      %v10527 = vpop.f32.mrb[0].mxu0
      %v10528 = vadd.f32 0.0, %v10527
      %v10529 = vpop.f32.mrb[0].mxu0
      %10530 = vmatprep.mubr.bf16.mxu0 0
      %10531 = vmatmul.mubr.bf16.gmra.mrb[0].mxu0 %v10362
      %v10532 = vpop.f32.mrb[0].mxu0
      %v10533 = vadd.f32 0.0, %v10532
      %v10534 = vpop.f32.mrb[0].mxu0
      %v10535 = vpop.f32.mrb[0].mxu0
      %v10536 = vadd.f32 0.0, %v10535
      %v10537 = vpop.f32.mrb[0].mxu0
      %10538 = vmatprep.mubr.bf16.mxu0 0
      %10539 = vmatmul.mubr.bf16.gmra.mrb[0].mxu0 %v10363
      %v10540 = vpop.f32.mrb[0].mxu0
      %v10541 = vadd.f32 0.0, %v10540
      %v10542 = vpop.f32.mrb[0].mxu0
      %v10543 = vpop.f32.mrb[0].mxu0
      %v10544 = vadd.f32 0.0, %v10543
      %v10545 = vpop.f32.mrb[0].mxu0
      %10546 = vmatprep.mubr.bf16.mxu0 0
      %10547 = vmatmul.mubr.bf16.gmra.mrb[0].mxu0 %v10364
      %v10548 = vpop.f32.mrb[0].mxu0
      %v10549 = vadd.f32 0.0, %v10548
      %v10550 = vpop.f32.mrb[0].mxu0
      %v10551 = vpop.f32.mrb[0].mxu0
      %v10552 = vadd.f32 0.0, %v10551
      %v10553 = vpop.f32.mrb[0].mxu0
      %10554 = vmatprep.mubr.bf16.mxu0 0
      %10555 = vmatmul.mubr.bf16.gmra.mrb[0].mxu0 %v10365
      %v10556 = vpop.f32.mrb[0].mxu0
      %v10557 = vadd.f32 0.0, %v10556
      %v10558 = vpop.f32.mrb[0].mxu0
      %v10559 = vpop.f32.mrb[0].mxu0
      %v10560 = vadd.f32 0.0, %v10559
      %v10561 = vpop.f32.mrb[0].mxu0
      %10562 = vmatprep.mubr.bf16.mxu0 0
      %10563 = vmatmul.mubr.bf16.gmra.mrb[0].mxu0 %v10366
      %v10564 = vpop.f32.mrb[0].mxu0
      %v10565 = vadd.f32 0.0, %v10564
      %v10566 = vpop.f32.mrb[0].mxu0
      %v10567 = vpop.f32.mrb[0].mxu0
      %v10568 = vadd.f32 0.0, %v10567
      %v10569 = vpop.f32.mrb[0].mxu0
      %10570 = vmatprep.mubr.bf16.mxu0 0
      %10571 = vmatmul.mubr.bf16.gmra.mrb[0].mxu0 %v10367
      %v10572 = vpop.f32.mrb[0].mxu0
      %v10573 = vadd.f32 0.0, %v10572
      %v10574 = vpop.f32.mrb[0].mxu0
      %v10575 = vpop.f32.mrb[0].mxu0
      %v10576 = vadd.f32 0.0, %v10575
      %v10577 = vpop.f32.mrb[0].mxu0
      %10578 = vmatprep.mubr.bf16.mxu0 0
      %10579 = vmatmul.mubr.bf16.gmra.mrb[0].mxu0 %v10368
      %v10580 = vpop.f32.mrb[0].mxu0
      %v10581 = vadd.f32 0.0, %v10580
      %v10582 = vpop.f32.mrb[0].mxu0
      %v10583 = vpop.f32.mrb[0].mxu0
      %v10584 = vadd.f32 0.0, %v10583
      %v10585 = vpop.f32.mrb[0].mxu0
      %10586 = vmatprep.mubr.bf16.mxu0 0
      %10587 = vmatmul.mubr.bf16.gmra.mrb[0].mxu0 %v10369
      %v10588 = vpop.f32.mrb[0].mxu0
      %v10589 = vadd.f32 0.0, %v10588
      %v10590 = vpop.f32.mrb[0].mxu0
      %v10591 = vpop.f32.mrb[0].mxu0
      %v10592 = vadd.f32 0.0, %v10591
      %v10593 = vpop.f32.mrb[0].mxu0
      %10594 = vdwg.mxu0
      %v10595 = vadd.f32 %v9841, %v10469
      %v10596 = vadd.f32 %v9842, %v10472
      %v10597 = vadd.f32 %v9843, %v10477
      %v10598 = vadd.f32 %v9844, %v10480
      %v10599 = vadd.f32 %v9845, %v10485
      %v10600 = vadd.f32 %v9846, %v10488
      %v10601 = vadd.f32 %v9847, %v10493
      %v10602 = vadd.f32 %v9848, %v10496
      %v10603 = vadd.f32 %v9849, %v10501
      %v10604 = vadd.f32 %v9850, %v10504
      %v10605 = vadd.f32 %v9851, %v10509
      %v10606 = vadd.f32 %v9852, %v10512
      %v10607 = vadd.f32 %v9853, %v10517
      %v10608 = vadd.f32 %v9854, %v10520
      %v10609 = vadd.f32 %v9855, %v10525
      %v10610 = vadd.f32 %v9856, %v10528
      %v10611 = vadd.f32 %v9857, %v10533
      %v10612 = vadd.f32 %v9858, %v10536
      %v10613 = vadd.f32 %v9859, %v10541
      %v10614 = vadd.f32 %v9860, %v10544
      %v10615 = vadd.f32 %v9861, %v10549
      %v10616 = vadd.f32 %v9862, %v10552
      %v10617 = vadd.f32 %v9863, %v10557
      %v10618 = vadd.f32 %v9864, %v10560
      %v10619 = vadd.f32 %v9865, %v10565
      %v10620 = vadd.f32 %v9866, %v10568
      %v10621 = vadd.f32 %v9867, %v10573
      %v10622 = vadd.f32 %v9868, %v10576
      %v10623 = vadd.f32 %v9869, %v10581
      %v10624 = vadd.f32 %v9870, %v10584
      %v10625 = vadd.f32 %v9871, %v10589
      %v10626 = vadd.f32 %v9872, %v10592
      %v10627 = vld [vmem:[%s9486] sm:$0xe]
      %v10628 = vld [vmem:[%s9486 + $0xc] sm:$0xe]
      %v10629 = vld [vmem:[%s9486 + $0x18] sm:$0xe]
      %v10630 = vld [vmem:[%s9486 + $0x24] sm:$0xe]
      %v10631 = vld [vmem:[%s9486 + $0x30] sm:$0xe]
      %v10632 = vld [vmem:[%s9486 + $0x3c] sm:$0xe]
      %v10633 = vld [vmem:[%s9486 + $0x48] sm:$0xe]
      %v10634 = vld [vmem:[%s9486 + $0x54] sm:$0xe]
      %v10635 = vld [vmem:[%s9486 + $0x60] sm:$0xe]
      %v10636 = vld [vmem:[%s9486 + $0x6c] sm:$0xe]
      %v10637 = vld [vmem:[%s9486 + $0x78] sm:$0xe]
      %v10638 = vld [vmem:[%s9486 + $0x84] sm:$0xe]
      %v10639 = vld [vmem:[%s9486 + $0x90] sm:$0xe]
      %v10640 = vld [vmem:[%s9486 + $0x9c] sm:$0xe]
      %v10641 = vld [vmem:[%s9486 + $0xa8] sm:$0xe]
      %v10642 = vld [vmem:[%s9486 + $0xb4] sm:$0xe]
      %v10691 = vrot.slane %v10627, 5
      %v10692 = vrot.slane %v10691, 4
      %v10693 = vrot.slane %v9874, 5
      %v10694 = vsel %vm1903, %v10692, %v10693
      %v10695 = vrot.slane %v10693, 4
      %v10696 = vrot.slane %v9875, 5
      %v10697 = vsel %vm1903, %v10695, %v10696
      %v10698 = vrot.slane %v10628, 5
      %v10699 = vrot.slane %v10698, 4
      %v10700 = vrot.slane %v9877, 5
      %v10701 = vsel %vm1903, %v10699, %v10700
      %v10702 = vrot.slane %v10700, 4
      %v10703 = vrot.slane %v9878, 5
      %v10704 = vsel %vm1903, %v10702, %v10703
      %v10705 = vrot.slane %v10629, 5
      %v10706 = vrot.slane %v10705, 4
      %v10707 = vrot.slane %v9880, 5
      %v10708 = vsel %vm1903, %v10706, %v10707
      %v10709 = vrot.slane %v10707, 4
      %v10710 = vrot.slane %v9881, 5
      %v10711 = vsel %vm1903, %v10709, %v10710
      %v10712 = vrot.slane %v10630, 5
      %v10713 = vrot.slane %v10712, 4
      %v10714 = vrot.slane %v9883, 5
      %v10715 = vsel %vm1903, %v10713, %v10714
      %v10716 = vrot.slane %v10714, 4
      %v10717 = vrot.slane %v9884, 5
      %v10718 = vsel %vm1903, %v10716, %v10717
      %v10719 = vrot.slane %v10631, 5
      %v10720 = vrot.slane %v10719, 4
      %v10721 = vrot.slane %v9886, 5
      %v10722 = vsel %vm1903, %v10720, %v10721
      %v10723 = vrot.slane %v10721, 4
      %v10724 = vrot.slane %v9887, 5
      %v10725 = vsel %vm1903, %v10723, %v10724
      %v10726 = vrot.slane %v10632, 5
      %v10727 = vrot.slane %v10726, 4
      %v10728 = vrot.slane %v9889, 5
      %v10729 = vsel %vm1903, %v10727, %v10728
      %v10730 = vrot.slane %v10728, 4
      %v10731 = vrot.slane %v9890, 5
      %v10732 = vsel %vm1903, %v10730, %v10731
      %v10733 = vrot.slane %v10633, 5
      %v10734 = vrot.slane %v10733, 4
      %v10735 = vrot.slane %v9892, 5
      %v10736 = vsel %vm1903, %v10734, %v10735
      %v10737 = vrot.slane %v10735, 4
      %v10738 = vrot.slane %v9893, 5
      %v10739 = vsel %vm1903, %v10737, %v10738
      %v10740 = vrot.slane %v10634, 5
      %v10741 = vrot.slane %v10740, 4
      %v10742 = vrot.slane %v9895, 5
      %v10743 = vsel %vm1903, %v10741, %v10742
      %v10744 = vrot.slane %v10742, 4
      %v10745 = vrot.slane %v9896, 5
      %v10746 = vsel %vm1903, %v10744, %v10745
      %v10747 = vrot.slane %v10635, 5
      %v10748 = vrot.slane %v10747, 4
      %v10749 = vrot.slane %v9898, 5
      %v10750 = vsel %vm1903, %v10748, %v10749
      %v10751 = vrot.slane %v10749, 4
      %v10752 = vrot.slane %v9899, 5
      %v10753 = vsel %vm1903, %v10751, %v10752
      %v10754 = vrot.slane %v10636, 5
      %v10755 = vrot.slane %v10754, 4
      %v10756 = vrot.slane %v9901, 5
      %v10757 = vsel %vm1903, %v10755, %v10756
      %v10758 = vrot.slane %v10756, 4
      %v10759 = vrot.slane %v9902, 5
      %v10760 = vsel %vm1903, %v10758, %v10759
      %v10761 = vrot.slane %v10637, 5
      %v10762 = vrot.slane %v10761, 4
      %v10763 = vrot.slane %v9904, 5
      %v10764 = vsel %vm1903, %v10762, %v10763
      %v10765 = vrot.slane %v10763, 4
      %v10766 = vrot.slane %v9905, 5
      %v10767 = vsel %vm1903, %v10765, %v10766
      %v10768 = vrot.slane %v10638, 5
      %v10769 = vrot.slane %v10768, 4
      %v10770 = vrot.slane %v9907, 5
      %v10771 = vsel %vm1903, %v10769, %v10770
      %v10772 = vrot.slane %v10770, 4
      %v10773 = vrot.slane %v9908, 5
      %v10774 = vsel %vm1903, %v10772, %v10773
      %v10775 = vrot.slane %v10639, 5
      %v10776 = vrot.slane %v10775, 4
      %v10777 = vrot.slane %v9910, 5
      %v10778 = vsel %vm1903, %v10776, %v10777
      %v10779 = vrot.slane %v10777, 4
      %v10780 = vrot.slane %v9911, 5
      %v10781 = vsel %vm1903, %v10779, %v10780
      %v10782 = vrot.slane %v10640, 5
      %v10783 = vrot.slane %v10782, 4
      %v10784 = vrot.slane %v9913, 5
      %v10785 = vsel %vm1903, %v10783, %v10784
      %v10786 = vrot.slane %v10784, 4
      %v10787 = vrot.slane %v9914, 5
      %v10788 = vsel %vm1903, %v10786, %v10787
      %v10789 = vrot.slane %v10641, 5
      %v10790 = vrot.slane %v10789, 4
      %v10791 = vrot.slane %v9916, 5
      %v10792 = vsel %vm1903, %v10790, %v10791
      %v10793 = vrot.slane %v10791, 4
      %v10794 = vrot.slane %v9917, 5
      %v10795 = vsel %vm1903, %v10793, %v10794
      %v10796 = vrot.slane %v10642, 5
      %v10797 = vrot.slane %v10796, 4
      %v10798 = vrot.slane %v9919, 5
      %v10799 = vsel %vm1903, %v10797, %v10798
      %v10800 = vrot.slane %v10798, 4
      %v10801 = vrot.slane %v9920, 5
      %v10802 = vsel %vm1903, %v10800, %v10801
      %s10803 = scalar_lea.vmem %s3, 512
      %v10804 = vld [vmem:[%s10803] sm:$0xf]
      %v10805 = vld [vmem:[%s10803 + $0x4] sm:$0xf]
      %v10806 = vld [vmem:[%s10803 + $0x8] sm:$0xf]
      %v10807 = vld [vmem:[%s10803 + $0xc] sm:$0xf]
      %v10808 = vld [vmem:[%s10803 + $0x10] sm:$0xf]
      %v10809 = vld [vmem:[%s10803 + $0x14] sm:$0xf]
      %v10810 = vld [vmem:[%s10803 + $0x18] sm:$0xf]
      %v10811 = vld [vmem:[%s10803 + $0x1c] sm:$0xf]
      %v10812 = vld [vmem:[%s10803 + $0x20] sm:$0xf]
      %v10813 = vld [vmem:[%s10803 + $0x24] sm:$0xf]
      %v10814 = vld [vmem:[%s10803 + $0x28] sm:$0xf]
      %v10815 = vld [vmem:[%s10803 + $0x2c] sm:$0xf]
      %v10816 = vld [vmem:[%s10803 + $0x30] sm:$0xf]
      %v10817 = vld [vmem:[%s10803 + $0x34] sm:$0xf]
      %v10818 = vld [vmem:[%s10803 + $0x38] sm:$0xf]
      %v10819 = vld [vmem:[%s10803 + $0x3c] sm:$0xf]
      %v10820 = vunpack.c.l.b16 %v10694
      %v10821 = vunpack.c.l.b16 %v10697
      %v10822 = vunpack.c.l.b16 %v10701
      %v10823 = vunpack.c.l.b16 %v10704
      %v10824 = vunpack.c.l.b16 %v10708
      %v10825 = vunpack.c.l.b16 %v10711
      %v10826 = vunpack.c.l.b16 %v10715
      %v10827 = vunpack.c.l.b16 %v10718
      %v10828 = vunpack.c.l.b16 %v10722
      %v10829 = vunpack.c.l.b16 %v10725
      %v10830 = vunpack.c.l.b16 %v10729
      %v10831 = vunpack.c.l.b16 %v10732
      %v10832 = vunpack.c.l.b16 %v10736
      %v10833 = vunpack.c.l.b16 %v10739
      %v10834 = vunpack.c.l.b16 %v10743
      %v10835 = vunpack.c.l.b16 %v10746
      %v10836 = vunpack.c.l.b16 %v10750
      %v10837 = vunpack.c.l.b16 %v10753
      %v10838 = vunpack.c.l.b16 %v10757
      %v10839 = vunpack.c.l.b16 %v10760
      %v10840 = vunpack.c.l.b16 %v10764
      %v10841 = vunpack.c.l.b16 %v10767
      %v10842 = vunpack.c.l.b16 %v10771
      %v10843 = vunpack.c.l.b16 %v10774
      %v10844 = vunpack.c.l.b16 %v10778
      %v10845 = vunpack.c.l.b16 %v10781
      %v10846 = vunpack.c.l.b16 %v10785
      %v10847 = vunpack.c.l.b16 %v10788
      %v10848 = vunpack.c.l.b16 %v10792
      %v10849 = vunpack.c.l.b16 %v10795
      %v10850 = vunpack.c.l.b16 %v10799
      %v10851 = vunpack.c.l.b16 %v10802
      %v10852 = vpack.c.b16 %v10821, %v10820
      %v10853 = vpack.c.b16 %v10823, %v10822
      %v10854 = vpack.c.b16 %v10825, %v10824
      %v10855 = vpack.c.b16 %v10827, %v10826
      %v10856 = vpack.c.b16 %v10829, %v10828
      %v10857 = vpack.c.b16 %v10831, %v10830
      %v10858 = vpack.c.b16 %v10833, %v10832
      %v10859 = vpack.c.b16 %v10835, %v10834
      %v10860 = vpack.c.b16 %v10837, %v10836
      %v10861 = vpack.c.b16 %v10839, %v10838
      %v10862 = vpack.c.b16 %v10841, %v10840
      %v10863 = vpack.c.b16 %v10843, %v10842
      %v10864 = vpack.c.b16 %v10845, %v10844
      %v10865 = vpack.c.b16 %v10847, %v10846
      %v10866 = vpack.c.b16 %v10849, %v10848
      %v10867 = vpack.c.b16 %v10851, %v10850
      %v10900 = vunpack.c.l.b16 %v10804
      %v10901 = vunpack.c.l.b16 %v10805
      %v10902 = vunpack.c.l.b16 %v10806
      %v10903 = vunpack.c.l.b16 %v10807
      %v10904 = vunpack.c.l.b16 %v10808
      %v10905 = vunpack.c.l.b16 %v10809
      %v10906 = vunpack.c.l.b16 %v10810
      %v10907 = vunpack.c.l.b16 %v10811
      %v10908 = vunpack.c.l.b16 %v10812
      %v10909 = vunpack.c.l.b16 %v10813
      %v10910 = vunpack.c.l.b16 %v10814
      %v10911 = vunpack.c.l.b16 %v10815
      %v10912 = vunpack.c.l.b16 %v10816
      %v10913 = vunpack.c.l.b16 %v10817
      %v10914 = vunpack.c.l.b16 %v10818
      %v10915 = vunpack.c.l.b16 %v10819
      %v10916 = vpack.c.b16 %v10901, %v10900
      %v10917 = vpack.c.b16 %v10903, %v10902
      %v10918 = vpack.c.b16 %v10905, %v10904
      %v10919 = vpack.c.b16 %v10907, %v10906
      %v10920 = vpack.c.b16 %v10909, %v10908
      %v10921 = vpack.c.b16 %v10911, %v10910
      %v10922 = vpack.c.b16 %v10913, %v10912
      %v10923 = vpack.c.b16 %v10915, %v10914
      %10932 = vmatprep.subr.bf16.mxu0 0
      %10933 = vmatpush1.bf16.msra.mxu0 %v10916
      %10934 = vmatprep.subr.bf16.mxu0 0
      %10935 = vmatpush1.bf16.msra.mxu0 %v10917
      %10936 = vmatprep.subr.bf16.mxu0 0
      %10937 = vmatpush1.bf16.msra.mxu0 %v10918
      %10938 = vmatprep.subr.bf16.mxu0 0
      %10939 = vmatpush1.bf16.msra.mxu0 %v10919
      %10940 = vmatprep.subr.bf16.mxu0 0
      %10941 = vmatpush1.bf16.msra.mxu0 %v10920
      %10942 = vmatprep.subr.bf16.mxu0 0
      %10943 = vmatpush1.bf16.msra.mxu0 %v10921
      %10944 = vmatprep.subr.bf16.mxu0 0
      %10945 = vmatpush1.bf16.msra.mxu0 %v10922
      %10946 = vmatprep.subr.bf16.mxu0 0
      %10947 = vmatpush1.bf16.msra.mxu0 %v10923
      %10948 = vmatprep.subr.bf16.mxu0 0
      %10949 = vmatpush1.bf16.msra.mxu0 0
      %10950 = vmatprep.subr.bf16.mxu0 0
      %10951 = vmatpush1.bf16.msra.mxu0 0
      %10952 = vmatprep.subr.bf16.mxu0 0
      %10953 = vmatpush1.bf16.msra.mxu0 0
      %10954 = vmatprep.subr.bf16.mxu0 0
      %10955 = vmatpush1.bf16.msra.mxu0 0
      %10956 = vmatprep.subr.bf16.mxu0 0
      %10957 = vmatpush1.bf16.msra.mxu0 0
      %10958 = vmatprep.subr.bf16.mxu0 0
      %10959 = vmatpush1.bf16.msra.mxu0 0
      %10960 = vmatprep.subr.bf16.mxu0 0
      %10961 = vmatpush1.bf16.msra.mxu0 0
      %10962 = vmatprep.subr.bf16.mxu0 0
      %10963 = vmatpush1.bf16.msra.mxu0 0
      %10964 = vmatprep.mubr.bf16.mxu0 0
      %10965 = vmatmul.mubr.bf16.gmra.mrb[0].mxu0 %v10852
      %v10966 = vpop.f32.mrb[0].mxu0
      %v10967 = vadd.f32 0.0, %v10966
      %v10968 = vpop.f32.mrb[0].mxu0
      %v10969 = vpop.f32.mrb[0].mxu0
      %v10970 = vadd.f32 0.0, %v10969
      %v10971 = vpop.f32.mrb[0].mxu0
      %10972 = vmatprep.mubr.bf16.mxu0 0
      %10973 = vmatmul.mubr.bf16.gmra.mrb[0].mxu0 %v10853
      %v10974 = vpop.f32.mrb[0].mxu0
      %v10975 = vadd.f32 0.0, %v10974
      %v10976 = vpop.f32.mrb[0].mxu0
      %v10977 = vpop.f32.mrb[0].mxu0
      %v10978 = vadd.f32 0.0, %v10977
      %v10979 = vpop.f32.mrb[0].mxu0
      %10980 = vmatprep.mubr.bf16.mxu0 0
      %10981 = vmatmul.mubr.bf16.gmra.mrb[0].mxu0 %v10854
      %v10982 = vpop.f32.mrb[0].mxu0
      %v10983 = vadd.f32 0.0, %v10982
      %v10984 = vpop.f32.mrb[0].mxu0
      %v10985 = vpop.f32.mrb[0].mxu0
      %v10986 = vadd.f32 0.0, %v10985
      %v10987 = vpop.f32.mrb[0].mxu0
      %10988 = vmatprep.mubr.bf16.mxu0 0
      %10989 = vmatmul.mubr.bf16.gmra.mrb[0].mxu0 %v10855
      %v10990 = vpop.f32.mrb[0].mxu0
      %v10991 = vadd.f32 0.0, %v10990
      %v10992 = vpop.f32.mrb[0].mxu0
      %v10993 = vpop.f32.mrb[0].mxu0
      %v10994 = vadd.f32 0.0, %v10993
      %v10995 = vpop.f32.mrb[0].mxu0
      %10996 = vmatprep.mubr.bf16.mxu0 0
      %10997 = vmatmul.mubr.bf16.gmra.mrb[0].mxu0 %v10856
      %v10998 = vpop.f32.mrb[0].mxu0
      %v10999 = vadd.f32 0.0, %v10998
      %v11000 = vpop.f32.mrb[0].mxu0
      %v11001 = vpop.f32.mrb[0].mxu0
      %v11002 = vadd.f32 0.0, %v11001
      %v11003 = vpop.f32.mrb[0].mxu0
      %11004 = vmatprep.mubr.bf16.mxu0 0
      %11005 = vmatmul.mubr.bf16.gmra.mrb[0].mxu0 %v10857
      %v11006 = vpop.f32.mrb[0].mxu0
      %v11007 = vadd.f32 0.0, %v11006
      %v11008 = vpop.f32.mrb[0].mxu0
      %v11009 = vpop.f32.mrb[0].mxu0
      %v11010 = vadd.f32 0.0, %v11009
      %v11011 = vpop.f32.mrb[0].mxu0
      %11012 = vmatprep.mubr.bf16.mxu0 0
      %11013 = vmatmul.mubr.bf16.gmra.mrb[0].mxu0 %v10858
      %v11014 = vpop.f32.mrb[0].mxu0
      %v11015 = vadd.f32 0.0, %v11014
      %v11016 = vpop.f32.mrb[0].mxu0
      %v11017 = vpop.f32.mrb[0].mxu0
      %v11018 = vadd.f32 0.0, %v11017
      %v11019 = vpop.f32.mrb[0].mxu0
      %11020 = vmatprep.mubr.bf16.mxu0 0
      %11021 = vmatmul.mubr.bf16.gmra.mrb[0].mxu0 %v10859
      %v11022 = vpop.f32.mrb[0].mxu0
      %v11023 = vadd.f32 0.0, %v11022
      %v11024 = vpop.f32.mrb[0].mxu0
      %v11025 = vpop.f32.mrb[0].mxu0
      %v11026 = vadd.f32 0.0, %v11025
      %v11027 = vpop.f32.mrb[0].mxu0
      %11028 = vmatprep.mubr.bf16.mxu0 0
      %11029 = vmatmul.mubr.bf16.gmra.mrb[0].mxu0 %v10860
      %v11030 = vpop.f32.mrb[0].mxu0
      %v11031 = vadd.f32 0.0, %v11030
      %v11032 = vpop.f32.mrb[0].mxu0
      %v11033 = vpop.f32.mrb[0].mxu0
      %v11034 = vadd.f32 0.0, %v11033
      %v11035 = vpop.f32.mrb[0].mxu0
      %11036 = vmatprep.mubr.bf16.mxu0 0
      %11037 = vmatmul.mubr.bf16.gmra.mrb[0].mxu0 %v10861
      %v11038 = vpop.f32.mrb[0].mxu0
      %v11039 = vadd.f32 0.0, %v11038
      %v11040 = vpop.f32.mrb[0].mxu0
      %v11041 = vpop.f32.mrb[0].mxu0
      %v11042 = vadd.f32 0.0, %v11041
      %v11043 = vpop.f32.mrb[0].mxu0
      %11044 = vmatprep.mubr.bf16.mxu0 0
      %11045 = vmatmul.mubr.bf16.gmra.mrb[0].mxu0 %v10862
      %v11046 = vpop.f32.mrb[0].mxu0
      %v11047 = vadd.f32 0.0, %v11046
      %v11048 = vpop.f32.mrb[0].mxu0
      %v11049 = vpop.f32.mrb[0].mxu0
      %v11050 = vadd.f32 0.0, %v11049
      %v11051 = vpop.f32.mrb[0].mxu0
      %11052 = vmatprep.mubr.bf16.mxu0 0
      %11053 = vmatmul.mubr.bf16.gmra.mrb[0].mxu0 %v10863
      %v11054 = vpop.f32.mrb[0].mxu0
      %v11055 = vadd.f32 0.0, %v11054
      %v11056 = vpop.f32.mrb[0].mxu0
      %v11057 = vpop.f32.mrb[0].mxu0
      %v11058 = vadd.f32 0.0, %v11057
      %v11059 = vpop.f32.mrb[0].mxu0
      %11060 = vmatprep.mubr.bf16.mxu0 0
      %11061 = vmatmul.mubr.bf16.gmra.mrb[0].mxu0 %v10864
      %v11062 = vpop.f32.mrb[0].mxu0
      %v11063 = vadd.f32 0.0, %v11062
      %v11064 = vpop.f32.mrb[0].mxu0
      %v11065 = vpop.f32.mrb[0].mxu0
      %v11066 = vadd.f32 0.0, %v11065
      %v11067 = vpop.f32.mrb[0].mxu0
      %11068 = vmatprep.mubr.bf16.mxu0 0
      %11069 = vmatmul.mubr.bf16.gmra.mrb[0].mxu0 %v10865
      %v11070 = vpop.f32.mrb[0].mxu0
      %v11071 = vadd.f32 0.0, %v11070
      %v11072 = vpop.f32.mrb[0].mxu0
      %v11073 = vpop.f32.mrb[0].mxu0
      %v11074 = vadd.f32 0.0, %v11073
      %v11075 = vpop.f32.mrb[0].mxu0
      %11076 = vmatprep.mubr.bf16.mxu0 0
      %11077 = vmatmul.mubr.bf16.gmra.mrb[0].mxu0 %v10866
      %v11078 = vpop.f32.mrb[0].mxu0
      %v11079 = vadd.f32 0.0, %v11078
      %v11080 = vpop.f32.mrb[0].mxu0
      %v11081 = vpop.f32.mrb[0].mxu0
      %v11082 = vadd.f32 0.0, %v11081
      %v11083 = vpop.f32.mrb[0].mxu0
      %11084 = vmatprep.mubr.bf16.mxu0 0
      %11085 = vmatmul.mubr.bf16.gmra.mrb[0].mxu0 %v10867
      %v11086 = vpop.f32.mrb[0].mxu0
      %v11087 = vadd.f32 0.0, %v11086
      %v11088 = vpop.f32.mrb[0].mxu0
      %v11089 = vpop.f32.mrb[0].mxu0
      %v11090 = vadd.f32 0.0, %v11089
      %v11091 = vpop.f32.mrb[0].mxu0
      %11092 = vdwg.mxu0
      %v11093 = vadd.f32 %v10595, %v10967
      %v11094 = vadd.f32 %v10596, %v10970
      %v11095 = vadd.f32 %v10597, %v10975
      %v11096 = vadd.f32 %v10598, %v10978
      %v11097 = vadd.f32 %v10599, %v10983
      %v11098 = vadd.f32 %v10600, %v10986
      %v11099 = vadd.f32 %v10601, %v10991
      %v11100 = vadd.f32 %v10602, %v10994
      %v11101 = vadd.f32 %v10603, %v10999
      %v11102 = vadd.f32 %v10604, %v11002
      %v11103 = vadd.f32 %v10605, %v11007
      %v11104 = vadd.f32 %v10606, %v11010
      %v11105 = vadd.f32 %v10607, %v11015
      %v11106 = vadd.f32 %v10608, %v11018
      %v11107 = vadd.f32 %v10609, %v11023
      %v11108 = vadd.f32 %v10610, %v11026
      %v11109 = vadd.f32 %v10611, %v11031
      %v11110 = vadd.f32 %v10612, %v11034
      %v11111 = vadd.f32 %v10613, %v11039
      %v11112 = vadd.f32 %v10614, %v11042
      %v11113 = vadd.f32 %v10615, %v11047
      %v11114 = vadd.f32 %v10616, %v11050
      %v11115 = vadd.f32 %v10617, %v11055
      %v11116 = vadd.f32 %v10618, %v11058
      %v11117 = vadd.f32 %v10619, %v11063
      %v11118 = vadd.f32 %v10620, %v11066
      %v11119 = vadd.f32 %v10621, %v11071
      %v11120 = vadd.f32 %v10622, %v11074
      %v11121 = vadd.f32 %v10623, %v11079
      %v11122 = vadd.f32 %v10624, %v11082
      %v11123 = vadd.f32 %v10625, %v11087
      %v11124 = vadd.f32 %v10626, %v11090
      %v11126 = vlaneseq
      %v11127 = vshrl.u32 %v11126, 7
      %v11128 = vsub.s32 0, %v11127
      %v11129 = vrot.slane %v6322, %v11128
      %v11131 = vadd.f32 %v11093, %v11129
      %v11132 = vadd.f32 %v11094, %v11129
      %v11133 = vadd.f32 %v11095, %v11129
      %v11134 = vadd.f32 %v11096, %v11129
      %v11135 = vadd.f32 %v11097, %v11129
      %v11136 = vadd.f32 %v11098, %v11129
      %v11137 = vadd.f32 %v11099, %v11129
      %v11138 = vadd.f32 %v11100, %v11129
      %v11139 = vadd.f32 %v11101, %v11129
      %v11140 = vadd.f32 %v11102, %v11129
      %v11141 = vadd.f32 %v11103, %v11129
      %v11142 = vadd.f32 %v11104, %v11129
      %v11143 = vadd.f32 %v11105, %v11129
      %v11144 = vadd.f32 %v11106, %v11129
      %v11145 = vadd.f32 %v11107, %v11129
      %v11146 = vadd.f32 %v11108, %v11129
      %v11147 = vadd.f32 %v11109, %v11129
      %v11148 = vadd.f32 %v11110, %v11129
      %v11149 = vadd.f32 %v11111, %v11129
      %v11150 = vadd.f32 %v11112, %v11129
      %v11151 = vadd.f32 %v11113, %v11129
      %v11152 = vadd.f32 %v11114, %v11129
      %v11153 = vadd.f32 %v11115, %v11129
      %v11154 = vadd.f32 %v11116, %v11129
      %v11155 = vadd.f32 %v11117, %v11129
      %v11156 = vadd.f32 %v11118, %v11129
      %v11157 = vadd.f32 %v11119, %v11129
      %v11158 = vadd.f32 %v11120, %v11129
      %v11159 = vadd.f32 %v11121, %v11129
      %v11160 = vadd.f32 %v11122, %v11129
      %v11161 = vadd.f32 %v11123, %v11129
      %v11162 = vadd.f32 %v11124, %v11129
      %v11163 = vmax.f32 %v11131, 0.0
      %v11164 = vmax.f32 %v11132, 0.0
      %v11165 = vmax.f32 %v11133, 0.0
      %v11166 = vmax.f32 %v11134, 0.0
      %v11167 = vmax.f32 %v11135, 0.0
      %v11168 = vmax.f32 %v11136, 0.0
      %v11169 = vmax.f32 %v11137, 0.0
      %v11170 = vmax.f32 %v11138, 0.0
      %v11171 = vmax.f32 %v11139, 0.0
      %v11172 = vmax.f32 %v11140, 0.0
      %v11173 = vmax.f32 %v11141, 0.0
      %v11174 = vmax.f32 %v11142, 0.0
      %v11175 = vmax.f32 %v11143, 0.0
      %v11176 = vmax.f32 %v11144, 0.0
      %v11177 = vmax.f32 %v11145, 0.0
      %v11178 = vmax.f32 %v11146, 0.0
      %v11179 = vmax.f32 %v11147, 0.0
      %v11180 = vmax.f32 %v11148, 0.0
      %v11181 = vmax.f32 %v11149, 0.0
      %v11182 = vmax.f32 %v11150, 0.0
      %v11183 = vmax.f32 %v11151, 0.0
      %v11184 = vmax.f32 %v11152, 0.0
      %v11185 = vmax.f32 %v11153, 0.0
      %v11186 = vmax.f32 %v11154, 0.0
      %v11187 = vmax.f32 %v11155, 0.0
      %v11188 = vmax.f32 %v11156, 0.0
      %v11189 = vmax.f32 %v11157, 0.0
      %v11190 = vmax.f32 %v11158, 0.0
      %v11191 = vmax.f32 %v11159, 0.0
      %v11192 = vmax.f32 %v11160, 0.0
      %v11193 = vmax.f32 %v11161, 0.0
      %v11194 = vmax.f32 %v11162, 0.0
      %11195 = vst [vmem:[%s224] sm:$0xff] %v11163
      %11196 = vst [vmem:[%s224 + $0x8] sm:$0xff] %v11164
      %11197 = vst [vmem:[%s224 + $0x10] sm:$0xff] %v11165
      %11198 = vst [vmem:[%s224 + $0x18] sm:$0xff] %v11166
      %11199 = vst [vmem:[%s224 + $0x20] sm:$0xff] %v11167
      %11200 = vst [vmem:[%s224 + $0x28] sm:$0xff] %v11168
      %11201 = vst [vmem:[%s224 + $0x30] sm:$0xff] %v11169
      %11202 = vst [vmem:[%s224 + $0x38] sm:$0xff] %v11170
      %11203 = vst [vmem:[%s224 + $0x40] sm:$0xff] %v11171
      %11204 = vst [vmem:[%s224 + $0x48] sm:$0xff] %v11172
      %11205 = vst [vmem:[%s224 + $0x50] sm:$0xff] %v11173
      %11206 = vst [vmem:[%s224 + $0x58] sm:$0xff] %v11174
      %11207 = vst [vmem:[%s224 + $0x60] sm:$0xff] %v11175
      %11208 = vst [vmem:[%s224 + $0x68] sm:$0xff] %v11176
      %11209 = vst [vmem:[%s224 + $0x70] sm:$0xff] %v11177
      %11210 = vst [vmem:[%s224 + $0x78] sm:$0xff] %v11178
      %11211 = vst [vmem:[%s224 + $0x80] sm:$0xff] %v11179
      %11212 = vst [vmem:[%s224 + $0x88] sm:$0xff] %v11180
      %11213 = vst [vmem:[%s224 + $0x90] sm:$0xff] %v11181
      %11214 = vst [vmem:[%s224 + $0x98] sm:$0xff] %v11182
      %11215 = vst [vmem:[%s224 + $0xa0] sm:$0xff] %v11183
      %11216 = vst [vmem:[%s224 + $0xa8] sm:$0xff] %v11184
      %11217 = vst [vmem:[%s224 + $0xb0] sm:$0xff] %v11185
      %11218 = vst [vmem:[%s224 + $0xb8] sm:$0xff] %v11186
      %11219 = vst [vmem:[%s224 + $0xc0] sm:$0xff] %v11187
      %11220 = vst [vmem:[%s224 + $0xc8] sm:$0xff] %v11188
      %11221 = vst [vmem:[%s224 + $0xd0] sm:$0xff] %v11189
      %11222 = vst [vmem:[%s224 + $0xd8] sm:$0xff] %v11190
      %11223 = vst [vmem:[%s224 + $0xe0] sm:$0xff] %v11191
      %11224 = vst [vmem:[%s224 + $0xe8] sm:$0xff] %v11192
      %11225 = vst [vmem:[%s224 + $0xf0] sm:$0xff] %v11193
      %11226 = vst [vmem:[%s224 + $0xf8] sm:$0xff] %v11194
      %p11227 = scmp.lt.s32.totalorder %s16, 1
      %s11228 = scalar_select %p11227, %s16, 1
      %s11229 = smul.addr %s11228, 32
      %s11230 = smul.addr %s11229, 8
      %s11231 = scalar_lea.vmem %s5, %s11230
      // Predicated region
      $region41: #{conv_block_forward.1} parent=39 // pred_check
        %p11232 = pneg %p144
      $region42: #{conv_block_forward.1} parent=39 // pred_check_branch
        %11234 = sbr.rel (%p11232) target = $region44
      $region43: #{conv_block_forward.1} parent=39 // pred_region
        _
      $region44: #{conv_block_forward.1} parent=39 // pred_fallthru
        _
    $region40: #{conv_block_forward.1} parent=5 // pred_fallthru
      _
    %p11235 = scmp.le.s32.totalorder 2, %s11
    // Predicated region
    $region45: #{conv_block_forward.1} parent=5 // pred_check
      %p11236 = pneg %p11235
    $region46: #{conv_block_forward.1} parent=5 // pred_check_branch
      %11238 = sbr.rel (%p11236) target = $region48
    $region47: #{conv_block_forward.1} parent=5 // pred_region
      %s11239 = ssub.s32 %s11, 2
      // Predicated region
      $region49: #{conv_block_forward.1} parent=47 // pred_check
        %p11240 = pneg %p150
      $region50: #{conv_block_forward.1} parent=47 // pred_check_branch
        %11242 = sbr.rel (%p11240) target = $region52
      $region51: #{conv_block_forward.1} parent=47 // pred_region
        %p11243 = scmp.lt.s32.totalorder %s17, 1
        %s11244 = scalar_select %p11243, %s17, 1
        %s11245 = smul.addr %s11244, 32
        %s11246 = smul.addr %s11245, 8
        %s11247 = scalar_lea.vmem %s5, %s11246
      $region52: #{conv_block_forward.1} parent=47 // pred_fallthru
        _
    $region48: #{conv_block_forward.1} parent=5 // pred_fallthru
      _
  $region6: #{conv_block_forward.1} parent=0 // loop_footer
    %s15 = sadd.s32 1, %s11
  $region7: #{conv_block_forward.1} parent=0 // loop_footer_branch
    %10 = sbr.rel target = $region3
  $region8: #{conv_block_forward.1} parent=0 // loop_exit
    _

</llo_original>
